<compile_context>
chip_gen: v5e
topology: v5e:2x2
jax: 0.10.0
libtpu: 0.0.40
codegen_flags: <defaults>
</compile_context>

<pallas_src>
import numpy as np
import jax
import jax.numpy as jnp
from jax.experimental import pallas as pl
from jax.experimental.pallas import tpu as pltpu

FM = 112          # num_conv_feature_maps (PyTorch)
FMP = 128         # channel count padded to a full lane tile
PATCH = 11        # patch size
OUT1 = 9          # spatial size after the first 3x3 valid conv
FC_IN = 2 * FM    # 224
FC_H = 384


def _mc_cnn_kernel(xc_ref,
                   w1, b1, w2, b2, w3, b3, w4, b4, w5, b5,
                   fw1l, fw1o, fb1, fw2, fb2, fw3, fb3, fw4r, fb4,
                   out_ref):
    # xc_ref: (9, 9, N, 9) im2col of the first conv layer, N = 3*B_tile
    #         (rows: [left | pos | neg] of this batch tile).
    n = xc_ref.shape[2]
    bt = n // 3

    # ---- conv layer 1 (Cin == 1): wrapper-built im2col, one K=9 MXU matmul.
    xc = xc_ref[...]
    h = jnp.dot(xc.reshape(OUT1 * OUT1 * n, 9), w1[...],
                preferred_element_type=jnp.float32)
    h = jnp.maximum(h + b1[...], 0.0).reshape(OUT1, OUT1, n, FMP)

    # ---- conv layers 2..5: in-kernel im2col (lane concat of full-vreg tap blocks)
    #      + a single K = 9*128 = 1152 matmul per layer.
    def conv_layer(x, w_ref, b_ref):
        H, W, _, C = x.shape
        Ho, Wo = H - 2, W - 2
        cols = jnp.concatenate(
            [x[ky:ky + Ho, kx:kx + Wo] for ky in range(3) for kx in range(3)],
            axis=-1)                                       # (Ho, Wo, N, 9*C)
        y = jnp.dot(cols.reshape(Ho * Wo * n, 9 * C), w_ref[...],
                    preferred_element_type=jnp.float32)
        y = jnp.maximum(y + b_ref[...], 0.0)
        return y.reshape(Ho, Wo, n, FMP)

    h = conv_layer(h, w2, b2)        # (7, 7, N, 128)
    h = conv_layer(h, w3, b3)        # (5, 5, N, 128)
    h = conv_layer(h, w4, b4)        # (3, 3, N, 128)
    h = conv_layer(h, w5, b5)        # (1, 1, N, 128)
    feat = h.reshape(n, FMP)         # (N, 128); lanes 112..127 are exactly zero.

    left_f = feat[0:bt]              # (Bt,  128)
    other_f = feat[bt:n]             # (2Bt, 128), rows = [pos | neg]

    # ---- fused FC head on 2*Bt rows; shared left branch computed once.
    # torch.cat((left, other), dim=1) @ fw1 == left @ fw1[:112] + other @ fw1[112:]
    left_z = jnp.dot(left_f, fw1l[...], preferred_element_type=jnp.float32)   # (Bt, 384)
    left_z2 = jnp.concatenate([left_z, left_z], axis=0)                       # (2Bt, 384)
    z = jnp.maximum(
        jnp.dot(other_f, fw1o[...], preferred_element_type=jnp.float32)
        + left_z2 + fb1[...], 0.0)
    z = jnp.maximum(jnp.dot(z, fw2[...], preferred_element_type=jnp.float32) + fb2[...], 0.0)
    z = jnp.maximum(jnp.dot(z, fw3[...], preferred_element_type=jnp.float32) + fb3[...], 0.0)

    # Final Linear(384, 1): VPU multiply + lane reduction instead of an N=1 matmul.
    s = jnp.sum(z * fw4r[...], axis=-1, keepdims=True) + fb4[...]             # (2Bt, 1)
    # sigmoid(x) = 0.5 * (tanh(x/2) + 1): numerically stable, single EUP op.
    out_ref[...] = 0.5 * (jnp.tanh(0.5 * s) + 1.0)


def _pad_axis(x, axis, size):
    pad = size - x.shape[axis]
    if pad <= 0:
        return x
    widths = [(0, 0)] * x.ndim
    widths[axis] = (0, pad)
    return jnp.pad(x, widths)


def acc_mc_cnn_forward(sample, params, *, b_tile=8):
    """Pallas forward of AccMcCnn.

    sample: (B, 3, 11, 11) float32 (NCHW, like the PyTorch module).
    returns (pos_score, neg_score), each (B, 1) float32.
    """
    B = sample.shape[0]
    assert sample.shape[1:] == (3, PATCH, PATCH)
    assert b_tile % 8 == 0, "batch tile must be a sublane multiple (8)"
    assert B % b_tile == 0, "batch must be a multiple of the batch tile"
    nt = B // b_tile
    n_tile = 3 * b_tile

    # ---- layout glue (pure data movement, no arithmetic) ----------------------
    # Tile-major packing: within tile t the N rows are [left | pos | neg] of that
    # tile's samples.
    imgs = sample.reshape(nt, b_tile, 3, PATCH, PATCH)
    imgs = jnp.transpose(imgs, (0, 2, 1, 3, 4)).reshape(3 * B, PATCH, PATCH)

    # im2col for the first conv layer (Cin == 1): 9 taps on the lane axis.
    taps = [imgs[:, ky:ky + OUT1, kx:kx + OUT1]
            for ky in range(3) for kx in range(3)]          # 9 x (3B, 9, 9)
    x_cols = jnp.stack(taps, axis=-1)                       # (3B, 9, 9, 9)
    x_cols = jnp.transpose(x_cols, (1, 2, 0, 3))            # (9, 9, 3B, 9)

    # ---- parameter packing (channels zero-padded to 128 lanes) ----------------
    w1_mat = _pad_axis(params["cw1"].reshape(9, FM), 1, FMP)            # (9, 128)
    b1 = _pad_axis(params["cb1"].reshape(1, FM), 1, FMP)                # (1, 128)
    conv_ws, conv_bs = [], []
    for i in range(2, 6):
        w = _pad_axis(_pad_axis(params[f"cw{i}"], 2, FMP), 3, FMP)      # (3,3,128,128)
        conv_ws.append(w.reshape(9 * FMP, FMP))                         # (1152, 128)
        conv_bs.append(_pad_axis(params[f"cb{i}"].reshape(1, FM), 1, FMP))

    fw1 = params["fw1"]                                                 # (224, 384)
    fw1l = _pad_axis(fw1[:FM], 0, FMP)                                  # (128, 384)
    fw1o = _pad_axis(fw1[FM:], 0, FMP)                                  # (128, 384)
    fb1 = params["fb1"].reshape(1, FC_H)
    fw2, fb2 = params["fw2"], params["fb2"].reshape(1, FC_H)
    fw3, fb3 = params["fw3"], params["fb3"].reshape(1, FC_H)
    fw4r = params["fw4"].reshape(1, FC_H)                               # (1, 384)
    fb4 = params["fb4"].reshape(1, 1)

    kernel_args = [
        x_cols,
        w1_mat, b1,
        conv_ws[0], conv_bs[0],
        conv_ws[1], conv_bs[1],
        conv_ws[2], conv_bs[2],
        conv_ws[3], conv_bs[3],
        fw1l, fw1o, fb1, fw2, fb2, fw3, fb3, fw4r, fb4,
    ]

    def const_spec(arr):
        nd = arr.ndim
        return pl.BlockSpec(arr.shape, lambda t, _nd=nd: (0,) * _nd)

    in_specs = [pl.BlockSpec((OUT1, OUT1, n_tile, 9), lambda t: (0, 0, t, 0))]
    in_specs += [const_spec(a) for a in kernel_args[1:]]

    out_specs = pl.BlockSpec((2 * b_tile, 1), lambda t: (t, 0))
    out_shape = jax.ShapeDtypeStruct((2 * B, 1), jnp.float32)

    fn = pl.pallas_call(
        _mc_cnn_kernel,
        grid=(nt,),
        in_specs=in_specs,
        out_specs=out_specs,
        out_shape=out_shape,
        compiler_params=pltpu.CompilerParams(
            dimension_semantics=("parallel",),           # batch tiles shard across TCs on v7x
            vmem_limit_bytes=48 * 1024 * 1024),          # explicit; fits v7x's 64 MiB VMEM
    )
    out = fn(*kernel_args)                               # (2B, 1), per tile [pos | neg]

    out = out.reshape(nt, 2, b_tile, 1)
    pos = out[:, 0].reshape(B, 1)
    neg = out[:, 1].reshape(B, 1)
    return pos, neg


def init_params(key):
    """Deterministic He-style init matching the module's parameter shapes.

    Conv weights are HWIO, Linear weights are (in, out)."""
    ks = jax.random.split(key, 18)

    def dense(k, shape, fan_in):
        return (jax.random.normal(k, shape, jnp.float32)
                * np.sqrt(2.0 / fan_in)).astype(jnp.float32)

    p = {}
    p["cw1"] = dense(ks[0], (3, 3, 1, FM), 3 * 3 * 1)
    p["cb1"] = 0.01 * jax.random.normal(ks[1], (FM,), jnp.float32)
    conv_keys = [(ks[2], ks[3]), (ks[4], ks[5]), (ks[6], ks[7]), (ks[8], ks[9])]
    for i, (kw, kb) in zip(range(2, 6), conv_keys):
        p[f"cw{i}"] = dense(kw, (3, 3, FM, FM), 3 * 3 * FM)
        p[f"cb{i}"] = 0.01 * jax.random.normal(kb, (FM,), jnp.float32)
    p["fw1"] = dense(ks[10], (FC_IN, FC_H), FC_IN)
    p["fb1"] = 0.01 * jax.random.normal(ks[11], (FC_H,), jnp.float32)
    p["fw2"] = dense(ks[12], (FC_H, FC_H), FC_H)
    p["fb2"] = 0.01 * jax.random.normal(ks[13], (FC_H,), jnp.float32)
    p["fw3"] = dense(ks[14], (FC_H, FC_H), FC_H)
    p["fb3"] = 0.01 * jax.random.normal(ks[15], (FC_H,), jnp.float32)
    p["fw4"] = dense(ks[16], (FC_H, 1), FC_H)
    p["fb4"] = 0.01 * jax.random.normal(ks[17], (1,), jnp.float32)
    return p


def reference_forward(sample, p):
    """Pure-JAX reference matching the PyTorch module semantics (B > 1 squeeze case)."""
    def feats(img):  # img: (B, 11, 11)
        h = img[..., None]                                        # NHWC
        for i in range(1, 6):
            h = jax.lax.conv_general_dilated(
                h, p[f"cw{i}"], window_strides=(1, 1), padding="VALID",
                dimension_numbers=("NHWC", "HWIO", "NHWC"))
            h = jax.nn.relu(h + p[f"cb{i}"])
        return h.reshape(img.shape[0], FM)

    lf = feats(sample[:, 0])
    pf = feats(sample[:, 1])
    nf = feats(sample[:, 2])

    def head(f):
        h = f
        for i in range(1, 4):
            h = jax.nn.relu(h @ p[f"fw{i}"] + p[f"fb{i}"])
        return jax.nn.sigmoid(h @ p["fw4"] + p["fb4"])

    return (head(jnp.concatenate([lf, pf], axis=1)),
            head(jnp.concatenate([lf, nf], axis=1)))


if __name__ == "__main__":
    key = jax.random.PRNGKey(0)
    pkey, xkey = jax.random.split(key)
    params = init_params(pkey)

    B = 8
    sample = jax.random.normal(xkey, (B, 3, PATCH, PATCH), jnp.float32)

    pos_score, neg_score = acc_mc_cnn_forward(sample, params, b_tile=8)
    jax.block_until_ready((pos_score, neg_score))

    assert pos_score.shape == (B, 1) and neg_score.shape == (B, 1)
    ref_pos, ref_neg = reference_forward(sample, params)
    np.testing.assert_allclose(np.asarray(pos_score), np.asarray(ref_pos),
                               rtol=1e-3, atol=1e-3)
    np.testing.assert_allclose(np.asarray(neg_score), np.asarray(ref_neg),
                               rtol=1e-3, atol=1e-3)

    print("KERNEL_OK")
</pallas_src>

<mosaic_0001>
module attributes {stable_mosaic.version = 11 : i64} {
  func.func @_mc_cnn_kernel(%arg0: i32, %arg1: memref<9x9x24x9xf32, #tpu.memory_space<vmem>>, %arg2: memref<9x128xf32, #tpu.memory_space<vmem>>, %arg3: memref<1x128xf32, #tpu.memory_space<vmem>>, %arg4: memref<1152x128xf32, #tpu.memory_space<vmem>>, %arg5: memref<1x128xf32, #tpu.memory_space<vmem>>, %arg6: memref<1152x128xf32, #tpu.memory_space<vmem>>, %arg7: memref<1x128xf32, #tpu.memory_space<vmem>>, %arg8: memref<1152x128xf32, #tpu.memory_space<vmem>>, %arg9: memref<1x128xf32, #tpu.memory_space<vmem>>, %arg10: memref<1152x128xf32, #tpu.memory_space<vmem>>, %arg11: memref<1x128xf32, #tpu.memory_space<vmem>>, %arg12: memref<128x384xf32, #tpu.memory_space<vmem>>, %arg13: memref<128x384xf32, #tpu.memory_space<vmem>>, %arg14: memref<1x384xf32, #tpu.memory_space<vmem>>, %arg15: memref<384x384xf32, #tpu.memory_space<vmem>>, %arg16: memref<1x384xf32, #tpu.memory_space<vmem>>, %arg17: memref<384x384xf32, #tpu.memory_space<vmem>>, %arg18: memref<1x384xf32, #tpu.memory_space<vmem>>, %arg19: memref<1x384xf32, #tpu.memory_space<vmem>>, %arg20: memref<1x1xf32, #tpu.memory_space<vmem>>, %arg21: memref<16x1xf32, #tpu.memory_space<vmem>>) attributes {dimension_semantics = [#tpu.dimension_semantics<parallel>], iteration_bounds = array<i64: 1>, scalar_prefetch = 0 : i64, scratch_operands = 0 : i64, tpu.core_type = #tpu.core_type<tc>, window_params = [{transform_indices = @transform_0, window_bounds = array<i64: 9, 9, 24, 9>}, {pipeline_mode = #tpu.pipeline_mode<synchronous>, transform_indices = @transform_1, window_bounds = array<i64: 9, 128>}, {pipeline_mode = #tpu.pipeline_mode<synchronous>, transform_indices = @transform_2, window_bounds = array<i64: 1, 128>}, {pipeline_mode = #tpu.pipeline_mode<synchronous>, transform_indices = @transform_3, window_bounds = array<i64: 1152, 128>}, {pipeline_mode = #tpu.pipeline_mode<synchronous>, transform_indices = @transform_4, window_bounds = array<i64: 1, 128>}, {pipeline_mode = #tpu.pipeline_mode<synchronous>, transform_indices = @transform_5, window_bounds = array<i64: 1152, 128>}, {pipeline_mode = #tpu.pipeline_mode<synchronous>, transform_indices = @transform_6, window_bounds = array<i64: 1, 128>}, {pipeline_mode = #tpu.pipeline_mode<synchronous>, transform_indices = @transform_7, window_bounds = array<i64: 1152, 128>}, {pipeline_mode = #tpu.pipeline_mode<synchronous>, transform_indices = @transform_8, window_bounds = array<i64: 1, 128>}, {pipeline_mode = #tpu.pipeline_mode<synchronous>, transform_indices = @transform_9, window_bounds = array<i64: 1152, 128>}, {pipeline_mode = #tpu.pipeline_mode<synchronous>, transform_indices = @transform_10, window_bounds = array<i64: 1, 128>}, {pipeline_mode = #tpu.pipeline_mode<synchronous>, transform_indices = @transform_11, window_bounds = array<i64: 128, 384>}, {pipeline_mode = #tpu.pipeline_mode<synchronous>, transform_indices = @transform_12, window_bounds = array<i64: 128, 384>}, {pipeline_mode = #tpu.pipeline_mode<synchronous>, transform_indices = @transform_13, window_bounds = array<i64: 1, 384>}, {pipeline_mode = #tpu.pipeline_mode<synchronous>, transform_indices = @transform_14, window_bounds = array<i64: 384, 384>}, {pipeline_mode = #tpu.pipeline_mode<synchronous>, transform_indices = @transform_15, window_bounds = array<i64: 1, 384>}, {pipeline_mode = #tpu.pipeline_mode<synchronous>, transform_indices = @transform_16, window_bounds = array<i64: 384, 384>}, {pipeline_mode = #tpu.pipeline_mode<synchronous>, transform_indices = @transform_17, window_bounds = array<i64: 1, 384>}, {pipeline_mode = #tpu.pipeline_mode<synchronous>, transform_indices = @transform_18, window_bounds = array<i64: 1, 384>}, {pipeline_mode = #tpu.pipeline_mode<synchronous>, transform_indices = @transform_19, window_bounds = array<i64: 1, 1>}, {transform_indices = @transform_20, window_bounds = array<i64: 16, 1>}]} {
    %c0 = arith.constant 0 : index
    %c0_0 = arith.constant 0 : index
    %c0_1 = arith.constant 0 : index
    %c0_2 = arith.constant 0 : index
    %0 = vector.load %arg1[%c0, %c0_0, %c0_1, %c0_2] : memref<9x9x24x9xf32, #tpu.memory_space<vmem>>, vector<9x9x24x9xf32>
    %1 = vector.shape_cast %0 : vector<9x9x24x9xf32> to vector<1944x9xf32>
    %c0_3 = arith.constant 0 : index
    %c0_4 = arith.constant 0 : index
    %2 = vector.load %arg2[%c0_3, %c0_4] : memref<9x128xf32, #tpu.memory_space<vmem>>, vector<9x128xf32>
    %cst = arith.constant dense<0.000000e+00> : vector<1944x128xf32>
    %3 = tpu.matmul %1, %2, %cst {dimension_numbers = #tpu.dot_dimension_numbers<[1], [0], [0], [1], [0, 0, 1, 1], [], []>} : vector<1944x9xf32>, vector<9x128xf32>, vector<1944x128xf32> -> vector<1944x128xf32>
    %c0_5 = arith.constant 0 : index
    %c0_6 = arith.constant 0 : index
    %4 = vector.load %arg3[%c0_5, %c0_6] : memref<1x128xf32, #tpu.memory_space<vmem>>, vector<1x128xf32>
    %5 = vector.broadcast %4 : vector<1x128xf32> to vector<1944x128xf32>
    %6 = arith.addf %3, %5 : vector<1944x128xf32>
    %cst_7 = arith.constant 0.000000e+00 : f32
    %7 = vector.broadcast %cst_7 : f32 to vector<1944x128xf32>
    %8 = arith.maximumf %6, %7 : vector<1944x128xf32>
    %9 = vector.shape_cast %8 : vector<1944x128xf32> to vector<9x9x24x128xf32>
    %10 = vector.extract_strided_slice %9 {offsets = [0, 0, 0, 0], sizes = [7, 7, 24, 128], strides = [1, 1, 1, 1]} : vector<9x9x24x128xf32> to vector<7x7x24x128xf32>
    %11 = vector.extract_strided_slice %9 {offsets = [0, 1, 0, 0], sizes = [7, 7, 24, 128], strides = [1, 1, 1, 1]} : vector<9x9x24x128xf32> to vector<7x7x24x128xf32>
    %12 = vector.extract_strided_slice %9 {offsets = [0, 2, 0, 0], sizes = [7, 7, 24, 128], strides = [1, 1, 1, 1]} : vector<9x9x24x128xf32> to vector<7x7x24x128xf32>
    %13 = vector.extract_strided_slice %9 {offsets = [1, 0, 0, 0], sizes = [7, 7, 24, 128], strides = [1, 1, 1, 1]} : vector<9x9x24x128xf32> to vector<7x7x24x128xf32>
    %14 = vector.extract_strided_slice %9 {offsets = [1, 1, 0, 0], sizes = [7, 7, 24, 128], strides = [1, 1, 1, 1]} : vector<9x9x24x128xf32> to vector<7x7x24x128xf32>
    %15 = vector.extract_strided_slice %9 {offsets = [1, 2, 0, 0], sizes = [7, 7, 24, 128], strides = [1, 1, 1, 1]} : vector<9x9x24x128xf32> to vector<7x7x24x128xf32>
    %16 = vector.extract_strided_slice %9 {offsets = [2, 0, 0, 0], sizes = [7, 7, 24, 128], strides = [1, 1, 1, 1]} : vector<9x9x24x128xf32> to vector<7x7x24x128xf32>
    %17 = vector.extract_strided_slice %9 {offsets = [2, 1, 0, 0], sizes = [7, 7, 24, 128], strides = [1, 1, 1, 1]} : vector<9x9x24x128xf32> to vector<7x7x24x128xf32>
    %18 = vector.extract_strided_slice %9 {offsets = [2, 2, 0, 0], sizes = [7, 7, 24, 128], strides = [1, 1, 1, 1]} : vector<9x9x24x128xf32> to vector<7x7x24x128xf32>
    %19 = tpu.concatenate %10, %11, %12, %13, %14, %15, %16, %17, %18 in 3 : vector<7x7x24x128xf32>, vector<7x7x24x128xf32>, vector<7x7x24x128xf32>, vector<7x7x24x128xf32>, vector<7x7x24x128xf32>, vector<7x7x24x128xf32>, vector<7x7x24x128xf32>, vector<7x7x24x128xf32>, vector<7x7x24x128xf32> -> vector<7x7x24x1152xf32>
    %20 = vector.shape_cast %19 : vector<7x7x24x1152xf32> to vector<1176x1152xf32>
    %c0_8 = arith.constant 0 : index
    %c0_9 = arith.constant 0 : index
    %21 = vector.load %arg4[%c0_8, %c0_9] : memref<1152x128xf32, #tpu.memory_space<vmem>>, vector<1152x128xf32>
    %cst_10 = arith.constant dense<0.000000e+00> : vector<1176x128xf32>
    %22 = tpu.matmul %20, %21, %cst_10 {dimension_numbers = #tpu.dot_dimension_numbers<[1], [0], [0], [1], [0, 0, 1, 1], [], []>} : vector<1176x1152xf32>, vector<1152x128xf32>, vector<1176x128xf32> -> vector<1176x128xf32>
    %c0_11 = arith.constant 0 : index
    %c0_12 = arith.constant 0 : index
    %23 = vector.load %arg5[%c0_11, %c0_12] : memref<1x128xf32, #tpu.memory_space<vmem>>, vector<1x128xf32>
    %24 = vector.broadcast %23 : vector<1x128xf32> to vector<1176x128xf32>
    %25 = arith.addf %22, %24 : vector<1176x128xf32>
    %cst_13 = arith.constant 0.000000e+00 : f32
    %26 = vector.broadcast %cst_13 : f32 to vector<1176x128xf32>
    %27 = arith.maximumf %25, %26 : vector<1176x128xf32>
    %28 = vector.shape_cast %27 : vector<1176x128xf32> to vector<7x7x24x128xf32>
    %29 = vector.extract_strided_slice %28 {offsets = [0, 0, 0, 0], sizes = [5, 5, 24, 128], strides = [1, 1, 1, 1]} : vector<7x7x24x128xf32> to vector<5x5x24x128xf32>
    %30 = vector.extract_strided_slice %28 {offsets = [0, 1, 0, 0], sizes = [5, 5, 24, 128], strides = [1, 1, 1, 1]} : vector<7x7x24x128xf32> to vector<5x5x24x128xf32>
    %31 = vector.extract_strided_slice %28 {offsets = [0, 2, 0, 0], sizes = [5, 5, 24, 128], strides = [1, 1, 1, 1]} : vector<7x7x24x128xf32> to vector<5x5x24x128xf32>
    %32 = vector.extract_strided_slice %28 {offsets = [1, 0, 0, 0], sizes = [5, 5, 24, 128], strides = [1, 1, 1, 1]} : vector<7x7x24x128xf32> to vector<5x5x24x128xf32>
    %33 = vector.extract_strided_slice %28 {offsets = [1, 1, 0, 0], sizes = [5, 5, 24, 128], strides = [1, 1, 1, 1]} : vector<7x7x24x128xf32> to vector<5x5x24x128xf32>
    %34 = vector.extract_strided_slice %28 {offsets = [1, 2, 0, 0], sizes = [5, 5, 24, 128], strides = [1, 1, 1, 1]} : vector<7x7x24x128xf32> to vector<5x5x24x128xf32>
    %35 = vector.extract_strided_slice %28 {offsets = [2, 0, 0, 0], sizes = [5, 5, 24, 128], strides = [1, 1, 1, 1]} : vector<7x7x24x128xf32> to vector<5x5x24x128xf32>
    %36 = vector.extract_strided_slice %28 {offsets = [2, 1, 0, 0], sizes = [5, 5, 24, 128], strides = [1, 1, 1, 1]} : vector<7x7x24x128xf32> to vector<5x5x24x128xf32>
    %37 = vector.extract_strided_slice %28 {offsets = [2, 2, 0, 0], sizes = [5, 5, 24, 128], strides = [1, 1, 1, 1]} : vector<7x7x24x128xf32> to vector<5x5x24x128xf32>
    %38 = tpu.concatenate %29, %30, %31, %32, %33, %34, %35, %36, %37 in 3 : vector<5x5x24x128xf32>, vector<5x5x24x128xf32>, vector<5x5x24x128xf32>, vector<5x5x24x128xf32>, vector<5x5x24x128xf32>, vector<5x5x24x128xf32>, vector<5x5x24x128xf32>, vector<5x5x24x128xf32>, vector<5x5x24x128xf32> -> vector<5x5x24x1152xf32>
    %39 = vector.shape_cast %38 : vector<5x5x24x1152xf32> to vector<600x1152xf32>
    %c0_14 = arith.constant 0 : index
    %c0_15 = arith.constant 0 : index
    %40 = vector.load %arg6[%c0_14, %c0_15] : memref<1152x128xf32, #tpu.memory_space<vmem>>, vector<1152x128xf32>
    %cst_16 = arith.constant dense<0.000000e+00> : vector<600x128xf32>
    %41 = tpu.matmul %39, %40, %cst_16 {dimension_numbers = #tpu.dot_dimension_numbers<[1], [0], [0], [1], [0, 0, 1, 1], [], []>} : vector<600x1152xf32>, vector<1152x128xf32>, vector<600x128xf32> -> vector<600x128xf32>
    %c0_17 = arith.constant 0 : index
    %c0_18 = arith.constant 0 : index
    %42 = vector.load %arg7[%c0_17, %c0_18] : memref<1x128xf32, #tpu.memory_space<vmem>>, vector<1x128xf32>
    %43 = vector.broadcast %42 : vector<1x128xf32> to vector<600x128xf32>
    %44 = arith.addf %41, %43 : vector<600x128xf32>
    %cst_19 = arith.constant 0.000000e+00 : f32
    %45 = vector.broadcast %cst_19 : f32 to vector<600x128xf32>
    %46 = arith.maximumf %44, %45 : vector<600x128xf32>
    %47 = vector.shape_cast %46 : vector<600x128xf32> to vector<5x5x24x128xf32>
    %48 = vector.extract_strided_slice %47 {offsets = [0, 0, 0, 0], sizes = [3, 3, 24, 128], strides = [1, 1, 1, 1]} : vector<5x5x24x128xf32> to vector<3x3x24x128xf32>
    %49 = vector.extract_strided_slice %47 {offsets = [0, 1, 0, 0], sizes = [3, 3, 24, 128], strides = [1, 1, 1, 1]} : vector<5x5x24x128xf32> to vector<3x3x24x128xf32>
    %50 = vector.extract_strided_slice %47 {offsets = [0, 2, 0, 0], sizes = [3, 3, 24, 128], strides = [1, 1, 1, 1]} : vector<5x5x24x128xf32> to vector<3x3x24x128xf32>
    %51 = vector.extract_strided_slice %47 {offsets = [1, 0, 0, 0], sizes = [3, 3, 24, 128], strides = [1, 1, 1, 1]} : vector<5x5x24x128xf32> to vector<3x3x24x128xf32>
    %52 = vector.extract_strided_slice %47 {offsets = [1, 1, 0, 0], sizes = [3, 3, 24, 128], strides = [1, 1, 1, 1]} : vector<5x5x24x128xf32> to vector<3x3x24x128xf32>
    %53 = vector.extract_strided_slice %47 {offsets = [1, 2, 0, 0], sizes = [3, 3, 24, 128], strides = [1, 1, 1, 1]} : vector<5x5x24x128xf32> to vector<3x3x24x128xf32>
    %54 = vector.extract_strided_slice %47 {offsets = [2, 0, 0, 0], sizes = [3, 3, 24, 128], strides = [1, 1, 1, 1]} : vector<5x5x24x128xf32> to vector<3x3x24x128xf32>
    %55 = vector.extract_strided_slice %47 {offsets = [2, 1, 0, 0], sizes = [3, 3, 24, 128], strides = [1, 1, 1, 1]} : vector<5x5x24x128xf32> to vector<3x3x24x128xf32>
    %56 = vector.extract_strided_slice %47 {offsets = [2, 2, 0, 0], sizes = [3, 3, 24, 128], strides = [1, 1, 1, 1]} : vector<5x5x24x128xf32> to vector<3x3x24x128xf32>
    %57 = tpu.concatenate %48, %49, %50, %51, %52, %53, %54, %55, %56 in 3 : vector<3x3x24x128xf32>, vector<3x3x24x128xf32>, vector<3x3x24x128xf32>, vector<3x3x24x128xf32>, vector<3x3x24x128xf32>, vector<3x3x24x128xf32>, vector<3x3x24x128xf32>, vector<3x3x24x128xf32>, vector<3x3x24x128xf32> -> vector<3x3x24x1152xf32>
    %58 = vector.shape_cast %57 : vector<3x3x24x1152xf32> to vector<216x1152xf32>
    %c0_20 = arith.constant 0 : index
    %c0_21 = arith.constant 0 : index
    %59 = vector.load %arg8[%c0_20, %c0_21] : memref<1152x128xf32, #tpu.memory_space<vmem>>, vector<1152x128xf32>
    %cst_22 = arith.constant dense<0.000000e+00> : vector<216x128xf32>
    %60 = tpu.matmul %58, %59, %cst_22 {dimension_numbers = #tpu.dot_dimension_numbers<[1], [0], [0], [1], [0, 0, 1, 1], [], []>} : vector<216x1152xf32>, vector<1152x128xf32>, vector<216x128xf32> -> vector<216x128xf32>
    %c0_23 = arith.constant 0 : index
    %c0_24 = arith.constant 0 : index
    %61 = vector.load %arg9[%c0_23, %c0_24] : memref<1x128xf32, #tpu.memory_space<vmem>>, vector<1x128xf32>
    %62 = vector.broadcast %61 : vector<1x128xf32> to vector<216x128xf32>
    %63 = arith.addf %60, %62 : vector<216x128xf32>
    %cst_25 = arith.constant 0.000000e+00 : f32
    %64 = vector.broadcast %cst_25 : f32 to vector<216x128xf32>
    %65 = arith.maximumf %63, %64 : vector<216x128xf32>
    %66 = vector.shape_cast %65 : vector<216x128xf32> to vector<3x3x24x128xf32>
    %67 = vector.extract_strided_slice %66 {offsets = [0, 0, 0, 0], sizes = [1, 1, 24, 128], strides = [1, 1, 1, 1]} : vector<3x3x24x128xf32> to vector<1x1x24x128xf32>
    %68 = vector.extract_strided_slice %66 {offsets = [0, 1, 0, 0], sizes = [1, 1, 24, 128], strides = [1, 1, 1, 1]} : vector<3x3x24x128xf32> to vector<1x1x24x128xf32>
    %69 = vector.extract_strided_slice %66 {offsets = [0, 2, 0, 0], sizes = [1, 1, 24, 128], strides = [1, 1, 1, 1]} : vector<3x3x24x128xf32> to vector<1x1x24x128xf32>
    %70 = vector.extract_strided_slice %66 {offsets = [1, 0, 0, 0], sizes = [1, 1, 24, 128], strides = [1, 1, 1, 1]} : vector<3x3x24x128xf32> to vector<1x1x24x128xf32>
    %71 = vector.extract_strided_slice %66 {offsets = [1, 1, 0, 0], sizes = [1, 1, 24, 128], strides = [1, 1, 1, 1]} : vector<3x3x24x128xf32> to vector<1x1x24x128xf32>
    %72 = vector.extract_strided_slice %66 {offsets = [1, 2, 0, 0], sizes = [1, 1, 24, 128], strides = [1, 1, 1, 1]} : vector<3x3x24x128xf32> to vector<1x1x24x128xf32>
    %73 = vector.extract_strided_slice %66 {offsets = [2, 0, 0, 0], sizes = [1, 1, 24, 128], strides = [1, 1, 1, 1]} : vector<3x3x24x128xf32> to vector<1x1x24x128xf32>
    %74 = vector.extract_strided_slice %66 {offsets = [2, 1, 0, 0], sizes = [1, 1, 24, 128], strides = [1, 1, 1, 1]} : vector<3x3x24x128xf32> to vector<1x1x24x128xf32>
    %75 = vector.extract_strided_slice %66 {offsets = [2, 2, 0, 0], sizes = [1, 1, 24, 128], strides = [1, 1, 1, 1]} : vector<3x3x24x128xf32> to vector<1x1x24x128xf32>
    %76 = tpu.concatenate %67, %68, %69, %70, %71, %72, %73, %74, %75 in 3 : vector<1x1x24x128xf32>, vector<1x1x24x128xf32>, vector<1x1x24x128xf32>, vector<1x1x24x128xf32>, vector<1x1x24x128xf32>, vector<1x1x24x128xf32>, vector<1x1x24x128xf32>, vector<1x1x24x128xf32>, vector<1x1x24x128xf32> -> vector<1x1x24x1152xf32>
    %77 = vector.shape_cast %76 : vector<1x1x24x1152xf32> to vector<24x1152xf32>
    %c0_26 = arith.constant 0 : index
    %c0_27 = arith.constant 0 : index
    %78 = vector.load %arg10[%c0_26, %c0_27] : memref<1152x128xf32, #tpu.memory_space<vmem>>, vector<1152x128xf32>
    %cst_28 = arith.constant dense<0.000000e+00> : vector<24x128xf32>
    %79 = tpu.matmul %77, %78, %cst_28 {dimension_numbers = #tpu.dot_dimension_numbers<[1], [0], [0], [1], [0, 0, 1, 1], [], []>} : vector<24x1152xf32>, vector<1152x128xf32>, vector<24x128xf32> -> vector<24x128xf32>
    %c0_29 = arith.constant 0 : index
    %c0_30 = arith.constant 0 : index
    %80 = vector.load %arg11[%c0_29, %c0_30] : memref<1x128xf32, #tpu.memory_space<vmem>>, vector<1x128xf32>
    %81 = vector.broadcast %80 : vector<1x128xf32> to vector<24x128xf32>
    %82 = arith.addf %79, %81 : vector<24x128xf32>
    %cst_31 = arith.constant 0.000000e+00 : f32
    %83 = vector.broadcast %cst_31 : f32 to vector<24x128xf32>
    %84 = arith.maximumf %82, %83 : vector<24x128xf32>
    %85 = vector.shape_cast %84 : vector<24x128xf32> to vector<1x1x24x128xf32>
    %86 = vector.shape_cast %85 : vector<1x1x24x128xf32> to vector<24x128xf32>
    %87 = vector.extract_strided_slice %86 {offsets = [0, 0], sizes = [8, 128], strides = [1, 1]} : vector<24x128xf32> to vector<8x128xf32>
    %88 = vector.extract_strided_slice %86 {offsets = [8, 0], sizes = [16, 128], strides = [1, 1]} : vector<24x128xf32> to vector<16x128xf32>
    %c0_32 = arith.constant 0 : index
    %c0_33 = arith.constant 0 : index
    %89 = vector.load %arg12[%c0_32, %c0_33] : memref<128x384xf32, #tpu.memory_space<vmem>>, vector<128x384xf32>
    %cst_34 = arith.constant dense<0.000000e+00> : vector<8x384xf32>
    %90 = tpu.matmul %87, %89, %cst_34 {dimension_numbers = #tpu.dot_dimension_numbers<[1], [0], [0], [1], [0, 0, 1, 1], [], []>} : vector<8x128xf32>, vector<128x384xf32>, vector<8x384xf32> -> vector<8x384xf32>
    %91 = tpu.concatenate %90, %90 in 0 : vector<8x384xf32>, vector<8x384xf32> -> vector<16x384xf32>
    %c0_35 = arith.constant 0 : index
    %c0_36 = arith.constant 0 : index
    %92 = vector.load %arg13[%c0_35, %c0_36] : memref<128x384xf32, #tpu.memory_space<vmem>>, vector<128x384xf32>
    %cst_37 = arith.constant dense<0.000000e+00> : vector<16x384xf32>
    %93 = tpu.matmul %88, %92, %cst_37 {dimension_numbers = #tpu.dot_dimension_numbers<[1], [0], [0], [1], [0, 0, 1, 1], [], []>} : vector<16x128xf32>, vector<128x384xf32>, vector<16x384xf32> -> vector<16x384xf32>
    %94 = arith.addf %93, %91 : vector<16x384xf32>
    %c0_38 = arith.constant 0 : index
    %c0_39 = arith.constant 0 : index
    %95 = vector.load %arg14[%c0_38, %c0_39] : memref<1x384xf32, #tpu.memory_space<vmem>>, vector<1x384xf32>
    %96 = vector.broadcast %95 : vector<1x384xf32> to vector<16x384xf32>
    %97 = arith.addf %94, %96 : vector<16x384xf32>
    %cst_40 = arith.constant 0.000000e+00 : f32
    %98 = vector.broadcast %cst_40 : f32 to vector<16x384xf32>
    %99 = arith.maximumf %97, %98 : vector<16x384xf32>
    %c0_41 = arith.constant 0 : index
    %c0_42 = arith.constant 0 : index
    %100 = vector.load %arg15[%c0_41, %c0_42] : memref<384x384xf32, #tpu.memory_space<vmem>>, vector<384x384xf32>
    %cst_43 = arith.constant dense<0.000000e+00> : vector<16x384xf32>
    %101 = tpu.matmul %99, %100, %cst_43 {dimension_numbers = #tpu.dot_dimension_numbers<[1], [0], [0], [1], [0, 0, 1, 1], [], []>} : vector<16x384xf32>, vector<384x384xf32>, vector<16x384xf32> -> vector<16x384xf32>
    %c0_44 = arith.constant 0 : index
    %c0_45 = arith.constant 0 : index
    %102 = vector.load %arg16[%c0_44, %c0_45] : memref<1x384xf32, #tpu.memory_space<vmem>>, vector<1x384xf32>
    %103 = vector.broadcast %102 : vector<1x384xf32> to vector<16x384xf32>
    %104 = arith.addf %101, %103 : vector<16x384xf32>
    %cst_46 = arith.constant 0.000000e+00 : f32
    %105 = vector.broadcast %cst_46 : f32 to vector<16x384xf32>
    %106 = arith.maximumf %104, %105 : vector<16x384xf32>
    %c0_47 = arith.constant 0 : index
    %c0_48 = arith.constant 0 : index
    %107 = vector.load %arg17[%c0_47, %c0_48] : memref<384x384xf32, #tpu.memory_space<vmem>>, vector<384x384xf32>
    %cst_49 = arith.constant dense<0.000000e+00> : vector<16x384xf32>
    %108 = tpu.matmul %106, %107, %cst_49 {dimension_numbers = #tpu.dot_dimension_numbers<[1], [0], [0], [1], [0, 0, 1, 1], [], []>} : vector<16x384xf32>, vector<384x384xf32>, vector<16x384xf32> -> vector<16x384xf32>
    %c0_50 = arith.constant 0 : index
    %c0_51 = arith.constant 0 : index
    %109 = vector.load %arg18[%c0_50, %c0_51] : memref<1x384xf32, #tpu.memory_space<vmem>>, vector<1x384xf32>
    %110 = vector.broadcast %109 : vector<1x384xf32> to vector<16x384xf32>
    %111 = arith.addf %108, %110 : vector<16x384xf32>
    %cst_52 = arith.constant 0.000000e+00 : f32
    %112 = vector.broadcast %cst_52 : f32 to vector<16x384xf32>
    %113 = arith.maximumf %111, %112 : vector<16x384xf32>
    %c0_53 = arith.constant 0 : index
    %c0_54 = arith.constant 0 : index
    %114 = vector.load %arg19[%c0_53, %c0_54] : memref<1x384xf32, #tpu.memory_space<vmem>>, vector<1x384xf32>
    %115 = vector.broadcast %114 : vector<1x384xf32> to vector<16x384xf32>
    %116 = arith.mulf %113, %115 : vector<16x384xf32>
    %cst_55 = arith.constant dense<0.000000e+00> : vector<16xf32>
    %117 = vector.multi_reduction <add>, %116, %cst_55 [1] : vector<16x384xf32> to vector<16xf32>
    %118 = vector.shape_cast %117 : vector<16xf32> to vector<16x1xf32>
    %c0_56 = arith.constant 0 : index
    %c0_57 = arith.constant 0 : index
    %119 = vector.load %arg20[%c0_56, %c0_57] : memref<1x1xf32, #tpu.memory_space<vmem>>, vector<1x1xf32>
    %120 = vector.broadcast %119 : vector<1x1xf32> to vector<16x1xf32>
    %121 = arith.addf %118, %120 : vector<16x1xf32>
    %cst_58 = arith.constant 5.000000e-01 : f32
    %122 = vector.broadcast %cst_58 : f32 to vector<16x1xf32>
    %123 = arith.mulf %122, %121 : vector<16x1xf32>
    %124 = math.tanh %123 : vector<16x1xf32>
    %cst_59 = arith.constant 1.000000e+00 : f32
    %125 = vector.broadcast %cst_59 : f32 to vector<16x1xf32>
    %126 = arith.addf %124, %125 : vector<16x1xf32>
    %cst_60 = arith.constant 5.000000e-01 : f32
    %127 = vector.broadcast %cst_60 : f32 to vector<16x1xf32>
    %128 = arith.mulf %127, %126 : vector<16x1xf32>
    %c0_61 = arith.constant 0 : index
    %c0_62 = arith.constant 0 : index
    %129 = vector.load %arg21[%c0_61, %c0_62] : memref<16x1xf32, #tpu.memory_space<vmem>>, vector<16x1xf32>
    tpu.vector_store %arg21[%c0_61, %c0_62], %128 {strides = array<i32>} : memref<16x1xf32, #tpu.memory_space<vmem>>, vector<16x1xf32>,
    return
  }
  func.func @transform_0(%arg0: i32) -> (i32, i32, i32, i32) {
    %c0_i32 = arith.constant 0 : i32
    %c0_i32_0 = arith.constant 0 : i32
    %c0_i32_1 = arith.constant 0 : i32
    %c0_i32_2 = arith.constant 0 : i32
    return %c0_i32, %c0_i32_0, %arg0, %c0_i32_1 : i32, i32, i32, i32
  }
  func.func @transform_1(%arg0: i32) -> (i32, i32) {
    %c0_i32 = arith.constant 0 : i32
    %c0_i32_0 = arith.constant 0 : i32
    %c0_i32_1 = arith.constant 0 : i32
    return %c0_i32, %c0_i32_0 : i32, i32
  }
  func.func @transform_2(%arg0: i32) -> (i32, i32) {
    %c0_i32 = arith.constant 0 : i32
    %c0_i32_0 = arith.constant 0 : i32
    %c0_i32_1 = arith.constant 0 : i32
    return %c0_i32, %c0_i32_0 : i32, i32
  }
  func.func @transform_3(%arg0: i32) -> (i32, i32) {
    %c0_i32 = arith.constant 0 : i32
    %c0_i32_0 = arith.constant 0 : i32
    %c0_i32_1 = arith.constant 0 : i32
    return %c0_i32, %c0_i32_0 : i32, i32
  }
  func.func @transform_4(%arg0: i32) -> (i32, i32) {
    %c0_i32 = arith.constant 0 : i32
    %c0_i32_0 = arith.constant 0 : i32
    %c0_i32_1 = arith.constant 0 : i32
    return %c0_i32, %c0_i32_0 : i32, i32
  }
  func.func @transform_5(%arg0: i32) -> (i32, i32) {
    %c0_i32 = arith.constant 0 : i32
    %c0_i32_0 = arith.constant 0 : i32
    %c0_i32_1 = arith.constant 0 : i32
    return %c0_i32, %c0_i32_0 : i32, i32
  }
  func.func @transform_6(%arg0: i32) -> (i32, i32) {
    %c0_i32 = arith.constant 0 : i32
    %c0_i32_0 = arith.constant 0 : i32
    %c0_i32_1 = arith.constant 0 : i32
    return %c0_i32, %c0_i32_0 : i32, i32
  }
  func.func @transform_7(%arg0: i32) -> (i32, i32) {
    %c0_i32 = arith.constant 0 : i32
    %c0_i32_0 = arith.constant 0 : i32
    %c0_i32_1 = arith.constant 0 : i32
    return %c0_i32, %c0_i32_0 : i32, i32
  }
  func.func @transform_8(%arg0: i32) -> (i32, i32) {
    %c0_i32 = arith.constant 0 : i32
    %c0_i32_0 = arith.constant 0 : i32
    %c0_i32_1 = arith.constant 0 : i32
    return %c0_i32, %c0_i32_0 : i32, i32
  }
  func.func @transform_9(%arg0: i32) -> (i32, i32) {
    %c0_i32 = arith.constant 0 : i32
    %c0_i32_0 = arith.constant 0 : i32
    %c0_i32_1 = arith.constant 0 : i32
    return %c0_i32, %c0_i32_0 : i32, i32
  }
  func.func @transform_10(%arg0: i32) -> (i32, i32) {
    %c0_i32 = arith.constant 0 : i32
    %c0_i32_0 = arith.constant 0 : i32
    %c0_i32_1 = arith.constant 0 : i32
    return %c0_i32, %c0_i32_0 : i32, i32
  }
  func.func @transform_11(%arg0: i32) -> (i32, i32) {
    %c0_i32 = arith.constant 0 : i32
    %c0_i32_0 = arith.constant 0 : i32
    %c0_i32_1 = arith.constant 0 : i32
    return %c0_i32, %c0_i32_0 : i32, i32
  }
  func.func @transform_12(%arg0: i32) -> (i32, i32) {
    %c0_i32 = arith.constant 0 : i32
    %c0_i32_0 = arith.constant 0 : i32
    %c0_i32_1 = arith.constant 0 : i32
    return %c0_i32, %c0_i32_0 : i32, i32
  }
  func.func @transform_13(%arg0: i32) -> (i32, i32) {
    %c0_i32 = arith.constant 0 : i32
    %c0_i32_0 = arith.constant 0 : i32
    %c0_i32_1 = arith.constant 0 : i32
    return %c0_i32, %c0_i32_0 : i32, i32
  }
  func.func @transform_14(%arg0: i32) -> (i32, i32) {
    %c0_i32 = arith.constant 0 : i32
    %c0_i32_0 = arith.constant 0 : i32
    %c0_i32_1 = arith.constant 0 : i32
    return %c0_i32, %c0_i32_0 : i32, i32
  }
  func.func @transform_15(%arg0: i32) -> (i32, i32) {
    %c0_i32 = arith.constant 0 : i32
    %c0_i32_0 = arith.constant 0 : i32
    %c0_i32_1 = arith.constant 0 : i32
    return %c0_i32, %c0_i32_0 : i32, i32
  }
  func.func @transform_16(%arg0: i32) -> (i32, i32) {
    %c0_i32 = arith.constant 0 : i32
    %c0_i32_0 = arith.constant 0 : i32
    %c0_i32_1 = arith.constant 0 : i32
    return %c0_i32, %c0_i32_0 : i32, i32
  }
  func.func @transform_17(%arg0: i32) -> (i32, i32) {
    %c0_i32 = arith.constant 0 : i32
    %c0_i32_0 = arith.constant 0 : i32
    %c0_i32_1 = arith.constant 0 : i32
    return %c0_i32, %c0_i32_0 : i32, i32
  }
  func.func @transform_18(%arg0: i32) -> (i32, i32) {
    %c0_i32 = arith.constant 0 : i32
    %c0_i32_0 = arith.constant 0 : i32
    %c0_i32_1 = arith.constant 0 : i32
    return %c0_i32, %c0_i32_0 : i32, i32
  }
  func.func @transform_19(%arg0: i32) -> (i32, i32) {
    %c0_i32 = arith.constant 0 : i32
    %c0_i32_0 = arith.constant 0 : i32
    %c0_i32_1 = arith.constant 0 : i32
    return %c0_i32, %c0_i32_0 : i32, i32
  }
  func.func @transform_20(%arg0: i32) -> (i32, i32) {
    %c0_i32 = arith.constant 0 : i32
    %c0_i32_0 = arith.constant 0 : i32
    return %arg0, %c0_i32 : i32, i32
  }
}

</mosaic_0001>

<llo_original>
// kernel: tpu_custom_call.1
$region0: #{tpu_custom_call.1}
  #allocation0 [shape = 'u32[]', space=smem, size = 0x4, offset = 0x4, fixed_abs, tag = 'smem constant byte address 0x4 - core index']
  #allocation1 [shape = 'u32[72,128]{1,0:T(1,128)}', space=vmem, size = 0x9000, scoped, tag = 'internal scratch']
  #allocation2 [shape = 'f32[1,1]{1,0:T(1,128)S(1)}', space=vmem, size = 0x200, scoped, tag = 'scoped memory for tpu_custom_call.1']
  %s0 = inlined_call_operand.vmem [shape: f32[9,9,24,9], index: 0, kind: input, shape index: {}]
  %s1 = inlined_call_operand.vmem [shape: f32[9,128], index: 1, kind: input, shape index: {}]
  %s2 = inlined_call_operand.vmem [shape: f32[1,128], index: 2, kind: input, shape index: {}]
  %s3 = inlined_call_operand.vmem [shape: f32[1152,128], index: 3, kind: input, shape index: {}]
  %s4 = inlined_call_operand.vmem [shape: f32[1,128], index: 4, kind: input, shape index: {}]
  %s5 = inlined_call_operand.vmem [shape: f32[1152,128], index: 5, kind: input, shape index: {}]
  %s6 = inlined_call_operand.vmem [shape: f32[1,128], index: 6, kind: input, shape index: {}]
  %s7 = inlined_call_operand.hbm [shape: f32[1152,128], index: 7, kind: input, shape index: {}]
  %s8 = inlined_call_operand.vmem [shape: f32[1,128], index: 8, kind: input, shape index: {}]
  %s9 = inlined_call_operand.hbm [shape: f32[1152,128], index: 9, kind: input, shape index: {}]
  %s10 = inlined_call_operand.vmem [shape: f32[1,128], index: 10, kind: input, shape index: {}]
  %s11 = inlined_call_operand.vmem [shape: f32[128,384], index: 11, kind: input, shape index: {}]
  %s12 = inlined_call_operand.vmem [shape: f32[128,384], index: 12, kind: input, shape index: {}]
  %s13 = inlined_call_operand.vmem [shape: f32[1,384], index: 13, kind: input, shape index: {}]
  %s14 = inlined_call_operand.hbm [shape: f32[384,384], index: 14, kind: input, shape index: {}]
  %s15 = inlined_call_operand.vmem [shape: f32[1,384], index: 15, kind: input, shape index: {}]
  %s16 = inlined_call_operand.hbm [shape: f32[384,384], index: 16, kind: input, shape index: {}]
  %s17 = inlined_call_operand.vmem [shape: f32[1,384], index: 17, kind: input, shape index: {}]
  %s18 = inlined_call_operand.vmem [shape: f32[1,384], index: 18, kind: input, shape index: {}]
  %s19 = inlined_call_operand.<no memory space> [shape: f32[1,1], index: 19, kind: input, shape index: {}]
  %s20 = inlined_call_operand.vmem [shape: f32[16,1], index: 20, kind: output, shape index: {}]
  %s21 = sld [smem:[#allocation0]]
  $region106: #{tpu_custom_call.1} parent=0
    _
  %s23 = ssub.s32 1, %s21
  %s24 = scalar_select 0, %s23, %s21
  %v25 = vstv %s19
  %26 = vst [vmem:[#allocation2] sm:$0x1] %v25
  $region1: #{tpu_custom_call.1} parent=0
    #allocation3 [shape = 'u8[589824]{0}', space=vmem, size = 0x90000, scoped, tag = 'input window, operand 7, single buffered']
    #allocation4 [shape = 's32[1]{0}', space=sflag, size = 0x4, scoped, tag = 'scoped memory for tpu_custom_call.1']
    #allocation5 [shape = 'u8[589824]{0}', space=vmem, size = 0x90000, scoped, tag = 'input window, operand 9, single buffered']
    #allocation6 [shape = 's32[1]{0}', space=sflag, size = 0x4, scoped, tag = 'scoped memory for tpu_custom_call.1']
    #allocation7 [shape = 'u8[589824]{0}', space=vmem, size = 0x90000, scoped, tag = 'input window, operand 14, single buffered']
    #allocation8 [shape = 'u8[589824]{0}', space=vmem, size = 0x90000, scoped, tag = 'input window, operand 16, single buffered']
    #allocation9 [shape = 's32[1]{0}', space=sflag, size = 0x4, scoped, tag = 'scoped memory for tpu_custom_call.1']
    %27 = vsyncpa [#allocation4], 0
    %28 = vsyncpa [#allocation6], 0
    %29 = vsyncpa [#allocation9], 0
    // Predicated region
    $region2: #{tpu_custom_call.1} parent=1 // pred_check
      _
    $region3: #{tpu_custom_call.1} parent=1 // pred_check_branch
      %31 = sbr.rel (0) target = $region5
    $region4: #{tpu_custom_call.1} parent=1 // pred_region
      _
    $region5: #{tpu_custom_call.1} parent=1 // pred_fallthru
      _
    // Predicated region
    $region6: #{tpu_custom_call.1} parent=1 // pred_check
      _
    $region7: #{tpu_custom_call.1} parent=1 // pred_check_branch
      %33 = sbr.rel (0) target = $region9
    $region8: #{tpu_custom_call.1} parent=1 // pred_region
      _
    $region9: #{tpu_custom_call.1} parent=1 // pred_fallthru
      _
    // Predicated region
    $region10: #{tpu_custom_call.1} parent=1 // pred_check
      _
    $region11: #{tpu_custom_call.1} parent=1 // pred_check_branch
      %35 = sbr.rel (0) target = $region13
    $region12: #{tpu_custom_call.1} parent=1 // pred_region
      _
    $region13: #{tpu_custom_call.1} parent=1 // pred_fallthru
      _
    // Predicated region
    $region14: #{tpu_custom_call.1} parent=1 // pred_check
      _
    $region15: #{tpu_custom_call.1} parent=1 // pred_check_branch
      %37 = sbr.rel (0) target = $region17
    $region16: #{tpu_custom_call.1} parent=1 // pred_region
      _
    $region17: #{tpu_custom_call.1} parent=1 // pred_fallthru
      _
    // Predicated region
    $region18: #{tpu_custom_call.1} parent=1 // pred_check
      _
    $region19: #{tpu_custom_call.1} parent=1 // pred_check_branch
      %39 = sbr.rel (0) target = $region21
    $region20: #{tpu_custom_call.1} parent=1 // pred_region
      _
    $region21: #{tpu_custom_call.1} parent=1 // pred_fallthru
      _
    // Predicated region
    $region22: #{tpu_custom_call.1} parent=1 // pred_check
      _
    $region23: #{tpu_custom_call.1} parent=1 // pred_check_branch
      %41 = sbr.rel (0) target = $region25
    $region24: #{tpu_custom_call.1} parent=1 // pred_region
      _
    $region25: #{tpu_custom_call.1} parent=1 // pred_fallthru
      _
    // Predicated region
    $region26: #{tpu_custom_call.1} parent=1 // pred_check
      _
    $region27: #{tpu_custom_call.1} parent=1 // pred_check_branch
      %43 = sbr.rel (0) target = $region29
    $region28: #{tpu_custom_call.1} parent=1 // pred_region
      _
    $region29: #{tpu_custom_call.1} parent=1 // pred_fallthru
      _
    // Predicated region
    $region30: #{tpu_custom_call.1} parent=1 // pred_check
      _
    $region31: #{tpu_custom_call.1} parent=1 // pred_check_branch
      %45 = sbr.rel (0) target = $region33
    $region32: #{tpu_custom_call.1} parent=1 // pred_region
      %47 = vsyncadd [#allocation4], 0
      %s48 = sshll.u32 %s7, 4
      %s49 = int_to_ptr.hbm [resolvable:$true] %s48
      %s50 = sshll.u32 [#allocation3], 4
      %s51 = int_to_ptr.vmem [resolvable:$true] %s50
      %56 = dma.hbm_to_vmem [thread:$0]  %s49, 18432, %s51, [#allocation4], 128, 128, 8
    $region33: #{tpu_custom_call.1} parent=1 // pred_fallthru
      _
    // Predicated region
    $region34: #{tpu_custom_call.1} parent=1 // pred_check
      _
    $region35: #{tpu_custom_call.1} parent=1 // pred_check_branch
      %58 = sbr.rel (0) target = $region37
    $region36: #{tpu_custom_call.1} parent=1 // pred_region
      _
    $region37: #{tpu_custom_call.1} parent=1 // pred_fallthru
      _
    // Predicated region
    $region38: #{tpu_custom_call.1} parent=1 // pred_check
      _
    $region39: #{tpu_custom_call.1} parent=1 // pred_check_branch
      %60 = sbr.rel (0) target = $region41
    $region40: #{tpu_custom_call.1} parent=1 // pred_region
      %62 = vsyncadd [#allocation6], 0
      %s63 = sshll.u32 %s9, 4
      %s64 = int_to_ptr.hbm [resolvable:$true] %s63
      %s65 = sshll.u32 [#allocation5], 4
      %s66 = int_to_ptr.vmem [resolvable:$true] %s65
      %71 = dma.hbm_to_vmem [thread:$0]  %s64, 18432, %s66, [#allocation6], 128, 128, 8
    $region41: #{tpu_custom_call.1} parent=1 // pred_fallthru
      _
    // Predicated region
    $region42: #{tpu_custom_call.1} parent=1 // pred_check
      _
    $region43: #{tpu_custom_call.1} parent=1 // pred_check_branch
      %73 = sbr.rel (0) target = $region45
    $region44: #{tpu_custom_call.1} parent=1 // pred_region
      _
    $region45: #{tpu_custom_call.1} parent=1 // pred_fallthru
      _
    // Predicated region
    $region46: #{tpu_custom_call.1} parent=1 // pred_check
      _
    $region47: #{tpu_custom_call.1} parent=1 // pred_check_branch
      %75 = sbr.rel (0) target = $region49
    $region48: #{tpu_custom_call.1} parent=1 // pred_region
      _
    $region49: #{tpu_custom_call.1} parent=1 // pred_fallthru
      _
    // Predicated region
    $region50: #{tpu_custom_call.1} parent=1 // pred_check
      _
    $region51: #{tpu_custom_call.1} parent=1 // pred_check_branch
      %77 = sbr.rel (0) target = $region53
    $region52: #{tpu_custom_call.1} parent=1 // pred_region
      _
    $region53: #{tpu_custom_call.1} parent=1 // pred_fallthru
      _
    // Predicated region
    $region54: #{tpu_custom_call.1} parent=1 // pred_check
      _
    $region55: #{tpu_custom_call.1} parent=1 // pred_check_branch
      %79 = sbr.rel (0) target = $region57
    $region56: #{tpu_custom_call.1} parent=1 // pred_region
      _
    $region57: #{tpu_custom_call.1} parent=1 // pred_fallthru
      _
    // Predicated region
    $region58: #{tpu_custom_call.1} parent=1 // pred_check
      _
    $region59: #{tpu_custom_call.1} parent=1 // pred_check_branch
      %81 = sbr.rel (0) target = $region61
    $region60: #{tpu_custom_call.1} parent=1 // pred_region
      %83 = vsyncadd [#allocation6], 0
      %s84 = sshll.u32 %s14, 4
      %s85 = int_to_ptr.hbm [resolvable:$true] %s84
      %s86 = sshll.u32 [#allocation7], 4
      %s87 = int_to_ptr.vmem [resolvable:$true] %s86
      %92 = dma.hbm_to_vmem [thread:$0]  %s85, 18432, %s87, [#allocation6], 384, 384, 24
    $region61: #{tpu_custom_call.1} parent=1 // pred_fallthru
      _
    // Predicated region
    $region62: #{tpu_custom_call.1} parent=1 // pred_check
      _
    $region63: #{tpu_custom_call.1} parent=1 // pred_check_branch
      %94 = sbr.rel (0) target = $region65
    $region64: #{tpu_custom_call.1} parent=1 // pred_region
      _
    $region65: #{tpu_custom_call.1} parent=1 // pred_fallthru
      _
    // Predicated region
    $region66: #{tpu_custom_call.1} parent=1 // pred_check
      _
    $region67: #{tpu_custom_call.1} parent=1 // pred_check_branch
      %96 = sbr.rel (0) target = $region69
    $region68: #{tpu_custom_call.1} parent=1 // pred_region
      %98 = vsyncadd [#allocation9], 0
      %s99 = sshll.u32 %s16, 4
      %s100 = int_to_ptr.hbm [resolvable:$true] %s99
      %s101 = sshll.u32 [#allocation8], 4
      %s102 = int_to_ptr.vmem [resolvable:$true] %s101
      %107 = dma.hbm_to_vmem [thread:$0]  %s100, 18432, %s102, [#allocation9], 384, 384, 24
    $region69: #{tpu_custom_call.1} parent=1 // pred_fallthru
      _
    // Predicated region
    $region70: #{tpu_custom_call.1} parent=1 // pred_check
      _
    $region71: #{tpu_custom_call.1} parent=1 // pred_check_branch
      %109 = sbr.rel (0) target = $region73
    $region72: #{tpu_custom_call.1} parent=1 // pred_region
      _
    $region73: #{tpu_custom_call.1} parent=1 // pred_fallthru
      _
    // Predicated region
    $region74: #{tpu_custom_call.1} parent=1 // pred_check
      _
    $region75: #{tpu_custom_call.1} parent=1 // pred_check_branch
      %111 = sbr.rel (0) target = $region77
    $region76: #{tpu_custom_call.1} parent=1 // pred_region
      _
    $region77: #{tpu_custom_call.1} parent=1 // pred_fallthru
      _
    // Predicated region
    $region78: #{tpu_custom_call.1} parent=1 // pred_check
      _
    $region79: #{tpu_custom_call.1} parent=1 // pred_check_branch
      %113 = sbr.rel (0) target = $region81
    $region80: #{tpu_custom_call.1} parent=1 // pred_region
      _
    $region81: #{tpu_custom_call.1} parent=1 // pred_fallthru
      _
    // Predicated region
    $region82: #{tpu_custom_call.1} parent=1 // pred_check
      _
    $region83: #{tpu_custom_call.1} parent=1 // pred_check_branch
      %115 = sbr.rel (0) target = $region85
    $region84: #{tpu_custom_call.1} parent=1 // pred_region
      %117 = dma.done [#allocation4], 18432
    $region85: #{tpu_custom_call.1} parent=1 // pred_fallthru
      _
    // Predicated region
    $region86: #{tpu_custom_call.1} parent=1 // pred_check
      _
    $region87: #{tpu_custom_call.1} parent=1 // pred_check_branch
      %119 = sbr.rel (0) target = $region89
    $region88: #{tpu_custom_call.1} parent=1 // pred_region
      %121 = dma.done [#allocation6], 18432
    $region89: #{tpu_custom_call.1} parent=1 // pred_fallthru
      _
    // Predicated region
    $region90: #{tpu_custom_call.1} parent=1 // pred_check
      _
    $region91: #{tpu_custom_call.1} parent=1 // pred_check_branch
      %123 = sbr.rel (0) target = $region93
    $region92: #{tpu_custom_call.1} parent=1 // pred_region
      %125 = dma.done [#allocation6], 18432
    $region93: #{tpu_custom_call.1} parent=1 // pred_fallthru
      _
    // Predicated region
    $region94: #{tpu_custom_call.1} parent=1 // pred_check
      _
    $region95: #{tpu_custom_call.1} parent=1 // pred_check_branch
      %127 = sbr.rel (0) target = $region97
    $region96: #{tpu_custom_call.1} parent=1 // pred_region
      %129 = dma.done [#allocation9], 18432
    $region97: #{tpu_custom_call.1} parent=1 // pred_fallthru
      _
    %v130 = vld [vmem:[%s0] sm:$0xff]
    %v131 = vld [vmem:[%s0 + $0x8] sm:$0xff]
    %v132 = vld [vmem:[%s0 + $0x10] sm:$0xff]
    %v133 = vld [vmem:[%s0 + $0x18] sm:$0xff]
    %v134 = vld [vmem:[%s0 + $0x20] sm:$0xff]
    %v135 = vld [vmem:[%s0 + $0x28] sm:$0xff]
    %v136 = vld [vmem:[%s0 + $0x30] sm:$0xff]
    %v137 = vld [vmem:[%s0 + $0x38] sm:$0xff]
    %v138 = vld [vmem:[%s0 + $0x40] sm:$0xff]
    %v139 = vld [vmem:[%s0 + $0x48] sm:$0xff]
    %v140 = vld [vmem:[%s0 + $0x50] sm:$0xff]
    %v141 = vld [vmem:[%s0 + $0x58] sm:$0xff]
    %v142 = vld [vmem:[%s0 + $0x60] sm:$0xff]
    %v143 = vld [vmem:[%s0 + $0x68] sm:$0xff]
    %v144 = vld [vmem:[%s0 + $0x70] sm:$0xff]
    %v145 = vld [vmem:[%s0 + $0x78] sm:$0xff]
    %v146 = vld [vmem:[%s0 + $0x80] sm:$0xff]
    %v147 = vld [vmem:[%s0 + $0x88] sm:$0xff]
    %v148 = vld [vmem:[%s0 + $0x90] sm:$0xff]
    %v149 = vld [vmem:[%s0 + $0x98] sm:$0xff]
    %v150 = vld [vmem:[%s0 + $0xa0] sm:$0xff]
    %v151 = vld [vmem:[%s0 + $0xa8] sm:$0xff]
    %v152 = vld [vmem:[%s0 + $0xb0] sm:$0xff]
    %v153 = vld [vmem:[%s0 + $0xb8] sm:$0xff]
    %v154 = vld [vmem:[%s0 + $0xc0] sm:$0xff]
    %v155 = vld [vmem:[%s0 + $0xc8] sm:$0xff]
    %v156 = vld [vmem:[%s0 + $0xd0] sm:$0xff]
    %v157 = vld [vmem:[%s0 + $0xd8] sm:$0xff]
    %v158 = vld [vmem:[%s0 + $0xe0] sm:$0xff]
    %v159 = vld [vmem:[%s0 + $0xe8] sm:$0xff]
    %v160 = vld [vmem:[%s0 + $0xf0] sm:$0xff]
    %v161 = vld [vmem:[%s0 + $0xf8] sm:$0xff]
    %v162 = vld [vmem:[%s0 + $0x100] sm:$0xff]
    %v163 = vld [vmem:[%s0 + $0x108] sm:$0xff]
    %v164 = vld [vmem:[%s0 + $0x110] sm:$0xff]
    %v165 = vld [vmem:[%s0 + $0x118] sm:$0xff]
    %v166 = vld [vmem:[%s0 + $0x120] sm:$0xff]
    %v167 = vld [vmem:[%s0 + $0x128] sm:$0xff]
    %v168 = vld [vmem:[%s0 + $0x130] sm:$0xff]
    %v169 = vld [vmem:[%s0 + $0x138] sm:$0xff]
    %v170 = vld [vmem:[%s0 + $0x140] sm:$0xff]
    %v171 = vld [vmem:[%s0 + $0x148] sm:$0xff]
    %v172 = vld [vmem:[%s0 + $0x150] sm:$0xff]
    %v173 = vld [vmem:[%s0 + $0x158] sm:$0xff]
    %v174 = vld [vmem:[%s0 + $0x160] sm:$0xff]
    %v175 = vld [vmem:[%s0 + $0x168] sm:$0xff]
    %v176 = vld [vmem:[%s0 + $0x170] sm:$0xff]
    %v177 = vld [vmem:[%s0 + $0x178] sm:$0xff]
    %v178 = vld [vmem:[%s0 + $0x180] sm:$0xff]
    %v179 = vld [vmem:[%s0 + $0x188] sm:$0xff]
    %v180 = vld [vmem:[%s0 + $0x190] sm:$0xff]
    %v181 = vld [vmem:[%s0 + $0x198] sm:$0xff]
    %v182 = vld [vmem:[%s0 + $0x1a0] sm:$0xff]
    %v183 = vld [vmem:[%s0 + $0x1a8] sm:$0xff]
    %v184 = vld [vmem:[%s0 + $0x1b0] sm:$0xff]
    %v185 = vld [vmem:[%s0 + $0x1b8] sm:$0xff]
    %v186 = vld [vmem:[%s0 + $0x1c0] sm:$0xff]
    %v187 = vld [vmem:[%s0 + $0x1c8] sm:$0xff]
    %v188 = vld [vmem:[%s0 + $0x1d0] sm:$0xff]
    %v189 = vld [vmem:[%s0 + $0x1d8] sm:$0xff]
    %v190 = vld [vmem:[%s0 + $0x1e0] sm:$0xff]
    %v191 = vld [vmem:[%s0 + $0x1e8] sm:$0xff]
    %v192 = vld [vmem:[%s0 + $0x1f0] sm:$0xff]
    %v193 = vld [vmem:[%s0 + $0x1f8] sm:$0xff]
    %v194 = vld [vmem:[%s0 + $0x200] sm:$0xff]
    %v195 = vld [vmem:[%s0 + $0x208] sm:$0xff]
    %v196 = vld [vmem:[%s0 + $0x210] sm:$0xff]
    %v197 = vld [vmem:[%s0 + $0x218] sm:$0xff]
    %v198 = vld [vmem:[%s0 + $0x220] sm:$0xff]
    %v199 = vld [vmem:[%s0 + $0x228] sm:$0xff]
    %v200 = vld [vmem:[%s0 + $0x230] sm:$0xff]
    %v201 = vld [vmem:[%s0 + $0x238] sm:$0xff]
    %v202 = vld [vmem:[%s0 + $0x240] sm:$0xff]
    %v203 = vld [vmem:[%s0 + $0x248] sm:$0xff]
    %v204 = vld [vmem:[%s0 + $0x250] sm:$0xff]
    %v205 = vld [vmem:[%s0 + $0x258] sm:$0xff]
    %v206 = vld [vmem:[%s0 + $0x260] sm:$0xff]
    %v207 = vld [vmem:[%s0 + $0x268] sm:$0xff]
    %v208 = vld [vmem:[%s0 + $0x270] sm:$0xff]
    %v209 = vld [vmem:[%s0 + $0x278] sm:$0xff]
    %v210 = vld [vmem:[%s0 + $0x280] sm:$0xff]
    %v211 = vld [vmem:[%s0 + $0x288] sm:$0xff]
    %v212 = vld [vmem:[%s0 + $0x290] sm:$0xff]
    %v213 = vld [vmem:[%s0 + $0x298] sm:$0xff]
    %v214 = vld [vmem:[%s0 + $0x2a0] sm:$0xff]
    %v215 = vld [vmem:[%s0 + $0x2a8] sm:$0xff]
    %v216 = vld [vmem:[%s0 + $0x2b0] sm:$0xff]
    %v217 = vld [vmem:[%s0 + $0x2b8] sm:$0xff]
    %v218 = vld [vmem:[%s0 + $0x2c0] sm:$0xff]
    %v219 = vld [vmem:[%s0 + $0x2c8] sm:$0xff]
    %v220 = vld [vmem:[%s0 + $0x2d0] sm:$0xff]
    %v221 = vld [vmem:[%s0 + $0x2d8] sm:$0xff]
    %v222 = vld [vmem:[%s0 + $0x2e0] sm:$0xff]
    %v223 = vld [vmem:[%s0 + $0x2e8] sm:$0xff]
    %v224 = vld [vmem:[%s0 + $0x2f0] sm:$0xff]
    %v225 = vld [vmem:[%s0 + $0x2f8] sm:$0xff]
    %v226 = vld [vmem:[%s0 + $0x300] sm:$0xff]
    %v227 = vld [vmem:[%s0 + $0x308] sm:$0xff]
    %v228 = vld [vmem:[%s0 + $0x310] sm:$0xff]
    %v229 = vld [vmem:[%s0 + $0x318] sm:$0xff]
    %v230 = vld [vmem:[%s0 + $0x320] sm:$0xff]
    %v231 = vld [vmem:[%s0 + $0x328] sm:$0xff]
    %v232 = vld [vmem:[%s0 + $0x330] sm:$0xff]
    %v233 = vld [vmem:[%s0 + $0x338] sm:$0xff]
    %v234 = vld [vmem:[%s0 + $0x340] sm:$0xff]
    %v235 = vld [vmem:[%s0 + $0x348] sm:$0xff]
    %v236 = vld [vmem:[%s0 + $0x350] sm:$0xff]
    %v237 = vld [vmem:[%s0 + $0x358] sm:$0xff]
    %v238 = vld [vmem:[%s0 + $0x360] sm:$0xff]
    %v239 = vld [vmem:[%s0 + $0x368] sm:$0xff]
    %v240 = vld [vmem:[%s0 + $0x370] sm:$0xff]
    %v241 = vld [vmem:[%s0 + $0x378] sm:$0xff]
    %v242 = vld [vmem:[%s0 + $0x380] sm:$0xff]
    %v243 = vld [vmem:[%s0 + $0x388] sm:$0xff]
    %v244 = vld [vmem:[%s0 + $0x390] sm:$0xff]
    %v245 = vld [vmem:[%s0 + $0x398] sm:$0xff]
    %v246 = vld [vmem:[%s0 + $0x3a0] sm:$0xff]
    %v247 = vld [vmem:[%s0 + $0x3a8] sm:$0xff]
    %v248 = vld [vmem:[%s0 + $0x3b0] sm:$0xff]
    %v249 = vld [vmem:[%s0 + $0x3b8] sm:$0xff]
    %v250 = vld [vmem:[%s0 + $0x3c0] sm:$0xff]
    %v251 = vld [vmem:[%s0 + $0x3c8] sm:$0xff]
    %v252 = vld [vmem:[%s0 + $0x3d0] sm:$0xff]
    %v253 = vld [vmem:[%s0 + $0x3d8] sm:$0xff]
    %v254 = vld [vmem:[%s0 + $0x3e0] sm:$0xff]
    %v255 = vld [vmem:[%s0 + $0x3e8] sm:$0xff]
    %v256 = vld [vmem:[%s0 + $0x3f0] sm:$0xff]
    %v257 = vld [vmem:[%s0 + $0x3f8] sm:$0xff]
    %v258 = vld [vmem:[%s0 + $0x400] sm:$0xff]
    %v259 = vld [vmem:[%s0 + $0x408] sm:$0xff]
    %v260 = vld [vmem:[%s0 + $0x410] sm:$0xff]
    %v261 = vld [vmem:[%s0 + $0x418] sm:$0xff]
    %v262 = vld [vmem:[%s0 + $0x420] sm:$0xff]
    %v263 = vld [vmem:[%s0 + $0x428] sm:$0xff]
    %v264 = vld [vmem:[%s0 + $0x430] sm:$0xff]
    %v265 = vld [vmem:[%s0 + $0x438] sm:$0xff]
    %v266 = vld [vmem:[%s0 + $0x440] sm:$0xff]
    %v267 = vld [vmem:[%s0 + $0x448] sm:$0xff]
    %v268 = vld [vmem:[%s0 + $0x450] sm:$0xff]
    %v269 = vld [vmem:[%s0 + $0x458] sm:$0xff]
    %v270 = vld [vmem:[%s0 + $0x460] sm:$0xff]
    %v271 = vld [vmem:[%s0 + $0x468] sm:$0xff]
    %v272 = vld [vmem:[%s0 + $0x470] sm:$0xff]
    %v273 = vld [vmem:[%s0 + $0x478] sm:$0xff]
    %v274 = vld [vmem:[%s0 + $0x480] sm:$0xff]
    %v275 = vld [vmem:[%s0 + $0x488] sm:$0xff]
    %v276 = vld [vmem:[%s0 + $0x490] sm:$0xff]
    %v277 = vld [vmem:[%s0 + $0x498] sm:$0xff]
    %v278 = vld [vmem:[%s0 + $0x4a0] sm:$0xff]
    %v279 = vld [vmem:[%s0 + $0x4a8] sm:$0xff]
    %v280 = vld [vmem:[%s0 + $0x4b0] sm:$0xff]
    %v281 = vld [vmem:[%s0 + $0x4b8] sm:$0xff]
    %v282 = vld [vmem:[%s0 + $0x4c0] sm:$0xff]
    %v283 = vld [vmem:[%s0 + $0x4c8] sm:$0xff]
    %v284 = vld [vmem:[%s0 + $0x4d0] sm:$0xff]
    %v285 = vld [vmem:[%s0 + $0x4d8] sm:$0xff]
    %v286 = vld [vmem:[%s0 + $0x4e0] sm:$0xff]
    %v287 = vld [vmem:[%s0 + $0x4e8] sm:$0xff]
    %v288 = vld [vmem:[%s0 + $0x4f0] sm:$0xff]
    %v289 = vld [vmem:[%s0 + $0x4f8] sm:$0xff]
    %v290 = vld [vmem:[%s0 + $0x500] sm:$0xff]
    %v291 = vld [vmem:[%s0 + $0x508] sm:$0xff]
    %v292 = vld [vmem:[%s0 + $0x510] sm:$0xff]
    %v293 = vld [vmem:[%s0 + $0x518] sm:$0xff]
    %v294 = vld [vmem:[%s0 + $0x520] sm:$0xff]
    %v295 = vld [vmem:[%s0 + $0x528] sm:$0xff]
    %v296 = vld [vmem:[%s0 + $0x530] sm:$0xff]
    %v297 = vld [vmem:[%s0 + $0x538] sm:$0xff]
    %v298 = vld [vmem:[%s0 + $0x540] sm:$0xff]
    %v299 = vld [vmem:[%s0 + $0x548] sm:$0xff]
    %v300 = vld [vmem:[%s0 + $0x550] sm:$0xff]
    %v301 = vld [vmem:[%s0 + $0x558] sm:$0xff]
    %v302 = vld [vmem:[%s0 + $0x560] sm:$0xff]
    %v303 = vld [vmem:[%s0 + $0x568] sm:$0xff]
    %v304 = vld [vmem:[%s0 + $0x570] sm:$0xff]
    %v305 = vld [vmem:[%s0 + $0x578] sm:$0xff]
    %v306 = vld [vmem:[%s0 + $0x580] sm:$0xff]
    %v307 = vld [vmem:[%s0 + $0x588] sm:$0xff]
    %v308 = vld [vmem:[%s0 + $0x590] sm:$0xff]
    %v309 = vld [vmem:[%s0 + $0x598] sm:$0xff]
    %v310 = vld [vmem:[%s0 + $0x5a0] sm:$0xff]
    %v311 = vld [vmem:[%s0 + $0x5a8] sm:$0xff]
    %v312 = vld [vmem:[%s0 + $0x5b0] sm:$0xff]
    %v313 = vld [vmem:[%s0 + $0x5b8] sm:$0xff]
    %v314 = vld [vmem:[%s0 + $0x5c0] sm:$0xff]
    %v315 = vld [vmem:[%s0 + $0x5c8] sm:$0xff]
    %v316 = vld [vmem:[%s0 + $0x5d0] sm:$0xff]
    %v317 = vld [vmem:[%s0 + $0x5d8] sm:$0xff]
    %v318 = vld [vmem:[%s0 + $0x5e0] sm:$0xff]
    %v319 = vld [vmem:[%s0 + $0x5e8] sm:$0xff]
    %v320 = vld [vmem:[%s0 + $0x5f0] sm:$0xff]
    %v321 = vld [vmem:[%s0 + $0x5f8] sm:$0xff]
    %v322 = vld [vmem:[%s0 + $0x600] sm:$0xff]
    %v323 = vld [vmem:[%s0 + $0x608] sm:$0xff]
    %v324 = vld [vmem:[%s0 + $0x610] sm:$0xff]
    %v325 = vld [vmem:[%s0 + $0x618] sm:$0xff]
    %v326 = vld [vmem:[%s0 + $0x620] sm:$0xff]
    %v327 = vld [vmem:[%s0 + $0x628] sm:$0xff]
    %v328 = vld [vmem:[%s0 + $0x630] sm:$0xff]
    %v329 = vld [vmem:[%s0 + $0x638] sm:$0xff]
    %v330 = vld [vmem:[%s0 + $0x640] sm:$0xff]
    %v331 = vld [vmem:[%s0 + $0x648] sm:$0xff]
    %v332 = vld [vmem:[%s0 + $0x650] sm:$0xff]
    %v333 = vld [vmem:[%s0 + $0x658] sm:$0xff]
    %v334 = vld [vmem:[%s0 + $0x660] sm:$0xff]
    %v335 = vld [vmem:[%s0 + $0x668] sm:$0xff]
    %v336 = vld [vmem:[%s0 + $0x670] sm:$0xff]
    %v337 = vld [vmem:[%s0 + $0x678] sm:$0xff]
    %v338 = vld [vmem:[%s0 + $0x680] sm:$0xff]
    %v339 = vld [vmem:[%s0 + $0x688] sm:$0xff]
    %v340 = vld [vmem:[%s0 + $0x690] sm:$0xff]
    %v341 = vld [vmem:[%s0 + $0x698] sm:$0xff]
    %v342 = vld [vmem:[%s0 + $0x6a0] sm:$0xff]
    %v343 = vld [vmem:[%s0 + $0x6a8] sm:$0xff]
    %v344 = vld [vmem:[%s0 + $0x6b0] sm:$0xff]
    %v345 = vld [vmem:[%s0 + $0x6b8] sm:$0xff]
    %v346 = vld [vmem:[%s0 + $0x6c0] sm:$0xff]
    %v347 = vld [vmem:[%s0 + $0x6c8] sm:$0xff]
    %v348 = vld [vmem:[%s0 + $0x6d0] sm:$0xff]
    %v349 = vld [vmem:[%s0 + $0x6d8] sm:$0xff]
    %v350 = vld [vmem:[%s0 + $0x6e0] sm:$0xff]
    %v351 = vld [vmem:[%s0 + $0x6e8] sm:$0xff]
    %v352 = vld [vmem:[%s0 + $0x6f0] sm:$0xff]
    %v353 = vld [vmem:[%s0 + $0x6f8] sm:$0xff]
    %v354 = vld [vmem:[%s0 + $0x700] sm:$0xff]
    %v355 = vld [vmem:[%s0 + $0x708] sm:$0xff]
    %v356 = vld [vmem:[%s0 + $0x710] sm:$0xff]
    %v357 = vld [vmem:[%s0 + $0x718] sm:$0xff]
    %v358 = vld [vmem:[%s0 + $0x720] sm:$0xff]
    %v359 = vld [vmem:[%s0 + $0x728] sm:$0xff]
    %v360 = vld [vmem:[%s0 + $0x730] sm:$0xff]
    %v361 = vld [vmem:[%s0 + $0x738] sm:$0xff]
    %v362 = vld [vmem:[%s0 + $0x740] sm:$0xff]
    %v363 = vld [vmem:[%s0 + $0x748] sm:$0xff]
    %v364 = vld [vmem:[%s0 + $0x750] sm:$0xff]
    %v365 = vld [vmem:[%s0 + $0x758] sm:$0xff]
    %v366 = vld [vmem:[%s0 + $0x760] sm:$0xff]
    %v367 = vld [vmem:[%s0 + $0x768] sm:$0xff]
    %v368 = vld [vmem:[%s0 + $0x770] sm:$0xff]
    %v369 = vld [vmem:[%s0 + $0x778] sm:$0xff]
    %v370 = vld [vmem:[%s0 + $0x780] sm:$0xff]
    %v371 = vld [vmem:[%s0 + $0x788] sm:$0xff]
    %v372 = vld [vmem:[%s0 + $0x790] sm:$0xff]
    %v373 = vld [vmem:[%s1] sm:$0xff]
    %v374 = vld [vmem:[%s1 + $0x8] sm:$0x1]
    %v375 = vld [vmem:[%s2] sm:$0x1]
    %v377 = vperm.slane %v375, 0
    %vm379 = vcmask 72704
    %v381 = vsel %vm379, %v130, 0
    %v384 = vsel %vm379, %v131, 0
    %v387 = vsel %vm379, %v132, 0
    %v390 = vsel %vm379, %v133, 0
    %v393 = vsel %vm379, %v134, 0
    %v396 = vsel %vm379, %v135, 0
    %v399 = vsel %vm379, %v136, 0
    %v402 = vsel %vm379, %v137, 0
    %v405 = vsel %vm379, %v138, 0
    %v408 = vsel %vm379, %v139, 0
    %v411 = vsel %vm379, %v140, 0
    %v414 = vsel %vm379, %v141, 0
    %v417 = vsel %vm379, %v142, 0
    %v420 = vsel %vm379, %v143, 0
    %v423 = vsel %vm379, %v144, 0
    %v426 = vsel %vm379, %v145, 0
    %v429 = vsel %vm379, %v146, 0
    %v432 = vsel %vm379, %v147, 0
    %v435 = vsel %vm379, %v148, 0
    %v438 = vsel %vm379, %v149, 0
    %v441 = vsel %vm379, %v150, 0
    %v444 = vsel %vm379, %v151, 0
    %v447 = vsel %vm379, %v152, 0
    %v450 = vsel %vm379, %v153, 0
    %v453 = vsel %vm379, %v154, 0
    %v456 = vsel %vm379, %v155, 0
    %v459 = vsel %vm379, %v156, 0
    %v462 = vsel %vm379, %v157, 0
    %v465 = vsel %vm379, %v158, 0
    %v468 = vsel %vm379, %v159, 0
    %v471 = vsel %vm379, %v160, 0
    %v474 = vsel %vm379, %v161, 0
    %v477 = vsel %vm379, %v162, 0
    %v480 = vsel %vm379, %v163, 0
    %v483 = vsel %vm379, %v164, 0
    %v486 = vsel %vm379, %v165, 0
    %v489 = vsel %vm379, %v166, 0
    %v492 = vsel %vm379, %v167, 0
    %v495 = vsel %vm379, %v168, 0
    %v498 = vsel %vm379, %v169, 0
    %v501 = vsel %vm379, %v170, 0
    %v504 = vsel %vm379, %v171, 0
    %v507 = vsel %vm379, %v172, 0
    %v510 = vsel %vm379, %v173, 0
    %v513 = vsel %vm379, %v174, 0
    %v516 = vsel %vm379, %v175, 0
    %v519 = vsel %vm379, %v176, 0
    %v522 = vsel %vm379, %v177, 0
    %v525 = vsel %vm379, %v178, 0
    %v528 = vsel %vm379, %v179, 0
    %v531 = vsel %vm379, %v180, 0
    %v534 = vsel %vm379, %v181, 0
    %v537 = vsel %vm379, %v182, 0
    %v540 = vsel %vm379, %v183, 0
    %v543 = vsel %vm379, %v184, 0
    %v546 = vsel %vm379, %v185, 0
    %v549 = vsel %vm379, %v186, 0
    %v552 = vsel %vm379, %v187, 0
    %v555 = vsel %vm379, %v188, 0
    %v558 = vsel %vm379, %v189, 0
    %v561 = vsel %vm379, %v190, 0
    %v564 = vsel %vm379, %v191, 0
    %v567 = vsel %vm379, %v192, 0
    %v570 = vsel %vm379, %v193, 0
    %v573 = vsel %vm379, %v194, 0
    %v576 = vsel %vm379, %v195, 0
    %v579 = vsel %vm379, %v196, 0
    %v582 = vsel %vm379, %v197, 0
    %v585 = vsel %vm379, %v198, 0
    %v588 = vsel %vm379, %v199, 0
    %v591 = vsel %vm379, %v200, 0
    %v594 = vsel %vm379, %v201, 0
    %v597 = vsel %vm379, %v202, 0
    %v600 = vsel %vm379, %v203, 0
    %v603 = vsel %vm379, %v204, 0
    %v606 = vsel %vm379, %v205, 0
    %v609 = vsel %vm379, %v206, 0
    %v612 = vsel %vm379, %v207, 0
    %v615 = vsel %vm379, %v208, 0
    %v618 = vsel %vm379, %v209, 0
    %v621 = vsel %vm379, %v210, 0
    %v624 = vsel %vm379, %v211, 0
    %v627 = vsel %vm379, %v212, 0
    %v630 = vsel %vm379, %v213, 0
    %v633 = vsel %vm379, %v214, 0
    %v636 = vsel %vm379, %v215, 0
    %v639 = vsel %vm379, %v216, 0
    %v642 = vsel %vm379, %v217, 0
    %v645 = vsel %vm379, %v218, 0
    %v648 = vsel %vm379, %v219, 0
    %v651 = vsel %vm379, %v220, 0
    %v654 = vsel %vm379, %v221, 0
    %v657 = vsel %vm379, %v222, 0
    %v660 = vsel %vm379, %v223, 0
    %v663 = vsel %vm379, %v224, 0
    %v666 = vsel %vm379, %v225, 0
    %v669 = vsel %vm379, %v226, 0
    %v672 = vsel %vm379, %v227, 0
    %v675 = vsel %vm379, %v228, 0
    %v678 = vsel %vm379, %v229, 0
    %v681 = vsel %vm379, %v230, 0
    %v684 = vsel %vm379, %v231, 0
    %v687 = vsel %vm379, %v232, 0
    %v690 = vsel %vm379, %v233, 0
    %v693 = vsel %vm379, %v234, 0
    %v696 = vsel %vm379, %v235, 0
    %v699 = vsel %vm379, %v236, 0
    %v702 = vsel %vm379, %v237, 0
    %v705 = vsel %vm379, %v238, 0
    %v708 = vsel %vm379, %v239, 0
    %v711 = vsel %vm379, %v240, 0
    %v714 = vsel %vm379, %v241, 0
    %v717 = vsel %vm379, %v242, 0
    %v720 = vsel %vm379, %v243, 0
    %v723 = vsel %vm379, %v244, 0
    %v726 = vsel %vm379, %v245, 0
    %v729 = vsel %vm379, %v246, 0
    %v732 = vsel %vm379, %v247, 0
    %v735 = vsel %vm379, %v248, 0
    %v738 = vsel %vm379, %v249, 0
    %v741 = vsel %vm379, %v250, 0
    %v744 = vsel %vm379, %v251, 0
    %v747 = vsel %vm379, %v252, 0
    %v750 = vsel %vm379, %v253, 0
    %v753 = vsel %vm379, %v254, 0
    %v756 = vsel %vm379, %v255, 0
    %v759 = vsel %vm379, %v256, 0
    %v762 = vsel %vm379, %v257, 0
    %v765 = vsel %vm379, %v258, 0
    %v768 = vsel %vm379, %v259, 0
    %v771 = vsel %vm379, %v260, 0
    %v774 = vsel %vm379, %v261, 0
    %v777 = vsel %vm379, %v262, 0
    %v780 = vsel %vm379, %v263, 0
    %v783 = vsel %vm379, %v264, 0
    %v786 = vsel %vm379, %v265, 0
    %v789 = vsel %vm379, %v266, 0
    %v792 = vsel %vm379, %v267, 0
    %v795 = vsel %vm379, %v268, 0
    %v798 = vsel %vm379, %v269, 0
    %v801 = vsel %vm379, %v270, 0
    %v804 = vsel %vm379, %v271, 0
    %v807 = vsel %vm379, %v272, 0
    %v810 = vsel %vm379, %v273, 0
    %v813 = vsel %vm379, %v274, 0
    %v816 = vsel %vm379, %v275, 0
    %v819 = vsel %vm379, %v276, 0
    %v822 = vsel %vm379, %v277, 0
    %v825 = vsel %vm379, %v278, 0
    %v828 = vsel %vm379, %v279, 0
    %v831 = vsel %vm379, %v280, 0
    %v834 = vsel %vm379, %v281, 0
    %v837 = vsel %vm379, %v282, 0
    %v840 = vsel %vm379, %v283, 0
    %v843 = vsel %vm379, %v284, 0
    %v846 = vsel %vm379, %v285, 0
    %v849 = vsel %vm379, %v286, 0
    %v852 = vsel %vm379, %v287, 0
    %v855 = vsel %vm379, %v288, 0
    %v858 = vsel %vm379, %v289, 0
    %v861 = vsel %vm379, %v290, 0
    %v864 = vsel %vm379, %v291, 0
    %v867 = vsel %vm379, %v292, 0
    %v870 = vsel %vm379, %v293, 0
    %v873 = vsel %vm379, %v294, 0
    %v876 = vsel %vm379, %v295, 0
    %v879 = vsel %vm379, %v296, 0
    %v882 = vsel %vm379, %v297, 0
    %v885 = vsel %vm379, %v298, 0
    %v888 = vsel %vm379, %v299, 0
    %v891 = vsel %vm379, %v300, 0
    %v894 = vsel %vm379, %v301, 0
    %v897 = vsel %vm379, %v302, 0
    %v900 = vsel %vm379, %v303, 0
    %v903 = vsel %vm379, %v304, 0
    %v906 = vsel %vm379, %v305, 0
    %v909 = vsel %vm379, %v306, 0
    %v912 = vsel %vm379, %v307, 0
    %v915 = vsel %vm379, %v308, 0
    %v918 = vsel %vm379, %v309, 0
    %v921 = vsel %vm379, %v310, 0
    %v924 = vsel %vm379, %v311, 0
    %v927 = vsel %vm379, %v312, 0
    %v930 = vsel %vm379, %v313, 0
    %v933 = vsel %vm379, %v314, 0
    %v936 = vsel %vm379, %v315, 0
    %v939 = vsel %vm379, %v316, 0
    %v942 = vsel %vm379, %v317, 0
    %v945 = vsel %vm379, %v318, 0
    %v948 = vsel %vm379, %v319, 0
    %v951 = vsel %vm379, %v320, 0
    %v954 = vsel %vm379, %v321, 0
    %v957 = vsel %vm379, %v322, 0
    %v960 = vsel %vm379, %v323, 0
    %v963 = vsel %vm379, %v324, 0
    %v966 = vsel %vm379, %v325, 0
    %v969 = vsel %vm379, %v326, 0
    %v972 = vsel %vm379, %v327, 0
    %v975 = vsel %vm379, %v328, 0
    %v978 = vsel %vm379, %v329, 0
    %v981 = vsel %vm379, %v330, 0
    %v984 = vsel %vm379, %v331, 0
    %v987 = vsel %vm379, %v332, 0
    %v990 = vsel %vm379, %v333, 0
    %v993 = vsel %vm379, %v334, 0
    %v996 = vsel %vm379, %v335, 0
    %v999 = vsel %vm379, %v336, 0
    %v1002 = vsel %vm379, %v337, 0
    %v1005 = vsel %vm379, %v338, 0
    %v1008 = vsel %vm379, %v339, 0
    %v1011 = vsel %vm379, %v340, 0
    %v1014 = vsel %vm379, %v341, 0
    %v1017 = vsel %vm379, %v342, 0
    %v1020 = vsel %vm379, %v343, 0
    %v1023 = vsel %vm379, %v344, 0
    %v1026 = vsel %vm379, %v345, 0
    %v1029 = vsel %vm379, %v346, 0
    %v1032 = vsel %vm379, %v347, 0
    %v1035 = vsel %vm379, %v348, 0
    %v1038 = vsel %vm379, %v349, 0
    %v1041 = vsel %vm379, %v350, 0
    %v1044 = vsel %vm379, %v351, 0
    %v1047 = vsel %vm379, %v352, 0
    %v1050 = vsel %vm379, %v353, 0
    %v1053 = vsel %vm379, %v354, 0
    %v1056 = vsel %vm379, %v355, 0
    %v1059 = vsel %vm379, %v356, 0
    %v1062 = vsel %vm379, %v357, 0
    %v1065 = vsel %vm379, %v358, 0
    %v1068 = vsel %vm379, %v359, 0
    %v1071 = vsel %vm379, %v360, 0
    %v1074 = vsel %vm379, %v361, 0
    %v1077 = vsel %vm379, %v362, 0
    %v1080 = vsel %vm379, %v363, 0
    %v1083 = vsel %vm379, %v364, 0
    %v1086 = vsel %vm379, %v365, 0
    %v1089 = vsel %vm379, %v366, 0
    %v1092 = vsel %vm379, %v367, 0
    %v1095 = vsel %vm379, %v368, 0
    %v1098 = vsel %vm379, %v369, 0
    %v1101 = vsel %vm379, %v370, 0
    %v1104 = vsel %vm379, %v371, 0
    %v1107 = vsel %vm379, %v372, 0
    %vm1109 = vcmask 1040384
    %v1111 = vsel %vm1109, %v374, 0
    %1113 = vmatpush.msra.mxu0 0.0
    %1114 = vmatpush.msra.mxu0 0.0
    %1115 = vmatpush.msra.mxu0 0.0
    %1116 = vmatpush.msra.mxu0 0.0
    %1117 = vmatpush.msra.mxu0 0.0
    %1118 = vmatpush.msra.mxu0 0.0
    %1119 = vmatpush.msra.mxu0 0.0
    %1120 = vmatpush.msra.mxu0 0.0
    %1121 = vmatpush.msra.mxu0 0.0
    %1122 = vmatpush.msra.mxu0 0.0
    %1123 = vmatpush.msra.mxu0 0.0
    %1124 = vmatpush.msra.mxu0 0.0
    %1125 = vmatpush.msra.mxu0 0.0
    %1126 = vmatpush.msra.mxu0 0.0
    %1127 = vmatpush.msra.mxu0 %v1111
    %1128 = vmatpush.msra.mxu0 %v373
    %1129 = vmatmul.f32.gmra.mxu0 %v381
    %v1130 = vpop.f32.mrf.mxu0
    %v1131 = vadd.f32 %v377, %v1130
    %1132 = vmatmul.f32.gmra.mxu0 %v384
    %v1133 = vpop.f32.mrf.mxu0
    %v1134 = vadd.f32 %v377, %v1133
    %1135 = vmatmul.f32.gmra.mxu0 %v387
    %v1136 = vpop.f32.mrf.mxu0
    %v1137 = vadd.f32 %v377, %v1136
    %1138 = vmatmul.f32.gmra.mxu0 %v390
    %v1139 = vpop.f32.mrf.mxu0
    %v1140 = vadd.f32 %v377, %v1139
    %1141 = vmatmul.f32.gmra.mxu0 %v393
    %v1142 = vpop.f32.mrf.mxu0
    %v1143 = vadd.f32 %v377, %v1142
    %1144 = vmatmul.f32.gmra.mxu0 %v396
    %v1145 = vpop.f32.mrf.mxu0
    %v1146 = vadd.f32 %v377, %v1145
    %1147 = vmatmul.f32.gmra.mxu0 %v399
    %v1148 = vpop.f32.mrf.mxu0
    %v1149 = vadd.f32 %v377, %v1148
    %1150 = vmatmul.f32.gmra.mxu0 %v402
    %v1151 = vpop.f32.mrf.mxu0
    %v1152 = vadd.f32 %v377, %v1151
    %1153 = vmatmul.f32.gmra.mxu0 %v405
    %v1154 = vpop.f32.mrf.mxu0
    %v1155 = vadd.f32 %v377, %v1154
    %1156 = vmatmul.f32.gmra.mxu0 %v408
    %v1157 = vpop.f32.mrf.mxu0
    %v1158 = vadd.f32 %v377, %v1157
    %1159 = vmatmul.f32.gmra.mxu0 %v411
    %v1160 = vpop.f32.mrf.mxu0
    %v1161 = vadd.f32 %v377, %v1160
    %1162 = vmatmul.f32.gmra.mxu0 %v414
    %v1163 = vpop.f32.mrf.mxu0
    %v1164 = vadd.f32 %v377, %v1163
    %1165 = vmatmul.f32.gmra.mxu0 %v417
    %v1166 = vpop.f32.mrf.mxu0
    %v1167 = vadd.f32 %v377, %v1166
    %1168 = vmatmul.f32.gmra.mxu0 %v420
    %v1169 = vpop.f32.mrf.mxu0
    %v1170 = vadd.f32 %v377, %v1169
    %1171 = vmatmul.f32.gmra.mxu0 %v423
    %v1172 = vpop.f32.mrf.mxu0
    %v1173 = vadd.f32 %v377, %v1172
    %1174 = vmatmul.f32.gmra.mxu0 %v426
    %v1175 = vpop.f32.mrf.mxu0
    %v1176 = vadd.f32 %v377, %v1175
    %1177 = vmatmul.f32.gmra.mxu0 %v429
    %v1178 = vpop.f32.mrf.mxu0
    %v1179 = vadd.f32 %v377, %v1178
    %1180 = vmatmul.f32.gmra.mxu0 %v432
    %v1181 = vpop.f32.mrf.mxu0
    %v1182 = vadd.f32 %v377, %v1181
    %1183 = vmatmul.f32.gmra.mxu0 %v435
    %v1184 = vpop.f32.mrf.mxu0
    %v1185 = vadd.f32 %v377, %v1184
    %1186 = vmatmul.f32.gmra.mxu0 %v438
    %v1187 = vpop.f32.mrf.mxu0
    %v1188 = vadd.f32 %v377, %v1187
    %1189 = vmatmul.f32.gmra.mxu0 %v441
    %v1190 = vpop.f32.mrf.mxu0
    %v1191 = vadd.f32 %v377, %v1190
    %1192 = vmatmul.f32.gmra.mxu0 %v444
    %v1193 = vpop.f32.mrf.mxu0
    %v1194 = vadd.f32 %v377, %v1193
    %1195 = vmatmul.f32.gmra.mxu0 %v447
    %v1196 = vpop.f32.mrf.mxu0
    %v1197 = vadd.f32 %v377, %v1196
    %1198 = vmatmul.f32.gmra.mxu0 %v450
    %v1199 = vpop.f32.mrf.mxu0
    %v1200 = vadd.f32 %v377, %v1199
    %1201 = vmatmul.f32.gmra.mxu0 %v453
    %v1202 = vpop.f32.mrf.mxu0
    %v1203 = vadd.f32 %v377, %v1202
    %1204 = vmatmul.f32.gmra.mxu0 %v456
    %v1205 = vpop.f32.mrf.mxu0
    %v1206 = vadd.f32 %v377, %v1205
    %1207 = vmatmul.f32.gmra.mxu0 %v459
    %v1208 = vpop.f32.mrf.mxu0
    %v1209 = vadd.f32 %v377, %v1208
    %1210 = vmatmul.f32.gmra.mxu0 %v462
    %v1211 = vpop.f32.mrf.mxu0
    %v1212 = vadd.f32 %v377, %v1211
    %1213 = vmatmul.f32.gmra.mxu0 %v465
    %v1214 = vpop.f32.mrf.mxu0
    %v1215 = vadd.f32 %v377, %v1214
    %1216 = vmatmul.f32.gmra.mxu0 %v468
    %v1217 = vpop.f32.mrf.mxu0
    %v1218 = vadd.f32 %v377, %v1217
    %1219 = vmatmul.f32.gmra.mxu0 %v471
    %v1220 = vpop.f32.mrf.mxu0
    %v1221 = vadd.f32 %v377, %v1220
    %1222 = vmatmul.f32.gmra.mxu0 %v474
    %v1223 = vpop.f32.mrf.mxu0
    %v1224 = vadd.f32 %v377, %v1223
    %1225 = vmatmul.f32.gmra.mxu0 %v477
    %v1226 = vpop.f32.mrf.mxu0
    %v1227 = vadd.f32 %v377, %v1226
    %1228 = vmatmul.f32.gmra.mxu0 %v480
    %v1229 = vpop.f32.mrf.mxu0
    %v1230 = vadd.f32 %v377, %v1229
    %1231 = vmatmul.f32.gmra.mxu0 %v483
    %v1232 = vpop.f32.mrf.mxu0
    %v1233 = vadd.f32 %v377, %v1232
    %1234 = vmatmul.f32.gmra.mxu0 %v486
    %v1235 = vpop.f32.mrf.mxu0
    %v1236 = vadd.f32 %v377, %v1235
    %1237 = vmatmul.f32.gmra.mxu0 %v489
    %v1238 = vpop.f32.mrf.mxu0
    %v1239 = vadd.f32 %v377, %v1238
    %1240 = vmatmul.f32.gmra.mxu0 %v492
    %v1241 = vpop.f32.mrf.mxu0
    %v1242 = vadd.f32 %v377, %v1241
    %1243 = vmatmul.f32.gmra.mxu0 %v495
    %v1244 = vpop.f32.mrf.mxu0
    %v1245 = vadd.f32 %v377, %v1244
    %1246 = vmatmul.f32.gmra.mxu0 %v498
    %v1247 = vpop.f32.mrf.mxu0
    %v1248 = vadd.f32 %v377, %v1247
    %1249 = vmatmul.f32.gmra.mxu0 %v501
    %v1250 = vpop.f32.mrf.mxu0
    %v1251 = vadd.f32 %v377, %v1250
    %1252 = vmatmul.f32.gmra.mxu0 %v504
    %v1253 = vpop.f32.mrf.mxu0
    %v1254 = vadd.f32 %v377, %v1253
    %1255 = vmatmul.f32.gmra.mxu0 %v507
    %v1256 = vpop.f32.mrf.mxu0
    %v1257 = vadd.f32 %v377, %v1256
    %1258 = vmatmul.f32.gmra.mxu0 %v510
    %v1259 = vpop.f32.mrf.mxu0
    %v1260 = vadd.f32 %v377, %v1259
    %1261 = vmatmul.f32.gmra.mxu0 %v513
    %v1262 = vpop.f32.mrf.mxu0
    %v1263 = vadd.f32 %v377, %v1262
    %1264 = vmatmul.f32.gmra.mxu0 %v516
    %v1265 = vpop.f32.mrf.mxu0
    %v1266 = vadd.f32 %v377, %v1265
    %1267 = vmatmul.f32.gmra.mxu0 %v519
    %v1268 = vpop.f32.mrf.mxu0
    %v1269 = vadd.f32 %v377, %v1268
    %1270 = vmatmul.f32.gmra.mxu0 %v522
    %v1271 = vpop.f32.mrf.mxu0
    %v1272 = vadd.f32 %v377, %v1271
    %1273 = vmatmul.f32.gmra.mxu0 %v525
    %v1274 = vpop.f32.mrf.mxu0
    %v1275 = vadd.f32 %v377, %v1274
    %1276 = vmatmul.f32.gmra.mxu0 %v528
    %v1277 = vpop.f32.mrf.mxu0
    %v1278 = vadd.f32 %v377, %v1277
    %1279 = vmatmul.f32.gmra.mxu0 %v531
    %v1280 = vpop.f32.mrf.mxu0
    %v1281 = vadd.f32 %v377, %v1280
    %1282 = vmatmul.f32.gmra.mxu0 %v534
    %v1283 = vpop.f32.mrf.mxu0
    %v1284 = vadd.f32 %v377, %v1283
    %1285 = vmatmul.f32.gmra.mxu0 %v537
    %v1286 = vpop.f32.mrf.mxu0
    %v1287 = vadd.f32 %v377, %v1286
    %1288 = vmatmul.f32.gmra.mxu0 %v540
    %v1289 = vpop.f32.mrf.mxu0
    %v1290 = vadd.f32 %v377, %v1289
    %1291 = vmatmul.f32.gmra.mxu0 %v543
    %v1292 = vpop.f32.mrf.mxu0
    %v1293 = vadd.f32 %v377, %v1292
    %1294 = vmatmul.f32.gmra.mxu0 %v546
    %v1295 = vpop.f32.mrf.mxu0
    %v1296 = vadd.f32 %v377, %v1295
    %1297 = vmatmul.f32.gmra.mxu0 %v549
    %v1298 = vpop.f32.mrf.mxu0
    %v1299 = vadd.f32 %v377, %v1298
    %1300 = vmatmul.f32.gmra.mxu0 %v552
    %v1301 = vpop.f32.mrf.mxu0
    %v1302 = vadd.f32 %v377, %v1301
    %1303 = vmatmul.f32.gmra.mxu0 %v555
    %v1304 = vpop.f32.mrf.mxu0
    %v1305 = vadd.f32 %v377, %v1304
    %1306 = vmatmul.f32.gmra.mxu0 %v558
    %v1307 = vpop.f32.mrf.mxu0
    %v1308 = vadd.f32 %v377, %v1307
    %1309 = vmatmul.f32.gmra.mxu0 %v561
    %v1310 = vpop.f32.mrf.mxu0
    %v1311 = vadd.f32 %v377, %v1310
    %1312 = vmatmul.f32.gmra.mxu0 %v564
    %v1313 = vpop.f32.mrf.mxu0
    %v1314 = vadd.f32 %v377, %v1313
    %1315 = vmatmul.f32.gmra.mxu0 %v567
    %v1316 = vpop.f32.mrf.mxu0
    %v1317 = vadd.f32 %v377, %v1316
    %1318 = vmatmul.f32.gmra.mxu0 %v570
    %v1319 = vpop.f32.mrf.mxu0
    %v1320 = vadd.f32 %v377, %v1319
    %1321 = vmatmul.f32.gmra.mxu0 %v573
    %v1322 = vpop.f32.mrf.mxu0
    %v1323 = vadd.f32 %v377, %v1322
    %1324 = vmatmul.f32.gmra.mxu0 %v576
    %v1325 = vpop.f32.mrf.mxu0
    %v1326 = vadd.f32 %v377, %v1325
    %1327 = vmatmul.f32.gmra.mxu0 %v579
    %v1328 = vpop.f32.mrf.mxu0
    %v1329 = vadd.f32 %v377, %v1328
    %1330 = vmatmul.f32.gmra.mxu0 %v582
    %v1331 = vpop.f32.mrf.mxu0
    %v1332 = vadd.f32 %v377, %v1331
    %1333 = vmatmul.f32.gmra.mxu0 %v585
    %v1334 = vpop.f32.mrf.mxu0
    %v1335 = vadd.f32 %v377, %v1334
    %1336 = vmatmul.f32.gmra.mxu0 %v588
    %v1337 = vpop.f32.mrf.mxu0
    %v1338 = vadd.f32 %v377, %v1337
    %1339 = vmatmul.f32.gmra.mxu0 %v591
    %v1340 = vpop.f32.mrf.mxu0
    %v1341 = vadd.f32 %v377, %v1340
    %1342 = vmatmul.f32.gmra.mxu0 %v594
    %v1343 = vpop.f32.mrf.mxu0
    %v1344 = vadd.f32 %v377, %v1343
    %1345 = vmatmul.f32.gmra.mxu0 %v597
    %v1346 = vpop.f32.mrf.mxu0
    %v1347 = vadd.f32 %v377, %v1346
    %1348 = vmatmul.f32.gmra.mxu0 %v600
    %v1349 = vpop.f32.mrf.mxu0
    %v1350 = vadd.f32 %v377, %v1349
    %1351 = vmatmul.f32.gmra.mxu0 %v603
    %v1352 = vpop.f32.mrf.mxu0
    %v1353 = vadd.f32 %v377, %v1352
    %1354 = vmatmul.f32.gmra.mxu0 %v606
    %v1355 = vpop.f32.mrf.mxu0
    %v1356 = vadd.f32 %v377, %v1355
    %1357 = vmatmul.f32.gmra.mxu0 %v609
    %v1358 = vpop.f32.mrf.mxu0
    %v1359 = vadd.f32 %v377, %v1358
    %1360 = vmatmul.f32.gmra.mxu0 %v612
    %v1361 = vpop.f32.mrf.mxu0
    %v1362 = vadd.f32 %v377, %v1361
    %1363 = vmatmul.f32.gmra.mxu0 %v615
    %v1364 = vpop.f32.mrf.mxu0
    %v1365 = vadd.f32 %v377, %v1364
    %1366 = vmatmul.f32.gmra.mxu0 %v618
    %v1367 = vpop.f32.mrf.mxu0
    %v1368 = vadd.f32 %v377, %v1367
    %1369 = vmatmul.f32.gmra.mxu0 %v621
    %v1370 = vpop.f32.mrf.mxu0
    %v1371 = vadd.f32 %v377, %v1370
    %1372 = vmatmul.f32.gmra.mxu0 %v624
    %v1373 = vpop.f32.mrf.mxu0
    %v1374 = vadd.f32 %v377, %v1373
    %1375 = vmatmul.f32.gmra.mxu0 %v627
    %v1376 = vpop.f32.mrf.mxu0
    %v1377 = vadd.f32 %v377, %v1376
    %1378 = vmatmul.f32.gmra.mxu0 %v630
    %v1379 = vpop.f32.mrf.mxu0
    %v1380 = vadd.f32 %v377, %v1379
    %1381 = vmatmul.f32.gmra.mxu0 %v633
    %v1382 = vpop.f32.mrf.mxu0
    %v1383 = vadd.f32 %v377, %v1382
    %1384 = vmatmul.f32.gmra.mxu0 %v636
    %v1385 = vpop.f32.mrf.mxu0
    %v1386 = vadd.f32 %v377, %v1385
    %1387 = vmatmul.f32.gmra.mxu0 %v639
    %v1388 = vpop.f32.mrf.mxu0
    %v1389 = vadd.f32 %v377, %v1388
    %1390 = vmatmul.f32.gmra.mxu0 %v642
    %v1391 = vpop.f32.mrf.mxu0
    %v1392 = vadd.f32 %v377, %v1391
    %1393 = vmatmul.f32.gmra.mxu0 %v645
    %v1394 = vpop.f32.mrf.mxu0
    %v1395 = vadd.f32 %v377, %v1394
    %1396 = vmatmul.f32.gmra.mxu0 %v648
    %v1397 = vpop.f32.mrf.mxu0
    %v1398 = vadd.f32 %v377, %v1397
    %1399 = vmatmul.f32.gmra.mxu0 %v651
    %v1400 = vpop.f32.mrf.mxu0
    %v1401 = vadd.f32 %v377, %v1400
    %1402 = vmatmul.f32.gmra.mxu0 %v654
    %v1403 = vpop.f32.mrf.mxu0
    %v1404 = vadd.f32 %v377, %v1403
    %1405 = vmatmul.f32.gmra.mxu0 %v657
    %v1406 = vpop.f32.mrf.mxu0
    %v1407 = vadd.f32 %v377, %v1406
    %1408 = vmatmul.f32.gmra.mxu0 %v660
    %v1409 = vpop.f32.mrf.mxu0
    %v1410 = vadd.f32 %v377, %v1409
    %1411 = vmatmul.f32.gmra.mxu0 %v663
    %v1412 = vpop.f32.mrf.mxu0
    %v1413 = vadd.f32 %v377, %v1412
    %1414 = vmatmul.f32.gmra.mxu0 %v666
    %v1415 = vpop.f32.mrf.mxu0
    %v1416 = vadd.f32 %v377, %v1415
    %1417 = vmatmul.f32.gmra.mxu0 %v669
    %v1418 = vpop.f32.mrf.mxu0
    %v1419 = vadd.f32 %v377, %v1418
    %1420 = vmatmul.f32.gmra.mxu0 %v672
    %v1421 = vpop.f32.mrf.mxu0
    %v1422 = vadd.f32 %v377, %v1421
    %1423 = vmatmul.f32.gmra.mxu0 %v675
    %v1424 = vpop.f32.mrf.mxu0
    %v1425 = vadd.f32 %v377, %v1424
    %1426 = vmatmul.f32.gmra.mxu0 %v678
    %v1427 = vpop.f32.mrf.mxu0
    %v1428 = vadd.f32 %v377, %v1427
    %1429 = vmatmul.f32.gmra.mxu0 %v681
    %v1430 = vpop.f32.mrf.mxu0
    %v1431 = vadd.f32 %v377, %v1430
    %1432 = vmatmul.f32.gmra.mxu0 %v684
    %v1433 = vpop.f32.mrf.mxu0
    %v1434 = vadd.f32 %v377, %v1433
    %1435 = vmatmul.f32.gmra.mxu0 %v687
    %v1436 = vpop.f32.mrf.mxu0
    %v1437 = vadd.f32 %v377, %v1436
    %1438 = vmatmul.f32.gmra.mxu0 %v690
    %v1439 = vpop.f32.mrf.mxu0
    %v1440 = vadd.f32 %v377, %v1439
    %1441 = vmatmul.f32.gmra.mxu0 %v693
    %v1442 = vpop.f32.mrf.mxu0
    %v1443 = vadd.f32 %v377, %v1442
    %1444 = vmatmul.f32.gmra.mxu0 %v696
    %v1445 = vpop.f32.mrf.mxu0
    %v1446 = vadd.f32 %v377, %v1445
    %1447 = vmatmul.f32.gmra.mxu0 %v699
    %v1448 = vpop.f32.mrf.mxu0
    %v1449 = vadd.f32 %v377, %v1448
    %1450 = vmatmul.f32.gmra.mxu0 %v702
    %v1451 = vpop.f32.mrf.mxu0
    %v1452 = vadd.f32 %v377, %v1451
    %1453 = vmatmul.f32.gmra.mxu0 %v705
    %v1454 = vpop.f32.mrf.mxu0
    %v1455 = vadd.f32 %v377, %v1454
    %1456 = vmatmul.f32.gmra.mxu0 %v708
    %v1457 = vpop.f32.mrf.mxu0
    %v1458 = vadd.f32 %v377, %v1457
    %1459 = vmatmul.f32.gmra.mxu0 %v711
    %v1460 = vpop.f32.mrf.mxu0
    %v1461 = vadd.f32 %v377, %v1460
    %1462 = vmatmul.f32.gmra.mxu0 %v714
    %v1463 = vpop.f32.mrf.mxu0
    %v1464 = vadd.f32 %v377, %v1463
    %1465 = vmatmul.f32.gmra.mxu0 %v717
    %v1466 = vpop.f32.mrf.mxu0
    %v1467 = vadd.f32 %v377, %v1466
    %1468 = vmatmul.f32.gmra.mxu0 %v720
    %v1469 = vpop.f32.mrf.mxu0
    %v1470 = vadd.f32 %v377, %v1469
    %1471 = vmatmul.f32.gmra.mxu0 %v723
    %v1472 = vpop.f32.mrf.mxu0
    %v1473 = vadd.f32 %v377, %v1472
    %1474 = vmatmul.f32.gmra.mxu0 %v726
    %v1475 = vpop.f32.mrf.mxu0
    %v1476 = vadd.f32 %v377, %v1475
    %1477 = vmatmul.f32.gmra.mxu0 %v729
    %v1478 = vpop.f32.mrf.mxu0
    %v1479 = vadd.f32 %v377, %v1478
    %1480 = vmatmul.f32.gmra.mxu0 %v732
    %v1481 = vpop.f32.mrf.mxu0
    %v1482 = vadd.f32 %v377, %v1481
    %1483 = vmatmul.f32.gmra.mxu0 %v735
    %v1484 = vpop.f32.mrf.mxu0
    %v1485 = vadd.f32 %v377, %v1484
    %1486 = vmatmul.f32.gmra.mxu0 %v738
    %v1487 = vpop.f32.mrf.mxu0
    %v1488 = vadd.f32 %v377, %v1487
    %1489 = vmatmul.f32.gmra.mxu0 %v741
    %v1490 = vpop.f32.mrf.mxu0
    %v1491 = vadd.f32 %v377, %v1490
    %1492 = vmatmul.f32.gmra.mxu0 %v744
    %v1493 = vpop.f32.mrf.mxu0
    %v1494 = vadd.f32 %v377, %v1493
    %1495 = vmatmul.f32.gmra.mxu0 %v747
    %v1496 = vpop.f32.mrf.mxu0
    %v1497 = vadd.f32 %v377, %v1496
    %1498 = vmatmul.f32.gmra.mxu0 %v750
    %v1499 = vpop.f32.mrf.mxu0
    %v1500 = vadd.f32 %v377, %v1499
    %1501 = vmatmul.f32.gmra.mxu0 %v753
    %v1502 = vpop.f32.mrf.mxu0
    %v1503 = vadd.f32 %v377, %v1502
    %1504 = vmatmul.f32.gmra.mxu0 %v756
    %v1505 = vpop.f32.mrf.mxu0
    %v1506 = vadd.f32 %v377, %v1505
    %1507 = vmatmul.f32.gmra.mxu0 %v759
    %v1508 = vpop.f32.mrf.mxu0
    %v1509 = vadd.f32 %v377, %v1508
    %1510 = vmatmul.f32.gmra.mxu0 %v762
    %v1511 = vpop.f32.mrf.mxu0
    %v1512 = vadd.f32 %v377, %v1511
    %1513 = vmatmul.f32.gmra.mxu0 %v765
    %v1514 = vpop.f32.mrf.mxu0
    %v1515 = vadd.f32 %v377, %v1514
    %1516 = vmatmul.f32.gmra.mxu0 %v768
    %v1517 = vpop.f32.mrf.mxu0
    %v1518 = vadd.f32 %v377, %v1517
    %1519 = vmatmul.f32.gmra.mxu0 %v771
    %v1520 = vpop.f32.mrf.mxu0
    %v1521 = vadd.f32 %v377, %v1520
    %1522 = vmatmul.f32.gmra.mxu0 %v774
    %v1523 = vpop.f32.mrf.mxu0
    %v1524 = vadd.f32 %v377, %v1523
    %1525 = vmatmul.f32.gmra.mxu0 %v777
    %v1526 = vpop.f32.mrf.mxu0
    %v1527 = vadd.f32 %v377, %v1526
    %1528 = vmatmul.f32.gmra.mxu0 %v780
    %v1529 = vpop.f32.mrf.mxu0
    %v1530 = vadd.f32 %v377, %v1529
    %1531 = vmatmul.f32.gmra.mxu0 %v783
    %v1532 = vpop.f32.mrf.mxu0
    %v1533 = vadd.f32 %v377, %v1532
    %1534 = vmatmul.f32.gmra.mxu0 %v786
    %v1535 = vpop.f32.mrf.mxu0
    %v1536 = vadd.f32 %v377, %v1535
    %1537 = vmatmul.f32.gmra.mxu0 %v789
    %v1538 = vpop.f32.mrf.mxu0
    %v1539 = vadd.f32 %v377, %v1538
    %1540 = vmatmul.f32.gmra.mxu0 %v792
    %v1541 = vpop.f32.mrf.mxu0
    %v1542 = vadd.f32 %v377, %v1541
    %1543 = vmatmul.f32.gmra.mxu0 %v795
    %v1544 = vpop.f32.mrf.mxu0
    %v1545 = vadd.f32 %v377, %v1544
    %1546 = vmatmul.f32.gmra.mxu0 %v798
    %v1547 = vpop.f32.mrf.mxu0
    %v1548 = vadd.f32 %v377, %v1547
    %1549 = vmatmul.f32.gmra.mxu0 %v801
    %v1550 = vpop.f32.mrf.mxu0
    %v1551 = vadd.f32 %v377, %v1550
    %1552 = vmatmul.f32.gmra.mxu0 %v804
    %v1553 = vpop.f32.mrf.mxu0
    %v1554 = vadd.f32 %v377, %v1553
    %1555 = vmatmul.f32.gmra.mxu0 %v807
    %v1556 = vpop.f32.mrf.mxu0
    %v1557 = vadd.f32 %v377, %v1556
    %1558 = vmatmul.f32.gmra.mxu0 %v810
    %v1559 = vpop.f32.mrf.mxu0
    %v1560 = vadd.f32 %v377, %v1559
    %1561 = vmatmul.f32.gmra.mxu0 %v813
    %v1562 = vpop.f32.mrf.mxu0
    %v1563 = vadd.f32 %v377, %v1562
    %1564 = vmatmul.f32.gmra.mxu0 %v816
    %v1565 = vpop.f32.mrf.mxu0
    %v1566 = vadd.f32 %v377, %v1565
    %1567 = vmatmul.f32.gmra.mxu0 %v819
    %v1568 = vpop.f32.mrf.mxu0
    %v1569 = vadd.f32 %v377, %v1568
    %1570 = vmatmul.f32.gmra.mxu0 %v822
    %v1571 = vpop.f32.mrf.mxu0
    %v1572 = vadd.f32 %v377, %v1571
    %1573 = vmatmul.f32.gmra.mxu0 %v825
    %v1574 = vpop.f32.mrf.mxu0
    %v1575 = vadd.f32 %v377, %v1574
    %1576 = vmatmul.f32.gmra.mxu0 %v828
    %v1577 = vpop.f32.mrf.mxu0
    %v1578 = vadd.f32 %v377, %v1577
    %1579 = vmatmul.f32.gmra.mxu0 %v831
    %v1580 = vpop.f32.mrf.mxu0
    %v1581 = vadd.f32 %v377, %v1580
    %1582 = vmatmul.f32.gmra.mxu0 %v834
    %v1583 = vpop.f32.mrf.mxu0
    %v1584 = vadd.f32 %v377, %v1583
    %1585 = vmatmul.f32.gmra.mxu0 %v837
    %v1586 = vpop.f32.mrf.mxu0
    %v1587 = vadd.f32 %v377, %v1586
    %1588 = vmatmul.f32.gmra.mxu0 %v840
    %v1589 = vpop.f32.mrf.mxu0
    %v1590 = vadd.f32 %v377, %v1589
    %1591 = vmatmul.f32.gmra.mxu0 %v843
    %v1592 = vpop.f32.mrf.mxu0
    %v1593 = vadd.f32 %v377, %v1592
    %1594 = vmatmul.f32.gmra.mxu0 %v846
    %v1595 = vpop.f32.mrf.mxu0
    %v1596 = vadd.f32 %v377, %v1595
    %1597 = vmatmul.f32.gmra.mxu0 %v849
    %v1598 = vpop.f32.mrf.mxu0
    %v1599 = vadd.f32 %v377, %v1598
    %1600 = vmatmul.f32.gmra.mxu0 %v852
    %v1601 = vpop.f32.mrf.mxu0
    %v1602 = vadd.f32 %v377, %v1601
    %1603 = vmatmul.f32.gmra.mxu0 %v855
    %v1604 = vpop.f32.mrf.mxu0
    %v1605 = vadd.f32 %v377, %v1604
    %1606 = vmatmul.f32.gmra.mxu0 %v858
    %v1607 = vpop.f32.mrf.mxu0
    %v1608 = vadd.f32 %v377, %v1607
    %1609 = vmatmul.f32.gmra.mxu0 %v861
    %v1610 = vpop.f32.mrf.mxu0
    %v1611 = vadd.f32 %v377, %v1610
    %1612 = vmatmul.f32.gmra.mxu0 %v864
    %v1613 = vpop.f32.mrf.mxu0
    %v1614 = vadd.f32 %v377, %v1613
    %1615 = vmatmul.f32.gmra.mxu0 %v867
    %v1616 = vpop.f32.mrf.mxu0
    %v1617 = vadd.f32 %v377, %v1616
    %1618 = vmatmul.f32.gmra.mxu0 %v870
    %v1619 = vpop.f32.mrf.mxu0
    %v1620 = vadd.f32 %v377, %v1619
    %1621 = vmatmul.f32.gmra.mxu0 %v873
    %v1622 = vpop.f32.mrf.mxu0
    %v1623 = vadd.f32 %v377, %v1622
    %1624 = vmatmul.f32.gmra.mxu0 %v876
    %v1625 = vpop.f32.mrf.mxu0
    %v1626 = vadd.f32 %v377, %v1625
    %1627 = vmatmul.f32.gmra.mxu0 %v879
    %v1628 = vpop.f32.mrf.mxu0
    %v1629 = vadd.f32 %v377, %v1628
    %1630 = vmatmul.f32.gmra.mxu0 %v882
    %v1631 = vpop.f32.mrf.mxu0
    %v1632 = vadd.f32 %v377, %v1631
    %1633 = vmatmul.f32.gmra.mxu0 %v885
    %v1634 = vpop.f32.mrf.mxu0
    %v1635 = vadd.f32 %v377, %v1634
    %1636 = vmatmul.f32.gmra.mxu0 %v888
    %v1637 = vpop.f32.mrf.mxu0
    %v1638 = vadd.f32 %v377, %v1637
    %1639 = vmatmul.f32.gmra.mxu0 %v891
    %v1640 = vpop.f32.mrf.mxu0
    %v1641 = vadd.f32 %v377, %v1640
    %1642 = vmatmul.f32.gmra.mxu0 %v894
    %v1643 = vpop.f32.mrf.mxu0
    %v1644 = vadd.f32 %v377, %v1643
    %1645 = vmatmul.f32.gmra.mxu0 %v897
    %v1646 = vpop.f32.mrf.mxu0
    %v1647 = vadd.f32 %v377, %v1646
    %1648 = vmatmul.f32.gmra.mxu0 %v900
    %v1649 = vpop.f32.mrf.mxu0
    %v1650 = vadd.f32 %v377, %v1649
    %1651 = vmatmul.f32.gmra.mxu0 %v903
    %v1652 = vpop.f32.mrf.mxu0
    %v1653 = vadd.f32 %v377, %v1652
    %1654 = vmatmul.f32.gmra.mxu0 %v906
    %v1655 = vpop.f32.mrf.mxu0
    %v1656 = vadd.f32 %v377, %v1655
    %1657 = vmatmul.f32.gmra.mxu0 %v909
    %v1658 = vpop.f32.mrf.mxu0
    %v1659 = vadd.f32 %v377, %v1658
    %1660 = vmatmul.f32.gmra.mxu0 %v912
    %v1661 = vpop.f32.mrf.mxu0
    %v1662 = vadd.f32 %v377, %v1661
    %1663 = vmatmul.f32.gmra.mxu0 %v915
    %v1664 = vpop.f32.mrf.mxu0
    %v1665 = vadd.f32 %v377, %v1664
    %1666 = vmatmul.f32.gmra.mxu0 %v918
    %v1667 = vpop.f32.mrf.mxu0
    %v1668 = vadd.f32 %v377, %v1667
    %1669 = vmatmul.f32.gmra.mxu0 %v921
    %v1670 = vpop.f32.mrf.mxu0
    %v1671 = vadd.f32 %v377, %v1670
    %1672 = vmatmul.f32.gmra.mxu0 %v924
    %v1673 = vpop.f32.mrf.mxu0
    %v1674 = vadd.f32 %v377, %v1673
    %1675 = vmatmul.f32.gmra.mxu0 %v927
    %v1676 = vpop.f32.mrf.mxu0
    %v1677 = vadd.f32 %v377, %v1676
    %1678 = vmatmul.f32.gmra.mxu0 %v930
    %v1679 = vpop.f32.mrf.mxu0
    %v1680 = vadd.f32 %v377, %v1679
    %1681 = vmatmul.f32.gmra.mxu0 %v933
    %v1682 = vpop.f32.mrf.mxu0
    %v1683 = vadd.f32 %v377, %v1682
    %1684 = vmatmul.f32.gmra.mxu0 %v936
    %v1685 = vpop.f32.mrf.mxu0
    %v1686 = vadd.f32 %v377, %v1685
    %1687 = vmatmul.f32.gmra.mxu0 %v939
    %v1688 = vpop.f32.mrf.mxu0
    %v1689 = vadd.f32 %v377, %v1688
    %1690 = vmatmul.f32.gmra.mxu0 %v942
    %v1691 = vpop.f32.mrf.mxu0
    %v1692 = vadd.f32 %v377, %v1691
    %1693 = vmatmul.f32.gmra.mxu0 %v945
    %v1694 = vpop.f32.mrf.mxu0
    %v1695 = vadd.f32 %v377, %v1694
    %1696 = vmatmul.f32.gmra.mxu0 %v948
    %v1697 = vpop.f32.mrf.mxu0
    %v1698 = vadd.f32 %v377, %v1697
    %1699 = vmatmul.f32.gmra.mxu0 %v951
    %v1700 = vpop.f32.mrf.mxu0
    %v1701 = vadd.f32 %v377, %v1700
    %1702 = vmatmul.f32.gmra.mxu0 %v954
    %v1703 = vpop.f32.mrf.mxu0
    %v1704 = vadd.f32 %v377, %v1703
    %1705 = vmatmul.f32.gmra.mxu0 %v957
    %v1706 = vpop.f32.mrf.mxu0
    %v1707 = vadd.f32 %v377, %v1706
    %1708 = vmatmul.f32.gmra.mxu0 %v960
    %v1709 = vpop.f32.mrf.mxu0
    %v1710 = vadd.f32 %v377, %v1709
    %1711 = vmatmul.f32.gmra.mxu0 %v963
    %v1712 = vpop.f32.mrf.mxu0
    %v1713 = vadd.f32 %v377, %v1712
    %1714 = vmatmul.f32.gmra.mxu0 %v966
    %v1715 = vpop.f32.mrf.mxu0
    %v1716 = vadd.f32 %v377, %v1715
    %1717 = vmatmul.f32.gmra.mxu0 %v969
    %v1718 = vpop.f32.mrf.mxu0
    %v1719 = vadd.f32 %v377, %v1718
    %1720 = vmatmul.f32.gmra.mxu0 %v972
    %v1721 = vpop.f32.mrf.mxu0
    %v1722 = vadd.f32 %v377, %v1721
    %1723 = vmatmul.f32.gmra.mxu0 %v975
    %v1724 = vpop.f32.mrf.mxu0
    %v1725 = vadd.f32 %v377, %v1724
    %1726 = vmatmul.f32.gmra.mxu0 %v978
    %v1727 = vpop.f32.mrf.mxu0
    %v1728 = vadd.f32 %v377, %v1727
    %1729 = vmatmul.f32.gmra.mxu0 %v981
    %v1730 = vpop.f32.mrf.mxu0
    %v1731 = vadd.f32 %v377, %v1730
    %1732 = vmatmul.f32.gmra.mxu0 %v984
    %v1733 = vpop.f32.mrf.mxu0
    %v1734 = vadd.f32 %v377, %v1733
    %1735 = vmatmul.f32.gmra.mxu0 %v987
    %v1736 = vpop.f32.mrf.mxu0
    %v1737 = vadd.f32 %v377, %v1736
    %1738 = vmatmul.f32.gmra.mxu0 %v990
    %v1739 = vpop.f32.mrf.mxu0
    %v1740 = vadd.f32 %v377, %v1739
    %1741 = vmatmul.f32.gmra.mxu0 %v993
    %v1742 = vpop.f32.mrf.mxu0
    %v1743 = vadd.f32 %v377, %v1742
    %1744 = vmatmul.f32.gmra.mxu0 %v996
    %v1745 = vpop.f32.mrf.mxu0
    %v1746 = vadd.f32 %v377, %v1745
    %1747 = vmatmul.f32.gmra.mxu0 %v999
    %v1748 = vpop.f32.mrf.mxu0
    %v1749 = vadd.f32 %v377, %v1748
    %1750 = vmatmul.f32.gmra.mxu0 %v1002
    %v1751 = vpop.f32.mrf.mxu0
    %v1752 = vadd.f32 %v377, %v1751
    %1753 = vmatmul.f32.gmra.mxu0 %v1005
    %v1754 = vpop.f32.mrf.mxu0
    %v1755 = vadd.f32 %v377, %v1754
    %1756 = vmatmul.f32.gmra.mxu0 %v1008
    %v1757 = vpop.f32.mrf.mxu0
    %v1758 = vadd.f32 %v377, %v1757
    %1759 = vmatmul.f32.gmra.mxu0 %v1011
    %v1760 = vpop.f32.mrf.mxu0
    %v1761 = vadd.f32 %v377, %v1760
    %1762 = vmatmul.f32.gmra.mxu0 %v1014
    %v1763 = vpop.f32.mrf.mxu0
    %v1764 = vadd.f32 %v377, %v1763
    %1765 = vmatmul.f32.gmra.mxu0 %v1017
    %v1766 = vpop.f32.mrf.mxu0
    %v1767 = vadd.f32 %v377, %v1766
    %1768 = vmatmul.f32.gmra.mxu0 %v1020
    %v1769 = vpop.f32.mrf.mxu0
    %v1770 = vadd.f32 %v377, %v1769
    %1771 = vmatmul.f32.gmra.mxu0 %v1023
    %v1772 = vpop.f32.mrf.mxu0
    %v1773 = vadd.f32 %v377, %v1772
    %1774 = vmatmul.f32.gmra.mxu0 %v1026
    %v1775 = vpop.f32.mrf.mxu0
    %v1776 = vadd.f32 %v377, %v1775
    %1777 = vmatmul.f32.gmra.mxu0 %v1029
    %v1778 = vpop.f32.mrf.mxu0
    %v1779 = vadd.f32 %v377, %v1778
    %1780 = vmatmul.f32.gmra.mxu0 %v1032
    %v1781 = vpop.f32.mrf.mxu0
    %v1782 = vadd.f32 %v377, %v1781
    %1783 = vmatmul.f32.gmra.mxu0 %v1035
    %v1784 = vpop.f32.mrf.mxu0
    %v1785 = vadd.f32 %v377, %v1784
    %1786 = vmatmul.f32.gmra.mxu0 %v1038
    %v1787 = vpop.f32.mrf.mxu0
    %v1788 = vadd.f32 %v377, %v1787
    %1789 = vmatmul.f32.gmra.mxu0 %v1041
    %v1790 = vpop.f32.mrf.mxu0
    %v1791 = vadd.f32 %v377, %v1790
    %1792 = vmatmul.f32.gmra.mxu0 %v1044
    %v1793 = vpop.f32.mrf.mxu0
    %v1794 = vadd.f32 %v377, %v1793
    %1795 = vmatmul.f32.gmra.mxu0 %v1047
    %v1796 = vpop.f32.mrf.mxu0
    %v1797 = vadd.f32 %v377, %v1796
    %1798 = vmatmul.f32.gmra.mxu0 %v1050
    %v1799 = vpop.f32.mrf.mxu0
    %v1800 = vadd.f32 %v377, %v1799
    %1801 = vmatmul.f32.gmra.mxu0 %v1053
    %v1802 = vpop.f32.mrf.mxu0
    %v1803 = vadd.f32 %v377, %v1802
    %1804 = vmatmul.f32.gmra.mxu0 %v1056
    %v1805 = vpop.f32.mrf.mxu0
    %v1806 = vadd.f32 %v377, %v1805
    %1807 = vmatmul.f32.gmra.mxu0 %v1059
    %v1808 = vpop.f32.mrf.mxu0
    %v1809 = vadd.f32 %v377, %v1808
    %1810 = vmatmul.f32.gmra.mxu0 %v1062
    %v1811 = vpop.f32.mrf.mxu0
    %v1812 = vadd.f32 %v377, %v1811
    %1813 = vmatmul.f32.gmra.mxu0 %v1065
    %v1814 = vpop.f32.mrf.mxu0
    %v1815 = vadd.f32 %v377, %v1814
    %1816 = vmatmul.f32.gmra.mxu0 %v1068
    %v1817 = vpop.f32.mrf.mxu0
    %v1818 = vadd.f32 %v377, %v1817
    %1819 = vmatmul.f32.gmra.mxu0 %v1071
    %v1820 = vpop.f32.mrf.mxu0
    %v1821 = vadd.f32 %v377, %v1820
    %1822 = vmatmul.f32.gmra.mxu0 %v1074
    %v1823 = vpop.f32.mrf.mxu0
    %v1824 = vadd.f32 %v377, %v1823
    %1825 = vmatmul.f32.gmra.mxu0 %v1077
    %v1826 = vpop.f32.mrf.mxu0
    %v1827 = vadd.f32 %v377, %v1826
    %1828 = vmatmul.f32.gmra.mxu0 %v1080
    %v1829 = vpop.f32.mrf.mxu0
    %v1830 = vadd.f32 %v377, %v1829
    %1831 = vmatmul.f32.gmra.mxu0 %v1083
    %v1832 = vpop.f32.mrf.mxu0
    %v1833 = vadd.f32 %v377, %v1832
    %1834 = vmatmul.f32.gmra.mxu0 %v1086
    %v1835 = vpop.f32.mrf.mxu0
    %v1836 = vadd.f32 %v377, %v1835
    %1837 = vmatmul.f32.gmra.mxu0 %v1089
    %v1838 = vpop.f32.mrf.mxu0
    %v1839 = vadd.f32 %v377, %v1838
    %1840 = vmatmul.f32.gmra.mxu0 %v1092
    %v1841 = vpop.f32.mrf.mxu0
    %v1842 = vadd.f32 %v377, %v1841
    %1843 = vmatmul.f32.gmra.mxu0 %v1095
    %v1844 = vpop.f32.mrf.mxu0
    %v1845 = vadd.f32 %v377, %v1844
    %1846 = vmatmul.f32.gmra.mxu0 %v1098
    %v1847 = vpop.f32.mrf.mxu0
    %v1848 = vadd.f32 %v377, %v1847
    %1849 = vmatmul.f32.gmra.mxu0 %v1101
    %v1850 = vpop.f32.mrf.mxu0
    %v1851 = vadd.f32 %v377, %v1850
    %1852 = vmatmul.f32.gmra.mxu0 %v1104
    %v1853 = vpop.f32.mrf.mxu0
    %v1854 = vadd.f32 %v377, %v1853
    %1855 = vmatmul.f32.gmra.mxu0 %v1107
    %v1856 = vpop.f32.mrf.mxu0
    %v1857 = vadd.f32 %v377, %v1856
    %1858 = vdwg.mxu0
    %v1859 = vmax.f32 %v1131, 0.0
    %v1860 = vmax.f32 %v1134, 0.0
    %v1861 = vmax.f32 %v1137, 0.0
    %v1862 = vmax.f32 %v1140, 0.0
    %v1863 = vmax.f32 %v1143, 0.0
    %v1864 = vmax.f32 %v1146, 0.0
    %v1865 = vmax.f32 %v1149, 0.0
    %v1866 = vmax.f32 %v1152, 0.0
    %v1867 = vmax.f32 %v1155, 0.0
    %v1868 = vmax.f32 %v1158, 0.0
    %v1869 = vmax.f32 %v1161, 0.0
    %v1870 = vmax.f32 %v1164, 0.0
    %v1871 = vmax.f32 %v1167, 0.0
    %v1872 = vmax.f32 %v1170, 0.0
    %v1873 = vmax.f32 %v1173, 0.0
    %v1874 = vmax.f32 %v1176, 0.0
    %v1875 = vmax.f32 %v1179, 0.0
    %v1876 = vmax.f32 %v1182, 0.0
    %v1877 = vmax.f32 %v1185, 0.0
    %v1878 = vmax.f32 %v1188, 0.0
    %v1879 = vmax.f32 %v1191, 0.0
    %v1880 = vmax.f32 %v1194, 0.0
    %v1881 = vmax.f32 %v1197, 0.0
    %v1882 = vmax.f32 %v1200, 0.0
    %v1883 = vmax.f32 %v1203, 0.0
    %v1884 = vmax.f32 %v1206, 0.0
    %v1885 = vmax.f32 %v1209, 0.0
    %v1886 = vmax.f32 %v1212, 0.0
    %v1887 = vmax.f32 %v1215, 0.0
    %v1888 = vmax.f32 %v1218, 0.0
    %v1889 = vmax.f32 %v1221, 0.0
    %v1890 = vmax.f32 %v1224, 0.0
    %v1891 = vmax.f32 %v1227, 0.0
    %v1892 = vmax.f32 %v1230, 0.0
    %v1893 = vmax.f32 %v1233, 0.0
    %v1894 = vmax.f32 %v1236, 0.0
    %v1895 = vmax.f32 %v1239, 0.0
    %v1896 = vmax.f32 %v1242, 0.0
    %v1897 = vmax.f32 %v1245, 0.0
    %v1898 = vmax.f32 %v1248, 0.0
    %v1899 = vmax.f32 %v1251, 0.0
    %v1900 = vmax.f32 %v1254, 0.0
    %v1901 = vmax.f32 %v1257, 0.0
    %v1902 = vmax.f32 %v1260, 0.0
    %v1903 = vmax.f32 %v1263, 0.0
    %v1904 = vmax.f32 %v1266, 0.0
    %v1905 = vmax.f32 %v1269, 0.0
    %v1906 = vmax.f32 %v1272, 0.0
    %v1907 = vmax.f32 %v1275, 0.0
    %v1908 = vmax.f32 %v1278, 0.0
    %v1909 = vmax.f32 %v1281, 0.0
    %v1910 = vmax.f32 %v1284, 0.0
    %v1911 = vmax.f32 %v1287, 0.0
    %v1912 = vmax.f32 %v1290, 0.0
    %v1913 = vmax.f32 %v1293, 0.0
    %v1914 = vmax.f32 %v1296, 0.0
    %v1915 = vmax.f32 %v1299, 0.0
    %v1916 = vmax.f32 %v1302, 0.0
    %v1917 = vmax.f32 %v1305, 0.0
    %v1918 = vmax.f32 %v1308, 0.0
    %v1919 = vmax.f32 %v1311, 0.0
    %v1920 = vmax.f32 %v1314, 0.0
    %v1921 = vmax.f32 %v1317, 0.0
    %v1922 = vmax.f32 %v1320, 0.0
    %v1923 = vmax.f32 %v1323, 0.0
    %v1924 = vmax.f32 %v1326, 0.0
    %v1925 = vmax.f32 %v1329, 0.0
    %v1926 = vmax.f32 %v1332, 0.0
    %v1927 = vmax.f32 %v1335, 0.0
    %v1928 = vmax.f32 %v1338, 0.0
    %v1929 = vmax.f32 %v1341, 0.0
    %v1930 = vmax.f32 %v1344, 0.0
    %v1931 = vmax.f32 %v1347, 0.0
    %v1932 = vmax.f32 %v1350, 0.0
    %v1933 = vmax.f32 %v1353, 0.0
    %v1934 = vmax.f32 %v1356, 0.0
    %v1935 = vmax.f32 %v1359, 0.0
    %v1936 = vmax.f32 %v1362, 0.0
    %v1937 = vmax.f32 %v1365, 0.0
    %v1938 = vmax.f32 %v1368, 0.0
    %v1939 = vmax.f32 %v1371, 0.0
    %v1940 = vmax.f32 %v1374, 0.0
    %v1941 = vmax.f32 %v1377, 0.0
    %v1942 = vmax.f32 %v1380, 0.0
    %v1943 = vmax.f32 %v1383, 0.0
    %v1944 = vmax.f32 %v1386, 0.0
    %v1945 = vmax.f32 %v1389, 0.0
    %v1946 = vmax.f32 %v1392, 0.0
    %v1947 = vmax.f32 %v1395, 0.0
    %v1948 = vmax.f32 %v1398, 0.0
    %v1949 = vmax.f32 %v1401, 0.0
    %v1950 = vmax.f32 %v1404, 0.0
    %v1951 = vmax.f32 %v1407, 0.0
    %v1952 = vmax.f32 %v1410, 0.0
    %v1953 = vmax.f32 %v1413, 0.0
    %v1954 = vmax.f32 %v1416, 0.0
    %v1955 = vmax.f32 %v1419, 0.0
    %v1956 = vmax.f32 %v1422, 0.0
    %v1957 = vmax.f32 %v1425, 0.0
    %v1958 = vmax.f32 %v1428, 0.0
    %v1959 = vmax.f32 %v1431, 0.0
    %v1960 = vmax.f32 %v1434, 0.0
    %v1961 = vmax.f32 %v1437, 0.0
    %v1962 = vmax.f32 %v1440, 0.0
    %v1963 = vmax.f32 %v1443, 0.0
    %v1964 = vmax.f32 %v1446, 0.0
    %v1965 = vmax.f32 %v1449, 0.0
    %v1966 = vmax.f32 %v1452, 0.0
    %v1967 = vmax.f32 %v1455, 0.0
    %v1968 = vmax.f32 %v1458, 0.0
    %v1969 = vmax.f32 %v1461, 0.0
    %v1970 = vmax.f32 %v1464, 0.0
    %v1971 = vmax.f32 %v1467, 0.0
    %v1972 = vmax.f32 %v1470, 0.0
    %v1973 = vmax.f32 %v1473, 0.0
    %v1974 = vmax.f32 %v1476, 0.0
    %v1975 = vmax.f32 %v1479, 0.0
    %v1976 = vmax.f32 %v1482, 0.0
    %v1977 = vmax.f32 %v1485, 0.0
    %v1978 = vmax.f32 %v1488, 0.0
    %v1979 = vmax.f32 %v1491, 0.0
    %v1980 = vmax.f32 %v1494, 0.0
    %v1981 = vmax.f32 %v1497, 0.0
    %v1982 = vmax.f32 %v1500, 0.0
    %v1983 = vmax.f32 %v1503, 0.0
    %v1984 = vmax.f32 %v1506, 0.0
    %v1985 = vmax.f32 %v1509, 0.0
    %v1986 = vmax.f32 %v1512, 0.0
    %v1987 = vmax.f32 %v1515, 0.0
    %v1988 = vmax.f32 %v1518, 0.0
    %v1989 = vmax.f32 %v1521, 0.0
    %v1990 = vmax.f32 %v1524, 0.0
    %v1991 = vmax.f32 %v1527, 0.0
    %v1992 = vmax.f32 %v1530, 0.0
    %v1993 = vmax.f32 %v1533, 0.0
    %v1994 = vmax.f32 %v1536, 0.0
    %v1995 = vmax.f32 %v1539, 0.0
    %v1996 = vmax.f32 %v1542, 0.0
    %v1997 = vmax.f32 %v1545, 0.0
    %v1998 = vmax.f32 %v1548, 0.0
    %v1999 = vmax.f32 %v1551, 0.0
    %v2000 = vmax.f32 %v1554, 0.0
    %v2001 = vmax.f32 %v1557, 0.0
    %v2002 = vmax.f32 %v1560, 0.0
    %v2003 = vmax.f32 %v1563, 0.0
    %v2004 = vmax.f32 %v1566, 0.0
    %v2005 = vmax.f32 %v1569, 0.0
    %v2006 = vmax.f32 %v1572, 0.0
    %v2007 = vmax.f32 %v1575, 0.0
    %v2008 = vmax.f32 %v1578, 0.0
    %v2009 = vmax.f32 %v1581, 0.0
    %v2010 = vmax.f32 %v1584, 0.0
    %v2011 = vmax.f32 %v1587, 0.0
    %v2012 = vmax.f32 %v1590, 0.0
    %v2013 = vmax.f32 %v1593, 0.0
    %v2014 = vmax.f32 %v1596, 0.0
    %v2015 = vmax.f32 %v1599, 0.0
    %v2016 = vmax.f32 %v1602, 0.0
    %v2017 = vmax.f32 %v1605, 0.0
    %v2018 = vmax.f32 %v1608, 0.0
    %v2019 = vmax.f32 %v1611, 0.0
    %v2020 = vmax.f32 %v1614, 0.0
    %v2021 = vmax.f32 %v1617, 0.0
    %v2022 = vmax.f32 %v1620, 0.0
    %v2023 = vmax.f32 %v1623, 0.0
    %v2024 = vmax.f32 %v1626, 0.0
    %v2025 = vmax.f32 %v1629, 0.0
    %v2026 = vmax.f32 %v1632, 0.0
    %v2027 = vmax.f32 %v1635, 0.0
    %v2028 = vmax.f32 %v1638, 0.0
    %v2029 = vmax.f32 %v1641, 0.0
    %v2030 = vmax.f32 %v1644, 0.0
    %v2031 = vmax.f32 %v1647, 0.0
    %v2032 = vmax.f32 %v1650, 0.0
    %v2033 = vmax.f32 %v1653, 0.0
    %v2034 = vmax.f32 %v1656, 0.0
    %v2035 = vmax.f32 %v1659, 0.0
    %v2036 = vmax.f32 %v1662, 0.0
    %v2037 = vmax.f32 %v1665, 0.0
    %v2038 = vmax.f32 %v1668, 0.0
    %v2039 = vmax.f32 %v1671, 0.0
    %v2040 = vmax.f32 %v1674, 0.0
    %v2041 = vmax.f32 %v1677, 0.0
    %v2042 = vmax.f32 %v1680, 0.0
    %v2043 = vmax.f32 %v1683, 0.0
    %v2044 = vmax.f32 %v1686, 0.0
    %v2045 = vmax.f32 %v1689, 0.0
    %v2046 = vmax.f32 %v1692, 0.0
    %v2047 = vmax.f32 %v1695, 0.0
    %v2048 = vmax.f32 %v1698, 0.0
    %v2049 = vmax.f32 %v1701, 0.0
    %v2050 = vmax.f32 %v1704, 0.0
    %v2051 = vmax.f32 %v1707, 0.0
    %v2052 = vmax.f32 %v1710, 0.0
    %v2053 = vmax.f32 %v1713, 0.0
    %v2054 = vmax.f32 %v1716, 0.0
    %v2055 = vmax.f32 %v1719, 0.0
    %v2056 = vmax.f32 %v1722, 0.0
    %v2057 = vmax.f32 %v1725, 0.0
    %v2058 = vmax.f32 %v1728, 0.0
    %v2059 = vmax.f32 %v1731, 0.0
    %v2060 = vmax.f32 %v1734, 0.0
    %v2061 = vmax.f32 %v1737, 0.0
    %v2062 = vmax.f32 %v1740, 0.0
    %v2063 = vmax.f32 %v1743, 0.0
    %v2064 = vmax.f32 %v1746, 0.0
    %v2065 = vmax.f32 %v1749, 0.0
    %v2066 = vmax.f32 %v1752, 0.0
    %v2067 = vmax.f32 %v1755, 0.0
    %v2068 = vmax.f32 %v1758, 0.0
    %v2069 = vmax.f32 %v1761, 0.0
    %v2070 = vmax.f32 %v1764, 0.0
    %v2071 = vmax.f32 %v1767, 0.0
    %v2072 = vmax.f32 %v1770, 0.0
    %v2073 = vmax.f32 %v1773, 0.0
    %v2074 = vmax.f32 %v1776, 0.0
    %v2075 = vmax.f32 %v1779, 0.0
    %v2076 = vmax.f32 %v1782, 0.0
    %v2077 = vmax.f32 %v1785, 0.0
    %v2078 = vmax.f32 %v1788, 0.0
    %v2079 = vmax.f32 %v1791, 0.0
    %v2080 = vmax.f32 %v1794, 0.0
    %v2081 = vmax.f32 %v1797, 0.0
    %v2082 = vmax.f32 %v1800, 0.0
    %v2083 = vmax.f32 %v1803, 0.0
    %v2084 = vmax.f32 %v1806, 0.0
    %v2085 = vmax.f32 %v1809, 0.0
    %v2086 = vmax.f32 %v1812, 0.0
    %v2087 = vmax.f32 %v1815, 0.0
    %v2088 = vmax.f32 %v1818, 0.0
    %v2089 = vmax.f32 %v1821, 0.0
    %v2090 = vmax.f32 %v1824, 0.0
    %v2091 = vmax.f32 %v1827, 0.0
    %v2092 = vmax.f32 %v1830, 0.0
    %v2093 = vmax.f32 %v1833, 0.0
    %v2094 = vmax.f32 %v1836, 0.0
    %v2095 = vmax.f32 %v1839, 0.0
    %v2096 = vmax.f32 %v1842, 0.0
    %v2097 = vmax.f32 %v1845, 0.0
    %v2098 = vmax.f32 %v1848, 0.0
    %v2099 = vmax.f32 %v1851, 0.0
    %v2100 = vmax.f32 %v1854, 0.0
    %v2101 = vmax.f32 %v1857, 0.0
    %v2102 = vld [vmem:[%s3] sm:$0xff]
    %v2103 = vld [vmem:[%s3 + $0x8] sm:$0xff]
    %v2104 = vld [vmem:[%s3 + $0x10] sm:$0xff]
    %v2105 = vld [vmem:[%s3 + $0x18] sm:$0xff]
    %v2106 = vld [vmem:[%s3 + $0x20] sm:$0xff]
    %v2107 = vld [vmem:[%s3 + $0x28] sm:$0xff]
    %v2108 = vld [vmem:[%s3 + $0x30] sm:$0xff]
    %v2109 = vld [vmem:[%s3 + $0x38] sm:$0xff]
    %v2110 = vld [vmem:[%s3 + $0x40] sm:$0xff]
    %v2111 = vld [vmem:[%s3 + $0x48] sm:$0xff]
    %v2112 = vld [vmem:[%s3 + $0x50] sm:$0xff]
    %v2113 = vld [vmem:[%s3 + $0x58] sm:$0xff]
    %v2114 = vld [vmem:[%s3 + $0x60] sm:$0xff]
    %v2115 = vld [vmem:[%s3 + $0x68] sm:$0xff]
    %v2116 = vld [vmem:[%s3 + $0x70] sm:$0xff]
    %v2117 = vld [vmem:[%s3 + $0x78] sm:$0xff]
    %v2118 = vld [vmem:[%s3 + $0x80] sm:$0xff]
    %v2119 = vld [vmem:[%s3 + $0x88] sm:$0xff]
    %v2120 = vld [vmem:[%s3 + $0x90] sm:$0xff]
    %v2121 = vld [vmem:[%s3 + $0x98] sm:$0xff]
    %v2122 = vld [vmem:[%s3 + $0xa0] sm:$0xff]
    %v2123 = vld [vmem:[%s3 + $0xa8] sm:$0xff]
    %v2124 = vld [vmem:[%s3 + $0xb0] sm:$0xff]
    %v2125 = vld [vmem:[%s3 + $0xb8] sm:$0xff]
    %v2126 = vld [vmem:[%s3 + $0xc0] sm:$0xff]
    %v2127 = vld [vmem:[%s3 + $0xc8] sm:$0xff]
    %v2128 = vld [vmem:[%s3 + $0xd0] sm:$0xff]
    %v2129 = vld [vmem:[%s3 + $0xd8] sm:$0xff]
    %v2130 = vld [vmem:[%s3 + $0xe0] sm:$0xff]
    %v2131 = vld [vmem:[%s3 + $0xe8] sm:$0xff]
    %v2132 = vld [vmem:[%s3 + $0xf0] sm:$0xff]
    %v2133 = vld [vmem:[%s3 + $0xf8] sm:$0xff]
    %v2134 = vld [vmem:[%s3 + $0x100] sm:$0xff]
    %v2135 = vld [vmem:[%s3 + $0x108] sm:$0xff]
    %v2136 = vld [vmem:[%s3 + $0x110] sm:$0xff]
    %v2137 = vld [vmem:[%s3 + $0x118] sm:$0xff]
    %v2138 = vld [vmem:[%s3 + $0x120] sm:$0xff]
    %v2139 = vld [vmem:[%s3 + $0x128] sm:$0xff]
    %v2140 = vld [vmem:[%s3 + $0x130] sm:$0xff]
    %v2141 = vld [vmem:[%s3 + $0x138] sm:$0xff]
    %v2142 = vld [vmem:[%s3 + $0x140] sm:$0xff]
    %v2143 = vld [vmem:[%s3 + $0x148] sm:$0xff]
    %v2144 = vld [vmem:[%s3 + $0x150] sm:$0xff]
    %v2145 = vld [vmem:[%s3 + $0x158] sm:$0xff]
    %v2146 = vld [vmem:[%s3 + $0x160] sm:$0xff]
    %v2147 = vld [vmem:[%s3 + $0x168] sm:$0xff]
    %v2148 = vld [vmem:[%s3 + $0x170] sm:$0xff]
    %v2149 = vld [vmem:[%s3 + $0x178] sm:$0xff]
    %v2150 = vld [vmem:[%s3 + $0x180] sm:$0xff]
    %v2151 = vld [vmem:[%s3 + $0x188] sm:$0xff]
    %v2152 = vld [vmem:[%s3 + $0x190] sm:$0xff]
    %v2153 = vld [vmem:[%s3 + $0x198] sm:$0xff]
    %v2154 = vld [vmem:[%s3 + $0x1a0] sm:$0xff]
    %v2155 = vld [vmem:[%s3 + $0x1a8] sm:$0xff]
    %v2156 = vld [vmem:[%s3 + $0x1b0] sm:$0xff]
    %v2157 = vld [vmem:[%s3 + $0x1b8] sm:$0xff]
    %v2158 = vld [vmem:[%s3 + $0x1c0] sm:$0xff]
    %v2159 = vld [vmem:[%s3 + $0x1c8] sm:$0xff]
    %v2160 = vld [vmem:[%s3 + $0x1d0] sm:$0xff]
    %v2161 = vld [vmem:[%s3 + $0x1d8] sm:$0xff]
    %v2162 = vld [vmem:[%s3 + $0x1e0] sm:$0xff]
    %v2163 = vld [vmem:[%s3 + $0x1e8] sm:$0xff]
    %v2164 = vld [vmem:[%s3 + $0x1f0] sm:$0xff]
    %v2165 = vld [vmem:[%s3 + $0x1f8] sm:$0xff]
    %v2166 = vld [vmem:[%s3 + $0x200] sm:$0xff]
    %v2167 = vld [vmem:[%s3 + $0x208] sm:$0xff]
    %v2168 = vld [vmem:[%s3 + $0x210] sm:$0xff]
    %v2169 = vld [vmem:[%s3 + $0x218] sm:$0xff]
    %v2170 = vld [vmem:[%s3 + $0x220] sm:$0xff]
    %v2171 = vld [vmem:[%s3 + $0x228] sm:$0xff]
    %v2172 = vld [vmem:[%s3 + $0x230] sm:$0xff]
    %v2173 = vld [vmem:[%s3 + $0x238] sm:$0xff]
    %v2174 = vld [vmem:[%s3 + $0x240] sm:$0xff]
    %v2175 = vld [vmem:[%s3 + $0x248] sm:$0xff]
    %v2176 = vld [vmem:[%s3 + $0x250] sm:$0xff]
    %v2177 = vld [vmem:[%s3 + $0x258] sm:$0xff]
    %v2178 = vld [vmem:[%s3 + $0x260] sm:$0xff]
    %v2179 = vld [vmem:[%s3 + $0x268] sm:$0xff]
    %v2180 = vld [vmem:[%s3 + $0x270] sm:$0xff]
    %v2181 = vld [vmem:[%s3 + $0x278] sm:$0xff]
    %v2182 = vld [vmem:[%s3 + $0x280] sm:$0xff]
    %v2183 = vld [vmem:[%s3 + $0x288] sm:$0xff]
    %v2184 = vld [vmem:[%s3 + $0x290] sm:$0xff]
    %v2185 = vld [vmem:[%s3 + $0x298] sm:$0xff]
    %v2186 = vld [vmem:[%s3 + $0x2a0] sm:$0xff]
    %v2187 = vld [vmem:[%s3 + $0x2a8] sm:$0xff]
    %v2188 = vld [vmem:[%s3 + $0x2b0] sm:$0xff]
    %v2189 = vld [vmem:[%s3 + $0x2b8] sm:$0xff]
    %v2190 = vld [vmem:[%s3 + $0x2c0] sm:$0xff]
    %v2191 = vld [vmem:[%s3 + $0x2c8] sm:$0xff]
    %v2192 = vld [vmem:[%s3 + $0x2d0] sm:$0xff]
    %v2193 = vld [vmem:[%s3 + $0x2d8] sm:$0xff]
    %v2194 = vld [vmem:[%s3 + $0x2e0] sm:$0xff]
    %v2195 = vld [vmem:[%s3 + $0x2e8] sm:$0xff]
    %v2196 = vld [vmem:[%s3 + $0x2f0] sm:$0xff]
    %v2197 = vld [vmem:[%s3 + $0x2f8] sm:$0xff]
    %v2198 = vld [vmem:[%s3 + $0x300] sm:$0xff]
    %v2199 = vld [vmem:[%s3 + $0x308] sm:$0xff]
    %v2200 = vld [vmem:[%s3 + $0x310] sm:$0xff]
    %v2201 = vld [vmem:[%s3 + $0x318] sm:$0xff]
    %v2202 = vld [vmem:[%s3 + $0x320] sm:$0xff]
    %v2203 = vld [vmem:[%s3 + $0x328] sm:$0xff]
    %v2204 = vld [vmem:[%s3 + $0x330] sm:$0xff]
    %v2205 = vld [vmem:[%s3 + $0x338] sm:$0xff]
    %v2206 = vld [vmem:[%s3 + $0x340] sm:$0xff]
    %v2207 = vld [vmem:[%s3 + $0x348] sm:$0xff]
    %v2208 = vld [vmem:[%s3 + $0x350] sm:$0xff]
    %v2209 = vld [vmem:[%s3 + $0x358] sm:$0xff]
    %v2210 = vld [vmem:[%s3 + $0x360] sm:$0xff]
    %v2211 = vld [vmem:[%s3 + $0x368] sm:$0xff]
    %v2212 = vld [vmem:[%s3 + $0x370] sm:$0xff]
    %v2213 = vld [vmem:[%s3 + $0x378] sm:$0xff]
    %v2214 = vld [vmem:[%s3 + $0x380] sm:$0xff]
    %v2215 = vld [vmem:[%s3 + $0x388] sm:$0xff]
    %v2216 = vld [vmem:[%s3 + $0x390] sm:$0xff]
    %v2217 = vld [vmem:[%s3 + $0x398] sm:$0xff]
    %v2218 = vld [vmem:[%s3 + $0x3a0] sm:$0xff]
    %v2219 = vld [vmem:[%s3 + $0x3a8] sm:$0xff]
    %v2220 = vld [vmem:[%s3 + $0x3b0] sm:$0xff]
    %v2221 = vld [vmem:[%s3 + $0x3b8] sm:$0xff]
    %v2222 = vld [vmem:[%s3 + $0x3c0] sm:$0xff]
    %v2223 = vld [vmem:[%s3 + $0x3c8] sm:$0xff]
    %v2224 = vld [vmem:[%s3 + $0x3d0] sm:$0xff]
    %v2225 = vld [vmem:[%s3 + $0x3d8] sm:$0xff]
    %v2226 = vld [vmem:[%s3 + $0x3e0] sm:$0xff]
    %v2227 = vld [vmem:[%s3 + $0x3e8] sm:$0xff]
    %v2228 = vld [vmem:[%s3 + $0x3f0] sm:$0xff]
    %v2229 = vld [vmem:[%s3 + $0x3f8] sm:$0xff]
    %v2230 = vld [vmem:[%s3 + $0x400] sm:$0xff]
    %v2231 = vld [vmem:[%s3 + $0x408] sm:$0xff]
    %v2232 = vld [vmem:[%s3 + $0x410] sm:$0xff]
    %v2233 = vld [vmem:[%s3 + $0x418] sm:$0xff]
    %v2234 = vld [vmem:[%s3 + $0x420] sm:$0xff]
    %v2235 = vld [vmem:[%s3 + $0x428] sm:$0xff]
    %v2236 = vld [vmem:[%s3 + $0x430] sm:$0xff]
    %v2237 = vld [vmem:[%s3 + $0x438] sm:$0xff]
    %v2238 = vld [vmem:[%s3 + $0x440] sm:$0xff]
    %v2239 = vld [vmem:[%s3 + $0x448] sm:$0xff]
    %v2240 = vld [vmem:[%s3 + $0x450] sm:$0xff]
    %v2241 = vld [vmem:[%s3 + $0x458] sm:$0xff]
    %v2242 = vld [vmem:[%s3 + $0x460] sm:$0xff]
    %v2243 = vld [vmem:[%s3 + $0x468] sm:$0xff]
    %v2244 = vld [vmem:[%s3 + $0x470] sm:$0xff]
    %v2245 = vld [vmem:[%s3 + $0x478] sm:$0xff]
    %v2246 = vld [vmem:[%s4] sm:$0x1]
    %v2248 = vperm.slane %v2246, 0
    %2250 = vmatpush.msra.mxu0 %v2117
    %2251 = vmatpush.msra.mxu0 %v2116
    %2252 = vmatpush.msra.mxu0 %v2115
    %2253 = vmatpush.msra.mxu0 %v2114
    %2254 = vmatpush.msra.mxu0 %v2113
    %2255 = vmatpush.msra.mxu0 %v2112
    %2256 = vmatpush.msra.mxu0 %v2111
    %2257 = vmatpush.msra.mxu0 %v2110
    %2258 = vmatpush.msra.mxu0 %v2109
    %2259 = vmatpush.msra.mxu0 %v2108
    %2260 = vmatpush.msra.mxu0 %v2107
    %2261 = vmatpush.msra.mxu0 %v2106
    %2262 = vmatpush.msra.mxu0 %v2105
    %2263 = vmatpush.msra.mxu0 %v2104
    %2264 = vmatpush.msra.mxu0 %v2103
    %2265 = vmatpush.msra.mxu0 %v2102
    %2266 = vmatmul.f32.gmra.mxu0 %v1859
    %v2267 = vpop.f32.mrf.mxu0
    %v2268 = vadd.f32 %v2248, %v2267
    %2269 = vmatmul.f32.gmra.mxu0 %v1860
    %v2270 = vpop.f32.mrf.mxu0
    %v2271 = vadd.f32 %v2248, %v2270
    %2272 = vmatmul.f32.gmra.mxu0 %v1861
    %v2273 = vpop.f32.mrf.mxu0
    %v2274 = vadd.f32 %v2248, %v2273
    %2275 = vmatmul.f32.gmra.mxu0 %v1862
    %v2276 = vpop.f32.mrf.mxu0
    %v2277 = vadd.f32 %v2248, %v2276
    %2278 = vmatmul.f32.gmra.mxu0 %v1863
    %v2279 = vpop.f32.mrf.mxu0
    %v2280 = vadd.f32 %v2248, %v2279
    %2281 = vmatmul.f32.gmra.mxu0 %v1864
    %v2282 = vpop.f32.mrf.mxu0
    %v2283 = vadd.f32 %v2248, %v2282
    %2284 = vmatmul.f32.gmra.mxu0 %v1865
    %v2285 = vpop.f32.mrf.mxu0
    %v2286 = vadd.f32 %v2248, %v2285
    %2287 = vmatmul.f32.gmra.mxu0 %v1866
    %v2288 = vpop.f32.mrf.mxu0
    %v2289 = vadd.f32 %v2248, %v2288
    %2290 = vmatmul.f32.gmra.mxu0 %v1867
    %v2291 = vpop.f32.mrf.mxu0
    %v2292 = vadd.f32 %v2248, %v2291
    %2293 = vmatmul.f32.gmra.mxu0 %v1868
    %v2294 = vpop.f32.mrf.mxu0
    %v2295 = vadd.f32 %v2248, %v2294
    %2296 = vmatmul.f32.gmra.mxu0 %v1869
    %v2297 = vpop.f32.mrf.mxu0
    %v2298 = vadd.f32 %v2248, %v2297
    %2299 = vmatmul.f32.gmra.mxu0 %v1870
    %v2300 = vpop.f32.mrf.mxu0
    %v2301 = vadd.f32 %v2248, %v2300
    %2302 = vmatmul.f32.gmra.mxu0 %v1871
    %v2303 = vpop.f32.mrf.mxu0
    %v2304 = vadd.f32 %v2248, %v2303
    %2305 = vmatmul.f32.gmra.mxu0 %v1872
    %v2306 = vpop.f32.mrf.mxu0
    %v2307 = vadd.f32 %v2248, %v2306
    %2308 = vmatmul.f32.gmra.mxu0 %v1873
    %v2309 = vpop.f32.mrf.mxu0
    %v2310 = vadd.f32 %v2248, %v2309
    %2311 = vmatmul.f32.gmra.mxu0 %v1874
    %v2312 = vpop.f32.mrf.mxu0
    %v2313 = vadd.f32 %v2248, %v2312
    %2314 = vmatmul.f32.gmra.mxu0 %v1875
    %v2315 = vpop.f32.mrf.mxu0
    %v2316 = vadd.f32 %v2248, %v2315
    %2317 = vmatmul.f32.gmra.mxu0 %v1876
    %v2318 = vpop.f32.mrf.mxu0
    %v2319 = vadd.f32 %v2248, %v2318
    %2320 = vmatmul.f32.gmra.mxu0 %v1877
    %v2321 = vpop.f32.mrf.mxu0
    %v2322 = vadd.f32 %v2248, %v2321
    %2323 = vmatmul.f32.gmra.mxu0 %v1878
    %v2324 = vpop.f32.mrf.mxu0
    %v2325 = vadd.f32 %v2248, %v2324
    %2326 = vmatmul.f32.gmra.mxu0 %v1879
    %v2327 = vpop.f32.mrf.mxu0
    %v2328 = vadd.f32 %v2248, %v2327
    %2329 = vmatmul.f32.gmra.mxu0 %v1886
    %v2330 = vpop.f32.mrf.mxu0
    %v2331 = vadd.f32 %v2248, %v2330
    %2332 = vmatmul.f32.gmra.mxu0 %v1887
    %v2333 = vpop.f32.mrf.mxu0
    %v2334 = vadd.f32 %v2248, %v2333
    %2335 = vmatmul.f32.gmra.mxu0 %v1888
    %v2336 = vpop.f32.mrf.mxu0
    %v2337 = vadd.f32 %v2248, %v2336
    %2338 = vmatmul.f32.gmra.mxu0 %v1889
    %v2339 = vpop.f32.mrf.mxu0
    %v2340 = vadd.f32 %v2248, %v2339
    %2341 = vmatmul.f32.gmra.mxu0 %v1890
    %v2342 = vpop.f32.mrf.mxu0
    %v2343 = vadd.f32 %v2248, %v2342
    %2344 = vmatmul.f32.gmra.mxu0 %v1891
    %v2345 = vpop.f32.mrf.mxu0
    %v2346 = vadd.f32 %v2248, %v2345
    %2347 = vmatmul.f32.gmra.mxu0 %v1892
    %v2348 = vpop.f32.mrf.mxu0
    %v2349 = vadd.f32 %v2248, %v2348
    %2350 = vmatmul.f32.gmra.mxu0 %v1893
    %v2351 = vpop.f32.mrf.mxu0
    %v2352 = vadd.f32 %v2248, %v2351
    %2353 = vmatmul.f32.gmra.mxu0 %v1894
    %v2354 = vpop.f32.mrf.mxu0
    %v2355 = vadd.f32 %v2248, %v2354
    %2356 = vmatmul.f32.gmra.mxu0 %v1895
    %v2357 = vpop.f32.mrf.mxu0
    %v2358 = vadd.f32 %v2248, %v2357
    %2359 = vmatmul.f32.gmra.mxu0 %v1896
    %v2360 = vpop.f32.mrf.mxu0
    %v2361 = vadd.f32 %v2248, %v2360
    %2362 = vmatmul.f32.gmra.mxu0 %v1897
    %v2363 = vpop.f32.mrf.mxu0
    %v2364 = vadd.f32 %v2248, %v2363
    %2365 = vmatmul.f32.gmra.mxu0 %v1898
    %v2366 = vpop.f32.mrf.mxu0
    %v2367 = vadd.f32 %v2248, %v2366
    %2368 = vmatmul.f32.gmra.mxu0 %v1899
    %v2369 = vpop.f32.mrf.mxu0
    %v2370 = vadd.f32 %v2248, %v2369
    %2371 = vmatmul.f32.gmra.mxu0 %v1900
    %v2372 = vpop.f32.mrf.mxu0
    %v2373 = vadd.f32 %v2248, %v2372
    %2374 = vmatmul.f32.gmra.mxu0 %v1901
    %v2375 = vpop.f32.mrf.mxu0
    %v2376 = vadd.f32 %v2248, %v2375
    %2377 = vmatmul.f32.gmra.mxu0 %v1902
    %v2378 = vpop.f32.mrf.mxu0
    %v2379 = vadd.f32 %v2248, %v2378
    %2380 = vmatmul.f32.gmra.mxu0 %v1903
    %v2381 = vpop.f32.mrf.mxu0
    %v2382 = vadd.f32 %v2248, %v2381
    %2383 = vmatmul.f32.gmra.mxu0 %v1904
    %v2384 = vpop.f32.mrf.mxu0
    %v2385 = vadd.f32 %v2248, %v2384
    %2386 = vmatmul.f32.gmra.mxu0 %v1905
    %v2387 = vpop.f32.mrf.mxu0
    %v2388 = vadd.f32 %v2248, %v2387
    %2389 = vmatmul.f32.gmra.mxu0 %v1906
    %v2390 = vpop.f32.mrf.mxu0
    %v2391 = vadd.f32 %v2248, %v2390
    %2392 = vmatmul.f32.gmra.mxu0 %v1913
    %v2393 = vpop.f32.mrf.mxu0
    %v2394 = vadd.f32 %v2248, %v2393
    %2395 = vmatmul.f32.gmra.mxu0 %v1914
    %v2396 = vpop.f32.mrf.mxu0
    %v2397 = vadd.f32 %v2248, %v2396
    %2398 = vmatmul.f32.gmra.mxu0 %v1915
    %v2399 = vpop.f32.mrf.mxu0
    %v2400 = vadd.f32 %v2248, %v2399
    %2401 = vmatmul.f32.gmra.mxu0 %v1916
    %v2402 = vpop.f32.mrf.mxu0
    %v2403 = vadd.f32 %v2248, %v2402
    %2404 = vmatmul.f32.gmra.mxu0 %v1917
    %v2405 = vpop.f32.mrf.mxu0
    %v2406 = vadd.f32 %v2248, %v2405
    %2407 = vmatmul.f32.gmra.mxu0 %v1918
    %v2408 = vpop.f32.mrf.mxu0
    %v2409 = vadd.f32 %v2248, %v2408
    %2410 = vmatmul.f32.gmra.mxu0 %v1919
    %v2411 = vpop.f32.mrf.mxu0
    %v2412 = vadd.f32 %v2248, %v2411
    %2413 = vmatmul.f32.gmra.mxu0 %v1920
    %v2414 = vpop.f32.mrf.mxu0
    %v2415 = vadd.f32 %v2248, %v2414
    %2416 = vmatmul.f32.gmra.mxu0 %v1921
    %v2417 = vpop.f32.mrf.mxu0
    %v2418 = vadd.f32 %v2248, %v2417
    %2419 = vmatmul.f32.gmra.mxu0 %v1922
    %v2420 = vpop.f32.mrf.mxu0
    %v2421 = vadd.f32 %v2248, %v2420
    %2422 = vmatmul.f32.gmra.mxu0 %v1923
    %v2423 = vpop.f32.mrf.mxu0
    %v2424 = vadd.f32 %v2248, %v2423
    %2425 = vmatmul.f32.gmra.mxu0 %v1924
    %v2426 = vpop.f32.mrf.mxu0
    %v2427 = vadd.f32 %v2248, %v2426
    %2428 = vmatmul.f32.gmra.mxu0 %v1925
    %v2429 = vpop.f32.mrf.mxu0
    %v2430 = vadd.f32 %v2248, %v2429
    %2431 = vmatmul.f32.gmra.mxu0 %v1926
    %v2432 = vpop.f32.mrf.mxu0
    %v2433 = vadd.f32 %v2248, %v2432
    %2434 = vmatmul.f32.gmra.mxu0 %v1927
    %v2435 = vpop.f32.mrf.mxu0
    %v2436 = vadd.f32 %v2248, %v2435
    %2437 = vmatmul.f32.gmra.mxu0 %v1928
    %v2438 = vpop.f32.mrf.mxu0
    %v2439 = vadd.f32 %v2248, %v2438
    %2440 = vmatmul.f32.gmra.mxu0 %v1929
    %v2441 = vpop.f32.mrf.mxu0
    %v2442 = vadd.f32 %v2248, %v2441
    %2443 = vmatmul.f32.gmra.mxu0 %v1930
    %v2444 = vpop.f32.mrf.mxu0
    %v2445 = vadd.f32 %v2248, %v2444
    %2446 = vmatmul.f32.gmra.mxu0 %v1931
    %v2447 = vpop.f32.mrf.mxu0
    %v2448 = vadd.f32 %v2248, %v2447
    %2449 = vmatmul.f32.gmra.mxu0 %v1932
    %v2450 = vpop.f32.mrf.mxu0
    %v2451 = vadd.f32 %v2248, %v2450
    %2452 = vmatmul.f32.gmra.mxu0 %v1933
    %v2453 = vpop.f32.mrf.mxu0
    %v2454 = vadd.f32 %v2248, %v2453
    %2455 = vmatmul.f32.gmra.mxu0 %v1940
    %v2456 = vpop.f32.mrf.mxu0
    %v2457 = vadd.f32 %v2248, %v2456
    %2458 = vmatmul.f32.gmra.mxu0 %v1941
    %v2459 = vpop.f32.mrf.mxu0
    %v2460 = vadd.f32 %v2248, %v2459
    %2461 = vmatmul.f32.gmra.mxu0 %v1942
    %v2462 = vpop.f32.mrf.mxu0
    %v2463 = vadd.f32 %v2248, %v2462
    %2464 = vmatmul.f32.gmra.mxu0 %v1943
    %v2465 = vpop.f32.mrf.mxu0
    %v2466 = vadd.f32 %v2248, %v2465
    %2467 = vmatmul.f32.gmra.mxu0 %v1944
    %v2468 = vpop.f32.mrf.mxu0
    %v2469 = vadd.f32 %v2248, %v2468
    %2470 = vmatmul.f32.gmra.mxu0 %v1945
    %v2471 = vpop.f32.mrf.mxu0
    %v2472 = vadd.f32 %v2248, %v2471
    %2473 = vmatmul.f32.gmra.mxu0 %v1946
    %v2474 = vpop.f32.mrf.mxu0
    %v2475 = vadd.f32 %v2248, %v2474
    %2476 = vmatmul.f32.gmra.mxu0 %v1947
    %v2477 = vpop.f32.mrf.mxu0
    %v2478 = vadd.f32 %v2248, %v2477
    %2479 = vmatmul.f32.gmra.mxu0 %v1948
    %v2480 = vpop.f32.mrf.mxu0
    %v2481 = vadd.f32 %v2248, %v2480
    %2482 = vmatmul.f32.gmra.mxu0 %v1949
    %v2483 = vpop.f32.mrf.mxu0
    %v2484 = vadd.f32 %v2248, %v2483
    %2485 = vmatmul.f32.gmra.mxu0 %v1950
    %v2486 = vpop.f32.mrf.mxu0
    %v2487 = vadd.f32 %v2248, %v2486
    %2488 = vmatmul.f32.gmra.mxu0 %v1951
    %v2489 = vpop.f32.mrf.mxu0
    %v2490 = vadd.f32 %v2248, %v2489
    %2491 = vmatmul.f32.gmra.mxu0 %v1952
    %v2492 = vpop.f32.mrf.mxu0
    %v2493 = vadd.f32 %v2248, %v2492
    %2494 = vmatmul.f32.gmra.mxu0 %v1953
    %v2495 = vpop.f32.mrf.mxu0
    %v2496 = vadd.f32 %v2248, %v2495
    %2497 = vmatmul.f32.gmra.mxu0 %v1954
    %v2498 = vpop.f32.mrf.mxu0
    %v2499 = vadd.f32 %v2248, %v2498
    %2500 = vmatmul.f32.gmra.mxu0 %v1955
    %v2501 = vpop.f32.mrf.mxu0
    %v2502 = vadd.f32 %v2248, %v2501
    %2503 = vmatmul.f32.gmra.mxu0 %v1956
    %v2504 = vpop.f32.mrf.mxu0
    %v2505 = vadd.f32 %v2248, %v2504
    %2506 = vmatmul.f32.gmra.mxu0 %v1957
    %v2507 = vpop.f32.mrf.mxu0
    %v2508 = vadd.f32 %v2248, %v2507
    %2509 = vmatmul.f32.gmra.mxu0 %v1958
    %v2510 = vpop.f32.mrf.mxu0
    %v2511 = vadd.f32 %v2248, %v2510
    %2512 = vmatmul.f32.gmra.mxu0 %v1959
    %v2513 = vpop.f32.mrf.mxu0
    %v2514 = vadd.f32 %v2248, %v2513
    %2515 = vmatmul.f32.gmra.mxu0 %v1960
    %v2516 = vpop.f32.mrf.mxu0
    %v2517 = vadd.f32 %v2248, %v2516
    %2518 = vmatmul.f32.gmra.mxu0 %v1967
    %v2519 = vpop.f32.mrf.mxu0
    %v2520 = vadd.f32 %v2248, %v2519
    %2521 = vmatmul.f32.gmra.mxu0 %v1968
    %v2522 = vpop.f32.mrf.mxu0
    %v2523 = vadd.f32 %v2248, %v2522
    %2524 = vmatmul.f32.gmra.mxu0 %v1969
    %v2525 = vpop.f32.mrf.mxu0
    %v2526 = vadd.f32 %v2248, %v2525
    %2527 = vmatmul.f32.gmra.mxu0 %v1970
    %v2528 = vpop.f32.mrf.mxu0
    %v2529 = vadd.f32 %v2248, %v2528
    %2530 = vmatmul.f32.gmra.mxu0 %v1971
    %v2531 = vpop.f32.mrf.mxu0
    %v2532 = vadd.f32 %v2248, %v2531
    %2533 = vmatmul.f32.gmra.mxu0 %v1972
    %v2534 = vpop.f32.mrf.mxu0
    %v2535 = vadd.f32 %v2248, %v2534
    %2536 = vmatmul.f32.gmra.mxu0 %v1973
    %v2537 = vpop.f32.mrf.mxu0
    %v2538 = vadd.f32 %v2248, %v2537
    %2539 = vmatmul.f32.gmra.mxu0 %v1974
    %v2540 = vpop.f32.mrf.mxu0
    %v2541 = vadd.f32 %v2248, %v2540
    %2542 = vmatmul.f32.gmra.mxu0 %v1975
    %v2543 = vpop.f32.mrf.mxu0
    %v2544 = vadd.f32 %v2248, %v2543
    %2545 = vmatmul.f32.gmra.mxu0 %v1976
    %v2546 = vpop.f32.mrf.mxu0
    %v2547 = vadd.f32 %v2248, %v2546
    %2548 = vmatmul.f32.gmra.mxu0 %v1977
    %v2549 = vpop.f32.mrf.mxu0
    %v2550 = vadd.f32 %v2248, %v2549
    %2551 = vmatmul.f32.gmra.mxu0 %v1978
    %v2552 = vpop.f32.mrf.mxu0
    %v2553 = vadd.f32 %v2248, %v2552
    %2554 = vmatmul.f32.gmra.mxu0 %v1979
    %v2555 = vpop.f32.mrf.mxu0
    %v2556 = vadd.f32 %v2248, %v2555
    %2557 = vmatmul.f32.gmra.mxu0 %v1980
    %v2558 = vpop.f32.mrf.mxu0
    %v2559 = vadd.f32 %v2248, %v2558
    %2560 = vmatmul.f32.gmra.mxu0 %v1981
    %v2561 = vpop.f32.mrf.mxu0
    %v2562 = vadd.f32 %v2248, %v2561
    %2563 = vmatmul.f32.gmra.mxu0 %v1982
    %v2564 = vpop.f32.mrf.mxu0
    %v2565 = vadd.f32 %v2248, %v2564
    %2566 = vmatmul.f32.gmra.mxu0 %v1983
    %v2567 = vpop.f32.mrf.mxu0
    %v2568 = vadd.f32 %v2248, %v2567
    %2569 = vmatmul.f32.gmra.mxu0 %v1984
    %v2570 = vpop.f32.mrf.mxu0
    %v2571 = vadd.f32 %v2248, %v2570
    %2572 = vmatmul.f32.gmra.mxu0 %v1985
    %v2573 = vpop.f32.mrf.mxu0
    %v2574 = vadd.f32 %v2248, %v2573
    %2575 = vmatmul.f32.gmra.mxu0 %v1986
    %v2576 = vpop.f32.mrf.mxu0
    %v2577 = vadd.f32 %v2248, %v2576
    %2578 = vmatmul.f32.gmra.mxu0 %v1987
    %v2579 = vpop.f32.mrf.mxu0
    %v2580 = vadd.f32 %v2248, %v2579
    %2581 = vmatmul.f32.gmra.mxu0 %v1994
    %v2582 = vpop.f32.mrf.mxu0
    %v2583 = vadd.f32 %v2248, %v2582
    %2584 = vmatmul.f32.gmra.mxu0 %v1995
    %v2585 = vpop.f32.mrf.mxu0
    %v2586 = vadd.f32 %v2248, %v2585
    %2587 = vmatmul.f32.gmra.mxu0 %v1996
    %v2588 = vpop.f32.mrf.mxu0
    %v2589 = vadd.f32 %v2248, %v2588
    %2590 = vmatmul.f32.gmra.mxu0 %v1997
    %v2591 = vpop.f32.mrf.mxu0
    %v2592 = vadd.f32 %v2248, %v2591
    %2593 = vmatmul.f32.gmra.mxu0 %v1998
    %v2594 = vpop.f32.mrf.mxu0
    %v2595 = vadd.f32 %v2248, %v2594
    %2596 = vmatmul.f32.gmra.mxu0 %v1999
    %v2597 = vpop.f32.mrf.mxu0
    %v2598 = vadd.f32 %v2248, %v2597
    %2599 = vmatmul.f32.gmra.mxu0 %v2000
    %v2600 = vpop.f32.mrf.mxu0
    %v2601 = vadd.f32 %v2248, %v2600
    %2602 = vmatmul.f32.gmra.mxu0 %v2001
    %v2603 = vpop.f32.mrf.mxu0
    %v2604 = vadd.f32 %v2248, %v2603
    %2605 = vmatmul.f32.gmra.mxu0 %v2002
    %v2606 = vpop.f32.mrf.mxu0
    %v2607 = vadd.f32 %v2248, %v2606
    %2608 = vmatmul.f32.gmra.mxu0 %v2003
    %v2609 = vpop.f32.mrf.mxu0
    %v2610 = vadd.f32 %v2248, %v2609
    %2611 = vmatmul.f32.gmra.mxu0 %v2004
    %v2612 = vpop.f32.mrf.mxu0
    %v2613 = vadd.f32 %v2248, %v2612
    %2614 = vmatmul.f32.gmra.mxu0 %v2005
    %v2615 = vpop.f32.mrf.mxu0
    %v2616 = vadd.f32 %v2248, %v2615
    %2617 = vmatmul.f32.gmra.mxu0 %v2006
    %v2618 = vpop.f32.mrf.mxu0
    %v2619 = vadd.f32 %v2248, %v2618
    %2620 = vmatmul.f32.gmra.mxu0 %v2007
    %v2621 = vpop.f32.mrf.mxu0
    %v2622 = vadd.f32 %v2248, %v2621
    %2623 = vmatmul.f32.gmra.mxu0 %v2008
    %v2624 = vpop.f32.mrf.mxu0
    %v2625 = vadd.f32 %v2248, %v2624
    %2626 = vmatmul.f32.gmra.mxu0 %v2009
    %v2627 = vpop.f32.mrf.mxu0
    %v2628 = vadd.f32 %v2248, %v2627
    %2629 = vmatmul.f32.gmra.mxu0 %v2010
    %v2630 = vpop.f32.mrf.mxu0
    %v2631 = vadd.f32 %v2248, %v2630
    %2632 = vmatmul.f32.gmra.mxu0 %v2011
    %v2633 = vpop.f32.mrf.mxu0
    %v2634 = vadd.f32 %v2248, %v2633
    %2635 = vmatmul.f32.gmra.mxu0 %v2012
    %v2636 = vpop.f32.mrf.mxu0
    %v2637 = vadd.f32 %v2248, %v2636
    %2638 = vmatmul.f32.gmra.mxu0 %v2013
    %v2639 = vpop.f32.mrf.mxu0
    %v2640 = vadd.f32 %v2248, %v2639
    %2641 = vmatmul.f32.gmra.mxu0 %v2014
    %v2642 = vpop.f32.mrf.mxu0
    %v2643 = vadd.f32 %v2248, %v2642
    %2644 = vmatmul.f32.gmra.mxu0 %v2021
    %v2645 = vpop.f32.mrf.mxu0
    %v2646 = vadd.f32 %v2248, %v2645
    %2647 = vmatmul.f32.gmra.mxu0 %v2022
    %v2648 = vpop.f32.mrf.mxu0
    %v2649 = vadd.f32 %v2248, %v2648
    %2650 = vmatmul.f32.gmra.mxu0 %v2023
    %v2651 = vpop.f32.mrf.mxu0
    %v2652 = vadd.f32 %v2248, %v2651
    %2653 = vmatmul.f32.gmra.mxu0 %v2024
    %v2654 = vpop.f32.mrf.mxu0
    %v2655 = vadd.f32 %v2248, %v2654
    %2656 = vmatmul.f32.gmra.mxu0 %v2025
    %v2657 = vpop.f32.mrf.mxu0
    %v2658 = vadd.f32 %v2248, %v2657
    %2659 = vmatmul.f32.gmra.mxu0 %v2026
    %v2660 = vpop.f32.mrf.mxu0
    %v2661 = vadd.f32 %v2248, %v2660
    %2662 = vmatmul.f32.gmra.mxu0 %v2027
    %v2663 = vpop.f32.mrf.mxu0
    %v2664 = vadd.f32 %v2248, %v2663
    %2665 = vmatmul.f32.gmra.mxu0 %v2028
    %v2666 = vpop.f32.mrf.mxu0
    %v2667 = vadd.f32 %v2248, %v2666
    %2668 = vmatmul.f32.gmra.mxu0 %v2029
    %v2669 = vpop.f32.mrf.mxu0
    %v2670 = vadd.f32 %v2248, %v2669
    %2671 = vmatmul.f32.gmra.mxu0 %v2030
    %v2672 = vpop.f32.mrf.mxu0
    %v2673 = vadd.f32 %v2248, %v2672
    %2674 = vmatmul.f32.gmra.mxu0 %v2031
    %v2675 = vpop.f32.mrf.mxu0
    %v2676 = vadd.f32 %v2248, %v2675
    %2677 = vmatmul.f32.gmra.mxu0 %v2032
    %v2678 = vpop.f32.mrf.mxu0
    %v2679 = vadd.f32 %v2248, %v2678
    %2680 = vmatmul.f32.gmra.mxu0 %v2033
    %v2681 = vpop.f32.mrf.mxu0
    %v2682 = vadd.f32 %v2248, %v2681
    %2683 = vmatmul.f32.gmra.mxu0 %v2034
    %v2684 = vpop.f32.mrf.mxu0
    %v2685 = vadd.f32 %v2248, %v2684
    %2686 = vmatmul.f32.gmra.mxu0 %v2035
    %v2687 = vpop.f32.mrf.mxu0
    %v2688 = vadd.f32 %v2248, %v2687
    %2689 = vmatmul.f32.gmra.mxu0 %v2036
    %v2690 = vpop.f32.mrf.mxu0
    %v2691 = vadd.f32 %v2248, %v2690
    %2692 = vmatmul.f32.gmra.mxu0 %v2037
    %v2693 = vpop.f32.mrf.mxu0
    %v2694 = vadd.f32 %v2248, %v2693
    %2695 = vmatmul.f32.gmra.mxu0 %v2038
    %v2696 = vpop.f32.mrf.mxu0
    %v2697 = vadd.f32 %v2248, %v2696
    %2698 = vmatmul.f32.gmra.mxu0 %v2039
    %v2699 = vpop.f32.mrf.mxu0
    %v2700 = vadd.f32 %v2248, %v2699
    %2701 = vmatmul.f32.gmra.mxu0 %v2040
    %v2702 = vpop.f32.mrf.mxu0
    %v2703 = vadd.f32 %v2248, %v2702
    %2704 = vmatmul.f32.gmra.mxu0 %v2041
    %v2705 = vpop.f32.mrf.mxu0
    %v2706 = vadd.f32 %v2248, %v2705
    %2707 = vdwg.mxu0
    %2708 = vmatpush.msra.mxu0 %v2133
    %2709 = vmatpush.msra.mxu0 %v2132
    %2710 = vmatpush.msra.mxu0 %v2131
    %2711 = vmatpush.msra.mxu0 %v2130
    %2712 = vmatpush.msra.mxu0 %v2129
    %2713 = vmatpush.msra.mxu0 %v2128
    %2714 = vmatpush.msra.mxu0 %v2127
    %2715 = vmatpush.msra.mxu0 %v2126
    %2716 = vmatpush.msra.mxu0 %v2125
    %2717 = vmatpush.msra.mxu0 %v2124
    %2718 = vmatpush.msra.mxu0 %v2123
    %2719 = vmatpush.msra.mxu0 %v2122
    %2720 = vmatpush.msra.mxu0 %v2121
    %2721 = vmatpush.msra.mxu0 %v2120
    %2722 = vmatpush.msra.mxu0 %v2119
    %2723 = vmatpush.msra.mxu0 %v2118
    %2724 = vmatmul.f32.gmra.mxu0 %v1862
    %v2725 = vpop.f32.mrf.mxu0
    %v2726 = vadd.f32 %v2268, %v2725
    %2727 = vmatmul.f32.gmra.mxu0 %v1863
    %v2728 = vpop.f32.mrf.mxu0
    %v2729 = vadd.f32 %v2271, %v2728
    %2730 = vmatmul.f32.gmra.mxu0 %v1864
    %v2731 = vpop.f32.mrf.mxu0
    %v2732 = vadd.f32 %v2274, %v2731
    %2733 = vmatmul.f32.gmra.mxu0 %v1865
    %v2734 = vpop.f32.mrf.mxu0
    %v2735 = vadd.f32 %v2277, %v2734
    %2736 = vmatmul.f32.gmra.mxu0 %v1866
    %v2737 = vpop.f32.mrf.mxu0
    %v2738 = vadd.f32 %v2280, %v2737
    %2739 = vmatmul.f32.gmra.mxu0 %v1867
    %v2740 = vpop.f32.mrf.mxu0
    %v2741 = vadd.f32 %v2283, %v2740
    %2742 = vmatmul.f32.gmra.mxu0 %v1868
    %v2743 = vpop.f32.mrf.mxu0
    %v2744 = vadd.f32 %v2286, %v2743
    %2745 = vmatmul.f32.gmra.mxu0 %v1869
    %v2746 = vpop.f32.mrf.mxu0
    %v2747 = vadd.f32 %v2289, %v2746
    %2748 = vmatmul.f32.gmra.mxu0 %v1870
    %v2749 = vpop.f32.mrf.mxu0
    %v2750 = vadd.f32 %v2292, %v2749
    %2751 = vmatmul.f32.gmra.mxu0 %v1871
    %v2752 = vpop.f32.mrf.mxu0
    %v2753 = vadd.f32 %v2295, %v2752
    %2754 = vmatmul.f32.gmra.mxu0 %v1872
    %v2755 = vpop.f32.mrf.mxu0
    %v2756 = vadd.f32 %v2298, %v2755
    %2757 = vmatmul.f32.gmra.mxu0 %v1873
    %v2758 = vpop.f32.mrf.mxu0
    %v2759 = vadd.f32 %v2301, %v2758
    %2760 = vmatmul.f32.gmra.mxu0 %v1874
    %v2761 = vpop.f32.mrf.mxu0
    %v2762 = vadd.f32 %v2304, %v2761
    %2763 = vmatmul.f32.gmra.mxu0 %v1875
    %v2764 = vpop.f32.mrf.mxu0
    %v2765 = vadd.f32 %v2307, %v2764
    %2766 = vmatmul.f32.gmra.mxu0 %v1876
    %v2767 = vpop.f32.mrf.mxu0
    %v2768 = vadd.f32 %v2310, %v2767
    %2769 = vmatmul.f32.gmra.mxu0 %v1877
    %v2770 = vpop.f32.mrf.mxu0
    %v2771 = vadd.f32 %v2313, %v2770
    %2772 = vmatmul.f32.gmra.mxu0 %v1878
    %v2773 = vpop.f32.mrf.mxu0
    %v2774 = vadd.f32 %v2316, %v2773
    %2775 = vmatmul.f32.gmra.mxu0 %v1879
    %v2776 = vpop.f32.mrf.mxu0
    %v2777 = vadd.f32 %v2319, %v2776
    %2778 = vmatmul.f32.gmra.mxu0 %v1880
    %v2779 = vpop.f32.mrf.mxu0
    %v2780 = vadd.f32 %v2322, %v2779
    %2781 = vmatmul.f32.gmra.mxu0 %v1881
    %v2782 = vpop.f32.mrf.mxu0
    %v2783 = vadd.f32 %v2325, %v2782
    %2784 = vmatmul.f32.gmra.mxu0 %v1882
    %v2785 = vpop.f32.mrf.mxu0
    %v2786 = vadd.f32 %v2328, %v2785
    %2787 = vmatmul.f32.gmra.mxu0 %v1889
    %v2788 = vpop.f32.mrf.mxu0
    %v2789 = vadd.f32 %v2331, %v2788
    %2790 = vmatmul.f32.gmra.mxu0 %v1890
    %v2791 = vpop.f32.mrf.mxu0
    %v2792 = vadd.f32 %v2334, %v2791
    %2793 = vmatmul.f32.gmra.mxu0 %v1891
    %v2794 = vpop.f32.mrf.mxu0
    %v2795 = vadd.f32 %v2337, %v2794
    %2796 = vmatmul.f32.gmra.mxu0 %v1892
    %v2797 = vpop.f32.mrf.mxu0
    %v2798 = vadd.f32 %v2340, %v2797
    %2799 = vmatmul.f32.gmra.mxu0 %v1893
    %v2800 = vpop.f32.mrf.mxu0
    %v2801 = vadd.f32 %v2343, %v2800
    %2802 = vmatmul.f32.gmra.mxu0 %v1894
    %v2803 = vpop.f32.mrf.mxu0
    %v2804 = vadd.f32 %v2346, %v2803
    %2805 = vmatmul.f32.gmra.mxu0 %v1895
    %v2806 = vpop.f32.mrf.mxu0
    %v2807 = vadd.f32 %v2349, %v2806
    %2808 = vmatmul.f32.gmra.mxu0 %v1896
    %v2809 = vpop.f32.mrf.mxu0
    %v2810 = vadd.f32 %v2352, %v2809
    %2811 = vmatmul.f32.gmra.mxu0 %v1897
    %v2812 = vpop.f32.mrf.mxu0
    %v2813 = vadd.f32 %v2355, %v2812
    %2814 = vmatmul.f32.gmra.mxu0 %v1898
    %v2815 = vpop.f32.mrf.mxu0
    %v2816 = vadd.f32 %v2358, %v2815
    %2817 = vmatmul.f32.gmra.mxu0 %v1899
    %v2818 = vpop.f32.mrf.mxu0
    %v2819 = vadd.f32 %v2361, %v2818
    %2820 = vmatmul.f32.gmra.mxu0 %v1900
    %v2821 = vpop.f32.mrf.mxu0
    %v2822 = vadd.f32 %v2364, %v2821
    %2823 = vmatmul.f32.gmra.mxu0 %v1901
    %v2824 = vpop.f32.mrf.mxu0
    %v2825 = vadd.f32 %v2367, %v2824
    %2826 = vmatmul.f32.gmra.mxu0 %v1902
    %v2827 = vpop.f32.mrf.mxu0
    %v2828 = vadd.f32 %v2370, %v2827
    %2829 = vmatmul.f32.gmra.mxu0 %v1903
    %v2830 = vpop.f32.mrf.mxu0
    %v2831 = vadd.f32 %v2373, %v2830
    %2832 = vmatmul.f32.gmra.mxu0 %v1904
    %v2833 = vpop.f32.mrf.mxu0
    %v2834 = vadd.f32 %v2376, %v2833
    %2835 = vmatmul.f32.gmra.mxu0 %v1905
    %v2836 = vpop.f32.mrf.mxu0
    %v2837 = vadd.f32 %v2379, %v2836
    %2838 = vmatmul.f32.gmra.mxu0 %v1906
    %v2839 = vpop.f32.mrf.mxu0
    %v2840 = vadd.f32 %v2382, %v2839
    %2841 = vmatmul.f32.gmra.mxu0 %v1907
    %v2842 = vpop.f32.mrf.mxu0
    %v2843 = vadd.f32 %v2385, %v2842
    %2844 = vmatmul.f32.gmra.mxu0 %v1908
    %v2845 = vpop.f32.mrf.mxu0
    %v2846 = vadd.f32 %v2388, %v2845
    %2847 = vmatmul.f32.gmra.mxu0 %v1909
    %v2848 = vpop.f32.mrf.mxu0
    %v2849 = vadd.f32 %v2391, %v2848
    %2850 = vmatmul.f32.gmra.mxu0 %v1916
    %v2851 = vpop.f32.mrf.mxu0
    %v2852 = vadd.f32 %v2394, %v2851
    %2853 = vmatmul.f32.gmra.mxu0 %v1917
    %v2854 = vpop.f32.mrf.mxu0
    %v2855 = vadd.f32 %v2397, %v2854
    %2856 = vmatmul.f32.gmra.mxu0 %v1918
    %v2857 = vpop.f32.mrf.mxu0
    %v2858 = vadd.f32 %v2400, %v2857
    %2859 = vmatmul.f32.gmra.mxu0 %v1919
    %v2860 = vpop.f32.mrf.mxu0
    %v2861 = vadd.f32 %v2403, %v2860
    %2862 = vmatmul.f32.gmra.mxu0 %v1920
    %v2863 = vpop.f32.mrf.mxu0
    %v2864 = vadd.f32 %v2406, %v2863
    %2865 = vmatmul.f32.gmra.mxu0 %v1921
    %v2866 = vpop.f32.mrf.mxu0
    %v2867 = vadd.f32 %v2409, %v2866
    %2868 = vmatmul.f32.gmra.mxu0 %v1922
    %v2869 = vpop.f32.mrf.mxu0
    %v2870 = vadd.f32 %v2412, %v2869
    %2871 = vmatmul.f32.gmra.mxu0 %v1923
    %v2872 = vpop.f32.mrf.mxu0
    %v2873 = vadd.f32 %v2415, %v2872
    %2874 = vmatmul.f32.gmra.mxu0 %v1924
    %v2875 = vpop.f32.mrf.mxu0
    %v2876 = vadd.f32 %v2418, %v2875
    %2877 = vmatmul.f32.gmra.mxu0 %v1925
    %v2878 = vpop.f32.mrf.mxu0
    %v2879 = vadd.f32 %v2421, %v2878
    %2880 = vmatmul.f32.gmra.mxu0 %v1926
    %v2881 = vpop.f32.mrf.mxu0
    %v2882 = vadd.f32 %v2424, %v2881
    %2883 = vmatmul.f32.gmra.mxu0 %v1927
    %v2884 = vpop.f32.mrf.mxu0
    %v2885 = vadd.f32 %v2427, %v2884
    %2886 = vmatmul.f32.gmra.mxu0 %v1928
    %v2887 = vpop.f32.mrf.mxu0
    %v2888 = vadd.f32 %v2430, %v2887
    %2889 = vmatmul.f32.gmra.mxu0 %v1929
    %v2890 = vpop.f32.mrf.mxu0
    %v2891 = vadd.f32 %v2433, %v2890
    %2892 = vmatmul.f32.gmra.mxu0 %v1930
    %v2893 = vpop.f32.mrf.mxu0
    %v2894 = vadd.f32 %v2436, %v2893
    %2895 = vmatmul.f32.gmra.mxu0 %v1931
    %v2896 = vpop.f32.mrf.mxu0
    %v2897 = vadd.f32 %v2439, %v2896
    %2898 = vmatmul.f32.gmra.mxu0 %v1932
    %v2899 = vpop.f32.mrf.mxu0
    %v2900 = vadd.f32 %v2442, %v2899
    %2901 = vmatmul.f32.gmra.mxu0 %v1933
    %v2902 = vpop.f32.mrf.mxu0
    %v2903 = vadd.f32 %v2445, %v2902
    %2904 = vmatmul.f32.gmra.mxu0 %v1934
    %v2905 = vpop.f32.mrf.mxu0
    %v2906 = vadd.f32 %v2448, %v2905
    %2907 = vmatmul.f32.gmra.mxu0 %v1935
    %v2908 = vpop.f32.mrf.mxu0
    %v2909 = vadd.f32 %v2451, %v2908
    %2910 = vmatmul.f32.gmra.mxu0 %v1936
    %v2911 = vpop.f32.mrf.mxu0
    %v2912 = vadd.f32 %v2454, %v2911
    %2913 = vmatmul.f32.gmra.mxu0 %v1943
    %v2914 = vpop.f32.mrf.mxu0
    %v2915 = vadd.f32 %v2457, %v2914
    %2916 = vmatmul.f32.gmra.mxu0 %v1944
    %v2917 = vpop.f32.mrf.mxu0
    %v2918 = vadd.f32 %v2460, %v2917
    %2919 = vmatmul.f32.gmra.mxu0 %v1945
    %v2920 = vpop.f32.mrf.mxu0
    %v2921 = vadd.f32 %v2463, %v2920
    %2922 = vmatmul.f32.gmra.mxu0 %v1946
    %v2923 = vpop.f32.mrf.mxu0
    %v2924 = vadd.f32 %v2466, %v2923
    %2925 = vmatmul.f32.gmra.mxu0 %v1947
    %v2926 = vpop.f32.mrf.mxu0
    %v2927 = vadd.f32 %v2469, %v2926
    %2928 = vmatmul.f32.gmra.mxu0 %v1948
    %v2929 = vpop.f32.mrf.mxu0
    %v2930 = vadd.f32 %v2472, %v2929
    %2931 = vmatmul.f32.gmra.mxu0 %v1949
    %v2932 = vpop.f32.mrf.mxu0
    %v2933 = vadd.f32 %v2475, %v2932
    %2934 = vmatmul.f32.gmra.mxu0 %v1950
    %v2935 = vpop.f32.mrf.mxu0
    %v2936 = vadd.f32 %v2478, %v2935
    %2937 = vmatmul.f32.gmra.mxu0 %v1951
    %v2938 = vpop.f32.mrf.mxu0
    %v2939 = vadd.f32 %v2481, %v2938
    %2940 = vmatmul.f32.gmra.mxu0 %v1952
    %v2941 = vpop.f32.mrf.mxu0
    %v2942 = vadd.f32 %v2484, %v2941
    %2943 = vmatmul.f32.gmra.mxu0 %v1953
    %v2944 = vpop.f32.mrf.mxu0
    %v2945 = vadd.f32 %v2487, %v2944
    %2946 = vmatmul.f32.gmra.mxu0 %v1954
    %v2947 = vpop.f32.mrf.mxu0
    %v2948 = vadd.f32 %v2490, %v2947
    %2949 = vmatmul.f32.gmra.mxu0 %v1955
    %v2950 = vpop.f32.mrf.mxu0
    %v2951 = vadd.f32 %v2493, %v2950
    %2952 = vmatmul.f32.gmra.mxu0 %v1956
    %v2953 = vpop.f32.mrf.mxu0
    %v2954 = vadd.f32 %v2496, %v2953
    %2955 = vmatmul.f32.gmra.mxu0 %v1957
    %v2956 = vpop.f32.mrf.mxu0
    %v2957 = vadd.f32 %v2499, %v2956
    %2958 = vmatmul.f32.gmra.mxu0 %v1958
    %v2959 = vpop.f32.mrf.mxu0
    %v2960 = vadd.f32 %v2502, %v2959
    %2961 = vmatmul.f32.gmra.mxu0 %v1959
    %v2962 = vpop.f32.mrf.mxu0
    %v2963 = vadd.f32 %v2505, %v2962
    %2964 = vmatmul.f32.gmra.mxu0 %v1960
    %v2965 = vpop.f32.mrf.mxu0
    %v2966 = vadd.f32 %v2508, %v2965
    %2967 = vmatmul.f32.gmra.mxu0 %v1961
    %v2968 = vpop.f32.mrf.mxu0
    %v2969 = vadd.f32 %v2511, %v2968
    %2970 = vmatmul.f32.gmra.mxu0 %v1962
    %v2971 = vpop.f32.mrf.mxu0
    %v2972 = vadd.f32 %v2514, %v2971
    %2973 = vmatmul.f32.gmra.mxu0 %v1963
    %v2974 = vpop.f32.mrf.mxu0
    %v2975 = vadd.f32 %v2517, %v2974
    %2976 = vmatmul.f32.gmra.mxu0 %v1970
    %v2977 = vpop.f32.mrf.mxu0
    %v2978 = vadd.f32 %v2520, %v2977
    %2979 = vmatmul.f32.gmra.mxu0 %v1971
    %v2980 = vpop.f32.mrf.mxu0
    %v2981 = vadd.f32 %v2523, %v2980
    %2982 = vmatmul.f32.gmra.mxu0 %v1972
    %v2983 = vpop.f32.mrf.mxu0
    %v2984 = vadd.f32 %v2526, %v2983
    %2985 = vmatmul.f32.gmra.mxu0 %v1973
    %v2986 = vpop.f32.mrf.mxu0
    %v2987 = vadd.f32 %v2529, %v2986
    %2988 = vmatmul.f32.gmra.mxu0 %v1974
    %v2989 = vpop.f32.mrf.mxu0
    %v2990 = vadd.f32 %v2532, %v2989
    %2991 = vmatmul.f32.gmra.mxu0 %v1975
    %v2992 = vpop.f32.mrf.mxu0
    %v2993 = vadd.f32 %v2535, %v2992
    %2994 = vmatmul.f32.gmra.mxu0 %v1976
    %v2995 = vpop.f32.mrf.mxu0
    %v2996 = vadd.f32 %v2538, %v2995
    %2997 = vmatmul.f32.gmra.mxu0 %v1977
    %v2998 = vpop.f32.mrf.mxu0
    %v2999 = vadd.f32 %v2541, %v2998
    %3000 = vmatmul.f32.gmra.mxu0 %v1978
    %v3001 = vpop.f32.mrf.mxu0
    %v3002 = vadd.f32 %v2544, %v3001
    %3003 = vmatmul.f32.gmra.mxu0 %v1979
    %v3004 = vpop.f32.mrf.mxu0
    %v3005 = vadd.f32 %v2547, %v3004
    %3006 = vmatmul.f32.gmra.mxu0 %v1980
    %v3007 = vpop.f32.mrf.mxu0
    %v3008 = vadd.f32 %v2550, %v3007
    %3009 = vmatmul.f32.gmra.mxu0 %v1981
    %v3010 = vpop.f32.mrf.mxu0
    %v3011 = vadd.f32 %v2553, %v3010
    %3012 = vmatmul.f32.gmra.mxu0 %v1982
    %v3013 = vpop.f32.mrf.mxu0
    %v3014 = vadd.f32 %v2556, %v3013
    %3015 = vmatmul.f32.gmra.mxu0 %v1983
    %v3016 = vpop.f32.mrf.mxu0
    %v3017 = vadd.f32 %v2559, %v3016
    %3018 = vmatmul.f32.gmra.mxu0 %v1984
    %v3019 = vpop.f32.mrf.mxu0
    %v3020 = vadd.f32 %v2562, %v3019
    %3021 = vmatmul.f32.gmra.mxu0 %v1985
    %v3022 = vpop.f32.mrf.mxu0
    %v3023 = vadd.f32 %v2565, %v3022
    %3024 = vmatmul.f32.gmra.mxu0 %v1986
    %v3025 = vpop.f32.mrf.mxu0
    %v3026 = vadd.f32 %v2568, %v3025
    %3027 = vmatmul.f32.gmra.mxu0 %v1987
    %v3028 = vpop.f32.mrf.mxu0
    %v3029 = vadd.f32 %v2571, %v3028
    %3030 = vmatmul.f32.gmra.mxu0 %v1988
    %v3031 = vpop.f32.mrf.mxu0
    %v3032 = vadd.f32 %v2574, %v3031
    %3033 = vmatmul.f32.gmra.mxu0 %v1989
    %v3034 = vpop.f32.mrf.mxu0
    %v3035 = vadd.f32 %v2577, %v3034
    %3036 = vmatmul.f32.gmra.mxu0 %v1990
    %v3037 = vpop.f32.mrf.mxu0
    %v3038 = vadd.f32 %v2580, %v3037
    %3039 = vmatmul.f32.gmra.mxu0 %v1997
    %v3040 = vpop.f32.mrf.mxu0
    %v3041 = vadd.f32 %v2583, %v3040
    %3042 = vmatmul.f32.gmra.mxu0 %v1998
    %v3043 = vpop.f32.mrf.mxu0
    %v3044 = vadd.f32 %v2586, %v3043
    %3045 = vmatmul.f32.gmra.mxu0 %v1999
    %v3046 = vpop.f32.mrf.mxu0
    %v3047 = vadd.f32 %v2589, %v3046
    %3048 = vmatmul.f32.gmra.mxu0 %v2000
    %v3049 = vpop.f32.mrf.mxu0
    %v3050 = vadd.f32 %v2592, %v3049
    %3051 = vmatmul.f32.gmra.mxu0 %v2001
    %v3052 = vpop.f32.mrf.mxu0
    %v3053 = vadd.f32 %v2595, %v3052
    %3054 = vmatmul.f32.gmra.mxu0 %v2002
    %v3055 = vpop.f32.mrf.mxu0
    %v3056 = vadd.f32 %v2598, %v3055
    %3057 = vmatmul.f32.gmra.mxu0 %v2003
    %v3058 = vpop.f32.mrf.mxu0
    %v3059 = vadd.f32 %v2601, %v3058
    %3060 = vmatmul.f32.gmra.mxu0 %v2004
    %v3061 = vpop.f32.mrf.mxu0
    %v3062 = vadd.f32 %v2604, %v3061
    %3063 = vmatmul.f32.gmra.mxu0 %v2005
    %v3064 = vpop.f32.mrf.mxu0
    %v3065 = vadd.f32 %v2607, %v3064
    %3066 = vmatmul.f32.gmra.mxu0 %v2006
    %v3067 = vpop.f32.mrf.mxu0
    %v3068 = vadd.f32 %v2610, %v3067
    %3069 = vmatmul.f32.gmra.mxu0 %v2007
    %v3070 = vpop.f32.mrf.mxu0
    %v3071 = vadd.f32 %v2613, %v3070
    %3072 = vmatmul.f32.gmra.mxu0 %v2008
    %v3073 = vpop.f32.mrf.mxu0
    %v3074 = vadd.f32 %v2616, %v3073
    %3075 = vmatmul.f32.gmra.mxu0 %v2009
    %v3076 = vpop.f32.mrf.mxu0
    %v3077 = vadd.f32 %v2619, %v3076
    %3078 = vmatmul.f32.gmra.mxu0 %v2010
    %v3079 = vpop.f32.mrf.mxu0
    %v3080 = vadd.f32 %v2622, %v3079
    %3081 = vmatmul.f32.gmra.mxu0 %v2011
    %v3082 = vpop.f32.mrf.mxu0
    %v3083 = vadd.f32 %v2625, %v3082
    %3084 = vmatmul.f32.gmra.mxu0 %v2012
    %v3085 = vpop.f32.mrf.mxu0
    %v3086 = vadd.f32 %v2628, %v3085
    %3087 = vmatmul.f32.gmra.mxu0 %v2013
    %v3088 = vpop.f32.mrf.mxu0
    %v3089 = vadd.f32 %v2631, %v3088
    %3090 = vmatmul.f32.gmra.mxu0 %v2014
    %v3091 = vpop.f32.mrf.mxu0
    %v3092 = vadd.f32 %v2634, %v3091
    %3093 = vmatmul.f32.gmra.mxu0 %v2015
    %v3094 = vpop.f32.mrf.mxu0
    %v3095 = vadd.f32 %v2637, %v3094
    %3096 = vmatmul.f32.gmra.mxu0 %v2016
    %v3097 = vpop.f32.mrf.mxu0
    %v3098 = vadd.f32 %v2640, %v3097
    %3099 = vmatmul.f32.gmra.mxu0 %v2017
    %v3100 = vpop.f32.mrf.mxu0
    %v3101 = vadd.f32 %v2643, %v3100
    %3102 = vmatmul.f32.gmra.mxu0 %v2024
    %v3103 = vpop.f32.mrf.mxu0
    %v3104 = vadd.f32 %v2646, %v3103
    %3105 = vmatmul.f32.gmra.mxu0 %v2025
    %v3106 = vpop.f32.mrf.mxu0
    %v3107 = vadd.f32 %v2649, %v3106
    %3108 = vmatmul.f32.gmra.mxu0 %v2026
    %v3109 = vpop.f32.mrf.mxu0
    %v3110 = vadd.f32 %v2652, %v3109
    %3111 = vmatmul.f32.gmra.mxu0 %v2027
    %v3112 = vpop.f32.mrf.mxu0
    %v3113 = vadd.f32 %v2655, %v3112
    %3114 = vmatmul.f32.gmra.mxu0 %v2028
    %v3115 = vpop.f32.mrf.mxu0
    %v3116 = vadd.f32 %v2658, %v3115
    %3117 = vmatmul.f32.gmra.mxu0 %v2029
    %v3118 = vpop.f32.mrf.mxu0
    %v3119 = vadd.f32 %v2661, %v3118
    %3120 = vmatmul.f32.gmra.mxu0 %v2030
    %v3121 = vpop.f32.mrf.mxu0
    %v3122 = vadd.f32 %v2664, %v3121
    %3123 = vmatmul.f32.gmra.mxu0 %v2031
    %v3124 = vpop.f32.mrf.mxu0
    %v3125 = vadd.f32 %v2667, %v3124
    %3126 = vmatmul.f32.gmra.mxu0 %v2032
    %v3127 = vpop.f32.mrf.mxu0
    %v3128 = vadd.f32 %v2670, %v3127
    %3129 = vmatmul.f32.gmra.mxu0 %v2033
    %v3130 = vpop.f32.mrf.mxu0
    %v3131 = vadd.f32 %v2673, %v3130
    %3132 = vmatmul.f32.gmra.mxu0 %v2034
    %v3133 = vpop.f32.mrf.mxu0
    %v3134 = vadd.f32 %v2676, %v3133
    %3135 = vmatmul.f32.gmra.mxu0 %v2035
    %v3136 = vpop.f32.mrf.mxu0
    %v3137 = vadd.f32 %v2679, %v3136
    %3138 = vmatmul.f32.gmra.mxu0 %v2036
    %v3139 = vpop.f32.mrf.mxu0
    %v3140 = vadd.f32 %v2682, %v3139
    %3141 = vmatmul.f32.gmra.mxu0 %v2037
    %v3142 = vpop.f32.mrf.mxu0
    %v3143 = vadd.f32 %v2685, %v3142
    %3144 = vmatmul.f32.gmra.mxu0 %v2038
    %v3145 = vpop.f32.mrf.mxu0
    %v3146 = vadd.f32 %v2688, %v3145
    %3147 = vmatmul.f32.gmra.mxu0 %v2039
    %v3148 = vpop.f32.mrf.mxu0
    %v3149 = vadd.f32 %v2691, %v3148
    %3150 = vmatmul.f32.gmra.mxu0 %v2040
    %v3151 = vpop.f32.mrf.mxu0
    %v3152 = vadd.f32 %v2694, %v3151
    %3153 = vmatmul.f32.gmra.mxu0 %v2041
    %v3154 = vpop.f32.mrf.mxu0
    %v3155 = vadd.f32 %v2697, %v3154
    %3156 = vmatmul.f32.gmra.mxu0 %v2042
    %v3157 = vpop.f32.mrf.mxu0
    %v3158 = vadd.f32 %v2700, %v3157
    %3159 = vmatmul.f32.gmra.mxu0 %v2043
    %v3160 = vpop.f32.mrf.mxu0
    %v3161 = vadd.f32 %v2703, %v3160
    %3162 = vmatmul.f32.gmra.mxu0 %v2044
    %v3163 = vpop.f32.mrf.mxu0
    %v3164 = vadd.f32 %v2706, %v3163
    %3165 = vdwg.mxu0
    %3166 = vmatpush.msra.mxu0 %v2149
    %3167 = vmatpush.msra.mxu0 %v2148
    %3168 = vmatpush.msra.mxu0 %v2147
    %3169 = vmatpush.msra.mxu0 %v2146
    %3170 = vmatpush.msra.mxu0 %v2145
    %3171 = vmatpush.msra.mxu0 %v2144
    %3172 = vmatpush.msra.mxu0 %v2143
    %3173 = vmatpush.msra.mxu0 %v2142
    %3174 = vmatpush.msra.mxu0 %v2141
    %3175 = vmatpush.msra.mxu0 %v2140
    %3176 = vmatpush.msra.mxu0 %v2139
    %3177 = vmatpush.msra.mxu0 %v2138
    %3178 = vmatpush.msra.mxu0 %v2137
    %3179 = vmatpush.msra.mxu0 %v2136
    %3180 = vmatpush.msra.mxu0 %v2135
    %3181 = vmatpush.msra.mxu0 %v2134
    %3182 = vmatmul.f32.gmra.mxu0 %v1865
    %v3183 = vpop.f32.mrf.mxu0
    %v3184 = vadd.f32 %v2726, %v3183
    %3185 = vmatmul.f32.gmra.mxu0 %v1866
    %v3186 = vpop.f32.mrf.mxu0
    %v3187 = vadd.f32 %v2729, %v3186
    %3188 = vmatmul.f32.gmra.mxu0 %v1867
    %v3189 = vpop.f32.mrf.mxu0
    %v3190 = vadd.f32 %v2732, %v3189
    %3191 = vmatmul.f32.gmra.mxu0 %v1868
    %v3192 = vpop.f32.mrf.mxu0
    %v3193 = vadd.f32 %v2735, %v3192
    %3194 = vmatmul.f32.gmra.mxu0 %v1869
    %v3195 = vpop.f32.mrf.mxu0
    %v3196 = vadd.f32 %v2738, %v3195
    %3197 = vmatmul.f32.gmra.mxu0 %v1870
    %v3198 = vpop.f32.mrf.mxu0
    %v3199 = vadd.f32 %v2741, %v3198
    %3200 = vmatmul.f32.gmra.mxu0 %v1871
    %v3201 = vpop.f32.mrf.mxu0
    %v3202 = vadd.f32 %v2744, %v3201
    %3203 = vmatmul.f32.gmra.mxu0 %v1872
    %v3204 = vpop.f32.mrf.mxu0
    %v3205 = vadd.f32 %v2747, %v3204
    %3206 = vmatmul.f32.gmra.mxu0 %v1873
    %v3207 = vpop.f32.mrf.mxu0
    %v3208 = vadd.f32 %v2750, %v3207
    %3209 = vmatmul.f32.gmra.mxu0 %v1874
    %v3210 = vpop.f32.mrf.mxu0
    %v3211 = vadd.f32 %v2753, %v3210
    %3212 = vmatmul.f32.gmra.mxu0 %v1875
    %v3213 = vpop.f32.mrf.mxu0
    %v3214 = vadd.f32 %v2756, %v3213
    %3215 = vmatmul.f32.gmra.mxu0 %v1876
    %v3216 = vpop.f32.mrf.mxu0
    %v3217 = vadd.f32 %v2759, %v3216
    %3218 = vmatmul.f32.gmra.mxu0 %v1877
    %v3219 = vpop.f32.mrf.mxu0
    %v3220 = vadd.f32 %v2762, %v3219
    %3221 = vmatmul.f32.gmra.mxu0 %v1878
    %v3222 = vpop.f32.mrf.mxu0
    %v3223 = vadd.f32 %v2765, %v3222
    %3224 = vmatmul.f32.gmra.mxu0 %v1879
    %v3225 = vpop.f32.mrf.mxu0
    %v3226 = vadd.f32 %v2768, %v3225
    %3227 = vmatmul.f32.gmra.mxu0 %v1880
    %v3228 = vpop.f32.mrf.mxu0
    %v3229 = vadd.f32 %v2771, %v3228
    %3230 = vmatmul.f32.gmra.mxu0 %v1881
    %v3231 = vpop.f32.mrf.mxu0
    %v3232 = vadd.f32 %v2774, %v3231
    %3233 = vmatmul.f32.gmra.mxu0 %v1882
    %v3234 = vpop.f32.mrf.mxu0
    %v3235 = vadd.f32 %v2777, %v3234
    %3236 = vmatmul.f32.gmra.mxu0 %v1883
    %v3237 = vpop.f32.mrf.mxu0
    %v3238 = vadd.f32 %v2780, %v3237
    %3239 = vmatmul.f32.gmra.mxu0 %v1884
    %v3240 = vpop.f32.mrf.mxu0
    %v3241 = vadd.f32 %v2783, %v3240
    %3242 = vmatmul.f32.gmra.mxu0 %v1885
    %v3243 = vpop.f32.mrf.mxu0
    %v3244 = vadd.f32 %v2786, %v3243
    %3245 = vmatmul.f32.gmra.mxu0 %v1892
    %v3246 = vpop.f32.mrf.mxu0
    %v3247 = vadd.f32 %v2789, %v3246
    %3248 = vmatmul.f32.gmra.mxu0 %v1893
    %v3249 = vpop.f32.mrf.mxu0
    %v3250 = vadd.f32 %v2792, %v3249
    %3251 = vmatmul.f32.gmra.mxu0 %v1894
    %v3252 = vpop.f32.mrf.mxu0
    %v3253 = vadd.f32 %v2795, %v3252
    %3254 = vmatmul.f32.gmra.mxu0 %v1895
    %v3255 = vpop.f32.mrf.mxu0
    %v3256 = vadd.f32 %v2798, %v3255
    %3257 = vmatmul.f32.gmra.mxu0 %v1896
    %v3258 = vpop.f32.mrf.mxu0
    %v3259 = vadd.f32 %v2801, %v3258
    %3260 = vmatmul.f32.gmra.mxu0 %v1897
    %v3261 = vpop.f32.mrf.mxu0
    %v3262 = vadd.f32 %v2804, %v3261
    %3263 = vmatmul.f32.gmra.mxu0 %v1898
    %v3264 = vpop.f32.mrf.mxu0
    %v3265 = vadd.f32 %v2807, %v3264
    %3266 = vmatmul.f32.gmra.mxu0 %v1899
    %v3267 = vpop.f32.mrf.mxu0
    %v3268 = vadd.f32 %v2810, %v3267
    %3269 = vmatmul.f32.gmra.mxu0 %v1900
    %v3270 = vpop.f32.mrf.mxu0
    %v3271 = vadd.f32 %v2813, %v3270
    %3272 = vmatmul.f32.gmra.mxu0 %v1901
    %v3273 = vpop.f32.mrf.mxu0
    %v3274 = vadd.f32 %v2816, %v3273
    %3275 = vmatmul.f32.gmra.mxu0 %v1902
    %v3276 = vpop.f32.mrf.mxu0
    %v3277 = vadd.f32 %v2819, %v3276
    %3278 = vmatmul.f32.gmra.mxu0 %v1903
    %v3279 = vpop.f32.mrf.mxu0
    %v3280 = vadd.f32 %v2822, %v3279
    %3281 = vmatmul.f32.gmra.mxu0 %v1904
    %v3282 = vpop.f32.mrf.mxu0
    %v3283 = vadd.f32 %v2825, %v3282
    %3284 = vmatmul.f32.gmra.mxu0 %v1905
    %v3285 = vpop.f32.mrf.mxu0
    %v3286 = vadd.f32 %v2828, %v3285
    %3287 = vmatmul.f32.gmra.mxu0 %v1906
    %v3288 = vpop.f32.mrf.mxu0
    %v3289 = vadd.f32 %v2831, %v3288
    %3290 = vmatmul.f32.gmra.mxu0 %v1907
    %v3291 = vpop.f32.mrf.mxu0
    %v3292 = vadd.f32 %v2834, %v3291
    %3293 = vmatmul.f32.gmra.mxu0 %v1908
    %v3294 = vpop.f32.mrf.mxu0
    %v3295 = vadd.f32 %v2837, %v3294
    %3296 = vmatmul.f32.gmra.mxu0 %v1909
    %v3297 = vpop.f32.mrf.mxu0
    %v3298 = vadd.f32 %v2840, %v3297
    %3299 = vmatmul.f32.gmra.mxu0 %v1910
    %v3300 = vpop.f32.mrf.mxu0
    %v3301 = vadd.f32 %v2843, %v3300
    %3302 = vmatmul.f32.gmra.mxu0 %v1911
    %v3303 = vpop.f32.mrf.mxu0
    %v3304 = vadd.f32 %v2846, %v3303
    %3305 = vmatmul.f32.gmra.mxu0 %v1912
    %v3306 = vpop.f32.mrf.mxu0
    %v3307 = vadd.f32 %v2849, %v3306
    %3308 = vmatmul.f32.gmra.mxu0 %v1919
    %v3309 = vpop.f32.mrf.mxu0
    %v3310 = vadd.f32 %v2852, %v3309
    %3311 = vmatmul.f32.gmra.mxu0 %v1920
    %v3312 = vpop.f32.mrf.mxu0
    %v3313 = vadd.f32 %v2855, %v3312
    %3314 = vmatmul.f32.gmra.mxu0 %v1921
    %v3315 = vpop.f32.mrf.mxu0
    %v3316 = vadd.f32 %v2858, %v3315
    %3317 = vmatmul.f32.gmra.mxu0 %v1922
    %v3318 = vpop.f32.mrf.mxu0
    %v3319 = vadd.f32 %v2861, %v3318
    %3320 = vmatmul.f32.gmra.mxu0 %v1923
    %v3321 = vpop.f32.mrf.mxu0
    %v3322 = vadd.f32 %v2864, %v3321
    %3323 = vmatmul.f32.gmra.mxu0 %v1924
    %v3324 = vpop.f32.mrf.mxu0
    %v3325 = vadd.f32 %v2867, %v3324
    %3326 = vmatmul.f32.gmra.mxu0 %v1925
    %v3327 = vpop.f32.mrf.mxu0
    %v3328 = vadd.f32 %v2870, %v3327
    %3329 = vmatmul.f32.gmra.mxu0 %v1926
    %v3330 = vpop.f32.mrf.mxu0
    %v3331 = vadd.f32 %v2873, %v3330
    %3332 = vmatmul.f32.gmra.mxu0 %v1927
    %v3333 = vpop.f32.mrf.mxu0
    %v3334 = vadd.f32 %v2876, %v3333
    %3335 = vmatmul.f32.gmra.mxu0 %v1928
    %v3336 = vpop.f32.mrf.mxu0
    %v3337 = vadd.f32 %v2879, %v3336
    %3338 = vmatmul.f32.gmra.mxu0 %v1929
    %v3339 = vpop.f32.mrf.mxu0
    %v3340 = vadd.f32 %v2882, %v3339
    %3341 = vmatmul.f32.gmra.mxu0 %v1930
    %v3342 = vpop.f32.mrf.mxu0
    %v3343 = vadd.f32 %v2885, %v3342
    %3344 = vmatmul.f32.gmra.mxu0 %v1931
    %v3345 = vpop.f32.mrf.mxu0
    %v3346 = vadd.f32 %v2888, %v3345
    %3347 = vmatmul.f32.gmra.mxu0 %v1932
    %v3348 = vpop.f32.mrf.mxu0
    %v3349 = vadd.f32 %v2891, %v3348
    %3350 = vmatmul.f32.gmra.mxu0 %v1933
    %v3351 = vpop.f32.mrf.mxu0
    %v3352 = vadd.f32 %v2894, %v3351
    %3353 = vmatmul.f32.gmra.mxu0 %v1934
    %v3354 = vpop.f32.mrf.mxu0
    %v3355 = vadd.f32 %v2897, %v3354
    %3356 = vmatmul.f32.gmra.mxu0 %v1935
    %v3357 = vpop.f32.mrf.mxu0
    %v3358 = vadd.f32 %v2900, %v3357
    %3359 = vmatmul.f32.gmra.mxu0 %v1936
    %v3360 = vpop.f32.mrf.mxu0
    %v3361 = vadd.f32 %v2903, %v3360
    %3362 = vmatmul.f32.gmra.mxu0 %v1937
    %v3363 = vpop.f32.mrf.mxu0
    %v3364 = vadd.f32 %v2906, %v3363
    %3365 = vmatmul.f32.gmra.mxu0 %v1938
    %v3366 = vpop.f32.mrf.mxu0
    %v3367 = vadd.f32 %v2909, %v3366
    %3368 = vmatmul.f32.gmra.mxu0 %v1939
    %v3369 = vpop.f32.mrf.mxu0
    %v3370 = vadd.f32 %v2912, %v3369
    %3371 = vmatmul.f32.gmra.mxu0 %v1946
    %v3372 = vpop.f32.mrf.mxu0
    %v3373 = vadd.f32 %v2915, %v3372
    %3374 = vmatmul.f32.gmra.mxu0 %v1947
    %v3375 = vpop.f32.mrf.mxu0
    %v3376 = vadd.f32 %v2918, %v3375
    %3377 = vmatmul.f32.gmra.mxu0 %v1948
    %v3378 = vpop.f32.mrf.mxu0
    %v3379 = vadd.f32 %v2921, %v3378
    %3380 = vmatmul.f32.gmra.mxu0 %v1949
    %v3381 = vpop.f32.mrf.mxu0
    %v3382 = vadd.f32 %v2924, %v3381
    %3383 = vmatmul.f32.gmra.mxu0 %v1950
    %v3384 = vpop.f32.mrf.mxu0
    %v3385 = vadd.f32 %v2927, %v3384
    %3386 = vmatmul.f32.gmra.mxu0 %v1951
    %v3387 = vpop.f32.mrf.mxu0
    %v3388 = vadd.f32 %v2930, %v3387
    %3389 = vmatmul.f32.gmra.mxu0 %v1952
    %v3390 = vpop.f32.mrf.mxu0
    %v3391 = vadd.f32 %v2933, %v3390
    %3392 = vmatmul.f32.gmra.mxu0 %v1953
    %v3393 = vpop.f32.mrf.mxu0
    %v3394 = vadd.f32 %v2936, %v3393
    %3395 = vmatmul.f32.gmra.mxu0 %v1954
    %v3396 = vpop.f32.mrf.mxu0
    %v3397 = vadd.f32 %v2939, %v3396
    %3398 = vmatmul.f32.gmra.mxu0 %v1955
    %v3399 = vpop.f32.mrf.mxu0
    %v3400 = vadd.f32 %v2942, %v3399
    %3401 = vmatmul.f32.gmra.mxu0 %v1956
    %v3402 = vpop.f32.mrf.mxu0
    %v3403 = vadd.f32 %v2945, %v3402
    %3404 = vmatmul.f32.gmra.mxu0 %v1957
    %v3405 = vpop.f32.mrf.mxu0
    %v3406 = vadd.f32 %v2948, %v3405
    %3407 = vmatmul.f32.gmra.mxu0 %v1958
    %v3408 = vpop.f32.mrf.mxu0
    %v3409 = vadd.f32 %v2951, %v3408
    %3410 = vmatmul.f32.gmra.mxu0 %v1959
    %v3411 = vpop.f32.mrf.mxu0
    %v3412 = vadd.f32 %v2954, %v3411
    %3413 = vmatmul.f32.gmra.mxu0 %v1960
    %v3414 = vpop.f32.mrf.mxu0
    %v3415 = vadd.f32 %v2957, %v3414
    %3416 = vmatmul.f32.gmra.mxu0 %v1961
    %v3417 = vpop.f32.mrf.mxu0
    %v3418 = vadd.f32 %v2960, %v3417
    %3419 = vmatmul.f32.gmra.mxu0 %v1962
    %v3420 = vpop.f32.mrf.mxu0
    %v3421 = vadd.f32 %v2963, %v3420
    %3422 = vmatmul.f32.gmra.mxu0 %v1963
    %v3423 = vpop.f32.mrf.mxu0
    %v3424 = vadd.f32 %v2966, %v3423
    %3425 = vmatmul.f32.gmra.mxu0 %v1964
    %v3426 = vpop.f32.mrf.mxu0
    %v3427 = vadd.f32 %v2969, %v3426
    %3428 = vmatmul.f32.gmra.mxu0 %v1965
    %v3429 = vpop.f32.mrf.mxu0
    %v3430 = vadd.f32 %v2972, %v3429
    %3431 = vmatmul.f32.gmra.mxu0 %v1966
    %v3432 = vpop.f32.mrf.mxu0
    %v3433 = vadd.f32 %v2975, %v3432
    %3434 = vmatmul.f32.gmra.mxu0 %v1973
    %v3435 = vpop.f32.mrf.mxu0
    %v3436 = vadd.f32 %v2978, %v3435
    %3437 = vmatmul.f32.gmra.mxu0 %v1974
    %v3438 = vpop.f32.mrf.mxu0
    %v3439 = vadd.f32 %v2981, %v3438
    %3440 = vmatmul.f32.gmra.mxu0 %v1975
    %v3441 = vpop.f32.mrf.mxu0
    %v3442 = vadd.f32 %v2984, %v3441
    %3443 = vmatmul.f32.gmra.mxu0 %v1976
    %v3444 = vpop.f32.mrf.mxu0
    %v3445 = vadd.f32 %v2987, %v3444
    %3446 = vmatmul.f32.gmra.mxu0 %v1977
    %v3447 = vpop.f32.mrf.mxu0
    %v3448 = vadd.f32 %v2990, %v3447
    %3449 = vmatmul.f32.gmra.mxu0 %v1978
    %v3450 = vpop.f32.mrf.mxu0
    %v3451 = vadd.f32 %v2993, %v3450
    %3452 = vmatmul.f32.gmra.mxu0 %v1979
    %v3453 = vpop.f32.mrf.mxu0
    %v3454 = vadd.f32 %v2996, %v3453
    %3455 = vmatmul.f32.gmra.mxu0 %v1980
    %v3456 = vpop.f32.mrf.mxu0
    %v3457 = vadd.f32 %v2999, %v3456
    %3458 = vmatmul.f32.gmra.mxu0 %v1981
    %v3459 = vpop.f32.mrf.mxu0
    %v3460 = vadd.f32 %v3002, %v3459
    %3461 = vmatmul.f32.gmra.mxu0 %v1982
    %v3462 = vpop.f32.mrf.mxu0
    %v3463 = vadd.f32 %v3005, %v3462
    %3464 = vmatmul.f32.gmra.mxu0 %v1983
    %v3465 = vpop.f32.mrf.mxu0
    %v3466 = vadd.f32 %v3008, %v3465
    %3467 = vmatmul.f32.gmra.mxu0 %v1984
    %v3468 = vpop.f32.mrf.mxu0
    %v3469 = vadd.f32 %v3011, %v3468
    %3470 = vmatmul.f32.gmra.mxu0 %v1985
    %v3471 = vpop.f32.mrf.mxu0
    %v3472 = vadd.f32 %v3014, %v3471
    %3473 = vmatmul.f32.gmra.mxu0 %v1986
    %v3474 = vpop.f32.mrf.mxu0
    %v3475 = vadd.f32 %v3017, %v3474
    %3476 = vmatmul.f32.gmra.mxu0 %v1987
    %v3477 = vpop.f32.mrf.mxu0
    %v3478 = vadd.f32 %v3020, %v3477
    %3479 = vmatmul.f32.gmra.mxu0 %v1988
    %v3480 = vpop.f32.mrf.mxu0
    %v3481 = vadd.f32 %v3023, %v3480
    %3482 = vmatmul.f32.gmra.mxu0 %v1989
    %v3483 = vpop.f32.mrf.mxu0
    %v3484 = vadd.f32 %v3026, %v3483
    %3485 = vmatmul.f32.gmra.mxu0 %v1990
    %v3486 = vpop.f32.mrf.mxu0
    %v3487 = vadd.f32 %v3029, %v3486
    %3488 = vmatmul.f32.gmra.mxu0 %v1991
    %v3489 = vpop.f32.mrf.mxu0
    %v3490 = vadd.f32 %v3032, %v3489
    %3491 = vmatmul.f32.gmra.mxu0 %v1992
    %v3492 = vpop.f32.mrf.mxu0
    %v3493 = vadd.f32 %v3035, %v3492
    %3494 = vmatmul.f32.gmra.mxu0 %v1993
    %v3495 = vpop.f32.mrf.mxu0
    %v3496 = vadd.f32 %v3038, %v3495
    %3497 = vmatmul.f32.gmra.mxu0 %v2000
    %v3498 = vpop.f32.mrf.mxu0
    %v3499 = vadd.f32 %v3041, %v3498
    %3500 = vmatmul.f32.gmra.mxu0 %v2001
    %v3501 = vpop.f32.mrf.mxu0
    %v3502 = vadd.f32 %v3044, %v3501
    %3503 = vmatmul.f32.gmra.mxu0 %v2002
    %v3504 = vpop.f32.mrf.mxu0
    %v3505 = vadd.f32 %v3047, %v3504
    %3506 = vmatmul.f32.gmra.mxu0 %v2003
    %v3507 = vpop.f32.mrf.mxu0
    %v3508 = vadd.f32 %v3050, %v3507
    %3509 = vmatmul.f32.gmra.mxu0 %v2004
    %v3510 = vpop.f32.mrf.mxu0
    %v3511 = vadd.f32 %v3053, %v3510
    %3512 = vmatmul.f32.gmra.mxu0 %v2005
    %v3513 = vpop.f32.mrf.mxu0
    %v3514 = vadd.f32 %v3056, %v3513
    %3515 = vmatmul.f32.gmra.mxu0 %v2006
    %v3516 = vpop.f32.mrf.mxu0
    %v3517 = vadd.f32 %v3059, %v3516
    %3518 = vmatmul.f32.gmra.mxu0 %v2007
    %v3519 = vpop.f32.mrf.mxu0
    %v3520 = vadd.f32 %v3062, %v3519
    %3521 = vmatmul.f32.gmra.mxu0 %v2008
    %v3522 = vpop.f32.mrf.mxu0
    %v3523 = vadd.f32 %v3065, %v3522
    %3524 = vmatmul.f32.gmra.mxu0 %v2009
    %v3525 = vpop.f32.mrf.mxu0
    %v3526 = vadd.f32 %v3068, %v3525
    %3527 = vmatmul.f32.gmra.mxu0 %v2010
    %v3528 = vpop.f32.mrf.mxu0
    %v3529 = vadd.f32 %v3071, %v3528
    %3530 = vmatmul.f32.gmra.mxu0 %v2011
    %v3531 = vpop.f32.mrf.mxu0
    %v3532 = vadd.f32 %v3074, %v3531
    %3533 = vmatmul.f32.gmra.mxu0 %v2012
    %v3534 = vpop.f32.mrf.mxu0
    %v3535 = vadd.f32 %v3077, %v3534
    %3536 = vmatmul.f32.gmra.mxu0 %v2013
    %v3537 = vpop.f32.mrf.mxu0
    %v3538 = vadd.f32 %v3080, %v3537
    %3539 = vmatmul.f32.gmra.mxu0 %v2014
    %v3540 = vpop.f32.mrf.mxu0
    %v3541 = vadd.f32 %v3083, %v3540
    %3542 = vmatmul.f32.gmra.mxu0 %v2015
    %v3543 = vpop.f32.mrf.mxu0
    %v3544 = vadd.f32 %v3086, %v3543
    %3545 = vmatmul.f32.gmra.mxu0 %v2016
    %v3546 = vpop.f32.mrf.mxu0
    %v3547 = vadd.f32 %v3089, %v3546
    %3548 = vmatmul.f32.gmra.mxu0 %v2017
    %v3549 = vpop.f32.mrf.mxu0
    %v3550 = vadd.f32 %v3092, %v3549
    %3551 = vmatmul.f32.gmra.mxu0 %v2018
    %v3552 = vpop.f32.mrf.mxu0
    %v3553 = vadd.f32 %v3095, %v3552
    %3554 = vmatmul.f32.gmra.mxu0 %v2019
    %v3555 = vpop.f32.mrf.mxu0
    %v3556 = vadd.f32 %v3098, %v3555
    %3557 = vmatmul.f32.gmra.mxu0 %v2020
    %v3558 = vpop.f32.mrf.mxu0
    %v3559 = vadd.f32 %v3101, %v3558
    %3560 = vmatmul.f32.gmra.mxu0 %v2027
    %v3561 = vpop.f32.mrf.mxu0
    %v3562 = vadd.f32 %v3104, %v3561
    %3563 = vmatmul.f32.gmra.mxu0 %v2028
    %v3564 = vpop.f32.mrf.mxu0
    %v3565 = vadd.f32 %v3107, %v3564
    %3566 = vmatmul.f32.gmra.mxu0 %v2029
    %v3567 = vpop.f32.mrf.mxu0
    %v3568 = vadd.f32 %v3110, %v3567
    %3569 = vmatmul.f32.gmra.mxu0 %v2030
    %v3570 = vpop.f32.mrf.mxu0
    %v3571 = vadd.f32 %v3113, %v3570
    %3572 = vmatmul.f32.gmra.mxu0 %v2031
    %v3573 = vpop.f32.mrf.mxu0
    %v3574 = vadd.f32 %v3116, %v3573
    %3575 = vmatmul.f32.gmra.mxu0 %v2032
    %v3576 = vpop.f32.mrf.mxu0
    %v3577 = vadd.f32 %v3119, %v3576
    %3578 = vmatmul.f32.gmra.mxu0 %v2033
    %v3579 = vpop.f32.mrf.mxu0
    %v3580 = vadd.f32 %v3122, %v3579
    %3581 = vmatmul.f32.gmra.mxu0 %v2034
    %v3582 = vpop.f32.mrf.mxu0
    %v3583 = vadd.f32 %v3125, %v3582
    %3584 = vmatmul.f32.gmra.mxu0 %v2035
    %v3585 = vpop.f32.mrf.mxu0
    %v3586 = vadd.f32 %v3128, %v3585
    %3587 = vmatmul.f32.gmra.mxu0 %v2036
    %v3588 = vpop.f32.mrf.mxu0
    %v3589 = vadd.f32 %v3131, %v3588
    %3590 = vmatmul.f32.gmra.mxu0 %v2037
    %v3591 = vpop.f32.mrf.mxu0
    %v3592 = vadd.f32 %v3134, %v3591
    %3593 = vmatmul.f32.gmra.mxu0 %v2038
    %v3594 = vpop.f32.mrf.mxu0
    %v3595 = vadd.f32 %v3137, %v3594
    %3596 = vmatmul.f32.gmra.mxu0 %v2039
    %v3597 = vpop.f32.mrf.mxu0
    %v3598 = vadd.f32 %v3140, %v3597
    %3599 = vmatmul.f32.gmra.mxu0 %v2040
    %v3600 = vpop.f32.mrf.mxu0
    %v3601 = vadd.f32 %v3143, %v3600
    %3602 = vmatmul.f32.gmra.mxu0 %v2041
    %v3603 = vpop.f32.mrf.mxu0
    %v3604 = vadd.f32 %v3146, %v3603
    %3605 = vmatmul.f32.gmra.mxu0 %v2042
    %v3606 = vpop.f32.mrf.mxu0
    %v3607 = vadd.f32 %v3149, %v3606
    %3608 = vmatmul.f32.gmra.mxu0 %v2043
    %v3609 = vpop.f32.mrf.mxu0
    %v3610 = vadd.f32 %v3152, %v3609
    %3611 = vmatmul.f32.gmra.mxu0 %v2044
    %v3612 = vpop.f32.mrf.mxu0
    %v3613 = vadd.f32 %v3155, %v3612
    %3614 = vmatmul.f32.gmra.mxu0 %v2045
    %v3615 = vpop.f32.mrf.mxu0
    %v3616 = vadd.f32 %v3158, %v3615
    %3617 = vmatmul.f32.gmra.mxu0 %v2046
    %v3618 = vpop.f32.mrf.mxu0
    %v3619 = vadd.f32 %v3161, %v3618
    %3620 = vmatmul.f32.gmra.mxu0 %v2047
    %v3621 = vpop.f32.mrf.mxu0
    %v3622 = vadd.f32 %v3164, %v3621
    %3623 = vdwg.mxu0
    %3624 = vmatpush.msra.mxu0 %v2165
    %3625 = vmatpush.msra.mxu0 %v2164
    %3626 = vmatpush.msra.mxu0 %v2163
    %3627 = vmatpush.msra.mxu0 %v2162
    %3628 = vmatpush.msra.mxu0 %v2161
    %3629 = vmatpush.msra.mxu0 %v2160
    %3630 = vmatpush.msra.mxu0 %v2159
    %3631 = vmatpush.msra.mxu0 %v2158
    %3632 = vmatpush.msra.mxu0 %v2157
    %3633 = vmatpush.msra.mxu0 %v2156
    %3634 = vmatpush.msra.mxu0 %v2155
    %3635 = vmatpush.msra.mxu0 %v2154
    %3636 = vmatpush.msra.mxu0 %v2153
    %3637 = vmatpush.msra.mxu0 %v2152
    %3638 = vmatpush.msra.mxu0 %v2151
    %3639 = vmatpush.msra.mxu0 %v2150
    %3640 = vmatmul.f32.gmra.mxu0 %v1886
    %v3641 = vpop.f32.mrf.mxu0
    %v3642 = vadd.f32 %v3184, %v3641
    %3643 = vmatmul.f32.gmra.mxu0 %v1887
    %v3644 = vpop.f32.mrf.mxu0
    %v3645 = vadd.f32 %v3187, %v3644
    %3646 = vmatmul.f32.gmra.mxu0 %v1888
    %v3647 = vpop.f32.mrf.mxu0
    %v3648 = vadd.f32 %v3190, %v3647
    %3649 = vmatmul.f32.gmra.mxu0 %v1889
    %v3650 = vpop.f32.mrf.mxu0
    %v3651 = vadd.f32 %v3193, %v3650
    %3652 = vmatmul.f32.gmra.mxu0 %v1890
    %v3653 = vpop.f32.mrf.mxu0
    %v3654 = vadd.f32 %v3196, %v3653
    %3655 = vmatmul.f32.gmra.mxu0 %v1891
    %v3656 = vpop.f32.mrf.mxu0
    %v3657 = vadd.f32 %v3199, %v3656
    %3658 = vmatmul.f32.gmra.mxu0 %v1892
    %v3659 = vpop.f32.mrf.mxu0
    %v3660 = vadd.f32 %v3202, %v3659
    %3661 = vmatmul.f32.gmra.mxu0 %v1893
    %v3662 = vpop.f32.mrf.mxu0
    %v3663 = vadd.f32 %v3205, %v3662
    %3664 = vmatmul.f32.gmra.mxu0 %v1894
    %v3665 = vpop.f32.mrf.mxu0
    %v3666 = vadd.f32 %v3208, %v3665
    %3667 = vmatmul.f32.gmra.mxu0 %v1895
    %v3668 = vpop.f32.mrf.mxu0
    %v3669 = vadd.f32 %v3211, %v3668
    %3670 = vmatmul.f32.gmra.mxu0 %v1896
    %v3671 = vpop.f32.mrf.mxu0
    %v3672 = vadd.f32 %v3214, %v3671
    %3673 = vmatmul.f32.gmra.mxu0 %v1897
    %v3674 = vpop.f32.mrf.mxu0
    %v3675 = vadd.f32 %v3217, %v3674
    %3676 = vmatmul.f32.gmra.mxu0 %v1898
    %v3677 = vpop.f32.mrf.mxu0
    %v3678 = vadd.f32 %v3220, %v3677
    %3679 = vmatmul.f32.gmra.mxu0 %v1899
    %v3680 = vpop.f32.mrf.mxu0
    %v3681 = vadd.f32 %v3223, %v3680
    %3682 = vmatmul.f32.gmra.mxu0 %v1900
    %v3683 = vpop.f32.mrf.mxu0
    %v3684 = vadd.f32 %v3226, %v3683
    %3685 = vmatmul.f32.gmra.mxu0 %v1901
    %v3686 = vpop.f32.mrf.mxu0
    %v3687 = vadd.f32 %v3229, %v3686
    %3688 = vmatmul.f32.gmra.mxu0 %v1902
    %v3689 = vpop.f32.mrf.mxu0
    %v3690 = vadd.f32 %v3232, %v3689
    %3691 = vmatmul.f32.gmra.mxu0 %v1903
    %v3692 = vpop.f32.mrf.mxu0
    %v3693 = vadd.f32 %v3235, %v3692
    %3694 = vmatmul.f32.gmra.mxu0 %v1904
    %v3695 = vpop.f32.mrf.mxu0
    %v3696 = vadd.f32 %v3238, %v3695
    %3697 = vmatmul.f32.gmra.mxu0 %v1905
    %v3698 = vpop.f32.mrf.mxu0
    %v3699 = vadd.f32 %v3241, %v3698
    %3700 = vmatmul.f32.gmra.mxu0 %v1906
    %v3701 = vpop.f32.mrf.mxu0
    %v3702 = vadd.f32 %v3244, %v3701
    %3703 = vmatmul.f32.gmra.mxu0 %v1913
    %v3704 = vpop.f32.mrf.mxu0
    %v3705 = vadd.f32 %v3247, %v3704
    %3706 = vmatmul.f32.gmra.mxu0 %v1914
    %v3707 = vpop.f32.mrf.mxu0
    %v3708 = vadd.f32 %v3250, %v3707
    %3709 = vmatmul.f32.gmra.mxu0 %v1915
    %v3710 = vpop.f32.mrf.mxu0
    %v3711 = vadd.f32 %v3253, %v3710
    %3712 = vmatmul.f32.gmra.mxu0 %v1916
    %v3713 = vpop.f32.mrf.mxu0
    %v3714 = vadd.f32 %v3256, %v3713
    %3715 = vmatmul.f32.gmra.mxu0 %v1917
    %v3716 = vpop.f32.mrf.mxu0
    %v3717 = vadd.f32 %v3259, %v3716
    %3718 = vmatmul.f32.gmra.mxu0 %v1918
    %v3719 = vpop.f32.mrf.mxu0
    %v3720 = vadd.f32 %v3262, %v3719
    %3721 = vmatmul.f32.gmra.mxu0 %v1919
    %v3722 = vpop.f32.mrf.mxu0
    %v3723 = vadd.f32 %v3265, %v3722
    %3724 = vmatmul.f32.gmra.mxu0 %v1920
    %v3725 = vpop.f32.mrf.mxu0
    %v3726 = vadd.f32 %v3268, %v3725
    %3727 = vmatmul.f32.gmra.mxu0 %v1921
    %v3728 = vpop.f32.mrf.mxu0
    %v3729 = vadd.f32 %v3271, %v3728
    %3730 = vmatmul.f32.gmra.mxu0 %v1922
    %v3731 = vpop.f32.mrf.mxu0
    %v3732 = vadd.f32 %v3274, %v3731
    %3733 = vmatmul.f32.gmra.mxu0 %v1923
    %v3734 = vpop.f32.mrf.mxu0
    %v3735 = vadd.f32 %v3277, %v3734
    %3736 = vmatmul.f32.gmra.mxu0 %v1924
    %v3737 = vpop.f32.mrf.mxu0
    %v3738 = vadd.f32 %v3280, %v3737
    %3739 = vmatmul.f32.gmra.mxu0 %v1925
    %v3740 = vpop.f32.mrf.mxu0
    %v3741 = vadd.f32 %v3283, %v3740
    %3742 = vmatmul.f32.gmra.mxu0 %v1926
    %v3743 = vpop.f32.mrf.mxu0
    %v3744 = vadd.f32 %v3286, %v3743
    %3745 = vmatmul.f32.gmra.mxu0 %v1927
    %v3746 = vpop.f32.mrf.mxu0
    %v3747 = vadd.f32 %v3289, %v3746
    %3748 = vmatmul.f32.gmra.mxu0 %v1928
    %v3749 = vpop.f32.mrf.mxu0
    %v3750 = vadd.f32 %v3292, %v3749
    %3751 = vmatmul.f32.gmra.mxu0 %v1929
    %v3752 = vpop.f32.mrf.mxu0
    %v3753 = vadd.f32 %v3295, %v3752
    %3754 = vmatmul.f32.gmra.mxu0 %v1930
    %v3755 = vpop.f32.mrf.mxu0
    %v3756 = vadd.f32 %v3298, %v3755
    %3757 = vmatmul.f32.gmra.mxu0 %v1931
    %v3758 = vpop.f32.mrf.mxu0
    %v3759 = vadd.f32 %v3301, %v3758
    %3760 = vmatmul.f32.gmra.mxu0 %v1932
    %v3761 = vpop.f32.mrf.mxu0
    %v3762 = vadd.f32 %v3304, %v3761
    %3763 = vmatmul.f32.gmra.mxu0 %v1933
    %v3764 = vpop.f32.mrf.mxu0
    %v3765 = vadd.f32 %v3307, %v3764
    %3766 = vmatmul.f32.gmra.mxu0 %v1940
    %v3767 = vpop.f32.mrf.mxu0
    %v3768 = vadd.f32 %v3310, %v3767
    %3769 = vmatmul.f32.gmra.mxu0 %v1941
    %v3770 = vpop.f32.mrf.mxu0
    %v3771 = vadd.f32 %v3313, %v3770
    %3772 = vmatmul.f32.gmra.mxu0 %v1942
    %v3773 = vpop.f32.mrf.mxu0
    %v3774 = vadd.f32 %v3316, %v3773
    %3775 = vmatmul.f32.gmra.mxu0 %v1943
    %v3776 = vpop.f32.mrf.mxu0
    %v3777 = vadd.f32 %v3319, %v3776
    %3778 = vmatmul.f32.gmra.mxu0 %v1944
    %v3779 = vpop.f32.mrf.mxu0
    %v3780 = vadd.f32 %v3322, %v3779
    %3781 = vmatmul.f32.gmra.mxu0 %v1945
    %v3782 = vpop.f32.mrf.mxu0
    %v3783 = vadd.f32 %v3325, %v3782
    %3784 = vmatmul.f32.gmra.mxu0 %v1946
    %v3785 = vpop.f32.mrf.mxu0
    %v3786 = vadd.f32 %v3328, %v3785
    %3787 = vmatmul.f32.gmra.mxu0 %v1947
    %v3788 = vpop.f32.mrf.mxu0
    %v3789 = vadd.f32 %v3331, %v3788
    %3790 = vmatmul.f32.gmra.mxu0 %v1948
    %v3791 = vpop.f32.mrf.mxu0
    %v3792 = vadd.f32 %v3334, %v3791
    %3793 = vmatmul.f32.gmra.mxu0 %v1949
    %v3794 = vpop.f32.mrf.mxu0
    %v3795 = vadd.f32 %v3337, %v3794
    %3796 = vmatmul.f32.gmra.mxu0 %v1950
    %v3797 = vpop.f32.mrf.mxu0
    %v3798 = vadd.f32 %v3340, %v3797
    %3799 = vmatmul.f32.gmra.mxu0 %v1951
    %v3800 = vpop.f32.mrf.mxu0
    %v3801 = vadd.f32 %v3343, %v3800
    %3802 = vmatmul.f32.gmra.mxu0 %v1952
    %v3803 = vpop.f32.mrf.mxu0
    %v3804 = vadd.f32 %v3346, %v3803
    %3805 = vmatmul.f32.gmra.mxu0 %v1953
    %v3806 = vpop.f32.mrf.mxu0
    %v3807 = vadd.f32 %v3349, %v3806
    %3808 = vmatmul.f32.gmra.mxu0 %v1954
    %v3809 = vpop.f32.mrf.mxu0
    %v3810 = vadd.f32 %v3352, %v3809
    %3811 = vmatmul.f32.gmra.mxu0 %v1955
    %v3812 = vpop.f32.mrf.mxu0
    %v3813 = vadd.f32 %v3355, %v3812
    %3814 = vmatmul.f32.gmra.mxu0 %v1956
    %v3815 = vpop.f32.mrf.mxu0
    %v3816 = vadd.f32 %v3358, %v3815
    %3817 = vmatmul.f32.gmra.mxu0 %v1957
    %v3818 = vpop.f32.mrf.mxu0
    %v3819 = vadd.f32 %v3361, %v3818
    %3820 = vmatmul.f32.gmra.mxu0 %v1958
    %v3821 = vpop.f32.mrf.mxu0
    %v3822 = vadd.f32 %v3364, %v3821
    %3823 = vmatmul.f32.gmra.mxu0 %v1959
    %v3824 = vpop.f32.mrf.mxu0
    %v3825 = vadd.f32 %v3367, %v3824
    %3826 = vmatmul.f32.gmra.mxu0 %v1960
    %v3827 = vpop.f32.mrf.mxu0
    %v3828 = vadd.f32 %v3370, %v3827
    %3829 = vmatmul.f32.gmra.mxu0 %v1967
    %v3830 = vpop.f32.mrf.mxu0
    %v3831 = vadd.f32 %v3373, %v3830
    %3832 = vmatmul.f32.gmra.mxu0 %v1968
    %v3833 = vpop.f32.mrf.mxu0
    %v3834 = vadd.f32 %v3376, %v3833
    %3835 = vmatmul.f32.gmra.mxu0 %v1969
    %v3836 = vpop.f32.mrf.mxu0
    %v3837 = vadd.f32 %v3379, %v3836
    %3838 = vmatmul.f32.gmra.mxu0 %v1970
    %v3839 = vpop.f32.mrf.mxu0
    %v3840 = vadd.f32 %v3382, %v3839
    %3841 = vmatmul.f32.gmra.mxu0 %v1971
    %v3842 = vpop.f32.mrf.mxu0
    %v3843 = vadd.f32 %v3385, %v3842
    %3844 = vmatmul.f32.gmra.mxu0 %v1972
    %v3845 = vpop.f32.mrf.mxu0
    %v3846 = vadd.f32 %v3388, %v3845
    %3847 = vmatmul.f32.gmra.mxu0 %v1973
    %v3848 = vpop.f32.mrf.mxu0
    %v3849 = vadd.f32 %v3391, %v3848
    %3850 = vmatmul.f32.gmra.mxu0 %v1974
    %v3851 = vpop.f32.mrf.mxu0
    %v3852 = vadd.f32 %v3394, %v3851
    %3853 = vmatmul.f32.gmra.mxu0 %v1975
    %v3854 = vpop.f32.mrf.mxu0
    %v3855 = vadd.f32 %v3397, %v3854
    %3856 = vmatmul.f32.gmra.mxu0 %v1976
    %v3857 = vpop.f32.mrf.mxu0
    %v3858 = vadd.f32 %v3400, %v3857
    %3859 = vmatmul.f32.gmra.mxu0 %v1977
    %v3860 = vpop.f32.mrf.mxu0
    %v3861 = vadd.f32 %v3403, %v3860
    %3862 = vmatmul.f32.gmra.mxu0 %v1978
    %v3863 = vpop.f32.mrf.mxu0
    %v3864 = vadd.f32 %v3406, %v3863
    %3865 = vmatmul.f32.gmra.mxu0 %v1979
    %v3866 = vpop.f32.mrf.mxu0
    %v3867 = vadd.f32 %v3409, %v3866
    %3868 = vmatmul.f32.gmra.mxu0 %v1980
    %v3869 = vpop.f32.mrf.mxu0
    %v3870 = vadd.f32 %v3412, %v3869
    %3871 = vmatmul.f32.gmra.mxu0 %v1981
    %v3872 = vpop.f32.mrf.mxu0
    %v3873 = vadd.f32 %v3415, %v3872
    %3874 = vmatmul.f32.gmra.mxu0 %v1982
    %v3875 = vpop.f32.mrf.mxu0
    %v3876 = vadd.f32 %v3418, %v3875
    %3877 = vmatmul.f32.gmra.mxu0 %v1983
    %v3878 = vpop.f32.mrf.mxu0
    %v3879 = vadd.f32 %v3421, %v3878
    %3880 = vmatmul.f32.gmra.mxu0 %v1984
    %v3881 = vpop.f32.mrf.mxu0
    %v3882 = vadd.f32 %v3424, %v3881
    %3883 = vmatmul.f32.gmra.mxu0 %v1985
    %v3884 = vpop.f32.mrf.mxu0
    %v3885 = vadd.f32 %v3427, %v3884
    %3886 = vmatmul.f32.gmra.mxu0 %v1986
    %v3887 = vpop.f32.mrf.mxu0
    %v3888 = vadd.f32 %v3430, %v3887
    %3889 = vmatmul.f32.gmra.mxu0 %v1987
    %v3890 = vpop.f32.mrf.mxu0
    %v3891 = vadd.f32 %v3433, %v3890
    %3892 = vmatmul.f32.gmra.mxu0 %v1994
    %v3893 = vpop.f32.mrf.mxu0
    %v3894 = vadd.f32 %v3436, %v3893
    %3895 = vmatmul.f32.gmra.mxu0 %v1995
    %v3896 = vpop.f32.mrf.mxu0
    %v3897 = vadd.f32 %v3439, %v3896
    %3898 = vmatmul.f32.gmra.mxu0 %v1996
    %v3899 = vpop.f32.mrf.mxu0
    %v3900 = vadd.f32 %v3442, %v3899
    %3901 = vmatmul.f32.gmra.mxu0 %v1997
    %v3902 = vpop.f32.mrf.mxu0
    %v3903 = vadd.f32 %v3445, %v3902
    %3904 = vmatmul.f32.gmra.mxu0 %v1998
    %v3905 = vpop.f32.mrf.mxu0
    %v3906 = vadd.f32 %v3448, %v3905
    %3907 = vmatmul.f32.gmra.mxu0 %v1999
    %v3908 = vpop.f32.mrf.mxu0
    %v3909 = vadd.f32 %v3451, %v3908
    %3910 = vmatmul.f32.gmra.mxu0 %v2000
    %v3911 = vpop.f32.mrf.mxu0
    %v3912 = vadd.f32 %v3454, %v3911
    %3913 = vmatmul.f32.gmra.mxu0 %v2001
    %v3914 = vpop.f32.mrf.mxu0
    %v3915 = vadd.f32 %v3457, %v3914
    %3916 = vmatmul.f32.gmra.mxu0 %v2002
    %v3917 = vpop.f32.mrf.mxu0
    %v3918 = vadd.f32 %v3460, %v3917
    %3919 = vmatmul.f32.gmra.mxu0 %v2003
    %v3920 = vpop.f32.mrf.mxu0
    %v3921 = vadd.f32 %v3463, %v3920
    %3922 = vmatmul.f32.gmra.mxu0 %v2004
    %v3923 = vpop.f32.mrf.mxu0
    %v3924 = vadd.f32 %v3466, %v3923
    %3925 = vmatmul.f32.gmra.mxu0 %v2005
    %v3926 = vpop.f32.mrf.mxu0
    %v3927 = vadd.f32 %v3469, %v3926
    %3928 = vmatmul.f32.gmra.mxu0 %v2006
    %v3929 = vpop.f32.mrf.mxu0
    %v3930 = vadd.f32 %v3472, %v3929
    %3931 = vmatmul.f32.gmra.mxu0 %v2007
    %v3932 = vpop.f32.mrf.mxu0
    %v3933 = vadd.f32 %v3475, %v3932
    %3934 = vmatmul.f32.gmra.mxu0 %v2008
    %v3935 = vpop.f32.mrf.mxu0
    %v3936 = vadd.f32 %v3478, %v3935
    %3937 = vmatmul.f32.gmra.mxu0 %v2009
    %v3938 = vpop.f32.mrf.mxu0
    %v3939 = vadd.f32 %v3481, %v3938
    %3940 = vmatmul.f32.gmra.mxu0 %v2010
    %v3941 = vpop.f32.mrf.mxu0
    %v3942 = vadd.f32 %v3484, %v3941
    %3943 = vmatmul.f32.gmra.mxu0 %v2011
    %v3944 = vpop.f32.mrf.mxu0
    %v3945 = vadd.f32 %v3487, %v3944
    %3946 = vmatmul.f32.gmra.mxu0 %v2012
    %v3947 = vpop.f32.mrf.mxu0
    %v3948 = vadd.f32 %v3490, %v3947
    %3949 = vmatmul.f32.gmra.mxu0 %v2013
    %v3950 = vpop.f32.mrf.mxu0
    %v3951 = vadd.f32 %v3493, %v3950
    %3952 = vmatmul.f32.gmra.mxu0 %v2014
    %v3953 = vpop.f32.mrf.mxu0
    %v3954 = vadd.f32 %v3496, %v3953
    %3955 = vmatmul.f32.gmra.mxu0 %v2021
    %v3956 = vpop.f32.mrf.mxu0
    %v3957 = vadd.f32 %v3499, %v3956
    %3958 = vmatmul.f32.gmra.mxu0 %v2022
    %v3959 = vpop.f32.mrf.mxu0
    %v3960 = vadd.f32 %v3502, %v3959
    %3961 = vmatmul.f32.gmra.mxu0 %v2023
    %v3962 = vpop.f32.mrf.mxu0
    %v3963 = vadd.f32 %v3505, %v3962
    %3964 = vmatmul.f32.gmra.mxu0 %v2024
    %v3965 = vpop.f32.mrf.mxu0
    %v3966 = vadd.f32 %v3508, %v3965
    %3967 = vmatmul.f32.gmra.mxu0 %v2025
    %v3968 = vpop.f32.mrf.mxu0
    %v3969 = vadd.f32 %v3511, %v3968
    %3970 = vmatmul.f32.gmra.mxu0 %v2026
    %v3971 = vpop.f32.mrf.mxu0
    %v3972 = vadd.f32 %v3514, %v3971
    %3973 = vmatmul.f32.gmra.mxu0 %v2027
    %v3974 = vpop.f32.mrf.mxu0
    %v3975 = vadd.f32 %v3517, %v3974
    %3976 = vmatmul.f32.gmra.mxu0 %v2028
    %v3977 = vpop.f32.mrf.mxu0
    %v3978 = vadd.f32 %v3520, %v3977
    %3979 = vmatmul.f32.gmra.mxu0 %v2029
    %v3980 = vpop.f32.mrf.mxu0
    %v3981 = vadd.f32 %v3523, %v3980
    %3982 = vmatmul.f32.gmra.mxu0 %v2030
    %v3983 = vpop.f32.mrf.mxu0
    %v3984 = vadd.f32 %v3526, %v3983
    %3985 = vmatmul.f32.gmra.mxu0 %v2031
    %v3986 = vpop.f32.mrf.mxu0
    %v3987 = vadd.f32 %v3529, %v3986
    %3988 = vmatmul.f32.gmra.mxu0 %v2032
    %v3989 = vpop.f32.mrf.mxu0
    %v3990 = vadd.f32 %v3532, %v3989
    %3991 = vmatmul.f32.gmra.mxu0 %v2033
    %v3992 = vpop.f32.mrf.mxu0
    %v3993 = vadd.f32 %v3535, %v3992
    %3994 = vmatmul.f32.gmra.mxu0 %v2034
    %v3995 = vpop.f32.mrf.mxu0
    %v3996 = vadd.f32 %v3538, %v3995
    %3997 = vmatmul.f32.gmra.mxu0 %v2035
    %v3998 = vpop.f32.mrf.mxu0
    %v3999 = vadd.f32 %v3541, %v3998
    %4000 = vmatmul.f32.gmra.mxu0 %v2036
    %v4001 = vpop.f32.mrf.mxu0
    %v4002 = vadd.f32 %v3544, %v4001
    %4003 = vmatmul.f32.gmra.mxu0 %v2037
    %v4004 = vpop.f32.mrf.mxu0
    %v4005 = vadd.f32 %v3547, %v4004
    %4006 = vmatmul.f32.gmra.mxu0 %v2038
    %v4007 = vpop.f32.mrf.mxu0
    %v4008 = vadd.f32 %v3550, %v4007
    %4009 = vmatmul.f32.gmra.mxu0 %v2039
    %v4010 = vpop.f32.mrf.mxu0
    %v4011 = vadd.f32 %v3553, %v4010
    %4012 = vmatmul.f32.gmra.mxu0 %v2040
    %v4013 = vpop.f32.mrf.mxu0
    %v4014 = vadd.f32 %v3556, %v4013
    %4015 = vmatmul.f32.gmra.mxu0 %v2041
    %v4016 = vpop.f32.mrf.mxu0
    %v4017 = vadd.f32 %v3559, %v4016
    %4018 = vmatmul.f32.gmra.mxu0 %v2048
    %v4019 = vpop.f32.mrf.mxu0
    %v4020 = vadd.f32 %v3562, %v4019
    %4021 = vmatmul.f32.gmra.mxu0 %v2049
    %v4022 = vpop.f32.mrf.mxu0
    %v4023 = vadd.f32 %v3565, %v4022
    %4024 = vmatmul.f32.gmra.mxu0 %v2050
    %v4025 = vpop.f32.mrf.mxu0
    %v4026 = vadd.f32 %v3568, %v4025
    %4027 = vmatmul.f32.gmra.mxu0 %v2051
    %v4028 = vpop.f32.mrf.mxu0
    %v4029 = vadd.f32 %v3571, %v4028
    %4030 = vmatmul.f32.gmra.mxu0 %v2052
    %v4031 = vpop.f32.mrf.mxu0
    %v4032 = vadd.f32 %v3574, %v4031
    %4033 = vmatmul.f32.gmra.mxu0 %v2053
    %v4034 = vpop.f32.mrf.mxu0
    %v4035 = vadd.f32 %v3577, %v4034
    %4036 = vmatmul.f32.gmra.mxu0 %v2054
    %v4037 = vpop.f32.mrf.mxu0
    %v4038 = vadd.f32 %v3580, %v4037
    %4039 = vmatmul.f32.gmra.mxu0 %v2055
    %v4040 = vpop.f32.mrf.mxu0
    %v4041 = vadd.f32 %v3583, %v4040
    %4042 = vmatmul.f32.gmra.mxu0 %v2056
    %v4043 = vpop.f32.mrf.mxu0
    %v4044 = vadd.f32 %v3586, %v4043
    %4045 = vmatmul.f32.gmra.mxu0 %v2057
    %v4046 = vpop.f32.mrf.mxu0
    %v4047 = vadd.f32 %v3589, %v4046
    %4048 = vmatmul.f32.gmra.mxu0 %v2058
    %v4049 = vpop.f32.mrf.mxu0
    %v4050 = vadd.f32 %v3592, %v4049
    %4051 = vmatmul.f32.gmra.mxu0 %v2059
    %v4052 = vpop.f32.mrf.mxu0
    %v4053 = vadd.f32 %v3595, %v4052
    %4054 = vmatmul.f32.gmra.mxu0 %v2060
    %v4055 = vpop.f32.mrf.mxu0
    %v4056 = vadd.f32 %v3598, %v4055
    %4057 = vmatmul.f32.gmra.mxu0 %v2061
    %v4058 = vpop.f32.mrf.mxu0
    %v4059 = vadd.f32 %v3601, %v4058
    %4060 = vmatmul.f32.gmra.mxu0 %v2062
    %v4061 = vpop.f32.mrf.mxu0
    %v4062 = vadd.f32 %v3604, %v4061
    %4063 = vmatmul.f32.gmra.mxu0 %v2063
    %v4064 = vpop.f32.mrf.mxu0
    %v4065 = vadd.f32 %v3607, %v4064
    %4066 = vmatmul.f32.gmra.mxu0 %v2064
    %v4067 = vpop.f32.mrf.mxu0
    %v4068 = vadd.f32 %v3610, %v4067
    %4069 = vmatmul.f32.gmra.mxu0 %v2065
    %v4070 = vpop.f32.mrf.mxu0
    %v4071 = vadd.f32 %v3613, %v4070
    %4072 = vmatmul.f32.gmra.mxu0 %v2066
    %v4073 = vpop.f32.mrf.mxu0
    %v4074 = vadd.f32 %v3616, %v4073
    %4075 = vmatmul.f32.gmra.mxu0 %v2067
    %v4076 = vpop.f32.mrf.mxu0
    %v4077 = vadd.f32 %v3619, %v4076
    %4078 = vmatmul.f32.gmra.mxu0 %v2068
    %v4079 = vpop.f32.mrf.mxu0
    %v4080 = vadd.f32 %v3622, %v4079
    %4081 = vdwg.mxu0
    %4082 = vmatpush.msra.mxu0 %v2181
    %4083 = vmatpush.msra.mxu0 %v2180
    %4084 = vmatpush.msra.mxu0 %v2179
    %4085 = vmatpush.msra.mxu0 %v2178
    %4086 = vmatpush.msra.mxu0 %v2177
    %4087 = vmatpush.msra.mxu0 %v2176
    %4088 = vmatpush.msra.mxu0 %v2175
    %4089 = vmatpush.msra.mxu0 %v2174
    %4090 = vmatpush.msra.mxu0 %v2173
    %4091 = vmatpush.msra.mxu0 %v2172
    %4092 = vmatpush.msra.mxu0 %v2171
    %4093 = vmatpush.msra.mxu0 %v2170
    %4094 = vmatpush.msra.mxu0 %v2169
    %4095 = vmatpush.msra.mxu0 %v2168
    %4096 = vmatpush.msra.mxu0 %v2167
    %4097 = vmatpush.msra.mxu0 %v2166
    %4098 = vmatmul.f32.gmra.mxu0 %v1889
    %v4099 = vpop.f32.mrf.mxu0
    %v4100 = vadd.f32 %v3642, %v4099
    %4101 = vmatmul.f32.gmra.mxu0 %v1890
    %v4102 = vpop.f32.mrf.mxu0
    %v4103 = vadd.f32 %v3645, %v4102
    %4104 = vmatmul.f32.gmra.mxu0 %v1891
    %v4105 = vpop.f32.mrf.mxu0
    %v4106 = vadd.f32 %v3648, %v4105
    %4107 = vmatmul.f32.gmra.mxu0 %v1892
    %v4108 = vpop.f32.mrf.mxu0
    %v4109 = vadd.f32 %v3651, %v4108
    %4110 = vmatmul.f32.gmra.mxu0 %v1893
    %v4111 = vpop.f32.mrf.mxu0
    %v4112 = vadd.f32 %v3654, %v4111
    %4113 = vmatmul.f32.gmra.mxu0 %v1894
    %v4114 = vpop.f32.mrf.mxu0
    %v4115 = vadd.f32 %v3657, %v4114
    %4116 = vmatmul.f32.gmra.mxu0 %v1895
    %v4117 = vpop.f32.mrf.mxu0
    %v4118 = vadd.f32 %v3660, %v4117
    %4119 = vmatmul.f32.gmra.mxu0 %v1896
    %v4120 = vpop.f32.mrf.mxu0
    %v4121 = vadd.f32 %v3663, %v4120
    %4122 = vmatmul.f32.gmra.mxu0 %v1897
    %v4123 = vpop.f32.mrf.mxu0
    %v4124 = vadd.f32 %v3666, %v4123
    %4125 = vmatmul.f32.gmra.mxu0 %v1898
    %v4126 = vpop.f32.mrf.mxu0
    %v4127 = vadd.f32 %v3669, %v4126
    %4128 = vmatmul.f32.gmra.mxu0 %v1899
    %v4129 = vpop.f32.mrf.mxu0
    %v4130 = vadd.f32 %v3672, %v4129
    %4131 = vmatmul.f32.gmra.mxu0 %v1900
    %v4132 = vpop.f32.mrf.mxu0
    %v4133 = vadd.f32 %v3675, %v4132
    %4134 = vmatmul.f32.gmra.mxu0 %v1901
    %v4135 = vpop.f32.mrf.mxu0
    %v4136 = vadd.f32 %v3678, %v4135
    %4137 = vmatmul.f32.gmra.mxu0 %v1902
    %v4138 = vpop.f32.mrf.mxu0
    %v4139 = vadd.f32 %v3681, %v4138
    %4140 = vmatmul.f32.gmra.mxu0 %v1903
    %v4141 = vpop.f32.mrf.mxu0
    %v4142 = vadd.f32 %v3684, %v4141
    %4143 = vmatmul.f32.gmra.mxu0 %v1904
    %v4144 = vpop.f32.mrf.mxu0
    %v4145 = vadd.f32 %v3687, %v4144
    %4146 = vmatmul.f32.gmra.mxu0 %v1905
    %v4147 = vpop.f32.mrf.mxu0
    %v4148 = vadd.f32 %v3690, %v4147
    %4149 = vmatmul.f32.gmra.mxu0 %v1906
    %v4150 = vpop.f32.mrf.mxu0
    %v4151 = vadd.f32 %v3693, %v4150
    %4152 = vmatmul.f32.gmra.mxu0 %v1907
    %v4153 = vpop.f32.mrf.mxu0
    %v4154 = vadd.f32 %v3696, %v4153
    %4155 = vmatmul.f32.gmra.mxu0 %v1908
    %v4156 = vpop.f32.mrf.mxu0
    %v4157 = vadd.f32 %v3699, %v4156
    %4158 = vmatmul.f32.gmra.mxu0 %v1909
    %v4159 = vpop.f32.mrf.mxu0
    %v4160 = vadd.f32 %v3702, %v4159
    %4161 = vmatmul.f32.gmra.mxu0 %v1916
    %v4162 = vpop.f32.mrf.mxu0
    %v4163 = vadd.f32 %v3705, %v4162
    %4164 = vmatmul.f32.gmra.mxu0 %v1917
    %v4165 = vpop.f32.mrf.mxu0
    %v4166 = vadd.f32 %v3708, %v4165
    %4167 = vmatmul.f32.gmra.mxu0 %v1918
    %v4168 = vpop.f32.mrf.mxu0
    %v4169 = vadd.f32 %v3711, %v4168
    %4170 = vmatmul.f32.gmra.mxu0 %v1919
    %v4171 = vpop.f32.mrf.mxu0
    %v4172 = vadd.f32 %v3714, %v4171
    %4173 = vmatmul.f32.gmra.mxu0 %v1920
    %v4174 = vpop.f32.mrf.mxu0
    %v4175 = vadd.f32 %v3717, %v4174
    %4176 = vmatmul.f32.gmra.mxu0 %v1921
    %v4177 = vpop.f32.mrf.mxu0
    %v4178 = vadd.f32 %v3720, %v4177
    %4179 = vmatmul.f32.gmra.mxu0 %v1922
    %v4180 = vpop.f32.mrf.mxu0
    %v4181 = vadd.f32 %v3723, %v4180
    %4182 = vmatmul.f32.gmra.mxu0 %v1923
    %v4183 = vpop.f32.mrf.mxu0
    %v4184 = vadd.f32 %v3726, %v4183
    %4185 = vmatmul.f32.gmra.mxu0 %v1924
    %v4186 = vpop.f32.mrf.mxu0
    %v4187 = vadd.f32 %v3729, %v4186
    %4188 = vmatmul.f32.gmra.mxu0 %v1925
    %v4189 = vpop.f32.mrf.mxu0
    %v4190 = vadd.f32 %v3732, %v4189
    %4191 = vmatmul.f32.gmra.mxu0 %v1926
    %v4192 = vpop.f32.mrf.mxu0
    %v4193 = vadd.f32 %v3735, %v4192
    %4194 = vmatmul.f32.gmra.mxu0 %v1927
    %v4195 = vpop.f32.mrf.mxu0
    %v4196 = vadd.f32 %v3738, %v4195
    %4197 = vmatmul.f32.gmra.mxu0 %v1928
    %v4198 = vpop.f32.mrf.mxu0
    %v4199 = vadd.f32 %v3741, %v4198
    %4200 = vmatmul.f32.gmra.mxu0 %v1929
    %v4201 = vpop.f32.mrf.mxu0
    %v4202 = vadd.f32 %v3744, %v4201
    %4203 = vmatmul.f32.gmra.mxu0 %v1930
    %v4204 = vpop.f32.mrf.mxu0
    %v4205 = vadd.f32 %v3747, %v4204
    %4206 = vmatmul.f32.gmra.mxu0 %v1931
    %v4207 = vpop.f32.mrf.mxu0
    %v4208 = vadd.f32 %v3750, %v4207
    %4209 = vmatmul.f32.gmra.mxu0 %v1932
    %v4210 = vpop.f32.mrf.mxu0
    %v4211 = vadd.f32 %v3753, %v4210
    %4212 = vmatmul.f32.gmra.mxu0 %v1933
    %v4213 = vpop.f32.mrf.mxu0
    %v4214 = vadd.f32 %v3756, %v4213
    %4215 = vmatmul.f32.gmra.mxu0 %v1934
    %v4216 = vpop.f32.mrf.mxu0
    %v4217 = vadd.f32 %v3759, %v4216
    %4218 = vmatmul.f32.gmra.mxu0 %v1935
    %v4219 = vpop.f32.mrf.mxu0
    %v4220 = vadd.f32 %v3762, %v4219
    %4221 = vmatmul.f32.gmra.mxu0 %v1936
    %v4222 = vpop.f32.mrf.mxu0
    %v4223 = vadd.f32 %v3765, %v4222
    %4224 = vmatmul.f32.gmra.mxu0 %v1943
    %v4225 = vpop.f32.mrf.mxu0
    %v4226 = vadd.f32 %v3768, %v4225
    %4227 = vmatmul.f32.gmra.mxu0 %v1944
    %v4228 = vpop.f32.mrf.mxu0
    %v4229 = vadd.f32 %v3771, %v4228
    %4230 = vmatmul.f32.gmra.mxu0 %v1945
    %v4231 = vpop.f32.mrf.mxu0
    %v4232 = vadd.f32 %v3774, %v4231
    %4233 = vmatmul.f32.gmra.mxu0 %v1946
    %v4234 = vpop.f32.mrf.mxu0
    %v4235 = vadd.f32 %v3777, %v4234
    %4236 = vmatmul.f32.gmra.mxu0 %v1947
    %v4237 = vpop.f32.mrf.mxu0
    %v4238 = vadd.f32 %v3780, %v4237
    %4239 = vmatmul.f32.gmra.mxu0 %v1948
    %v4240 = vpop.f32.mrf.mxu0
    %v4241 = vadd.f32 %v3783, %v4240
    %4242 = vmatmul.f32.gmra.mxu0 %v1949
    %v4243 = vpop.f32.mrf.mxu0
    %v4244 = vadd.f32 %v3786, %v4243
    %4245 = vmatmul.f32.gmra.mxu0 %v1950
    %v4246 = vpop.f32.mrf.mxu0
    %v4247 = vadd.f32 %v3789, %v4246
    %4248 = vmatmul.f32.gmra.mxu0 %v1951
    %v4249 = vpop.f32.mrf.mxu0
    %v4250 = vadd.f32 %v3792, %v4249
    %4251 = vmatmul.f32.gmra.mxu0 %v1952
    %v4252 = vpop.f32.mrf.mxu0
    %v4253 = vadd.f32 %v3795, %v4252
    %4254 = vmatmul.f32.gmra.mxu0 %v1953
    %v4255 = vpop.f32.mrf.mxu0
    %v4256 = vadd.f32 %v3798, %v4255
    %4257 = vmatmul.f32.gmra.mxu0 %v1954
    %v4258 = vpop.f32.mrf.mxu0
    %v4259 = vadd.f32 %v3801, %v4258
    %4260 = vmatmul.f32.gmra.mxu0 %v1955
    %v4261 = vpop.f32.mrf.mxu0
    %v4262 = vadd.f32 %v3804, %v4261
    %4263 = vmatmul.f32.gmra.mxu0 %v1956
    %v4264 = vpop.f32.mrf.mxu0
    %v4265 = vadd.f32 %v3807, %v4264
    %4266 = vmatmul.f32.gmra.mxu0 %v1957
    %v4267 = vpop.f32.mrf.mxu0
    %v4268 = vadd.f32 %v3810, %v4267
    %4269 = vmatmul.f32.gmra.mxu0 %v1958
    %v4270 = vpop.f32.mrf.mxu0
    %v4271 = vadd.f32 %v3813, %v4270
    %4272 = vmatmul.f32.gmra.mxu0 %v1959
    %v4273 = vpop.f32.mrf.mxu0
    %v4274 = vadd.f32 %v3816, %v4273
    %4275 = vmatmul.f32.gmra.mxu0 %v1960
    %v4276 = vpop.f32.mrf.mxu0
    %v4277 = vadd.f32 %v3819, %v4276
    %4278 = vmatmul.f32.gmra.mxu0 %v1961
    %v4279 = vpop.f32.mrf.mxu0
    %v4280 = vadd.f32 %v3822, %v4279
    %4281 = vmatmul.f32.gmra.mxu0 %v1962
    %v4282 = vpop.f32.mrf.mxu0
    %v4283 = vadd.f32 %v3825, %v4282
    %4284 = vmatmul.f32.gmra.mxu0 %v1963
    %v4285 = vpop.f32.mrf.mxu0
    %v4286 = vadd.f32 %v3828, %v4285
    %4287 = vmatmul.f32.gmra.mxu0 %v1970
    %v4288 = vpop.f32.mrf.mxu0
    %v4289 = vadd.f32 %v3831, %v4288
    %4290 = vmatmul.f32.gmra.mxu0 %v1971
    %v4291 = vpop.f32.mrf.mxu0
    %v4292 = vadd.f32 %v3834, %v4291
    %4293 = vmatmul.f32.gmra.mxu0 %v1972
    %v4294 = vpop.f32.mrf.mxu0
    %v4295 = vadd.f32 %v3837, %v4294
    %4296 = vmatmul.f32.gmra.mxu0 %v1973
    %v4297 = vpop.f32.mrf.mxu0
    %v4298 = vadd.f32 %v3840, %v4297
    %4299 = vmatmul.f32.gmra.mxu0 %v1974
    %v4300 = vpop.f32.mrf.mxu0
    %v4301 = vadd.f32 %v3843, %v4300
    %4302 = vmatmul.f32.gmra.mxu0 %v1975
    %v4303 = vpop.f32.mrf.mxu0
    %v4304 = vadd.f32 %v3846, %v4303
    %4305 = vmatmul.f32.gmra.mxu0 %v1976
    %v4306 = vpop.f32.mrf.mxu0
    %v4307 = vadd.f32 %v3849, %v4306
    %4308 = vmatmul.f32.gmra.mxu0 %v1977
    %v4309 = vpop.f32.mrf.mxu0
    %v4310 = vadd.f32 %v3852, %v4309
    %4311 = vmatmul.f32.gmra.mxu0 %v1978
    %v4312 = vpop.f32.mrf.mxu0
    %v4313 = vadd.f32 %v3855, %v4312
    %4314 = vmatmul.f32.gmra.mxu0 %v1979
    %v4315 = vpop.f32.mrf.mxu0
    %v4316 = vadd.f32 %v3858, %v4315
    %4317 = vmatmul.f32.gmra.mxu0 %v1980
    %v4318 = vpop.f32.mrf.mxu0
    %v4319 = vadd.f32 %v3861, %v4318
    %4320 = vmatmul.f32.gmra.mxu0 %v1981
    %v4321 = vpop.f32.mrf.mxu0
    %v4322 = vadd.f32 %v3864, %v4321
    %4323 = vmatmul.f32.gmra.mxu0 %v1982
    %v4324 = vpop.f32.mrf.mxu0
    %v4325 = vadd.f32 %v3867, %v4324
    %4326 = vmatmul.f32.gmra.mxu0 %v1983
    %v4327 = vpop.f32.mrf.mxu0
    %v4328 = vadd.f32 %v3870, %v4327
    %4329 = vmatmul.f32.gmra.mxu0 %v1984
    %v4330 = vpop.f32.mrf.mxu0
    %v4331 = vadd.f32 %v3873, %v4330
    %4332 = vmatmul.f32.gmra.mxu0 %v1985
    %v4333 = vpop.f32.mrf.mxu0
    %v4334 = vadd.f32 %v3876, %v4333
    %4335 = vmatmul.f32.gmra.mxu0 %v1986
    %v4336 = vpop.f32.mrf.mxu0
    %v4337 = vadd.f32 %v3879, %v4336
    %4338 = vmatmul.f32.gmra.mxu0 %v1987
    %v4339 = vpop.f32.mrf.mxu0
    %v4340 = vadd.f32 %v3882, %v4339
    %4341 = vmatmul.f32.gmra.mxu0 %v1988
    %v4342 = vpop.f32.mrf.mxu0
    %v4343 = vadd.f32 %v3885, %v4342
    %4344 = vmatmul.f32.gmra.mxu0 %v1989
    %v4345 = vpop.f32.mrf.mxu0
    %v4346 = vadd.f32 %v3888, %v4345
    %4347 = vmatmul.f32.gmra.mxu0 %v1990
    %v4348 = vpop.f32.mrf.mxu0
    %v4349 = vadd.f32 %v3891, %v4348
    %4350 = vmatmul.f32.gmra.mxu0 %v1997
    %v4351 = vpop.f32.mrf.mxu0
    %v4352 = vadd.f32 %v3894, %v4351
    %4353 = vmatmul.f32.gmra.mxu0 %v1998
    %v4354 = vpop.f32.mrf.mxu0
    %v4355 = vadd.f32 %v3897, %v4354
    %4356 = vmatmul.f32.gmra.mxu0 %v1999
    %v4357 = vpop.f32.mrf.mxu0
    %v4358 = vadd.f32 %v3900, %v4357
    %4359 = vmatmul.f32.gmra.mxu0 %v2000
    %v4360 = vpop.f32.mrf.mxu0
    %v4361 = vadd.f32 %v3903, %v4360
    %4362 = vmatmul.f32.gmra.mxu0 %v2001
    %v4363 = vpop.f32.mrf.mxu0
    %v4364 = vadd.f32 %v3906, %v4363
    %4365 = vmatmul.f32.gmra.mxu0 %v2002
    %v4366 = vpop.f32.mrf.mxu0
    %v4367 = vadd.f32 %v3909, %v4366
    %4368 = vmatmul.f32.gmra.mxu0 %v2003
    %v4369 = vpop.f32.mrf.mxu0
    %v4370 = vadd.f32 %v3912, %v4369
    %4371 = vmatmul.f32.gmra.mxu0 %v2004
    %v4372 = vpop.f32.mrf.mxu0
    %v4373 = vadd.f32 %v3915, %v4372
    %4374 = vmatmul.f32.gmra.mxu0 %v2005
    %v4375 = vpop.f32.mrf.mxu0
    %v4376 = vadd.f32 %v3918, %v4375
    %4377 = vmatmul.f32.gmra.mxu0 %v2006
    %v4378 = vpop.f32.mrf.mxu0
    %v4379 = vadd.f32 %v3921, %v4378
    %4380 = vmatmul.f32.gmra.mxu0 %v2007
    %v4381 = vpop.f32.mrf.mxu0
    %v4382 = vadd.f32 %v3924, %v4381
    %4383 = vmatmul.f32.gmra.mxu0 %v2008
    %v4384 = vpop.f32.mrf.mxu0
    %v4385 = vadd.f32 %v3927, %v4384
    %4386 = vmatmul.f32.gmra.mxu0 %v2009
    %v4387 = vpop.f32.mrf.mxu0
    %v4388 = vadd.f32 %v3930, %v4387
    %4389 = vmatmul.f32.gmra.mxu0 %v2010
    %v4390 = vpop.f32.mrf.mxu0
    %v4391 = vadd.f32 %v3933, %v4390
    %4392 = vmatmul.f32.gmra.mxu0 %v2011
    %v4393 = vpop.f32.mrf.mxu0
    %v4394 = vadd.f32 %v3936, %v4393
    %4395 = vmatmul.f32.gmra.mxu0 %v2012
    %v4396 = vpop.f32.mrf.mxu0
    %v4397 = vadd.f32 %v3939, %v4396
    %4398 = vmatmul.f32.gmra.mxu0 %v2013
    %v4399 = vpop.f32.mrf.mxu0
    %v4400 = vadd.f32 %v3942, %v4399
    %4401 = vmatmul.f32.gmra.mxu0 %v2014
    %v4402 = vpop.f32.mrf.mxu0
    %v4403 = vadd.f32 %v3945, %v4402
    %4404 = vmatmul.f32.gmra.mxu0 %v2015
    %v4405 = vpop.f32.mrf.mxu0
    %v4406 = vadd.f32 %v3948, %v4405
    %4407 = vmatmul.f32.gmra.mxu0 %v2016
    %v4408 = vpop.f32.mrf.mxu0
    %v4409 = vadd.f32 %v3951, %v4408
    %4410 = vmatmul.f32.gmra.mxu0 %v2017
    %v4411 = vpop.f32.mrf.mxu0
    %v4412 = vadd.f32 %v3954, %v4411
    %4413 = vmatmul.f32.gmra.mxu0 %v2024
    %v4414 = vpop.f32.mrf.mxu0
    %v4415 = vadd.f32 %v3957, %v4414
    %4416 = vmatmul.f32.gmra.mxu0 %v2025
    %v4417 = vpop.f32.mrf.mxu0
    %v4418 = vadd.f32 %v3960, %v4417
    %4419 = vmatmul.f32.gmra.mxu0 %v2026
    %v4420 = vpop.f32.mrf.mxu0
    %v4421 = vadd.f32 %v3963, %v4420
    %4422 = vmatmul.f32.gmra.mxu0 %v2027
    %v4423 = vpop.f32.mrf.mxu0
    %v4424 = vadd.f32 %v3966, %v4423
    %4425 = vmatmul.f32.gmra.mxu0 %v2028
    %v4426 = vpop.f32.mrf.mxu0
    %v4427 = vadd.f32 %v3969, %v4426
    %4428 = vmatmul.f32.gmra.mxu0 %v2029
    %v4429 = vpop.f32.mrf.mxu0
    %v4430 = vadd.f32 %v3972, %v4429
    %4431 = vmatmul.f32.gmra.mxu0 %v2030
    %v4432 = vpop.f32.mrf.mxu0
    %v4433 = vadd.f32 %v3975, %v4432
    %4434 = vmatmul.f32.gmra.mxu0 %v2031
    %v4435 = vpop.f32.mrf.mxu0
    %v4436 = vadd.f32 %v3978, %v4435
    %4437 = vmatmul.f32.gmra.mxu0 %v2032
    %v4438 = vpop.f32.mrf.mxu0
    %v4439 = vadd.f32 %v3981, %v4438
    %4440 = vmatmul.f32.gmra.mxu0 %v2033
    %v4441 = vpop.f32.mrf.mxu0
    %v4442 = vadd.f32 %v3984, %v4441
    %4443 = vmatmul.f32.gmra.mxu0 %v2034
    %v4444 = vpop.f32.mrf.mxu0
    %v4445 = vadd.f32 %v3987, %v4444
    %4446 = vmatmul.f32.gmra.mxu0 %v2035
    %v4447 = vpop.f32.mrf.mxu0
    %v4448 = vadd.f32 %v3990, %v4447
    %4449 = vmatmul.f32.gmra.mxu0 %v2036
    %v4450 = vpop.f32.mrf.mxu0
    %v4451 = vadd.f32 %v3993, %v4450
    %4452 = vmatmul.f32.gmra.mxu0 %v2037
    %v4453 = vpop.f32.mrf.mxu0
    %v4454 = vadd.f32 %v3996, %v4453
    %4455 = vmatmul.f32.gmra.mxu0 %v2038
    %v4456 = vpop.f32.mrf.mxu0
    %v4457 = vadd.f32 %v3999, %v4456
    %4458 = vmatmul.f32.gmra.mxu0 %v2039
    %v4459 = vpop.f32.mrf.mxu0
    %v4460 = vadd.f32 %v4002, %v4459
    %4461 = vmatmul.f32.gmra.mxu0 %v2040
    %v4462 = vpop.f32.mrf.mxu0
    %v4463 = vadd.f32 %v4005, %v4462
    %4464 = vmatmul.f32.gmra.mxu0 %v2041
    %v4465 = vpop.f32.mrf.mxu0
    %v4466 = vadd.f32 %v4008, %v4465
    %4467 = vmatmul.f32.gmra.mxu0 %v2042
    %v4468 = vpop.f32.mrf.mxu0
    %v4469 = vadd.f32 %v4011, %v4468
    %4470 = vmatmul.f32.gmra.mxu0 %v2043
    %v4471 = vpop.f32.mrf.mxu0
    %v4472 = vadd.f32 %v4014, %v4471
    %4473 = vmatmul.f32.gmra.mxu0 %v2044
    %v4474 = vpop.f32.mrf.mxu0
    %v4475 = vadd.f32 %v4017, %v4474
    %4476 = vmatmul.f32.gmra.mxu0 %v2051
    %v4477 = vpop.f32.mrf.mxu0
    %v4478 = vadd.f32 %v4020, %v4477
    %4479 = vmatmul.f32.gmra.mxu0 %v2052
    %v4480 = vpop.f32.mrf.mxu0
    %v4481 = vadd.f32 %v4023, %v4480
    %4482 = vmatmul.f32.gmra.mxu0 %v2053
    %v4483 = vpop.f32.mrf.mxu0
    %v4484 = vadd.f32 %v4026, %v4483
    %4485 = vmatmul.f32.gmra.mxu0 %v2054
    %v4486 = vpop.f32.mrf.mxu0
    %v4487 = vadd.f32 %v4029, %v4486
    %4488 = vmatmul.f32.gmra.mxu0 %v2055
    %v4489 = vpop.f32.mrf.mxu0
    %v4490 = vadd.f32 %v4032, %v4489
    %4491 = vmatmul.f32.gmra.mxu0 %v2056
    %v4492 = vpop.f32.mrf.mxu0
    %v4493 = vadd.f32 %v4035, %v4492
    %4494 = vmatmul.f32.gmra.mxu0 %v2057
    %v4495 = vpop.f32.mrf.mxu0
    %v4496 = vadd.f32 %v4038, %v4495
    %4497 = vmatmul.f32.gmra.mxu0 %v2058
    %v4498 = vpop.f32.mrf.mxu0
    %v4499 = vadd.f32 %v4041, %v4498
    %4500 = vmatmul.f32.gmra.mxu0 %v2059
    %v4501 = vpop.f32.mrf.mxu0
    %v4502 = vadd.f32 %v4044, %v4501
    %4503 = vmatmul.f32.gmra.mxu0 %v2060
    %v4504 = vpop.f32.mrf.mxu0
    %v4505 = vadd.f32 %v4047, %v4504
    %4506 = vmatmul.f32.gmra.mxu0 %v2061
    %v4507 = vpop.f32.mrf.mxu0
    %v4508 = vadd.f32 %v4050, %v4507
    %4509 = vmatmul.f32.gmra.mxu0 %v2062
    %v4510 = vpop.f32.mrf.mxu0
    %v4511 = vadd.f32 %v4053, %v4510
    %4512 = vmatmul.f32.gmra.mxu0 %v2063
    %v4513 = vpop.f32.mrf.mxu0
    %v4514 = vadd.f32 %v4056, %v4513
    %4515 = vmatmul.f32.gmra.mxu0 %v2064
    %v4516 = vpop.f32.mrf.mxu0
    %v4517 = vadd.f32 %v4059, %v4516
    %4518 = vmatmul.f32.gmra.mxu0 %v2065
    %v4519 = vpop.f32.mrf.mxu0
    %v4520 = vadd.f32 %v4062, %v4519
    %4521 = vmatmul.f32.gmra.mxu0 %v2066
    %v4522 = vpop.f32.mrf.mxu0
    %v4523 = vadd.f32 %v4065, %v4522
    %4524 = vmatmul.f32.gmra.mxu0 %v2067
    %v4525 = vpop.f32.mrf.mxu0
    %v4526 = vadd.f32 %v4068, %v4525
    %4527 = vmatmul.f32.gmra.mxu0 %v2068
    %v4528 = vpop.f32.mrf.mxu0
    %v4529 = vadd.f32 %v4071, %v4528
    %4530 = vmatmul.f32.gmra.mxu0 %v2069
    %v4531 = vpop.f32.mrf.mxu0
    %v4532 = vadd.f32 %v4074, %v4531
    %4533 = vmatmul.f32.gmra.mxu0 %v2070
    %v4534 = vpop.f32.mrf.mxu0
    %v4535 = vadd.f32 %v4077, %v4534
    %4536 = vmatmul.f32.gmra.mxu0 %v2071
    %v4537 = vpop.f32.mrf.mxu0
    %v4538 = vadd.f32 %v4080, %v4537
    %4539 = vdwg.mxu0
    %4540 = vmatpush.msra.mxu0 %v2197
    %4541 = vmatpush.msra.mxu0 %v2196
    %4542 = vmatpush.msra.mxu0 %v2195
    %4543 = vmatpush.msra.mxu0 %v2194
    %4544 = vmatpush.msra.mxu0 %v2193
    %4545 = vmatpush.msra.mxu0 %v2192
    %4546 = vmatpush.msra.mxu0 %v2191
    %4547 = vmatpush.msra.mxu0 %v2190
    %4548 = vmatpush.msra.mxu0 %v2189
    %4549 = vmatpush.msra.mxu0 %v2188
    %4550 = vmatpush.msra.mxu0 %v2187
    %4551 = vmatpush.msra.mxu0 %v2186
    %4552 = vmatpush.msra.mxu0 %v2185
    %4553 = vmatpush.msra.mxu0 %v2184
    %4554 = vmatpush.msra.mxu0 %v2183
    %4555 = vmatpush.msra.mxu0 %v2182
    %4556 = vmatmul.f32.gmra.mxu0 %v1892
    %v4557 = vpop.f32.mrf.mxu0
    %v4558 = vadd.f32 %v4100, %v4557
    %4559 = vmatmul.f32.gmra.mxu0 %v1893
    %v4560 = vpop.f32.mrf.mxu0
    %v4561 = vadd.f32 %v4103, %v4560
    %4562 = vmatmul.f32.gmra.mxu0 %v1894
    %v4563 = vpop.f32.mrf.mxu0
    %v4564 = vadd.f32 %v4106, %v4563
    %4565 = vmatmul.f32.gmra.mxu0 %v1895
    %v4566 = vpop.f32.mrf.mxu0
    %v4567 = vadd.f32 %v4109, %v4566
    %4568 = vmatmul.f32.gmra.mxu0 %v1896
    %v4569 = vpop.f32.mrf.mxu0
    %v4570 = vadd.f32 %v4112, %v4569
    %4571 = vmatmul.f32.gmra.mxu0 %v1897
    %v4572 = vpop.f32.mrf.mxu0
    %v4573 = vadd.f32 %v4115, %v4572
    %4574 = vmatmul.f32.gmra.mxu0 %v1898
    %v4575 = vpop.f32.mrf.mxu0
    %v4576 = vadd.f32 %v4118, %v4575
    %4577 = vmatmul.f32.gmra.mxu0 %v1899
    %v4578 = vpop.f32.mrf.mxu0
    %v4579 = vadd.f32 %v4121, %v4578
    %4580 = vmatmul.f32.gmra.mxu0 %v1900
    %v4581 = vpop.f32.mrf.mxu0
    %v4582 = vadd.f32 %v4124, %v4581
    %4583 = vmatmul.f32.gmra.mxu0 %v1901
    %v4584 = vpop.f32.mrf.mxu0
    %v4585 = vadd.f32 %v4127, %v4584
    %4586 = vmatmul.f32.gmra.mxu0 %v1902
    %v4587 = vpop.f32.mrf.mxu0
    %v4588 = vadd.f32 %v4130, %v4587
    %4589 = vmatmul.f32.gmra.mxu0 %v1903
    %v4590 = vpop.f32.mrf.mxu0
    %v4591 = vadd.f32 %v4133, %v4590
    %4592 = vmatmul.f32.gmra.mxu0 %v1904
    %v4593 = vpop.f32.mrf.mxu0
    %v4594 = vadd.f32 %v4136, %v4593
    %4595 = vmatmul.f32.gmra.mxu0 %v1905
    %v4596 = vpop.f32.mrf.mxu0
    %v4597 = vadd.f32 %v4139, %v4596
    %4598 = vmatmul.f32.gmra.mxu0 %v1906
    %v4599 = vpop.f32.mrf.mxu0
    %v4600 = vadd.f32 %v4142, %v4599
    %4601 = vmatmul.f32.gmra.mxu0 %v1907
    %v4602 = vpop.f32.mrf.mxu0
    %v4603 = vadd.f32 %v4145, %v4602
    %4604 = vmatmul.f32.gmra.mxu0 %v1908
    %v4605 = vpop.f32.mrf.mxu0
    %v4606 = vadd.f32 %v4148, %v4605
    %4607 = vmatmul.f32.gmra.mxu0 %v1909
    %v4608 = vpop.f32.mrf.mxu0
    %v4609 = vadd.f32 %v4151, %v4608
    %4610 = vmatmul.f32.gmra.mxu0 %v1910
    %v4611 = vpop.f32.mrf.mxu0
    %v4612 = vadd.f32 %v4154, %v4611
    %4613 = vmatmul.f32.gmra.mxu0 %v1911
    %v4614 = vpop.f32.mrf.mxu0
    %v4615 = vadd.f32 %v4157, %v4614
    %4616 = vmatmul.f32.gmra.mxu0 %v1912
    %v4617 = vpop.f32.mrf.mxu0
    %v4618 = vadd.f32 %v4160, %v4617
    %4619 = vmatmul.f32.gmra.mxu0 %v1919
    %v4620 = vpop.f32.mrf.mxu0
    %v4621 = vadd.f32 %v4163, %v4620
    %4622 = vmatmul.f32.gmra.mxu0 %v1920
    %v4623 = vpop.f32.mrf.mxu0
    %v4624 = vadd.f32 %v4166, %v4623
    %4625 = vmatmul.f32.gmra.mxu0 %v1921
    %v4626 = vpop.f32.mrf.mxu0
    %v4627 = vadd.f32 %v4169, %v4626
    %4628 = vmatmul.f32.gmra.mxu0 %v1922
    %v4629 = vpop.f32.mrf.mxu0
    %v4630 = vadd.f32 %v4172, %v4629
    %4631 = vmatmul.f32.gmra.mxu0 %v1923
    %v4632 = vpop.f32.mrf.mxu0
    %v4633 = vadd.f32 %v4175, %v4632
    %4634 = vmatmul.f32.gmra.mxu0 %v1924
    %v4635 = vpop.f32.mrf.mxu0
    %v4636 = vadd.f32 %v4178, %v4635
    %4637 = vmatmul.f32.gmra.mxu0 %v1925
    %v4638 = vpop.f32.mrf.mxu0
    %v4639 = vadd.f32 %v4181, %v4638
    %4640 = vmatmul.f32.gmra.mxu0 %v1926
    %v4641 = vpop.f32.mrf.mxu0
    %v4642 = vadd.f32 %v4184, %v4641
    %4643 = vmatmul.f32.gmra.mxu0 %v1927
    %v4644 = vpop.f32.mrf.mxu0
    %v4645 = vadd.f32 %v4187, %v4644
    %4646 = vmatmul.f32.gmra.mxu0 %v1928
    %v4647 = vpop.f32.mrf.mxu0
    %v4648 = vadd.f32 %v4190, %v4647
    %4649 = vmatmul.f32.gmra.mxu0 %v1929
    %v4650 = vpop.f32.mrf.mxu0
    %v4651 = vadd.f32 %v4193, %v4650
    %4652 = vmatmul.f32.gmra.mxu0 %v1930
    %v4653 = vpop.f32.mrf.mxu0
    %v4654 = vadd.f32 %v4196, %v4653
    %4655 = vmatmul.f32.gmra.mxu0 %v1931
    %v4656 = vpop.f32.mrf.mxu0
    %v4657 = vadd.f32 %v4199, %v4656
    %4658 = vmatmul.f32.gmra.mxu0 %v1932
    %v4659 = vpop.f32.mrf.mxu0
    %v4660 = vadd.f32 %v4202, %v4659
    %4661 = vmatmul.f32.gmra.mxu0 %v1933
    %v4662 = vpop.f32.mrf.mxu0
    %v4663 = vadd.f32 %v4205, %v4662
    %4664 = vmatmul.f32.gmra.mxu0 %v1934
    %v4665 = vpop.f32.mrf.mxu0
    %v4666 = vadd.f32 %v4208, %v4665
    %4667 = vmatmul.f32.gmra.mxu0 %v1935
    %v4668 = vpop.f32.mrf.mxu0
    %v4669 = vadd.f32 %v4211, %v4668
    %4670 = vmatmul.f32.gmra.mxu0 %v1936
    %v4671 = vpop.f32.mrf.mxu0
    %v4672 = vadd.f32 %v4214, %v4671
    %4673 = vmatmul.f32.gmra.mxu0 %v1937
    %v4674 = vpop.f32.mrf.mxu0
    %v4675 = vadd.f32 %v4217, %v4674
    %4676 = vmatmul.f32.gmra.mxu0 %v1938
    %v4677 = vpop.f32.mrf.mxu0
    %v4678 = vadd.f32 %v4220, %v4677
    %4679 = vmatmul.f32.gmra.mxu0 %v1939
    %v4680 = vpop.f32.mrf.mxu0
    %v4681 = vadd.f32 %v4223, %v4680
    %4682 = vmatmul.f32.gmra.mxu0 %v1946
    %v4683 = vpop.f32.mrf.mxu0
    %v4684 = vadd.f32 %v4226, %v4683
    %4685 = vmatmul.f32.gmra.mxu0 %v1947
    %v4686 = vpop.f32.mrf.mxu0
    %v4687 = vadd.f32 %v4229, %v4686
    %4688 = vmatmul.f32.gmra.mxu0 %v1948
    %v4689 = vpop.f32.mrf.mxu0
    %v4690 = vadd.f32 %v4232, %v4689
    %4691 = vmatmul.f32.gmra.mxu0 %v1949
    %v4692 = vpop.f32.mrf.mxu0
    %v4693 = vadd.f32 %v4235, %v4692
    %4694 = vmatmul.f32.gmra.mxu0 %v1950
    %v4695 = vpop.f32.mrf.mxu0
    %v4696 = vadd.f32 %v4238, %v4695
    %4697 = vmatmul.f32.gmra.mxu0 %v1951
    %v4698 = vpop.f32.mrf.mxu0
    %v4699 = vadd.f32 %v4241, %v4698
    %4700 = vmatmul.f32.gmra.mxu0 %v1952
    %v4701 = vpop.f32.mrf.mxu0
    %v4702 = vadd.f32 %v4244, %v4701
    %4703 = vmatmul.f32.gmra.mxu0 %v1953
    %v4704 = vpop.f32.mrf.mxu0
    %v4705 = vadd.f32 %v4247, %v4704
    %4706 = vmatmul.f32.gmra.mxu0 %v1954
    %v4707 = vpop.f32.mrf.mxu0
    %v4708 = vadd.f32 %v4250, %v4707
    %4709 = vmatmul.f32.gmra.mxu0 %v1955
    %v4710 = vpop.f32.mrf.mxu0
    %v4711 = vadd.f32 %v4253, %v4710
    %4712 = vmatmul.f32.gmra.mxu0 %v1956
    %v4713 = vpop.f32.mrf.mxu0
    %v4714 = vadd.f32 %v4256, %v4713
    %4715 = vmatmul.f32.gmra.mxu0 %v1957
    %v4716 = vpop.f32.mrf.mxu0
    %v4717 = vadd.f32 %v4259, %v4716
    %4718 = vmatmul.f32.gmra.mxu0 %v1958
    %v4719 = vpop.f32.mrf.mxu0
    %v4720 = vadd.f32 %v4262, %v4719
    %4721 = vmatmul.f32.gmra.mxu0 %v1959
    %v4722 = vpop.f32.mrf.mxu0
    %v4723 = vadd.f32 %v4265, %v4722
    %4724 = vmatmul.f32.gmra.mxu0 %v1960
    %v4725 = vpop.f32.mrf.mxu0
    %v4726 = vadd.f32 %v4268, %v4725
    %4727 = vmatmul.f32.gmra.mxu0 %v1961
    %v4728 = vpop.f32.mrf.mxu0
    %v4729 = vadd.f32 %v4271, %v4728
    %4730 = vmatmul.f32.gmra.mxu0 %v1962
    %v4731 = vpop.f32.mrf.mxu0
    %v4732 = vadd.f32 %v4274, %v4731
    %4733 = vmatmul.f32.gmra.mxu0 %v1963
    %v4734 = vpop.f32.mrf.mxu0
    %v4735 = vadd.f32 %v4277, %v4734
    %4736 = vmatmul.f32.gmra.mxu0 %v1964
    %v4737 = vpop.f32.mrf.mxu0
    %v4738 = vadd.f32 %v4280, %v4737
    %4739 = vmatmul.f32.gmra.mxu0 %v1965
    %v4740 = vpop.f32.mrf.mxu0
    %v4741 = vadd.f32 %v4283, %v4740
    %4742 = vmatmul.f32.gmra.mxu0 %v1966
    %v4743 = vpop.f32.mrf.mxu0
    %v4744 = vadd.f32 %v4286, %v4743
    %4745 = vmatmul.f32.gmra.mxu0 %v1973
    %v4746 = vpop.f32.mrf.mxu0
    %v4747 = vadd.f32 %v4289, %v4746
    %4748 = vmatmul.f32.gmra.mxu0 %v1974
    %v4749 = vpop.f32.mrf.mxu0
    %v4750 = vadd.f32 %v4292, %v4749
    %4751 = vmatmul.f32.gmra.mxu0 %v1975
    %v4752 = vpop.f32.mrf.mxu0
    %v4753 = vadd.f32 %v4295, %v4752
    %4754 = vmatmul.f32.gmra.mxu0 %v1976
    %v4755 = vpop.f32.mrf.mxu0
    %v4756 = vadd.f32 %v4298, %v4755
    %4757 = vmatmul.f32.gmra.mxu0 %v1977
    %v4758 = vpop.f32.mrf.mxu0
    %v4759 = vadd.f32 %v4301, %v4758
    %4760 = vmatmul.f32.gmra.mxu0 %v1978
    %v4761 = vpop.f32.mrf.mxu0
    %v4762 = vadd.f32 %v4304, %v4761
    %4763 = vmatmul.f32.gmra.mxu0 %v1979
    %v4764 = vpop.f32.mrf.mxu0
    %v4765 = vadd.f32 %v4307, %v4764
    %4766 = vmatmul.f32.gmra.mxu0 %v1980
    %v4767 = vpop.f32.mrf.mxu0
    %v4768 = vadd.f32 %v4310, %v4767
    %4769 = vmatmul.f32.gmra.mxu0 %v1981
    %v4770 = vpop.f32.mrf.mxu0
    %v4771 = vadd.f32 %v4313, %v4770
    %4772 = vmatmul.f32.gmra.mxu0 %v1982
    %v4773 = vpop.f32.mrf.mxu0
    %v4774 = vadd.f32 %v4316, %v4773
    %4775 = vmatmul.f32.gmra.mxu0 %v1983
    %v4776 = vpop.f32.mrf.mxu0
    %v4777 = vadd.f32 %v4319, %v4776
    %4778 = vmatmul.f32.gmra.mxu0 %v1984
    %v4779 = vpop.f32.mrf.mxu0
    %v4780 = vadd.f32 %v4322, %v4779
    %4781 = vmatmul.f32.gmra.mxu0 %v1985
    %v4782 = vpop.f32.mrf.mxu0
    %v4783 = vadd.f32 %v4325, %v4782
    %4784 = vmatmul.f32.gmra.mxu0 %v1986
    %v4785 = vpop.f32.mrf.mxu0
    %v4786 = vadd.f32 %v4328, %v4785
    %4787 = vmatmul.f32.gmra.mxu0 %v1987
    %v4788 = vpop.f32.mrf.mxu0
    %v4789 = vadd.f32 %v4331, %v4788
    %4790 = vmatmul.f32.gmra.mxu0 %v1988
    %v4791 = vpop.f32.mrf.mxu0
    %v4792 = vadd.f32 %v4334, %v4791
    %4793 = vmatmul.f32.gmra.mxu0 %v1989
    %v4794 = vpop.f32.mrf.mxu0
    %v4795 = vadd.f32 %v4337, %v4794
    %4796 = vmatmul.f32.gmra.mxu0 %v1990
    %v4797 = vpop.f32.mrf.mxu0
    %v4798 = vadd.f32 %v4340, %v4797
    %4799 = vmatmul.f32.gmra.mxu0 %v1991
    %v4800 = vpop.f32.mrf.mxu0
    %v4801 = vadd.f32 %v4343, %v4800
    %4802 = vmatmul.f32.gmra.mxu0 %v1992
    %v4803 = vpop.f32.mrf.mxu0
    %v4804 = vadd.f32 %v4346, %v4803
    %4805 = vmatmul.f32.gmra.mxu0 %v1993
    %v4806 = vpop.f32.mrf.mxu0
    %v4807 = vadd.f32 %v4349, %v4806
    %4808 = vmatmul.f32.gmra.mxu0 %v2000
    %v4809 = vpop.f32.mrf.mxu0
    %v4810 = vadd.f32 %v4352, %v4809
    %4811 = vmatmul.f32.gmra.mxu0 %v2001
    %v4812 = vpop.f32.mrf.mxu0
    %v4813 = vadd.f32 %v4355, %v4812
    %4814 = vmatmul.f32.gmra.mxu0 %v2002
    %v4815 = vpop.f32.mrf.mxu0
    %v4816 = vadd.f32 %v4358, %v4815
    %4817 = vmatmul.f32.gmra.mxu0 %v2003
    %v4818 = vpop.f32.mrf.mxu0
    %v4819 = vadd.f32 %v4361, %v4818
    %4820 = vmatmul.f32.gmra.mxu0 %v2004
    %v4821 = vpop.f32.mrf.mxu0
    %v4822 = vadd.f32 %v4364, %v4821
    %4823 = vmatmul.f32.gmra.mxu0 %v2005
    %v4824 = vpop.f32.mrf.mxu0
    %v4825 = vadd.f32 %v4367, %v4824
    %4826 = vmatmul.f32.gmra.mxu0 %v2006
    %v4827 = vpop.f32.mrf.mxu0
    %v4828 = vadd.f32 %v4370, %v4827
    %4829 = vmatmul.f32.gmra.mxu0 %v2007
    %v4830 = vpop.f32.mrf.mxu0
    %v4831 = vadd.f32 %v4373, %v4830
    %4832 = vmatmul.f32.gmra.mxu0 %v2008
    %v4833 = vpop.f32.mrf.mxu0
    %v4834 = vadd.f32 %v4376, %v4833
    %4835 = vmatmul.f32.gmra.mxu0 %v2009
    %v4836 = vpop.f32.mrf.mxu0
    %v4837 = vadd.f32 %v4379, %v4836
    %4838 = vmatmul.f32.gmra.mxu0 %v2010
    %v4839 = vpop.f32.mrf.mxu0
    %v4840 = vadd.f32 %v4382, %v4839
    %4841 = vmatmul.f32.gmra.mxu0 %v2011
    %v4842 = vpop.f32.mrf.mxu0
    %v4843 = vadd.f32 %v4385, %v4842
    %4844 = vmatmul.f32.gmra.mxu0 %v2012
    %v4845 = vpop.f32.mrf.mxu0
    %v4846 = vadd.f32 %v4388, %v4845
    %4847 = vmatmul.f32.gmra.mxu0 %v2013
    %v4848 = vpop.f32.mrf.mxu0
    %v4849 = vadd.f32 %v4391, %v4848
    %4850 = vmatmul.f32.gmra.mxu0 %v2014
    %v4851 = vpop.f32.mrf.mxu0
    %v4852 = vadd.f32 %v4394, %v4851
    %4853 = vmatmul.f32.gmra.mxu0 %v2015
    %v4854 = vpop.f32.mrf.mxu0
    %v4855 = vadd.f32 %v4397, %v4854
    %4856 = vmatmul.f32.gmra.mxu0 %v2016
    %v4857 = vpop.f32.mrf.mxu0
    %v4858 = vadd.f32 %v4400, %v4857
    %4859 = vmatmul.f32.gmra.mxu0 %v2017
    %v4860 = vpop.f32.mrf.mxu0
    %v4861 = vadd.f32 %v4403, %v4860
    %4862 = vmatmul.f32.gmra.mxu0 %v2018
    %v4863 = vpop.f32.mrf.mxu0
    %v4864 = vadd.f32 %v4406, %v4863
    %4865 = vmatmul.f32.gmra.mxu0 %v2019
    %v4866 = vpop.f32.mrf.mxu0
    %v4867 = vadd.f32 %v4409, %v4866
    %4868 = vmatmul.f32.gmra.mxu0 %v2020
    %v4869 = vpop.f32.mrf.mxu0
    %v4870 = vadd.f32 %v4412, %v4869
    %4871 = vmatmul.f32.gmra.mxu0 %v2027
    %v4872 = vpop.f32.mrf.mxu0
    %v4873 = vadd.f32 %v4415, %v4872
    %4874 = vmatmul.f32.gmra.mxu0 %v2028
    %v4875 = vpop.f32.mrf.mxu0
    %v4876 = vadd.f32 %v4418, %v4875
    %4877 = vmatmul.f32.gmra.mxu0 %v2029
    %v4878 = vpop.f32.mrf.mxu0
    %v4879 = vadd.f32 %v4421, %v4878
    %4880 = vmatmul.f32.gmra.mxu0 %v2030
    %v4881 = vpop.f32.mrf.mxu0
    %v4882 = vadd.f32 %v4424, %v4881
    %4883 = vmatmul.f32.gmra.mxu0 %v2031
    %v4884 = vpop.f32.mrf.mxu0
    %v4885 = vadd.f32 %v4427, %v4884
    %4886 = vmatmul.f32.gmra.mxu0 %v2032
    %v4887 = vpop.f32.mrf.mxu0
    %v4888 = vadd.f32 %v4430, %v4887
    %4889 = vmatmul.f32.gmra.mxu0 %v2033
    %v4890 = vpop.f32.mrf.mxu0
    %v4891 = vadd.f32 %v4433, %v4890
    %4892 = vmatmul.f32.gmra.mxu0 %v2034
    %v4893 = vpop.f32.mrf.mxu0
    %v4894 = vadd.f32 %v4436, %v4893
    %4895 = vmatmul.f32.gmra.mxu0 %v2035
    %v4896 = vpop.f32.mrf.mxu0
    %v4897 = vadd.f32 %v4439, %v4896
    %4898 = vmatmul.f32.gmra.mxu0 %v2036
    %v4899 = vpop.f32.mrf.mxu0
    %v4900 = vadd.f32 %v4442, %v4899
    %4901 = vmatmul.f32.gmra.mxu0 %v2037
    %v4902 = vpop.f32.mrf.mxu0
    %v4903 = vadd.f32 %v4445, %v4902
    %4904 = vmatmul.f32.gmra.mxu0 %v2038
    %v4905 = vpop.f32.mrf.mxu0
    %v4906 = vadd.f32 %v4448, %v4905
    %4907 = vmatmul.f32.gmra.mxu0 %v2039
    %v4908 = vpop.f32.mrf.mxu0
    %v4909 = vadd.f32 %v4451, %v4908
    %4910 = vmatmul.f32.gmra.mxu0 %v2040
    %v4911 = vpop.f32.mrf.mxu0
    %v4912 = vadd.f32 %v4454, %v4911
    %4913 = vmatmul.f32.gmra.mxu0 %v2041
    %v4914 = vpop.f32.mrf.mxu0
    %v4915 = vadd.f32 %v4457, %v4914
    %4916 = vmatmul.f32.gmra.mxu0 %v2042
    %v4917 = vpop.f32.mrf.mxu0
    %v4918 = vadd.f32 %v4460, %v4917
    %4919 = vmatmul.f32.gmra.mxu0 %v2043
    %v4920 = vpop.f32.mrf.mxu0
    %v4921 = vadd.f32 %v4463, %v4920
    %4922 = vmatmul.f32.gmra.mxu0 %v2044
    %v4923 = vpop.f32.mrf.mxu0
    %v4924 = vadd.f32 %v4466, %v4923
    %4925 = vmatmul.f32.gmra.mxu0 %v2045
    %v4926 = vpop.f32.mrf.mxu0
    %v4927 = vadd.f32 %v4469, %v4926
    %4928 = vmatmul.f32.gmra.mxu0 %v2046
    %v4929 = vpop.f32.mrf.mxu0
    %v4930 = vadd.f32 %v4472, %v4929
    %4931 = vmatmul.f32.gmra.mxu0 %v2047
    %v4932 = vpop.f32.mrf.mxu0
    %v4933 = vadd.f32 %v4475, %v4932
    %4934 = vmatmul.f32.gmra.mxu0 %v2054
    %v4935 = vpop.f32.mrf.mxu0
    %v4936 = vadd.f32 %v4478, %v4935
    %4937 = vmatmul.f32.gmra.mxu0 %v2055
    %v4938 = vpop.f32.mrf.mxu0
    %v4939 = vadd.f32 %v4481, %v4938
    %4940 = vmatmul.f32.gmra.mxu0 %v2056
    %v4941 = vpop.f32.mrf.mxu0
    %v4942 = vadd.f32 %v4484, %v4941
    %4943 = vmatmul.f32.gmra.mxu0 %v2057
    %v4944 = vpop.f32.mrf.mxu0
    %v4945 = vadd.f32 %v4487, %v4944
    %4946 = vmatmul.f32.gmra.mxu0 %v2058
    %v4947 = vpop.f32.mrf.mxu0
    %v4948 = vadd.f32 %v4490, %v4947
    %4949 = vmatmul.f32.gmra.mxu0 %v2059
    %v4950 = vpop.f32.mrf.mxu0
    %v4951 = vadd.f32 %v4493, %v4950
    %4952 = vmatmul.f32.gmra.mxu0 %v2060
    %v4953 = vpop.f32.mrf.mxu0
    %v4954 = vadd.f32 %v4496, %v4953
    %4955 = vmatmul.f32.gmra.mxu0 %v2061
    %v4956 = vpop.f32.mrf.mxu0
    %v4957 = vadd.f32 %v4499, %v4956
    %4958 = vmatmul.f32.gmra.mxu0 %v2062
    %v4959 = vpop.f32.mrf.mxu0
    %v4960 = vadd.f32 %v4502, %v4959
    %4961 = vmatmul.f32.gmra.mxu0 %v2063
    %v4962 = vpop.f32.mrf.mxu0
    %v4963 = vadd.f32 %v4505, %v4962
    %4964 = vmatmul.f32.gmra.mxu0 %v2064
    %v4965 = vpop.f32.mrf.mxu0
    %v4966 = vadd.f32 %v4508, %v4965
    %4967 = vmatmul.f32.gmra.mxu0 %v2065
    %v4968 = vpop.f32.mrf.mxu0
    %v4969 = vadd.f32 %v4511, %v4968
    %4970 = vmatmul.f32.gmra.mxu0 %v2066
    %v4971 = vpop.f32.mrf.mxu0
    %v4972 = vadd.f32 %v4514, %v4971
    %4973 = vmatmul.f32.gmra.mxu0 %v2067
    %v4974 = vpop.f32.mrf.mxu0
    %v4975 = vadd.f32 %v4517, %v4974
    %4976 = vmatmul.f32.gmra.mxu0 %v2068
    %v4977 = vpop.f32.mrf.mxu0
    %v4978 = vadd.f32 %v4520, %v4977
    %4979 = vmatmul.f32.gmra.mxu0 %v2069
    %v4980 = vpop.f32.mrf.mxu0
    %v4981 = vadd.f32 %v4523, %v4980
    %4982 = vmatmul.f32.gmra.mxu0 %v2070
    %v4983 = vpop.f32.mrf.mxu0
    %v4984 = vadd.f32 %v4526, %v4983
    %4985 = vmatmul.f32.gmra.mxu0 %v2071
    %v4986 = vpop.f32.mrf.mxu0
    %v4987 = vadd.f32 %v4529, %v4986
    %4988 = vmatmul.f32.gmra.mxu0 %v2072
    %v4989 = vpop.f32.mrf.mxu0
    %v4990 = vadd.f32 %v4532, %v4989
    %4991 = vmatmul.f32.gmra.mxu0 %v2073
    %v4992 = vpop.f32.mrf.mxu0
    %v4993 = vadd.f32 %v4535, %v4992
    %4994 = vmatmul.f32.gmra.mxu0 %v2074
    %v4995 = vpop.f32.mrf.mxu0
    %v4996 = vadd.f32 %v4538, %v4995
    %4997 = vdwg.mxu0
    %4998 = vmatpush.msra.mxu0 %v2213
    %4999 = vmatpush.msra.mxu0 %v2212
    %5000 = vmatpush.msra.mxu0 %v2211
    %5001 = vmatpush.msra.mxu0 %v2210
    %5002 = vmatpush.msra.mxu0 %v2209
    %5003 = vmatpush.msra.mxu0 %v2208
    %5004 = vmatpush.msra.mxu0 %v2207
    %5005 = vmatpush.msra.mxu0 %v2206
    %5006 = vmatpush.msra.mxu0 %v2205
    %5007 = vmatpush.msra.mxu0 %v2204
    %5008 = vmatpush.msra.mxu0 %v2203
    %5009 = vmatpush.msra.mxu0 %v2202
    %5010 = vmatpush.msra.mxu0 %v2201
    %5011 = vmatpush.msra.mxu0 %v2200
    %5012 = vmatpush.msra.mxu0 %v2199
    %5013 = vmatpush.msra.mxu0 %v2198
    %5014 = vmatmul.f32.gmra.mxu0 %v1913
    %v5015 = vpop.f32.mrf.mxu0
    %v5016 = vadd.f32 %v4558, %v5015
    %5017 = vmatmul.f32.gmra.mxu0 %v1914
    %v5018 = vpop.f32.mrf.mxu0
    %v5019 = vadd.f32 %v4561, %v5018
    %5020 = vmatmul.f32.gmra.mxu0 %v1915
    %v5021 = vpop.f32.mrf.mxu0
    %v5022 = vadd.f32 %v4564, %v5021
    %5023 = vmatmul.f32.gmra.mxu0 %v1916
    %v5024 = vpop.f32.mrf.mxu0
    %v5025 = vadd.f32 %v4567, %v5024
    %5026 = vmatmul.f32.gmra.mxu0 %v1917
    %v5027 = vpop.f32.mrf.mxu0
    %v5028 = vadd.f32 %v4570, %v5027
    %5029 = vmatmul.f32.gmra.mxu0 %v1918
    %v5030 = vpop.f32.mrf.mxu0
    %v5031 = vadd.f32 %v4573, %v5030
    %5032 = vmatmul.f32.gmra.mxu0 %v1919
    %v5033 = vpop.f32.mrf.mxu0
    %v5034 = vadd.f32 %v4576, %v5033
    %5035 = vmatmul.f32.gmra.mxu0 %v1920
    %v5036 = vpop.f32.mrf.mxu0
    %v5037 = vadd.f32 %v4579, %v5036
    %5038 = vmatmul.f32.gmra.mxu0 %v1921
    %v5039 = vpop.f32.mrf.mxu0
    %v5040 = vadd.f32 %v4582, %v5039
    %5041 = vmatmul.f32.gmra.mxu0 %v1922
    %v5042 = vpop.f32.mrf.mxu0
    %v5043 = vadd.f32 %v4585, %v5042
    %5044 = vmatmul.f32.gmra.mxu0 %v1923
    %v5045 = vpop.f32.mrf.mxu0
    %v5046 = vadd.f32 %v4588, %v5045
    %5047 = vmatmul.f32.gmra.mxu0 %v1924
    %v5048 = vpop.f32.mrf.mxu0
    %v5049 = vadd.f32 %v4591, %v5048
    %5050 = vmatmul.f32.gmra.mxu0 %v1925
    %v5051 = vpop.f32.mrf.mxu0
    %v5052 = vadd.f32 %v4594, %v5051
    %5053 = vmatmul.f32.gmra.mxu0 %v1926
    %v5054 = vpop.f32.mrf.mxu0
    %v5055 = vadd.f32 %v4597, %v5054
    %5056 = vmatmul.f32.gmra.mxu0 %v1927
    %v5057 = vpop.f32.mrf.mxu0
    %v5058 = vadd.f32 %v4600, %v5057
    %5059 = vmatmul.f32.gmra.mxu0 %v1928
    %v5060 = vpop.f32.mrf.mxu0
    %v5061 = vadd.f32 %v4603, %v5060
    %5062 = vmatmul.f32.gmra.mxu0 %v1929
    %v5063 = vpop.f32.mrf.mxu0
    %v5064 = vadd.f32 %v4606, %v5063
    %5065 = vmatmul.f32.gmra.mxu0 %v1930
    %v5066 = vpop.f32.mrf.mxu0
    %v5067 = vadd.f32 %v4609, %v5066
    %5068 = vmatmul.f32.gmra.mxu0 %v1931
    %v5069 = vpop.f32.mrf.mxu0
    %v5070 = vadd.f32 %v4612, %v5069
    %5071 = vmatmul.f32.gmra.mxu0 %v1932
    %v5072 = vpop.f32.mrf.mxu0
    %v5073 = vadd.f32 %v4615, %v5072
    %5074 = vmatmul.f32.gmra.mxu0 %v1933
    %v5075 = vpop.f32.mrf.mxu0
    %v5076 = vadd.f32 %v4618, %v5075
    %5077 = vmatmul.f32.gmra.mxu0 %v1940
    %v5078 = vpop.f32.mrf.mxu0
    %v5079 = vadd.f32 %v4621, %v5078
    %5080 = vmatmul.f32.gmra.mxu0 %v1941
    %v5081 = vpop.f32.mrf.mxu0
    %v5082 = vadd.f32 %v4624, %v5081
    %5083 = vmatmul.f32.gmra.mxu0 %v1942
    %v5084 = vpop.f32.mrf.mxu0
    %v5085 = vadd.f32 %v4627, %v5084
    %5086 = vmatmul.f32.gmra.mxu0 %v1943
    %v5087 = vpop.f32.mrf.mxu0
    %v5088 = vadd.f32 %v4630, %v5087
    %5089 = vmatmul.f32.gmra.mxu0 %v1944
    %v5090 = vpop.f32.mrf.mxu0
    %v5091 = vadd.f32 %v4633, %v5090
    %5092 = vmatmul.f32.gmra.mxu0 %v1945
    %v5093 = vpop.f32.mrf.mxu0
    %v5094 = vadd.f32 %v4636, %v5093
    %5095 = vmatmul.f32.gmra.mxu0 %v1946
    %v5096 = vpop.f32.mrf.mxu0
    %v5097 = vadd.f32 %v4639, %v5096
    %5098 = vmatmul.f32.gmra.mxu0 %v1947
    %v5099 = vpop.f32.mrf.mxu0
    %v5100 = vadd.f32 %v4642, %v5099
    %5101 = vmatmul.f32.gmra.mxu0 %v1948
    %v5102 = vpop.f32.mrf.mxu0
    %v5103 = vadd.f32 %v4645, %v5102
    %5104 = vmatmul.f32.gmra.mxu0 %v1949
    %v5105 = vpop.f32.mrf.mxu0
    %v5106 = vadd.f32 %v4648, %v5105
    %5107 = vmatmul.f32.gmra.mxu0 %v1950
    %v5108 = vpop.f32.mrf.mxu0
    %v5109 = vadd.f32 %v4651, %v5108
    %5110 = vmatmul.f32.gmra.mxu0 %v1951
    %v5111 = vpop.f32.mrf.mxu0
    %v5112 = vadd.f32 %v4654, %v5111
    %5113 = vmatmul.f32.gmra.mxu0 %v1952
    %v5114 = vpop.f32.mrf.mxu0
    %v5115 = vadd.f32 %v4657, %v5114
    %5116 = vmatmul.f32.gmra.mxu0 %v1953
    %v5117 = vpop.f32.mrf.mxu0
    %v5118 = vadd.f32 %v4660, %v5117
    %5119 = vmatmul.f32.gmra.mxu0 %v1954
    %v5120 = vpop.f32.mrf.mxu0
    %v5121 = vadd.f32 %v4663, %v5120
    %5122 = vmatmul.f32.gmra.mxu0 %v1955
    %v5123 = vpop.f32.mrf.mxu0
    %v5124 = vadd.f32 %v4666, %v5123
    %5125 = vmatmul.f32.gmra.mxu0 %v1956
    %v5126 = vpop.f32.mrf.mxu0
    %v5127 = vadd.f32 %v4669, %v5126
    %5128 = vmatmul.f32.gmra.mxu0 %v1957
    %v5129 = vpop.f32.mrf.mxu0
    %v5130 = vadd.f32 %v4672, %v5129
    %5131 = vmatmul.f32.gmra.mxu0 %v1958
    %v5132 = vpop.f32.mrf.mxu0
    %v5133 = vadd.f32 %v4675, %v5132
    %5134 = vmatmul.f32.gmra.mxu0 %v1959
    %v5135 = vpop.f32.mrf.mxu0
    %v5136 = vadd.f32 %v4678, %v5135
    %5137 = vmatmul.f32.gmra.mxu0 %v1960
    %v5138 = vpop.f32.mrf.mxu0
    %v5139 = vadd.f32 %v4681, %v5138
    %5140 = vmatmul.f32.gmra.mxu0 %v1967
    %v5141 = vpop.f32.mrf.mxu0
    %v5142 = vadd.f32 %v4684, %v5141
    %5143 = vmatmul.f32.gmra.mxu0 %v1968
    %v5144 = vpop.f32.mrf.mxu0
    %v5145 = vadd.f32 %v4687, %v5144
    %5146 = vmatmul.f32.gmra.mxu0 %v1969
    %v5147 = vpop.f32.mrf.mxu0
    %v5148 = vadd.f32 %v4690, %v5147
    %5149 = vmatmul.f32.gmra.mxu0 %v1970
    %v5150 = vpop.f32.mrf.mxu0
    %v5151 = vadd.f32 %v4693, %v5150
    %5152 = vmatmul.f32.gmra.mxu0 %v1971
    %v5153 = vpop.f32.mrf.mxu0
    %v5154 = vadd.f32 %v4696, %v5153
    %5155 = vmatmul.f32.gmra.mxu0 %v1972
    %v5156 = vpop.f32.mrf.mxu0
    %v5157 = vadd.f32 %v4699, %v5156
    %5158 = vmatmul.f32.gmra.mxu0 %v1973
    %v5159 = vpop.f32.mrf.mxu0
    %v5160 = vadd.f32 %v4702, %v5159
    %5161 = vmatmul.f32.gmra.mxu0 %v1974
    %v5162 = vpop.f32.mrf.mxu0
    %v5163 = vadd.f32 %v4705, %v5162
    %5164 = vmatmul.f32.gmra.mxu0 %v1975
    %v5165 = vpop.f32.mrf.mxu0
    %v5166 = vadd.f32 %v4708, %v5165
    %5167 = vmatmul.f32.gmra.mxu0 %v1976
    %v5168 = vpop.f32.mrf.mxu0
    %v5169 = vadd.f32 %v4711, %v5168
    %5170 = vmatmul.f32.gmra.mxu0 %v1977
    %v5171 = vpop.f32.mrf.mxu0
    %v5172 = vadd.f32 %v4714, %v5171
    %5173 = vmatmul.f32.gmra.mxu0 %v1978
    %v5174 = vpop.f32.mrf.mxu0
    %v5175 = vadd.f32 %v4717, %v5174
    %5176 = vmatmul.f32.gmra.mxu0 %v1979
    %v5177 = vpop.f32.mrf.mxu0
    %v5178 = vadd.f32 %v4720, %v5177
    %5179 = vmatmul.f32.gmra.mxu0 %v1980
    %v5180 = vpop.f32.mrf.mxu0
    %v5181 = vadd.f32 %v4723, %v5180
    %5182 = vmatmul.f32.gmra.mxu0 %v1981
    %v5183 = vpop.f32.mrf.mxu0
    %v5184 = vadd.f32 %v4726, %v5183
    %5185 = vmatmul.f32.gmra.mxu0 %v1982
    %v5186 = vpop.f32.mrf.mxu0
    %v5187 = vadd.f32 %v4729, %v5186
    %5188 = vmatmul.f32.gmra.mxu0 %v1983
    %v5189 = vpop.f32.mrf.mxu0
    %v5190 = vadd.f32 %v4732, %v5189
    %5191 = vmatmul.f32.gmra.mxu0 %v1984
    %v5192 = vpop.f32.mrf.mxu0
    %v5193 = vadd.f32 %v4735, %v5192
    %5194 = vmatmul.f32.gmra.mxu0 %v1985
    %v5195 = vpop.f32.mrf.mxu0
    %v5196 = vadd.f32 %v4738, %v5195
    %5197 = vmatmul.f32.gmra.mxu0 %v1986
    %v5198 = vpop.f32.mrf.mxu0
    %v5199 = vadd.f32 %v4741, %v5198
    %5200 = vmatmul.f32.gmra.mxu0 %v1987
    %v5201 = vpop.f32.mrf.mxu0
    %v5202 = vadd.f32 %v4744, %v5201
    %5203 = vmatmul.f32.gmra.mxu0 %v1994
    %v5204 = vpop.f32.mrf.mxu0
    %v5205 = vadd.f32 %v4747, %v5204
    %5206 = vmatmul.f32.gmra.mxu0 %v1995
    %v5207 = vpop.f32.mrf.mxu0
    %v5208 = vadd.f32 %v4750, %v5207
    %5209 = vmatmul.f32.gmra.mxu0 %v1996
    %v5210 = vpop.f32.mrf.mxu0
    %v5211 = vadd.f32 %v4753, %v5210
    %5212 = vmatmul.f32.gmra.mxu0 %v1997
    %v5213 = vpop.f32.mrf.mxu0
    %v5214 = vadd.f32 %v4756, %v5213
    %5215 = vmatmul.f32.gmra.mxu0 %v1998
    %v5216 = vpop.f32.mrf.mxu0
    %v5217 = vadd.f32 %v4759, %v5216
    %5218 = vmatmul.f32.gmra.mxu0 %v1999
    %v5219 = vpop.f32.mrf.mxu0
    %v5220 = vadd.f32 %v4762, %v5219
    %5221 = vmatmul.f32.gmra.mxu0 %v2000
    %v5222 = vpop.f32.mrf.mxu0
    %v5223 = vadd.f32 %v4765, %v5222
    %5224 = vmatmul.f32.gmra.mxu0 %v2001
    %v5225 = vpop.f32.mrf.mxu0
    %v5226 = vadd.f32 %v4768, %v5225
    %5227 = vmatmul.f32.gmra.mxu0 %v2002
    %v5228 = vpop.f32.mrf.mxu0
    %v5229 = vadd.f32 %v4771, %v5228
    %5230 = vmatmul.f32.gmra.mxu0 %v2003
    %v5231 = vpop.f32.mrf.mxu0
    %v5232 = vadd.f32 %v4774, %v5231
    %5233 = vmatmul.f32.gmra.mxu0 %v2004
    %v5234 = vpop.f32.mrf.mxu0
    %v5235 = vadd.f32 %v4777, %v5234
    %5236 = vmatmul.f32.gmra.mxu0 %v2005
    %v5237 = vpop.f32.mrf.mxu0
    %v5238 = vadd.f32 %v4780, %v5237
    %5239 = vmatmul.f32.gmra.mxu0 %v2006
    %v5240 = vpop.f32.mrf.mxu0
    %v5241 = vadd.f32 %v4783, %v5240
    %5242 = vmatmul.f32.gmra.mxu0 %v2007
    %v5243 = vpop.f32.mrf.mxu0
    %v5244 = vadd.f32 %v4786, %v5243
    %5245 = vmatmul.f32.gmra.mxu0 %v2008
    %v5246 = vpop.f32.mrf.mxu0
    %v5247 = vadd.f32 %v4789, %v5246
    %5248 = vmatmul.f32.gmra.mxu0 %v2009
    %v5249 = vpop.f32.mrf.mxu0
    %v5250 = vadd.f32 %v4792, %v5249
    %5251 = vmatmul.f32.gmra.mxu0 %v2010
    %v5252 = vpop.f32.mrf.mxu0
    %v5253 = vadd.f32 %v4795, %v5252
    %5254 = vmatmul.f32.gmra.mxu0 %v2011
    %v5255 = vpop.f32.mrf.mxu0
    %v5256 = vadd.f32 %v4798, %v5255
    %5257 = vmatmul.f32.gmra.mxu0 %v2012
    %v5258 = vpop.f32.mrf.mxu0
    %v5259 = vadd.f32 %v4801, %v5258
    %5260 = vmatmul.f32.gmra.mxu0 %v2013
    %v5261 = vpop.f32.mrf.mxu0
    %v5262 = vadd.f32 %v4804, %v5261
    %5263 = vmatmul.f32.gmra.mxu0 %v2014
    %v5264 = vpop.f32.mrf.mxu0
    %v5265 = vadd.f32 %v4807, %v5264
    %5266 = vmatmul.f32.gmra.mxu0 %v2021
    %v5267 = vpop.f32.mrf.mxu0
    %v5268 = vadd.f32 %v4810, %v5267
    %5269 = vmatmul.f32.gmra.mxu0 %v2022
    %v5270 = vpop.f32.mrf.mxu0
    %v5271 = vadd.f32 %v4813, %v5270
    %5272 = vmatmul.f32.gmra.mxu0 %v2023
    %v5273 = vpop.f32.mrf.mxu0
    %v5274 = vadd.f32 %v4816, %v5273
    %5275 = vmatmul.f32.gmra.mxu0 %v2024
    %v5276 = vpop.f32.mrf.mxu0
    %v5277 = vadd.f32 %v4819, %v5276
    %5278 = vmatmul.f32.gmra.mxu0 %v2025
    %v5279 = vpop.f32.mrf.mxu0
    %v5280 = vadd.f32 %v4822, %v5279
    %5281 = vmatmul.f32.gmra.mxu0 %v2026
    %v5282 = vpop.f32.mrf.mxu0
    %v5283 = vadd.f32 %v4825, %v5282
    %5284 = vmatmul.f32.gmra.mxu0 %v2027
    %v5285 = vpop.f32.mrf.mxu0
    %v5286 = vadd.f32 %v4828, %v5285
    %5287 = vmatmul.f32.gmra.mxu0 %v2028
    %v5288 = vpop.f32.mrf.mxu0
    %v5289 = vadd.f32 %v4831, %v5288
    %5290 = vmatmul.f32.gmra.mxu0 %v2029
    %v5291 = vpop.f32.mrf.mxu0
    %v5292 = vadd.f32 %v4834, %v5291
    %5293 = vmatmul.f32.gmra.mxu0 %v2030
    %v5294 = vpop.f32.mrf.mxu0
    %v5295 = vadd.f32 %v4837, %v5294
    %5296 = vmatmul.f32.gmra.mxu0 %v2031
    %v5297 = vpop.f32.mrf.mxu0
    %v5298 = vadd.f32 %v4840, %v5297
    %5299 = vmatmul.f32.gmra.mxu0 %v2032
    %v5300 = vpop.f32.mrf.mxu0
    %v5301 = vadd.f32 %v4843, %v5300
    %5302 = vmatmul.f32.gmra.mxu0 %v2033
    %v5303 = vpop.f32.mrf.mxu0
    %v5304 = vadd.f32 %v4846, %v5303
    %5305 = vmatmul.f32.gmra.mxu0 %v2034
    %v5306 = vpop.f32.mrf.mxu0
    %v5307 = vadd.f32 %v4849, %v5306
    %5308 = vmatmul.f32.gmra.mxu0 %v2035
    %v5309 = vpop.f32.mrf.mxu0
    %v5310 = vadd.f32 %v4852, %v5309
    %5311 = vmatmul.f32.gmra.mxu0 %v2036
    %v5312 = vpop.f32.mrf.mxu0
    %v5313 = vadd.f32 %v4855, %v5312
    %5314 = vmatmul.f32.gmra.mxu0 %v2037
    %v5315 = vpop.f32.mrf.mxu0
    %v5316 = vadd.f32 %v4858, %v5315
    %5317 = vmatmul.f32.gmra.mxu0 %v2038
    %v5318 = vpop.f32.mrf.mxu0
    %v5319 = vadd.f32 %v4861, %v5318
    %5320 = vmatmul.f32.gmra.mxu0 %v2039
    %v5321 = vpop.f32.mrf.mxu0
    %v5322 = vadd.f32 %v4864, %v5321
    %5323 = vmatmul.f32.gmra.mxu0 %v2040
    %v5324 = vpop.f32.mrf.mxu0
    %v5325 = vadd.f32 %v4867, %v5324
    %5326 = vmatmul.f32.gmra.mxu0 %v2041
    %v5327 = vpop.f32.mrf.mxu0
    %v5328 = vadd.f32 %v4870, %v5327
    %5329 = vmatmul.f32.gmra.mxu0 %v2048
    %v5330 = vpop.f32.mrf.mxu0
    %v5331 = vadd.f32 %v4873, %v5330
    %5332 = vmatmul.f32.gmra.mxu0 %v2049
    %v5333 = vpop.f32.mrf.mxu0
    %v5334 = vadd.f32 %v4876, %v5333
    %5335 = vmatmul.f32.gmra.mxu0 %v2050
    %v5336 = vpop.f32.mrf.mxu0
    %v5337 = vadd.f32 %v4879, %v5336
    %5338 = vmatmul.f32.gmra.mxu0 %v2051
    %v5339 = vpop.f32.mrf.mxu0
    %v5340 = vadd.f32 %v4882, %v5339
    %5341 = vmatmul.f32.gmra.mxu0 %v2052
    %v5342 = vpop.f32.mrf.mxu0
    %v5343 = vadd.f32 %v4885, %v5342
    %5344 = vmatmul.f32.gmra.mxu0 %v2053
    %v5345 = vpop.f32.mrf.mxu0
    %v5346 = vadd.f32 %v4888, %v5345
    %5347 = vmatmul.f32.gmra.mxu0 %v2054
    %v5348 = vpop.f32.mrf.mxu0
    %v5349 = vadd.f32 %v4891, %v5348
    %5350 = vmatmul.f32.gmra.mxu0 %v2055
    %v5351 = vpop.f32.mrf.mxu0
    %v5352 = vadd.f32 %v4894, %v5351
    %5353 = vmatmul.f32.gmra.mxu0 %v2056
    %v5354 = vpop.f32.mrf.mxu0
    %v5355 = vadd.f32 %v4897, %v5354
    %5356 = vmatmul.f32.gmra.mxu0 %v2057
    %v5357 = vpop.f32.mrf.mxu0
    %v5358 = vadd.f32 %v4900, %v5357
    %5359 = vmatmul.f32.gmra.mxu0 %v2058
    %v5360 = vpop.f32.mrf.mxu0
    %v5361 = vadd.f32 %v4903, %v5360
    %5362 = vmatmul.f32.gmra.mxu0 %v2059
    %v5363 = vpop.f32.mrf.mxu0
    %v5364 = vadd.f32 %v4906, %v5363
    %5365 = vmatmul.f32.gmra.mxu0 %v2060
    %v5366 = vpop.f32.mrf.mxu0
    %v5367 = vadd.f32 %v4909, %v5366
    %5368 = vmatmul.f32.gmra.mxu0 %v2061
    %v5369 = vpop.f32.mrf.mxu0
    %v5370 = vadd.f32 %v4912, %v5369
    %5371 = vmatmul.f32.gmra.mxu0 %v2062
    %v5372 = vpop.f32.mrf.mxu0
    %v5373 = vadd.f32 %v4915, %v5372
    %5374 = vmatmul.f32.gmra.mxu0 %v2063
    %v5375 = vpop.f32.mrf.mxu0
    %v5376 = vadd.f32 %v4918, %v5375
    %5377 = vmatmul.f32.gmra.mxu0 %v2064
    %v5378 = vpop.f32.mrf.mxu0
    %v5379 = vadd.f32 %v4921, %v5378
    %5380 = vmatmul.f32.gmra.mxu0 %v2065
    %v5381 = vpop.f32.mrf.mxu0
    %v5382 = vadd.f32 %v4924, %v5381
    %5383 = vmatmul.f32.gmra.mxu0 %v2066
    %v5384 = vpop.f32.mrf.mxu0
    %v5385 = vadd.f32 %v4927, %v5384
    %5386 = vmatmul.f32.gmra.mxu0 %v2067
    %v5387 = vpop.f32.mrf.mxu0
    %v5388 = vadd.f32 %v4930, %v5387
    %5389 = vmatmul.f32.gmra.mxu0 %v2068
    %v5390 = vpop.f32.mrf.mxu0
    %v5391 = vadd.f32 %v4933, %v5390
    %5392 = vmatmul.f32.gmra.mxu0 %v2075
    %v5393 = vpop.f32.mrf.mxu0
    %v5394 = vadd.f32 %v4936, %v5393
    %5395 = vmatmul.f32.gmra.mxu0 %v2076
    %v5396 = vpop.f32.mrf.mxu0
    %v5397 = vadd.f32 %v4939, %v5396
    %5398 = vmatmul.f32.gmra.mxu0 %v2077
    %v5399 = vpop.f32.mrf.mxu0
    %v5400 = vadd.f32 %v4942, %v5399
    %5401 = vmatmul.f32.gmra.mxu0 %v2078
    %v5402 = vpop.f32.mrf.mxu0
    %v5403 = vadd.f32 %v4945, %v5402
    %5404 = vmatmul.f32.gmra.mxu0 %v2079
    %v5405 = vpop.f32.mrf.mxu0
    %v5406 = vadd.f32 %v4948, %v5405
    %5407 = vmatmul.f32.gmra.mxu0 %v2080
    %v5408 = vpop.f32.mrf.mxu0
    %v5409 = vadd.f32 %v4951, %v5408
    %5410 = vmatmul.f32.gmra.mxu0 %v2081
    %v5411 = vpop.f32.mrf.mxu0
    %v5412 = vadd.f32 %v4954, %v5411
    %5413 = vmatmul.f32.gmra.mxu0 %v2082
    %v5414 = vpop.f32.mrf.mxu0
    %v5415 = vadd.f32 %v4957, %v5414
    %5416 = vmatmul.f32.gmra.mxu0 %v2083
    %v5417 = vpop.f32.mrf.mxu0
    %v5418 = vadd.f32 %v4960, %v5417
    %5419 = vmatmul.f32.gmra.mxu0 %v2084
    %v5420 = vpop.f32.mrf.mxu0
    %v5421 = vadd.f32 %v4963, %v5420
    %5422 = vmatmul.f32.gmra.mxu0 %v2085
    %v5423 = vpop.f32.mrf.mxu0
    %v5424 = vadd.f32 %v4966, %v5423
    %5425 = vmatmul.f32.gmra.mxu0 %v2086
    %v5426 = vpop.f32.mrf.mxu0
    %v5427 = vadd.f32 %v4969, %v5426
    %5428 = vmatmul.f32.gmra.mxu0 %v2087
    %v5429 = vpop.f32.mrf.mxu0
    %v5430 = vadd.f32 %v4972, %v5429
    %5431 = vmatmul.f32.gmra.mxu0 %v2088
    %v5432 = vpop.f32.mrf.mxu0
    %v5433 = vadd.f32 %v4975, %v5432
    %5434 = vmatmul.f32.gmra.mxu0 %v2089
    %v5435 = vpop.f32.mrf.mxu0
    %v5436 = vadd.f32 %v4978, %v5435
    %5437 = vmatmul.f32.gmra.mxu0 %v2090
    %v5438 = vpop.f32.mrf.mxu0
    %v5439 = vadd.f32 %v4981, %v5438
    %5440 = vmatmul.f32.gmra.mxu0 %v2091
    %v5441 = vpop.f32.mrf.mxu0
    %v5442 = vadd.f32 %v4984, %v5441
    %5443 = vmatmul.f32.gmra.mxu0 %v2092
    %v5444 = vpop.f32.mrf.mxu0
    %v5445 = vadd.f32 %v4987, %v5444
    %5446 = vmatmul.f32.gmra.mxu0 %v2093
    %v5447 = vpop.f32.mrf.mxu0
    %v5448 = vadd.f32 %v4990, %v5447
    %5449 = vmatmul.f32.gmra.mxu0 %v2094
    %v5450 = vpop.f32.mrf.mxu0
    %v5451 = vadd.f32 %v4993, %v5450
    %5452 = vmatmul.f32.gmra.mxu0 %v2095
    %v5453 = vpop.f32.mrf.mxu0
    %v5454 = vadd.f32 %v4996, %v5453
    %5455 = vdwg.mxu0
    %5456 = vmatpush.msra.mxu0 %v2229
    %5457 = vmatpush.msra.mxu0 %v2228
    %5458 = vmatpush.msra.mxu0 %v2227
    %5459 = vmatpush.msra.mxu0 %v2226
    %5460 = vmatpush.msra.mxu0 %v2225
    %5461 = vmatpush.msra.mxu0 %v2224
    %5462 = vmatpush.msra.mxu0 %v2223
    %5463 = vmatpush.msra.mxu0 %v2222
    %5464 = vmatpush.msra.mxu0 %v2221
    %5465 = vmatpush.msra.mxu0 %v2220
    %5466 = vmatpush.msra.mxu0 %v2219
    %5467 = vmatpush.msra.mxu0 %v2218
    %5468 = vmatpush.msra.mxu0 %v2217
    %5469 = vmatpush.msra.mxu0 %v2216
    %5470 = vmatpush.msra.mxu0 %v2215
    %5471 = vmatpush.msra.mxu0 %v2214
    %5472 = vmatmul.f32.gmra.mxu0 %v1916
    %v5473 = vpop.f32.mrf.mxu0
    %v5474 = vadd.f32 %v5016, %v5473
    %5475 = vmatmul.f32.gmra.mxu0 %v1917
    %v5476 = vpop.f32.mrf.mxu0
    %v5477 = vadd.f32 %v5019, %v5476
    %5478 = vmatmul.f32.gmra.mxu0 %v1918
    %v5479 = vpop.f32.mrf.mxu0
    %v5480 = vadd.f32 %v5022, %v5479
    %5481 = vmatmul.f32.gmra.mxu0 %v1919
    %v5482 = vpop.f32.mrf.mxu0
    %v5483 = vadd.f32 %v5025, %v5482
    %5484 = vmatmul.f32.gmra.mxu0 %v1920
    %v5485 = vpop.f32.mrf.mxu0
    %v5486 = vadd.f32 %v5028, %v5485
    %5487 = vmatmul.f32.gmra.mxu0 %v1921
    %v5488 = vpop.f32.mrf.mxu0
    %v5489 = vadd.f32 %v5031, %v5488
    %5490 = vmatmul.f32.gmra.mxu0 %v1922
    %v5491 = vpop.f32.mrf.mxu0
    %v5492 = vadd.f32 %v5034, %v5491
    %5493 = vmatmul.f32.gmra.mxu0 %v1923
    %v5494 = vpop.f32.mrf.mxu0
    %v5495 = vadd.f32 %v5037, %v5494
    %5496 = vmatmul.f32.gmra.mxu0 %v1924
    %v5497 = vpop.f32.mrf.mxu0
    %v5498 = vadd.f32 %v5040, %v5497
    %5499 = vmatmul.f32.gmra.mxu0 %v1925
    %v5500 = vpop.f32.mrf.mxu0
    %v5501 = vadd.f32 %v5043, %v5500
    %5502 = vmatmul.f32.gmra.mxu0 %v1926
    %v5503 = vpop.f32.mrf.mxu0
    %v5504 = vadd.f32 %v5046, %v5503
    %5505 = vmatmul.f32.gmra.mxu0 %v1927
    %v5506 = vpop.f32.mrf.mxu0
    %v5507 = vadd.f32 %v5049, %v5506
    %5508 = vmatmul.f32.gmra.mxu0 %v1928
    %v5509 = vpop.f32.mrf.mxu0
    %v5510 = vadd.f32 %v5052, %v5509
    %5511 = vmatmul.f32.gmra.mxu0 %v1929
    %v5512 = vpop.f32.mrf.mxu0
    %v5513 = vadd.f32 %v5055, %v5512
    %5514 = vmatmul.f32.gmra.mxu0 %v1930
    %v5515 = vpop.f32.mrf.mxu0
    %v5516 = vadd.f32 %v5058, %v5515
    %5517 = vmatmul.f32.gmra.mxu0 %v1931
    %v5518 = vpop.f32.mrf.mxu0
    %v5519 = vadd.f32 %v5061, %v5518
    %5520 = vmatmul.f32.gmra.mxu0 %v1932
    %v5521 = vpop.f32.mrf.mxu0
    %v5522 = vadd.f32 %v5064, %v5521
    %5523 = vmatmul.f32.gmra.mxu0 %v1933
    %v5524 = vpop.f32.mrf.mxu0
    %v5525 = vadd.f32 %v5067, %v5524
    %5526 = vmatmul.f32.gmra.mxu0 %v1934
    %v5527 = vpop.f32.mrf.mxu0
    %v5528 = vadd.f32 %v5070, %v5527
    %5529 = vmatmul.f32.gmra.mxu0 %v1935
    %v5530 = vpop.f32.mrf.mxu0
    %v5531 = vadd.f32 %v5073, %v5530
    %5532 = vmatmul.f32.gmra.mxu0 %v1936
    %v5533 = vpop.f32.mrf.mxu0
    %v5534 = vadd.f32 %v5076, %v5533
    %5535 = vmatmul.f32.gmra.mxu0 %v1943
    %v5536 = vpop.f32.mrf.mxu0
    %v5537 = vadd.f32 %v5079, %v5536
    %5538 = vmatmul.f32.gmra.mxu0 %v1944
    %v5539 = vpop.f32.mrf.mxu0
    %v5540 = vadd.f32 %v5082, %v5539
    %5541 = vmatmul.f32.gmra.mxu0 %v1945
    %v5542 = vpop.f32.mrf.mxu0
    %v5543 = vadd.f32 %v5085, %v5542
    %5544 = vmatmul.f32.gmra.mxu0 %v1946
    %v5545 = vpop.f32.mrf.mxu0
    %v5546 = vadd.f32 %v5088, %v5545
    %5547 = vmatmul.f32.gmra.mxu0 %v1947
    %v5548 = vpop.f32.mrf.mxu0
    %v5549 = vadd.f32 %v5091, %v5548
    %5550 = vmatmul.f32.gmra.mxu0 %v1948
    %v5551 = vpop.f32.mrf.mxu0
    %v5552 = vadd.f32 %v5094, %v5551
    %5553 = vmatmul.f32.gmra.mxu0 %v1949
    %v5554 = vpop.f32.mrf.mxu0
    %v5555 = vadd.f32 %v5097, %v5554
    %5556 = vmatmul.f32.gmra.mxu0 %v1950
    %v5557 = vpop.f32.mrf.mxu0
    %v5558 = vadd.f32 %v5100, %v5557
    %5559 = vmatmul.f32.gmra.mxu0 %v1951
    %v5560 = vpop.f32.mrf.mxu0
    %v5561 = vadd.f32 %v5103, %v5560
    %5562 = vmatmul.f32.gmra.mxu0 %v1952
    %v5563 = vpop.f32.mrf.mxu0
    %v5564 = vadd.f32 %v5106, %v5563
    %5565 = vmatmul.f32.gmra.mxu0 %v1953
    %v5566 = vpop.f32.mrf.mxu0
    %v5567 = vadd.f32 %v5109, %v5566
    %5568 = vmatmul.f32.gmra.mxu0 %v1954
    %v5569 = vpop.f32.mrf.mxu0
    %v5570 = vadd.f32 %v5112, %v5569
    %5571 = vmatmul.f32.gmra.mxu0 %v1955
    %v5572 = vpop.f32.mrf.mxu0
    %v5573 = vadd.f32 %v5115, %v5572
    %5574 = vmatmul.f32.gmra.mxu0 %v1956
    %v5575 = vpop.f32.mrf.mxu0
    %v5576 = vadd.f32 %v5118, %v5575
    %5577 = vmatmul.f32.gmra.mxu0 %v1957
    %v5578 = vpop.f32.mrf.mxu0
    %v5579 = vadd.f32 %v5121, %v5578
    %5580 = vmatmul.f32.gmra.mxu0 %v1958
    %v5581 = vpop.f32.mrf.mxu0
    %v5582 = vadd.f32 %v5124, %v5581
    %5583 = vmatmul.f32.gmra.mxu0 %v1959
    %v5584 = vpop.f32.mrf.mxu0
    %v5585 = vadd.f32 %v5127, %v5584
    %5586 = vmatmul.f32.gmra.mxu0 %v1960
    %v5587 = vpop.f32.mrf.mxu0
    %v5588 = vadd.f32 %v5130, %v5587
    %5589 = vmatmul.f32.gmra.mxu0 %v1961
    %v5590 = vpop.f32.mrf.mxu0
    %v5591 = vadd.f32 %v5133, %v5590
    %5592 = vmatmul.f32.gmra.mxu0 %v1962
    %v5593 = vpop.f32.mrf.mxu0
    %v5594 = vadd.f32 %v5136, %v5593
    %5595 = vmatmul.f32.gmra.mxu0 %v1963
    %v5596 = vpop.f32.mrf.mxu0
    %v5597 = vadd.f32 %v5139, %v5596
    %5598 = vmatmul.f32.gmra.mxu0 %v1970
    %v5599 = vpop.f32.mrf.mxu0
    %v5600 = vadd.f32 %v5142, %v5599
    %5601 = vmatmul.f32.gmra.mxu0 %v1971
    %v5602 = vpop.f32.mrf.mxu0
    %v5603 = vadd.f32 %v5145, %v5602
    %5604 = vmatmul.f32.gmra.mxu0 %v1972
    %v5605 = vpop.f32.mrf.mxu0
    %v5606 = vadd.f32 %v5148, %v5605
    %5607 = vmatmul.f32.gmra.mxu0 %v1973
    %v5608 = vpop.f32.mrf.mxu0
    %v5609 = vadd.f32 %v5151, %v5608
    %5610 = vmatmul.f32.gmra.mxu0 %v1974
    %v5611 = vpop.f32.mrf.mxu0
    %v5612 = vadd.f32 %v5154, %v5611
    %5613 = vmatmul.f32.gmra.mxu0 %v1975
    %v5614 = vpop.f32.mrf.mxu0
    %v5615 = vadd.f32 %v5157, %v5614
    %5616 = vmatmul.f32.gmra.mxu0 %v1976
    %v5617 = vpop.f32.mrf.mxu0
    %v5618 = vadd.f32 %v5160, %v5617
    %5619 = vmatmul.f32.gmra.mxu0 %v1977
    %v5620 = vpop.f32.mrf.mxu0
    %v5621 = vadd.f32 %v5163, %v5620
    %5622 = vmatmul.f32.gmra.mxu0 %v1978
    %v5623 = vpop.f32.mrf.mxu0
    %v5624 = vadd.f32 %v5166, %v5623
    %5625 = vmatmul.f32.gmra.mxu0 %v1979
    %v5626 = vpop.f32.mrf.mxu0
    %v5627 = vadd.f32 %v5169, %v5626
    %5628 = vmatmul.f32.gmra.mxu0 %v1980
    %v5629 = vpop.f32.mrf.mxu0
    %v5630 = vadd.f32 %v5172, %v5629
    %5631 = vmatmul.f32.gmra.mxu0 %v1981
    %v5632 = vpop.f32.mrf.mxu0
    %v5633 = vadd.f32 %v5175, %v5632
    %5634 = vmatmul.f32.gmra.mxu0 %v1982
    %v5635 = vpop.f32.mrf.mxu0
    %v5636 = vadd.f32 %v5178, %v5635
    %5637 = vmatmul.f32.gmra.mxu0 %v1983
    %v5638 = vpop.f32.mrf.mxu0
    %v5639 = vadd.f32 %v5181, %v5638
    %5640 = vmatmul.f32.gmra.mxu0 %v1984
    %v5641 = vpop.f32.mrf.mxu0
    %v5642 = vadd.f32 %v5184, %v5641
    %5643 = vmatmul.f32.gmra.mxu0 %v1985
    %v5644 = vpop.f32.mrf.mxu0
    %v5645 = vadd.f32 %v5187, %v5644
    %5646 = vmatmul.f32.gmra.mxu0 %v1986
    %v5647 = vpop.f32.mrf.mxu0
    %v5648 = vadd.f32 %v5190, %v5647
    %5649 = vmatmul.f32.gmra.mxu0 %v1987
    %v5650 = vpop.f32.mrf.mxu0
    %v5651 = vadd.f32 %v5193, %v5650
    %5652 = vmatmul.f32.gmra.mxu0 %v1988
    %v5653 = vpop.f32.mrf.mxu0
    %v5654 = vadd.f32 %v5196, %v5653
    %5655 = vmatmul.f32.gmra.mxu0 %v1989
    %v5656 = vpop.f32.mrf.mxu0
    %v5657 = vadd.f32 %v5199, %v5656
    %5658 = vmatmul.f32.gmra.mxu0 %v1990
    %v5659 = vpop.f32.mrf.mxu0
    %v5660 = vadd.f32 %v5202, %v5659
    %5661 = vmatmul.f32.gmra.mxu0 %v1997
    %v5662 = vpop.f32.mrf.mxu0
    %v5663 = vadd.f32 %v5205, %v5662
    %5664 = vmatmul.f32.gmra.mxu0 %v1998
    %v5665 = vpop.f32.mrf.mxu0
    %v5666 = vadd.f32 %v5208, %v5665
    %5667 = vmatmul.f32.gmra.mxu0 %v1999
    %v5668 = vpop.f32.mrf.mxu0
    %v5669 = vadd.f32 %v5211, %v5668
    %5670 = vmatmul.f32.gmra.mxu0 %v2000
    %v5671 = vpop.f32.mrf.mxu0
    %v5672 = vadd.f32 %v5214, %v5671
    %5673 = vmatmul.f32.gmra.mxu0 %v2001
    %v5674 = vpop.f32.mrf.mxu0
    %v5675 = vadd.f32 %v5217, %v5674
    %5676 = vmatmul.f32.gmra.mxu0 %v2002
    %v5677 = vpop.f32.mrf.mxu0
    %v5678 = vadd.f32 %v5220, %v5677
    %5679 = vmatmul.f32.gmra.mxu0 %v2003
    %v5680 = vpop.f32.mrf.mxu0
    %v5681 = vadd.f32 %v5223, %v5680
    %5682 = vmatmul.f32.gmra.mxu0 %v2004
    %v5683 = vpop.f32.mrf.mxu0
    %v5684 = vadd.f32 %v5226, %v5683
    %5685 = vmatmul.f32.gmra.mxu0 %v2005
    %v5686 = vpop.f32.mrf.mxu0
    %v5687 = vadd.f32 %v5229, %v5686
    %5688 = vmatmul.f32.gmra.mxu0 %v2006
    %v5689 = vpop.f32.mrf.mxu0
    %v5690 = vadd.f32 %v5232, %v5689
    %5691 = vmatmul.f32.gmra.mxu0 %v2007
    %v5692 = vpop.f32.mrf.mxu0
    %v5693 = vadd.f32 %v5235, %v5692
    %5694 = vmatmul.f32.gmra.mxu0 %v2008
    %v5695 = vpop.f32.mrf.mxu0
    %v5696 = vadd.f32 %v5238, %v5695
    %5697 = vmatmul.f32.gmra.mxu0 %v2009
    %v5698 = vpop.f32.mrf.mxu0
    %v5699 = vadd.f32 %v5241, %v5698
    %5700 = vmatmul.f32.gmra.mxu0 %v2010
    %v5701 = vpop.f32.mrf.mxu0
    %v5702 = vadd.f32 %v5244, %v5701
    %5703 = vmatmul.f32.gmra.mxu0 %v2011
    %v5704 = vpop.f32.mrf.mxu0
    %v5705 = vadd.f32 %v5247, %v5704
    %5706 = vmatmul.f32.gmra.mxu0 %v2012
    %v5707 = vpop.f32.mrf.mxu0
    %v5708 = vadd.f32 %v5250, %v5707
    %5709 = vmatmul.f32.gmra.mxu0 %v2013
    %v5710 = vpop.f32.mrf.mxu0
    %v5711 = vadd.f32 %v5253, %v5710
    %5712 = vmatmul.f32.gmra.mxu0 %v2014
    %v5713 = vpop.f32.mrf.mxu0
    %v5714 = vadd.f32 %v5256, %v5713
    %5715 = vmatmul.f32.gmra.mxu0 %v2015
    %v5716 = vpop.f32.mrf.mxu0
    %v5717 = vadd.f32 %v5259, %v5716
    %5718 = vmatmul.f32.gmra.mxu0 %v2016
    %v5719 = vpop.f32.mrf.mxu0
    %v5720 = vadd.f32 %v5262, %v5719
    %5721 = vmatmul.f32.gmra.mxu0 %v2017
    %v5722 = vpop.f32.mrf.mxu0
    %v5723 = vadd.f32 %v5265, %v5722
    %5724 = vmatmul.f32.gmra.mxu0 %v2024
    %v5725 = vpop.f32.mrf.mxu0
    %v5726 = vadd.f32 %v5268, %v5725
    %5727 = vmatmul.f32.gmra.mxu0 %v2025
    %v5728 = vpop.f32.mrf.mxu0
    %v5729 = vadd.f32 %v5271, %v5728
    %5730 = vmatmul.f32.gmra.mxu0 %v2026
    %v5731 = vpop.f32.mrf.mxu0
    %v5732 = vadd.f32 %v5274, %v5731
    %5733 = vmatmul.f32.gmra.mxu0 %v2027
    %v5734 = vpop.f32.mrf.mxu0
    %v5735 = vadd.f32 %v5277, %v5734
    %5736 = vmatmul.f32.gmra.mxu0 %v2028
    %v5737 = vpop.f32.mrf.mxu0
    %v5738 = vadd.f32 %v5280, %v5737
    %5739 = vmatmul.f32.gmra.mxu0 %v2029
    %v5740 = vpop.f32.mrf.mxu0
    %v5741 = vadd.f32 %v5283, %v5740
    %5742 = vmatmul.f32.gmra.mxu0 %v2030
    %v5743 = vpop.f32.mrf.mxu0
    %v5744 = vadd.f32 %v5286, %v5743
    %5745 = vmatmul.f32.gmra.mxu0 %v2031
    %v5746 = vpop.f32.mrf.mxu0
    %v5747 = vadd.f32 %v5289, %v5746
    %5748 = vmatmul.f32.gmra.mxu0 %v2032
    %v5749 = vpop.f32.mrf.mxu0
    %v5750 = vadd.f32 %v5292, %v5749
    %5751 = vmatmul.f32.gmra.mxu0 %v2033
    %v5752 = vpop.f32.mrf.mxu0
    %v5753 = vadd.f32 %v5295, %v5752
    %5754 = vmatmul.f32.gmra.mxu0 %v2034
    %v5755 = vpop.f32.mrf.mxu0
    %v5756 = vadd.f32 %v5298, %v5755
    %5757 = vmatmul.f32.gmra.mxu0 %v2035
    %v5758 = vpop.f32.mrf.mxu0
    %v5759 = vadd.f32 %v5301, %v5758
    %5760 = vmatmul.f32.gmra.mxu0 %v2036
    %v5761 = vpop.f32.mrf.mxu0
    %v5762 = vadd.f32 %v5304, %v5761
    %5763 = vmatmul.f32.gmra.mxu0 %v2037
    %v5764 = vpop.f32.mrf.mxu0
    %v5765 = vadd.f32 %v5307, %v5764
    %5766 = vmatmul.f32.gmra.mxu0 %v2038
    %v5767 = vpop.f32.mrf.mxu0
    %v5768 = vadd.f32 %v5310, %v5767
    %5769 = vmatmul.f32.gmra.mxu0 %v2039
    %v5770 = vpop.f32.mrf.mxu0
    %v5771 = vadd.f32 %v5313, %v5770
    %5772 = vmatmul.f32.gmra.mxu0 %v2040
    %v5773 = vpop.f32.mrf.mxu0
    %v5774 = vadd.f32 %v5316, %v5773
    %5775 = vmatmul.f32.gmra.mxu0 %v2041
    %v5776 = vpop.f32.mrf.mxu0
    %v5777 = vadd.f32 %v5319, %v5776
    %5778 = vmatmul.f32.gmra.mxu0 %v2042
    %v5779 = vpop.f32.mrf.mxu0
    %v5780 = vadd.f32 %v5322, %v5779
    %5781 = vmatmul.f32.gmra.mxu0 %v2043
    %v5782 = vpop.f32.mrf.mxu0
    %v5783 = vadd.f32 %v5325, %v5782
    %5784 = vmatmul.f32.gmra.mxu0 %v2044
    %v5785 = vpop.f32.mrf.mxu0
    %v5786 = vadd.f32 %v5328, %v5785
    %5787 = vmatmul.f32.gmra.mxu0 %v2051
    %v5788 = vpop.f32.mrf.mxu0
    %v5789 = vadd.f32 %v5331, %v5788
    %5790 = vmatmul.f32.gmra.mxu0 %v2052
    %v5791 = vpop.f32.mrf.mxu0
    %v5792 = vadd.f32 %v5334, %v5791
    %5793 = vmatmul.f32.gmra.mxu0 %v2053
    %v5794 = vpop.f32.mrf.mxu0
    %v5795 = vadd.f32 %v5337, %v5794
    %5796 = vmatmul.f32.gmra.mxu0 %v2054
    %v5797 = vpop.f32.mrf.mxu0
    %v5798 = vadd.f32 %v5340, %v5797
    %5799 = vmatmul.f32.gmra.mxu0 %v2055
    %v5800 = vpop.f32.mrf.mxu0
    %v5801 = vadd.f32 %v5343, %v5800
    %5802 = vmatmul.f32.gmra.mxu0 %v2056
    %v5803 = vpop.f32.mrf.mxu0
    %v5804 = vadd.f32 %v5346, %v5803
    %5805 = vmatmul.f32.gmra.mxu0 %v2057
    %v5806 = vpop.f32.mrf.mxu0
    %v5807 = vadd.f32 %v5349, %v5806
    %5808 = vmatmul.f32.gmra.mxu0 %v2058
    %v5809 = vpop.f32.mrf.mxu0
    %v5810 = vadd.f32 %v5352, %v5809
    %5811 = vmatmul.f32.gmra.mxu0 %v2059
    %v5812 = vpop.f32.mrf.mxu0
    %v5813 = vadd.f32 %v5355, %v5812
    %5814 = vmatmul.f32.gmra.mxu0 %v2060
    %v5815 = vpop.f32.mrf.mxu0
    %v5816 = vadd.f32 %v5358, %v5815
    %5817 = vmatmul.f32.gmra.mxu0 %v2061
    %v5818 = vpop.f32.mrf.mxu0
    %v5819 = vadd.f32 %v5361, %v5818
    %5820 = vmatmul.f32.gmra.mxu0 %v2062
    %v5821 = vpop.f32.mrf.mxu0
    %v5822 = vadd.f32 %v5364, %v5821
    %5823 = vmatmul.f32.gmra.mxu0 %v2063
    %v5824 = vpop.f32.mrf.mxu0
    %v5825 = vadd.f32 %v5367, %v5824
    %5826 = vmatmul.f32.gmra.mxu0 %v2064
    %v5827 = vpop.f32.mrf.mxu0
    %v5828 = vadd.f32 %v5370, %v5827
    %5829 = vmatmul.f32.gmra.mxu0 %v2065
    %v5830 = vpop.f32.mrf.mxu0
    %v5831 = vadd.f32 %v5373, %v5830
    %5832 = vmatmul.f32.gmra.mxu0 %v2066
    %v5833 = vpop.f32.mrf.mxu0
    %v5834 = vadd.f32 %v5376, %v5833
    %5835 = vmatmul.f32.gmra.mxu0 %v2067
    %v5836 = vpop.f32.mrf.mxu0
    %v5837 = vadd.f32 %v5379, %v5836
    %5838 = vmatmul.f32.gmra.mxu0 %v2068
    %v5839 = vpop.f32.mrf.mxu0
    %v5840 = vadd.f32 %v5382, %v5839
    %5841 = vmatmul.f32.gmra.mxu0 %v2069
    %v5842 = vpop.f32.mrf.mxu0
    %v5843 = vadd.f32 %v5385, %v5842
    %5844 = vmatmul.f32.gmra.mxu0 %v2070
    %v5845 = vpop.f32.mrf.mxu0
    %v5846 = vadd.f32 %v5388, %v5845
    %5847 = vmatmul.f32.gmra.mxu0 %v2071
    %v5848 = vpop.f32.mrf.mxu0
    %v5849 = vadd.f32 %v5391, %v5848
    %5850 = vmatmul.f32.gmra.mxu0 %v2078
    %v5851 = vpop.f32.mrf.mxu0
    %v5852 = vadd.f32 %v5394, %v5851
    %5853 = vmatmul.f32.gmra.mxu0 %v2079
    %v5854 = vpop.f32.mrf.mxu0
    %v5855 = vadd.f32 %v5397, %v5854
    %5856 = vmatmul.f32.gmra.mxu0 %v2080
    %v5857 = vpop.f32.mrf.mxu0
    %v5858 = vadd.f32 %v5400, %v5857
    %5859 = vmatmul.f32.gmra.mxu0 %v2081
    %v5860 = vpop.f32.mrf.mxu0
    %v5861 = vadd.f32 %v5403, %v5860
    %5862 = vmatmul.f32.gmra.mxu0 %v2082
    %v5863 = vpop.f32.mrf.mxu0
    %v5864 = vadd.f32 %v5406, %v5863
    %5865 = vmatmul.f32.gmra.mxu0 %v2083
    %v5866 = vpop.f32.mrf.mxu0
    %v5867 = vadd.f32 %v5409, %v5866
    %5868 = vmatmul.f32.gmra.mxu0 %v2084
    %v5869 = vpop.f32.mrf.mxu0
    %v5870 = vadd.f32 %v5412, %v5869
    %5871 = vmatmul.f32.gmra.mxu0 %v2085
    %v5872 = vpop.f32.mrf.mxu0
    %v5873 = vadd.f32 %v5415, %v5872
    %5874 = vmatmul.f32.gmra.mxu0 %v2086
    %v5875 = vpop.f32.mrf.mxu0
    %v5876 = vadd.f32 %v5418, %v5875
    %5877 = vmatmul.f32.gmra.mxu0 %v2087
    %v5878 = vpop.f32.mrf.mxu0
    %v5879 = vadd.f32 %v5421, %v5878
    %5880 = vmatmul.f32.gmra.mxu0 %v2088
    %v5881 = vpop.f32.mrf.mxu0
    %v5882 = vadd.f32 %v5424, %v5881
    %5883 = vmatmul.f32.gmra.mxu0 %v2089
    %v5884 = vpop.f32.mrf.mxu0
    %v5885 = vadd.f32 %v5427, %v5884
    %5886 = vmatmul.f32.gmra.mxu0 %v2090
    %v5887 = vpop.f32.mrf.mxu0
    %v5888 = vadd.f32 %v5430, %v5887
    %5889 = vmatmul.f32.gmra.mxu0 %v2091
    %v5890 = vpop.f32.mrf.mxu0
    %v5891 = vadd.f32 %v5433, %v5890
    %5892 = vmatmul.f32.gmra.mxu0 %v2092
    %v5893 = vpop.f32.mrf.mxu0
    %v5894 = vadd.f32 %v5436, %v5893
    %5895 = vmatmul.f32.gmra.mxu0 %v2093
    %v5896 = vpop.f32.mrf.mxu0
    %v5897 = vadd.f32 %v5439, %v5896
    %5898 = vmatmul.f32.gmra.mxu0 %v2094
    %v5899 = vpop.f32.mrf.mxu0
    %v5900 = vadd.f32 %v5442, %v5899
    %5901 = vmatmul.f32.gmra.mxu0 %v2095
    %v5902 = vpop.f32.mrf.mxu0
    %v5903 = vadd.f32 %v5445, %v5902
    %5904 = vmatmul.f32.gmra.mxu0 %v2096
    %v5905 = vpop.f32.mrf.mxu0
    %v5906 = vadd.f32 %v5448, %v5905
    %5907 = vmatmul.f32.gmra.mxu0 %v2097
    %v5908 = vpop.f32.mrf.mxu0
    %v5909 = vadd.f32 %v5451, %v5908
    %5910 = vmatmul.f32.gmra.mxu0 %v2098
    %v5911 = vpop.f32.mrf.mxu0
    %v5912 = vadd.f32 %v5454, %v5911
    %5913 = vdwg.mxu0
    %5914 = vmatpush.msra.mxu0 %v2245
    %5915 = vmatpush.msra.mxu0 %v2244
    %5916 = vmatpush.msra.mxu0 %v2243
    %5917 = vmatpush.msra.mxu0 %v2242
    %5918 = vmatpush.msra.mxu0 %v2241
    %5919 = vmatpush.msra.mxu0 %v2240
    %5920 = vmatpush.msra.mxu0 %v2239
    %5921 = vmatpush.msra.mxu0 %v2238
    %5922 = vmatpush.msra.mxu0 %v2237
    %5923 = vmatpush.msra.mxu0 %v2236
    %5924 = vmatpush.msra.mxu0 %v2235
    %5925 = vmatpush.msra.mxu0 %v2234
    %5926 = vmatpush.msra.mxu0 %v2233
    %5927 = vmatpush.msra.mxu0 %v2232
    %5928 = vmatpush.msra.mxu0 %v2231
    %5929 = vmatpush.msra.mxu0 %v2230
    %5930 = vmatmul.f32.gmra.mxu0 %v1919
    %v5931 = vpop.f32.mrf.mxu0
    %v5932 = vadd.f32 %v5474, %v5931
    %5933 = vmatmul.f32.gmra.mxu0 %v1920
    %v5934 = vpop.f32.mrf.mxu0
    %v5935 = vadd.f32 %v5477, %v5934
    %5936 = vmatmul.f32.gmra.mxu0 %v1921
    %v5937 = vpop.f32.mrf.mxu0
    %v5938 = vadd.f32 %v5480, %v5937
    %5939 = vmatmul.f32.gmra.mxu0 %v1922
    %v5940 = vpop.f32.mrf.mxu0
    %v5941 = vadd.f32 %v5483, %v5940
    %5942 = vmatmul.f32.gmra.mxu0 %v1923
    %v5943 = vpop.f32.mrf.mxu0
    %v5944 = vadd.f32 %v5486, %v5943
    %5945 = vmatmul.f32.gmra.mxu0 %v1924
    %v5946 = vpop.f32.mrf.mxu0
    %v5947 = vadd.f32 %v5489, %v5946
    %5948 = vmatmul.f32.gmra.mxu0 %v1925
    %v5949 = vpop.f32.mrf.mxu0
    %v5950 = vadd.f32 %v5492, %v5949
    %5951 = vmatmul.f32.gmra.mxu0 %v1926
    %v5952 = vpop.f32.mrf.mxu0
    %v5953 = vadd.f32 %v5495, %v5952
    %5954 = vmatmul.f32.gmra.mxu0 %v1927
    %v5955 = vpop.f32.mrf.mxu0
    %v5956 = vadd.f32 %v5498, %v5955
    %5957 = vmatmul.f32.gmra.mxu0 %v1928
    %v5958 = vpop.f32.mrf.mxu0
    %v5959 = vadd.f32 %v5501, %v5958
    %5960 = vmatmul.f32.gmra.mxu0 %v1929
    %v5961 = vpop.f32.mrf.mxu0
    %v5962 = vadd.f32 %v5504, %v5961
    %5963 = vmatmul.f32.gmra.mxu0 %v1930
    %v5964 = vpop.f32.mrf.mxu0
    %v5965 = vadd.f32 %v5507, %v5964
    %5966 = vmatmul.f32.gmra.mxu0 %v1931
    %v5967 = vpop.f32.mrf.mxu0
    %v5968 = vadd.f32 %v5510, %v5967
    %5969 = vmatmul.f32.gmra.mxu0 %v1932
    %v5970 = vpop.f32.mrf.mxu0
    %v5971 = vadd.f32 %v5513, %v5970
    %5972 = vmatmul.f32.gmra.mxu0 %v1933
    %v5973 = vpop.f32.mrf.mxu0
    %v5974 = vadd.f32 %v5516, %v5973
    %5975 = vmatmul.f32.gmra.mxu0 %v1934
    %v5976 = vpop.f32.mrf.mxu0
    %v5977 = vadd.f32 %v5519, %v5976
    %5978 = vmatmul.f32.gmra.mxu0 %v1935
    %v5979 = vpop.f32.mrf.mxu0
    %v5980 = vadd.f32 %v5522, %v5979
    %5981 = vmatmul.f32.gmra.mxu0 %v1936
    %v5982 = vpop.f32.mrf.mxu0
    %v5983 = vadd.f32 %v5525, %v5982
    %5984 = vmatmul.f32.gmra.mxu0 %v1937
    %v5985 = vpop.f32.mrf.mxu0
    %v5986 = vadd.f32 %v5528, %v5985
    %5987 = vmatmul.f32.gmra.mxu0 %v1938
    %v5988 = vpop.f32.mrf.mxu0
    %v5989 = vadd.f32 %v5531, %v5988
    %5990 = vmatmul.f32.gmra.mxu0 %v1939
    %v5991 = vpop.f32.mrf.mxu0
    %v5992 = vadd.f32 %v5534, %v5991
    %5993 = vmatmul.f32.gmra.mxu0 %v1946
    %v5994 = vpop.f32.mrf.mxu0
    %v5995 = vadd.f32 %v5537, %v5994
    %5996 = vmatmul.f32.gmra.mxu0 %v1947
    %v5997 = vpop.f32.mrf.mxu0
    %v5998 = vadd.f32 %v5540, %v5997
    %5999 = vmatmul.f32.gmra.mxu0 %v1948
    %v6000 = vpop.f32.mrf.mxu0
    %v6001 = vadd.f32 %v5543, %v6000
    %6002 = vmatmul.f32.gmra.mxu0 %v1949
    %v6003 = vpop.f32.mrf.mxu0
    %v6004 = vadd.f32 %v5546, %v6003
    %6005 = vmatmul.f32.gmra.mxu0 %v1950
    %v6006 = vpop.f32.mrf.mxu0
    %v6007 = vadd.f32 %v5549, %v6006
    %6008 = vmatmul.f32.gmra.mxu0 %v1951
    %v6009 = vpop.f32.mrf.mxu0
    %v6010 = vadd.f32 %v5552, %v6009
    %6011 = vmatmul.f32.gmra.mxu0 %v1952
    %v6012 = vpop.f32.mrf.mxu0
    %v6013 = vadd.f32 %v5555, %v6012
    %6014 = vmatmul.f32.gmra.mxu0 %v1953
    %v6015 = vpop.f32.mrf.mxu0
    %v6016 = vadd.f32 %v5558, %v6015
    %6017 = vmatmul.f32.gmra.mxu0 %v1954
    %v6018 = vpop.f32.mrf.mxu0
    %v6019 = vadd.f32 %v5561, %v6018
    %6020 = vmatmul.f32.gmra.mxu0 %v1955
    %v6021 = vpop.f32.mrf.mxu0
    %v6022 = vadd.f32 %v5564, %v6021
    %6023 = vmatmul.f32.gmra.mxu0 %v1956
    %v6024 = vpop.f32.mrf.mxu0
    %v6025 = vadd.f32 %v5567, %v6024
    %6026 = vmatmul.f32.gmra.mxu0 %v1957
    %v6027 = vpop.f32.mrf.mxu0
    %v6028 = vadd.f32 %v5570, %v6027
    %6029 = vmatmul.f32.gmra.mxu0 %v1958
    %v6030 = vpop.f32.mrf.mxu0
    %v6031 = vadd.f32 %v5573, %v6030
    %6032 = vmatmul.f32.gmra.mxu0 %v1959
    %v6033 = vpop.f32.mrf.mxu0
    %v6034 = vadd.f32 %v5576, %v6033
    %6035 = vmatmul.f32.gmra.mxu0 %v1960
    %v6036 = vpop.f32.mrf.mxu0
    %v6037 = vadd.f32 %v5579, %v6036
    %6038 = vmatmul.f32.gmra.mxu0 %v1961
    %v6039 = vpop.f32.mrf.mxu0
    %v6040 = vadd.f32 %v5582, %v6039
    %6041 = vmatmul.f32.gmra.mxu0 %v1962
    %v6042 = vpop.f32.mrf.mxu0
    %v6043 = vadd.f32 %v5585, %v6042
    %6044 = vmatmul.f32.gmra.mxu0 %v1963
    %v6045 = vpop.f32.mrf.mxu0
    %v6046 = vadd.f32 %v5588, %v6045
    %6047 = vmatmul.f32.gmra.mxu0 %v1964
    %v6048 = vpop.f32.mrf.mxu0
    %v6049 = vadd.f32 %v5591, %v6048
    %6050 = vmatmul.f32.gmra.mxu0 %v1965
    %v6051 = vpop.f32.mrf.mxu0
    %v6052 = vadd.f32 %v5594, %v6051
    %6053 = vmatmul.f32.gmra.mxu0 %v1966
    %v6054 = vpop.f32.mrf.mxu0
    %v6055 = vadd.f32 %v5597, %v6054
    %6056 = vmatmul.f32.gmra.mxu0 %v1973
    %v6057 = vpop.f32.mrf.mxu0
    %v6058 = vadd.f32 %v5600, %v6057
    %6059 = vmatmul.f32.gmra.mxu0 %v1974
    %v6060 = vpop.f32.mrf.mxu0
    %v6061 = vadd.f32 %v5603, %v6060
    %6062 = vmatmul.f32.gmra.mxu0 %v1975
    %v6063 = vpop.f32.mrf.mxu0
    %v6064 = vadd.f32 %v5606, %v6063
    %6065 = vmatmul.f32.gmra.mxu0 %v1976
    %v6066 = vpop.f32.mrf.mxu0
    %v6067 = vadd.f32 %v5609, %v6066
    %6068 = vmatmul.f32.gmra.mxu0 %v1977
    %v6069 = vpop.f32.mrf.mxu0
    %v6070 = vadd.f32 %v5612, %v6069
    %6071 = vmatmul.f32.gmra.mxu0 %v1978
    %v6072 = vpop.f32.mrf.mxu0
    %v6073 = vadd.f32 %v5615, %v6072
    %6074 = vmatmul.f32.gmra.mxu0 %v1979
    %v6075 = vpop.f32.mrf.mxu0
    %v6076 = vadd.f32 %v5618, %v6075
    %6077 = vmatmul.f32.gmra.mxu0 %v1980
    %v6078 = vpop.f32.mrf.mxu0
    %v6079 = vadd.f32 %v5621, %v6078
    %6080 = vmatmul.f32.gmra.mxu0 %v1981
    %v6081 = vpop.f32.mrf.mxu0
    %v6082 = vadd.f32 %v5624, %v6081
    %6083 = vmatmul.f32.gmra.mxu0 %v1982
    %v6084 = vpop.f32.mrf.mxu0
    %v6085 = vadd.f32 %v5627, %v6084
    %6086 = vmatmul.f32.gmra.mxu0 %v1983
    %v6087 = vpop.f32.mrf.mxu0
    %v6088 = vadd.f32 %v5630, %v6087
    %6089 = vmatmul.f32.gmra.mxu0 %v1984
    %v6090 = vpop.f32.mrf.mxu0
    %v6091 = vadd.f32 %v5633, %v6090
    %6092 = vmatmul.f32.gmra.mxu0 %v1985
    %v6093 = vpop.f32.mrf.mxu0
    %v6094 = vadd.f32 %v5636, %v6093
    %6095 = vmatmul.f32.gmra.mxu0 %v1986
    %v6096 = vpop.f32.mrf.mxu0
    %v6097 = vadd.f32 %v5639, %v6096
    %6098 = vmatmul.f32.gmra.mxu0 %v1987
    %v6099 = vpop.f32.mrf.mxu0
    %v6100 = vadd.f32 %v5642, %v6099
    %6101 = vmatmul.f32.gmra.mxu0 %v1988
    %v6102 = vpop.f32.mrf.mxu0
    %v6103 = vadd.f32 %v5645, %v6102
    %6104 = vmatmul.f32.gmra.mxu0 %v1989
    %v6105 = vpop.f32.mrf.mxu0
    %v6106 = vadd.f32 %v5648, %v6105
    %6107 = vmatmul.f32.gmra.mxu0 %v1990
    %v6108 = vpop.f32.mrf.mxu0
    %v6109 = vadd.f32 %v5651, %v6108
    %6110 = vmatmul.f32.gmra.mxu0 %v1991
    %v6111 = vpop.f32.mrf.mxu0
    %v6112 = vadd.f32 %v5654, %v6111
    %6113 = vmatmul.f32.gmra.mxu0 %v1992
    %v6114 = vpop.f32.mrf.mxu0
    %v6115 = vadd.f32 %v5657, %v6114
    %6116 = vmatmul.f32.gmra.mxu0 %v1993
    %v6117 = vpop.f32.mrf.mxu0
    %v6118 = vadd.f32 %v5660, %v6117
    %6119 = vmatmul.f32.gmra.mxu0 %v2000
    %v6120 = vpop.f32.mrf.mxu0
    %v6121 = vadd.f32 %v5663, %v6120
    %6122 = vmatmul.f32.gmra.mxu0 %v2001
    %v6123 = vpop.f32.mrf.mxu0
    %v6124 = vadd.f32 %v5666, %v6123
    %6125 = vmatmul.f32.gmra.mxu0 %v2002
    %v6126 = vpop.f32.mrf.mxu0
    %v6127 = vadd.f32 %v5669, %v6126
    %6128 = vmatmul.f32.gmra.mxu0 %v2003
    %v6129 = vpop.f32.mrf.mxu0
    %v6130 = vadd.f32 %v5672, %v6129
    %6131 = vmatmul.f32.gmra.mxu0 %v2004
    %v6132 = vpop.f32.mrf.mxu0
    %v6133 = vadd.f32 %v5675, %v6132
    %6134 = vmatmul.f32.gmra.mxu0 %v2005
    %v6135 = vpop.f32.mrf.mxu0
    %v6136 = vadd.f32 %v5678, %v6135
    %6137 = vmatmul.f32.gmra.mxu0 %v2006
    %v6138 = vpop.f32.mrf.mxu0
    %v6139 = vadd.f32 %v5681, %v6138
    %6140 = vmatmul.f32.gmra.mxu0 %v2007
    %v6141 = vpop.f32.mrf.mxu0
    %v6142 = vadd.f32 %v5684, %v6141
    %6143 = vmatmul.f32.gmra.mxu0 %v2008
    %v6144 = vpop.f32.mrf.mxu0
    %v6145 = vadd.f32 %v5687, %v6144
    %6146 = vmatmul.f32.gmra.mxu0 %v2009
    %v6147 = vpop.f32.mrf.mxu0
    %v6148 = vadd.f32 %v5690, %v6147
    %6149 = vmatmul.f32.gmra.mxu0 %v2010
    %v6150 = vpop.f32.mrf.mxu0
    %v6151 = vadd.f32 %v5693, %v6150
    %6152 = vmatmul.f32.gmra.mxu0 %v2011
    %v6153 = vpop.f32.mrf.mxu0
    %v6154 = vadd.f32 %v5696, %v6153
    %6155 = vmatmul.f32.gmra.mxu0 %v2012
    %v6156 = vpop.f32.mrf.mxu0
    %v6157 = vadd.f32 %v5699, %v6156
    %6158 = vmatmul.f32.gmra.mxu0 %v2013
    %v6159 = vpop.f32.mrf.mxu0
    %v6160 = vadd.f32 %v5702, %v6159
    %6161 = vmatmul.f32.gmra.mxu0 %v2014
    %v6162 = vpop.f32.mrf.mxu0
    %v6163 = vadd.f32 %v5705, %v6162
    %6164 = vmatmul.f32.gmra.mxu0 %v2015
    %v6165 = vpop.f32.mrf.mxu0
    %v6166 = vadd.f32 %v5708, %v6165
    %6167 = vmatmul.f32.gmra.mxu0 %v2016
    %v6168 = vpop.f32.mrf.mxu0
    %v6169 = vadd.f32 %v5711, %v6168
    %6170 = vmatmul.f32.gmra.mxu0 %v2017
    %v6171 = vpop.f32.mrf.mxu0
    %v6172 = vadd.f32 %v5714, %v6171
    %6173 = vmatmul.f32.gmra.mxu0 %v2018
    %v6174 = vpop.f32.mrf.mxu0
    %v6175 = vadd.f32 %v5717, %v6174
    %6176 = vmatmul.f32.gmra.mxu0 %v2019
    %v6177 = vpop.f32.mrf.mxu0
    %v6178 = vadd.f32 %v5720, %v6177
    %6179 = vmatmul.f32.gmra.mxu0 %v2020
    %v6180 = vpop.f32.mrf.mxu0
    %v6181 = vadd.f32 %v5723, %v6180
    %6182 = vmatmul.f32.gmra.mxu0 %v2027
    %v6183 = vpop.f32.mrf.mxu0
    %v6184 = vadd.f32 %v5726, %v6183
    %6185 = vmatmul.f32.gmra.mxu0 %v2028
    %v6186 = vpop.f32.mrf.mxu0
    %v6187 = vadd.f32 %v5729, %v6186
    %6188 = vmatmul.f32.gmra.mxu0 %v2029
    %v6189 = vpop.f32.mrf.mxu0
    %v6190 = vadd.f32 %v5732, %v6189
    %6191 = vmatmul.f32.gmra.mxu0 %v2030
    %v6192 = vpop.f32.mrf.mxu0
    %v6193 = vadd.f32 %v5735, %v6192
    %6194 = vmatmul.f32.gmra.mxu0 %v2031
    %v6195 = vpop.f32.mrf.mxu0
    %v6196 = vadd.f32 %v5738, %v6195
    %6197 = vmatmul.f32.gmra.mxu0 %v2032
    %v6198 = vpop.f32.mrf.mxu0
    %v6199 = vadd.f32 %v5741, %v6198
    %6200 = vmatmul.f32.gmra.mxu0 %v2033
    %v6201 = vpop.f32.mrf.mxu0
    %v6202 = vadd.f32 %v5744, %v6201
    %6203 = vmatmul.f32.gmra.mxu0 %v2034
    %v6204 = vpop.f32.mrf.mxu0
    %v6205 = vadd.f32 %v5747, %v6204
    %6206 = vmatmul.f32.gmra.mxu0 %v2035
    %v6207 = vpop.f32.mrf.mxu0
    %v6208 = vadd.f32 %v5750, %v6207
    %6209 = vmatmul.f32.gmra.mxu0 %v2036
    %v6210 = vpop.f32.mrf.mxu0
    %v6211 = vadd.f32 %v5753, %v6210
    %6212 = vmatmul.f32.gmra.mxu0 %v2037
    %v6213 = vpop.f32.mrf.mxu0
    %v6214 = vadd.f32 %v5756, %v6213
    %6215 = vmatmul.f32.gmra.mxu0 %v2038
    %v6216 = vpop.f32.mrf.mxu0
    %v6217 = vadd.f32 %v5759, %v6216
    %6218 = vmatmul.f32.gmra.mxu0 %v2039
    %v6219 = vpop.f32.mrf.mxu0
    %v6220 = vadd.f32 %v5762, %v6219
    %6221 = vmatmul.f32.gmra.mxu0 %v2040
    %v6222 = vpop.f32.mrf.mxu0
    %v6223 = vadd.f32 %v5765, %v6222
    %6224 = vmatmul.f32.gmra.mxu0 %v2041
    %v6225 = vpop.f32.mrf.mxu0
    %v6226 = vadd.f32 %v5768, %v6225
    %6227 = vmatmul.f32.gmra.mxu0 %v2042
    %v6228 = vpop.f32.mrf.mxu0
    %v6229 = vadd.f32 %v5771, %v6228
    %6230 = vmatmul.f32.gmra.mxu0 %v2043
    %v6231 = vpop.f32.mrf.mxu0
    %v6232 = vadd.f32 %v5774, %v6231
    %6233 = vmatmul.f32.gmra.mxu0 %v2044
    %v6234 = vpop.f32.mrf.mxu0
    %v6235 = vadd.f32 %v5777, %v6234
    %6236 = vmatmul.f32.gmra.mxu0 %v2045
    %v6237 = vpop.f32.mrf.mxu0
    %v6238 = vadd.f32 %v5780, %v6237
    %6239 = vmatmul.f32.gmra.mxu0 %v2046
    %v6240 = vpop.f32.mrf.mxu0
    %v6241 = vadd.f32 %v5783, %v6240
    %6242 = vmatmul.f32.gmra.mxu0 %v2047
    %v6243 = vpop.f32.mrf.mxu0
    %v6244 = vadd.f32 %v5786, %v6243
    %6245 = vmatmul.f32.gmra.mxu0 %v2054
    %v6246 = vpop.f32.mrf.mxu0
    %v6247 = vadd.f32 %v5789, %v6246
    %6248 = vmatmul.f32.gmra.mxu0 %v2055
    %v6249 = vpop.f32.mrf.mxu0
    %v6250 = vadd.f32 %v5792, %v6249
    %6251 = vmatmul.f32.gmra.mxu0 %v2056
    %v6252 = vpop.f32.mrf.mxu0
    %v6253 = vadd.f32 %v5795, %v6252
    %6254 = vmatmul.f32.gmra.mxu0 %v2057
    %v6255 = vpop.f32.mrf.mxu0
    %v6256 = vadd.f32 %v5798, %v6255
    %6257 = vmatmul.f32.gmra.mxu0 %v2058
    %v6258 = vpop.f32.mrf.mxu0
    %v6259 = vadd.f32 %v5801, %v6258
    %6260 = vmatmul.f32.gmra.mxu0 %v2059
    %v6261 = vpop.f32.mrf.mxu0
    %v6262 = vadd.f32 %v5804, %v6261
    %6263 = vmatmul.f32.gmra.mxu0 %v2060
    %v6264 = vpop.f32.mrf.mxu0
    %v6265 = vadd.f32 %v5807, %v6264
    %6266 = vmatmul.f32.gmra.mxu0 %v2061
    %v6267 = vpop.f32.mrf.mxu0
    %v6268 = vadd.f32 %v5810, %v6267
    %6269 = vmatmul.f32.gmra.mxu0 %v2062
    %v6270 = vpop.f32.mrf.mxu0
    %v6271 = vadd.f32 %v5813, %v6270
    %6272 = vmatmul.f32.gmra.mxu0 %v2063
    %v6273 = vpop.f32.mrf.mxu0
    %v6274 = vadd.f32 %v5816, %v6273
    %6275 = vmatmul.f32.gmra.mxu0 %v2064
    %v6276 = vpop.f32.mrf.mxu0
    %v6277 = vadd.f32 %v5819, %v6276
    %6278 = vmatmul.f32.gmra.mxu0 %v2065
    %v6279 = vpop.f32.mrf.mxu0
    %v6280 = vadd.f32 %v5822, %v6279
    %6281 = vmatmul.f32.gmra.mxu0 %v2066
    %v6282 = vpop.f32.mrf.mxu0
    %v6283 = vadd.f32 %v5825, %v6282
    %6284 = vmatmul.f32.gmra.mxu0 %v2067
    %v6285 = vpop.f32.mrf.mxu0
    %v6286 = vadd.f32 %v5828, %v6285
    %6287 = vmatmul.f32.gmra.mxu0 %v2068
    %v6288 = vpop.f32.mrf.mxu0
    %v6289 = vadd.f32 %v5831, %v6288
    %6290 = vmatmul.f32.gmra.mxu0 %v2069
    %v6291 = vpop.f32.mrf.mxu0
    %v6292 = vadd.f32 %v5834, %v6291
    %6293 = vmatmul.f32.gmra.mxu0 %v2070
    %v6294 = vpop.f32.mrf.mxu0
    %v6295 = vadd.f32 %v5837, %v6294
    %6296 = vmatmul.f32.gmra.mxu0 %v2071
    %v6297 = vpop.f32.mrf.mxu0
    %v6298 = vadd.f32 %v5840, %v6297
    %6299 = vmatmul.f32.gmra.mxu0 %v2072
    %v6300 = vpop.f32.mrf.mxu0
    %v6301 = vadd.f32 %v5843, %v6300
    %6302 = vmatmul.f32.gmra.mxu0 %v2073
    %v6303 = vpop.f32.mrf.mxu0
    %v6304 = vadd.f32 %v5846, %v6303
    %6305 = vmatmul.f32.gmra.mxu0 %v2074
    %v6306 = vpop.f32.mrf.mxu0
    %v6307 = vadd.f32 %v5849, %v6306
    %6308 = vmatmul.f32.gmra.mxu0 %v2081
    %v6309 = vpop.f32.mrf.mxu0
    %v6310 = vadd.f32 %v5852, %v6309
    %6311 = vmatmul.f32.gmra.mxu0 %v2082
    %v6312 = vpop.f32.mrf.mxu0
    %v6313 = vadd.f32 %v5855, %v6312
    %6314 = vmatmul.f32.gmra.mxu0 %v2083
    %v6315 = vpop.f32.mrf.mxu0
    %v6316 = vadd.f32 %v5858, %v6315
    %6317 = vmatmul.f32.gmra.mxu0 %v2084
    %v6318 = vpop.f32.mrf.mxu0
    %v6319 = vadd.f32 %v5861, %v6318
    %6320 = vmatmul.f32.gmra.mxu0 %v2085
    %v6321 = vpop.f32.mrf.mxu0
    %v6322 = vadd.f32 %v5864, %v6321
    %6323 = vmatmul.f32.gmra.mxu0 %v2086
    %v6324 = vpop.f32.mrf.mxu0
    %v6325 = vadd.f32 %v5867, %v6324
    %6326 = vmatmul.f32.gmra.mxu0 %v2087
    %v6327 = vpop.f32.mrf.mxu0
    %v6328 = vadd.f32 %v5870, %v6327
    %6329 = vmatmul.f32.gmra.mxu0 %v2088
    %v6330 = vpop.f32.mrf.mxu0
    %v6331 = vadd.f32 %v5873, %v6330
    %6332 = vmatmul.f32.gmra.mxu0 %v2089
    %v6333 = vpop.f32.mrf.mxu0
    %v6334 = vadd.f32 %v5876, %v6333
    %6335 = vmatmul.f32.gmra.mxu0 %v2090
    %v6336 = vpop.f32.mrf.mxu0
    %v6337 = vadd.f32 %v5879, %v6336
    %6338 = vmatmul.f32.gmra.mxu0 %v2091
    %v6339 = vpop.f32.mrf.mxu0
    %v6340 = vadd.f32 %v5882, %v6339
    %6341 = vmatmul.f32.gmra.mxu0 %v2092
    %v6342 = vpop.f32.mrf.mxu0
    %v6343 = vadd.f32 %v5885, %v6342
    %6344 = vmatmul.f32.gmra.mxu0 %v2093
    %v6345 = vpop.f32.mrf.mxu0
    %v6346 = vadd.f32 %v5888, %v6345
    %6347 = vmatmul.f32.gmra.mxu0 %v2094
    %v6348 = vpop.f32.mrf.mxu0
    %v6349 = vadd.f32 %v5891, %v6348
    %6350 = vmatmul.f32.gmra.mxu0 %v2095
    %v6351 = vpop.f32.mrf.mxu0
    %v6352 = vadd.f32 %v5894, %v6351
    %6353 = vmatmul.f32.gmra.mxu0 %v2096
    %v6354 = vpop.f32.mrf.mxu0
    %v6355 = vadd.f32 %v5897, %v6354
    %6356 = vmatmul.f32.gmra.mxu0 %v2097
    %v6357 = vpop.f32.mrf.mxu0
    %v6358 = vadd.f32 %v5900, %v6357
    %6359 = vmatmul.f32.gmra.mxu0 %v2098
    %v6360 = vpop.f32.mrf.mxu0
    %v6361 = vadd.f32 %v5903, %v6360
    %6362 = vmatmul.f32.gmra.mxu0 %v2099
    %v6363 = vpop.f32.mrf.mxu0
    %v6364 = vadd.f32 %v5906, %v6363
    %6365 = vmatmul.f32.gmra.mxu0 %v2100
    %v6366 = vpop.f32.mrf.mxu0
    %v6367 = vadd.f32 %v5909, %v6366
    %6368 = vmatmul.f32.gmra.mxu0 %v2101
    %v6369 = vpop.f32.mrf.mxu0
    %v6370 = vadd.f32 %v5912, %v6369
    %6371 = vdwg.mxu0
    %v6372 = vmax.f32 %v5932, 0.0
    %v6373 = vmax.f32 %v5935, 0.0
    %v6374 = vmax.f32 %v5938, 0.0
    %v6375 = vmax.f32 %v5941, 0.0
    %v6376 = vmax.f32 %v5944, 0.0
    %v6377 = vmax.f32 %v5947, 0.0
    %v6378 = vmax.f32 %v5950, 0.0
    %v6379 = vmax.f32 %v5953, 0.0
    %v6380 = vmax.f32 %v5956, 0.0
    %v6381 = vmax.f32 %v5959, 0.0
    %v6382 = vmax.f32 %v5962, 0.0
    %v6383 = vmax.f32 %v5965, 0.0
    %v6384 = vmax.f32 %v5968, 0.0
    %v6385 = vmax.f32 %v5971, 0.0
    %v6386 = vmax.f32 %v5974, 0.0
    %v6387 = vmax.f32 %v5977, 0.0
    %v6388 = vmax.f32 %v5980, 0.0
    %v6389 = vmax.f32 %v5983, 0.0
    %v6390 = vmax.f32 %v5986, 0.0
    %v6391 = vmax.f32 %v5989, 0.0
    %v6392 = vmax.f32 %v5992, 0.0
    %v6393 = vmax.f32 %v5995, 0.0
    %v6394 = vmax.f32 %v5998, 0.0
    %v6395 = vmax.f32 %v6001, 0.0
    %v6396 = vmax.f32 %v6004, 0.0
    %v6397 = vmax.f32 %v6007, 0.0
    %v6398 = vmax.f32 %v6010, 0.0
    %v6399 = vmax.f32 %v6013, 0.0
    %v6400 = vmax.f32 %v6016, 0.0
    %v6401 = vmax.f32 %v6019, 0.0
    %v6402 = vmax.f32 %v6022, 0.0
    %v6403 = vmax.f32 %v6025, 0.0
    %v6404 = vmax.f32 %v6028, 0.0
    %v6405 = vmax.f32 %v6031, 0.0
    %v6406 = vmax.f32 %v6034, 0.0
    %v6407 = vmax.f32 %v6037, 0.0
    %v6408 = vmax.f32 %v6040, 0.0
    %v6409 = vmax.f32 %v6043, 0.0
    %v6410 = vmax.f32 %v6046, 0.0
    %v6411 = vmax.f32 %v6049, 0.0
    %v6412 = vmax.f32 %v6052, 0.0
    %v6413 = vmax.f32 %v6055, 0.0
    %v6414 = vmax.f32 %v6058, 0.0
    %v6415 = vmax.f32 %v6061, 0.0
    %v6416 = vmax.f32 %v6064, 0.0
    %v6417 = vmax.f32 %v6067, 0.0
    %v6418 = vmax.f32 %v6070, 0.0
    %v6419 = vmax.f32 %v6073, 0.0
    %v6420 = vmax.f32 %v6076, 0.0
    %v6421 = vmax.f32 %v6079, 0.0
    %v6422 = vmax.f32 %v6082, 0.0
    %v6423 = vmax.f32 %v6085, 0.0
    %v6424 = vmax.f32 %v6088, 0.0
    %v6425 = vmax.f32 %v6091, 0.0
    %v6426 = vmax.f32 %v6094, 0.0
    %v6427 = vmax.f32 %v6097, 0.0
    %v6428 = vmax.f32 %v6100, 0.0
    %v6429 = vmax.f32 %v6103, 0.0
    %v6430 = vmax.f32 %v6106, 0.0
    %v6431 = vmax.f32 %v6109, 0.0
    %v6432 = vmax.f32 %v6112, 0.0
    %v6433 = vmax.f32 %v6115, 0.0
    %v6434 = vmax.f32 %v6118, 0.0
    %v6435 = vmax.f32 %v6121, 0.0
    %v6436 = vmax.f32 %v6124, 0.0
    %v6437 = vmax.f32 %v6127, 0.0
    %v6438 = vmax.f32 %v6130, 0.0
    %v6439 = vmax.f32 %v6133, 0.0
    %v6440 = vmax.f32 %v6136, 0.0
    %v6441 = vmax.f32 %v6139, 0.0
    %v6442 = vmax.f32 %v6142, 0.0
    %v6443 = vmax.f32 %v6145, 0.0
    %v6444 = vmax.f32 %v6148, 0.0
    %v6445 = vmax.f32 %v6151, 0.0
    %v6446 = vmax.f32 %v6154, 0.0
    %v6447 = vmax.f32 %v6157, 0.0
    %v6448 = vmax.f32 %v6160, 0.0
    %v6449 = vmax.f32 %v6163, 0.0
    %v6450 = vmax.f32 %v6166, 0.0
    %v6451 = vmax.f32 %v6169, 0.0
    %v6452 = vmax.f32 %v6172, 0.0
    %v6453 = vmax.f32 %v6175, 0.0
    %v6454 = vmax.f32 %v6178, 0.0
    %v6455 = vmax.f32 %v6181, 0.0
    %v6456 = vmax.f32 %v6184, 0.0
    %v6457 = vmax.f32 %v6187, 0.0
    %v6458 = vmax.f32 %v6190, 0.0
    %v6459 = vmax.f32 %v6193, 0.0
    %v6460 = vmax.f32 %v6196, 0.0
    %v6461 = vmax.f32 %v6199, 0.0
    %v6462 = vmax.f32 %v6202, 0.0
    %v6463 = vmax.f32 %v6205, 0.0
    %v6464 = vmax.f32 %v6208, 0.0
    %v6465 = vmax.f32 %v6211, 0.0
    %v6466 = vmax.f32 %v6214, 0.0
    %v6467 = vmax.f32 %v6217, 0.0
    %v6468 = vmax.f32 %v6220, 0.0
    %v6469 = vmax.f32 %v6223, 0.0
    %v6470 = vmax.f32 %v6226, 0.0
    %v6471 = vmax.f32 %v6229, 0.0
    %v6472 = vmax.f32 %v6232, 0.0
    %v6473 = vmax.f32 %v6235, 0.0
    %v6474 = vmax.f32 %v6238, 0.0
    %v6475 = vmax.f32 %v6241, 0.0
    %v6476 = vmax.f32 %v6244, 0.0
    %v6477 = vmax.f32 %v6247, 0.0
    %v6478 = vmax.f32 %v6250, 0.0
    %v6479 = vmax.f32 %v6253, 0.0
    %v6480 = vmax.f32 %v6256, 0.0
    %v6481 = vmax.f32 %v6259, 0.0
    %v6482 = vmax.f32 %v6262, 0.0
    %v6483 = vmax.f32 %v6265, 0.0
    %v6484 = vmax.f32 %v6268, 0.0
    %v6485 = vmax.f32 %v6271, 0.0
    %v6486 = vmax.f32 %v6274, 0.0
    %v6487 = vmax.f32 %v6277, 0.0
    %v6488 = vmax.f32 %v6280, 0.0
    %v6489 = vmax.f32 %v6283, 0.0
    %v6490 = vmax.f32 %v6286, 0.0
    %v6491 = vmax.f32 %v6289, 0.0
    %v6492 = vmax.f32 %v6292, 0.0
    %v6493 = vmax.f32 %v6295, 0.0
    %v6494 = vmax.f32 %v6298, 0.0
    %v6495 = vmax.f32 %v6301, 0.0
    %v6496 = vmax.f32 %v6304, 0.0
    %v6497 = vmax.f32 %v6307, 0.0
    %v6498 = vmax.f32 %v6310, 0.0
    %v6499 = vmax.f32 %v6313, 0.0
    %v6500 = vmax.f32 %v6316, 0.0
    %v6501 = vmax.f32 %v6319, 0.0
    %v6502 = vmax.f32 %v6322, 0.0
    %v6503 = vmax.f32 %v6325, 0.0
    %v6504 = vmax.f32 %v6328, 0.0
    %v6505 = vmax.f32 %v6331, 0.0
    %v6506 = vmax.f32 %v6334, 0.0
    %v6507 = vmax.f32 %v6337, 0.0
    %v6508 = vmax.f32 %v6340, 0.0
    %v6509 = vmax.f32 %v6343, 0.0
    %v6510 = vmax.f32 %v6346, 0.0
    %v6511 = vmax.f32 %v6349, 0.0
    %v6512 = vmax.f32 %v6352, 0.0
    %v6513 = vmax.f32 %v6355, 0.0
    %v6514 = vmax.f32 %v6358, 0.0
    %v6515 = vmax.f32 %v6361, 0.0
    %v6516 = vmax.f32 %v6364, 0.0
    %v6517 = vmax.f32 %v6367, 0.0
    %v6518 = vmax.f32 %v6370, 0.0
    %v6519 = vld [vmem:[%s5] sm:$0xff]
    %v6520 = vld [vmem:[%s5 + $0x8] sm:$0xff]
    %v6521 = vld [vmem:[%s5 + $0x10] sm:$0xff]
    %v6522 = vld [vmem:[%s5 + $0x18] sm:$0xff]
    %v6523 = vld [vmem:[%s5 + $0x20] sm:$0xff]
    %v6524 = vld [vmem:[%s5 + $0x28] sm:$0xff]
    %v6525 = vld [vmem:[%s5 + $0x30] sm:$0xff]
    %v6526 = vld [vmem:[%s5 + $0x38] sm:$0xff]
    %v6527 = vld [vmem:[%s5 + $0x40] sm:$0xff]
    %v6528 = vld [vmem:[%s5 + $0x48] sm:$0xff]
    %v6529 = vld [vmem:[%s5 + $0x50] sm:$0xff]
    %v6530 = vld [vmem:[%s5 + $0x58] sm:$0xff]
    %v6531 = vld [vmem:[%s5 + $0x60] sm:$0xff]
    %v6532 = vld [vmem:[%s5 + $0x68] sm:$0xff]
    %v6533 = vld [vmem:[%s5 + $0x70] sm:$0xff]
    %v6534 = vld [vmem:[%s5 + $0x78] sm:$0xff]
    %v6535 = vld [vmem:[%s5 + $0x80] sm:$0xff]
    %v6536 = vld [vmem:[%s5 + $0x88] sm:$0xff]
    %v6537 = vld [vmem:[%s5 + $0x90] sm:$0xff]
    %v6538 = vld [vmem:[%s5 + $0x98] sm:$0xff]
    %v6539 = vld [vmem:[%s5 + $0xa0] sm:$0xff]
    %v6540 = vld [vmem:[%s5 + $0xa8] sm:$0xff]
    %v6541 = vld [vmem:[%s5 + $0xb0] sm:$0xff]
    %v6542 = vld [vmem:[%s5 + $0xb8] sm:$0xff]
    %v6543 = vld [vmem:[%s5 + $0xc0] sm:$0xff]
    %v6544 = vld [vmem:[%s5 + $0xc8] sm:$0xff]
    %v6545 = vld [vmem:[%s5 + $0xd0] sm:$0xff]
    %v6546 = vld [vmem:[%s5 + $0xd8] sm:$0xff]
    %v6547 = vld [vmem:[%s5 + $0xe0] sm:$0xff]
    %v6548 = vld [vmem:[%s5 + $0xe8] sm:$0xff]
    %v6549 = vld [vmem:[%s5 + $0xf0] sm:$0xff]
    %v6550 = vld [vmem:[%s5 + $0xf8] sm:$0xff]
    %v6551 = vld [vmem:[%s5 + $0x100] sm:$0xff]
    %v6552 = vld [vmem:[%s5 + $0x108] sm:$0xff]
    %v6553 = vld [vmem:[%s5 + $0x110] sm:$0xff]
    %v6554 = vld [vmem:[%s5 + $0x118] sm:$0xff]
    %v6555 = vld [vmem:[%s5 + $0x120] sm:$0xff]
    %v6556 = vld [vmem:[%s5 + $0x128] sm:$0xff]
    %v6557 = vld [vmem:[%s5 + $0x130] sm:$0xff]
    %v6558 = vld [vmem:[%s5 + $0x138] sm:$0xff]
    %v6559 = vld [vmem:[%s5 + $0x140] sm:$0xff]
    %v6560 = vld [vmem:[%s5 + $0x148] sm:$0xff]
    %v6561 = vld [vmem:[%s5 + $0x150] sm:$0xff]
    %v6562 = vld [vmem:[%s5 + $0x158] sm:$0xff]
    %v6563 = vld [vmem:[%s5 + $0x160] sm:$0xff]
    %v6564 = vld [vmem:[%s5 + $0x168] sm:$0xff]
    %v6565 = vld [vmem:[%s5 + $0x170] sm:$0xff]
    %v6566 = vld [vmem:[%s5 + $0x178] sm:$0xff]
    %v6567 = vld [vmem:[%s5 + $0x180] sm:$0xff]
    %v6568 = vld [vmem:[%s5 + $0x188] sm:$0xff]
    %v6569 = vld [vmem:[%s5 + $0x190] sm:$0xff]
    %v6570 = vld [vmem:[%s5 + $0x198] sm:$0xff]
    %v6571 = vld [vmem:[%s5 + $0x1a0] sm:$0xff]
    %v6572 = vld [vmem:[%s5 + $0x1a8] sm:$0xff]
    %v6573 = vld [vmem:[%s5 + $0x1b0] sm:$0xff]
    %v6574 = vld [vmem:[%s5 + $0x1b8] sm:$0xff]
    %v6575 = vld [vmem:[%s5 + $0x1c0] sm:$0xff]
    %v6576 = vld [vmem:[%s5 + $0x1c8] sm:$0xff]
    %v6577 = vld [vmem:[%s5 + $0x1d0] sm:$0xff]
    %v6578 = vld [vmem:[%s5 + $0x1d8] sm:$0xff]
    %v6579 = vld [vmem:[%s5 + $0x1e0] sm:$0xff]
    %v6580 = vld [vmem:[%s5 + $0x1e8] sm:$0xff]
    %v6581 = vld [vmem:[%s5 + $0x1f0] sm:$0xff]
    %v6582 = vld [vmem:[%s5 + $0x1f8] sm:$0xff]
    %v6583 = vld [vmem:[%s5 + $0x200] sm:$0xff]
    %v6584 = vld [vmem:[%s5 + $0x208] sm:$0xff]
    %v6585 = vld [vmem:[%s5 + $0x210] sm:$0xff]
    %v6586 = vld [vmem:[%s5 + $0x218] sm:$0xff]
    %v6587 = vld [vmem:[%s5 + $0x220] sm:$0xff]
    %v6588 = vld [vmem:[%s5 + $0x228] sm:$0xff]
    %v6589 = vld [vmem:[%s5 + $0x230] sm:$0xff]
    %v6590 = vld [vmem:[%s5 + $0x238] sm:$0xff]
    %v6591 = vld [vmem:[%s5 + $0x240] sm:$0xff]
    %v6592 = vld [vmem:[%s5 + $0x248] sm:$0xff]
    %v6593 = vld [vmem:[%s5 + $0x250] sm:$0xff]
    %v6594 = vld [vmem:[%s5 + $0x258] sm:$0xff]
    %v6595 = vld [vmem:[%s5 + $0x260] sm:$0xff]
    %v6596 = vld [vmem:[%s5 + $0x268] sm:$0xff]
    %v6597 = vld [vmem:[%s5 + $0x270] sm:$0xff]
    %v6598 = vld [vmem:[%s5 + $0x278] sm:$0xff]
    %v6599 = vld [vmem:[%s5 + $0x280] sm:$0xff]
    %v6600 = vld [vmem:[%s5 + $0x288] sm:$0xff]
    %v6601 = vld [vmem:[%s5 + $0x290] sm:$0xff]
    %v6602 = vld [vmem:[%s5 + $0x298] sm:$0xff]
    %v6603 = vld [vmem:[%s5 + $0x2a0] sm:$0xff]
    %v6604 = vld [vmem:[%s5 + $0x2a8] sm:$0xff]
    %v6605 = vld [vmem:[%s5 + $0x2b0] sm:$0xff]
    %v6606 = vld [vmem:[%s5 + $0x2b8] sm:$0xff]
    %v6607 = vld [vmem:[%s5 + $0x2c0] sm:$0xff]
    %v6608 = vld [vmem:[%s5 + $0x2c8] sm:$0xff]
    %v6609 = vld [vmem:[%s5 + $0x2d0] sm:$0xff]
    %v6610 = vld [vmem:[%s5 + $0x2d8] sm:$0xff]
    %v6611 = vld [vmem:[%s5 + $0x2e0] sm:$0xff]
    %v6612 = vld [vmem:[%s5 + $0x2e8] sm:$0xff]
    %v6613 = vld [vmem:[%s5 + $0x2f0] sm:$0xff]
    %v6614 = vld [vmem:[%s5 + $0x2f8] sm:$0xff]
    %v6615 = vld [vmem:[%s5 + $0x300] sm:$0xff]
    %v6616 = vld [vmem:[%s5 + $0x308] sm:$0xff]
    %v6617 = vld [vmem:[%s5 + $0x310] sm:$0xff]
    %v6618 = vld [vmem:[%s5 + $0x318] sm:$0xff]
    %v6619 = vld [vmem:[%s5 + $0x320] sm:$0xff]
    %v6620 = vld [vmem:[%s5 + $0x328] sm:$0xff]
    %v6621 = vld [vmem:[%s5 + $0x330] sm:$0xff]
    %v6622 = vld [vmem:[%s5 + $0x338] sm:$0xff]
    %v6623 = vld [vmem:[%s5 + $0x340] sm:$0xff]
    %v6624 = vld [vmem:[%s5 + $0x348] sm:$0xff]
    %v6625 = vld [vmem:[%s5 + $0x350] sm:$0xff]
    %v6626 = vld [vmem:[%s5 + $0x358] sm:$0xff]
    %v6627 = vld [vmem:[%s5 + $0x360] sm:$0xff]
    %v6628 = vld [vmem:[%s5 + $0x368] sm:$0xff]
    %v6629 = vld [vmem:[%s5 + $0x370] sm:$0xff]
    %v6630 = vld [vmem:[%s5 + $0x378] sm:$0xff]
    %v6631 = vld [vmem:[%s5 + $0x380] sm:$0xff]
    %v6632 = vld [vmem:[%s5 + $0x388] sm:$0xff]
    %v6633 = vld [vmem:[%s5 + $0x390] sm:$0xff]
    %v6634 = vld [vmem:[%s5 + $0x398] sm:$0xff]
    %v6635 = vld [vmem:[%s5 + $0x3a0] sm:$0xff]
    %v6636 = vld [vmem:[%s5 + $0x3a8] sm:$0xff]
    %v6637 = vld [vmem:[%s5 + $0x3b0] sm:$0xff]
    %v6638 = vld [vmem:[%s5 + $0x3b8] sm:$0xff]
    %v6639 = vld [vmem:[%s5 + $0x3c0] sm:$0xff]
    %v6640 = vld [vmem:[%s5 + $0x3c8] sm:$0xff]
    %v6641 = vld [vmem:[%s5 + $0x3d0] sm:$0xff]
    %v6642 = vld [vmem:[%s5 + $0x3d8] sm:$0xff]
    %v6643 = vld [vmem:[%s5 + $0x3e0] sm:$0xff]
    %v6644 = vld [vmem:[%s5 + $0x3e8] sm:$0xff]
    %v6645 = vld [vmem:[%s5 + $0x3f0] sm:$0xff]
    %v6646 = vld [vmem:[%s5 + $0x3f8] sm:$0xff]
    %v6647 = vld [vmem:[%s5 + $0x400] sm:$0xff]
    %v6648 = vld [vmem:[%s5 + $0x408] sm:$0xff]
    %v6649 = vld [vmem:[%s5 + $0x410] sm:$0xff]
    %v6650 = vld [vmem:[%s5 + $0x418] sm:$0xff]
    %v6651 = vld [vmem:[%s5 + $0x420] sm:$0xff]
    %v6652 = vld [vmem:[%s5 + $0x428] sm:$0xff]
    %v6653 = vld [vmem:[%s5 + $0x430] sm:$0xff]
    %v6654 = vld [vmem:[%s5 + $0x438] sm:$0xff]
    %v6655 = vld [vmem:[%s5 + $0x440] sm:$0xff]
    %v6656 = vld [vmem:[%s5 + $0x448] sm:$0xff]
    %v6657 = vld [vmem:[%s5 + $0x450] sm:$0xff]
    %v6658 = vld [vmem:[%s5 + $0x458] sm:$0xff]
    %v6659 = vld [vmem:[%s5 + $0x460] sm:$0xff]
    %v6660 = vld [vmem:[%s5 + $0x468] sm:$0xff]
    %v6661 = vld [vmem:[%s5 + $0x470] sm:$0xff]
    %v6662 = vld [vmem:[%s5 + $0x478] sm:$0xff]
    %v6663 = vld [vmem:[%s6] sm:$0x1]
    %v6665 = vperm.slane %v6663, 0
    %6667 = vmatpush.msra.mxu0 %v6534
    %6668 = vmatpush.msra.mxu0 %v6533
    %6669 = vmatpush.msra.mxu0 %v6532
    %6670 = vmatpush.msra.mxu0 %v6531
    %6671 = vmatpush.msra.mxu0 %v6530
    %6672 = vmatpush.msra.mxu0 %v6529
    %6673 = vmatpush.msra.mxu0 %v6528
    %6674 = vmatpush.msra.mxu0 %v6527
    %6675 = vmatpush.msra.mxu0 %v6526
    %6676 = vmatpush.msra.mxu0 %v6525
    %6677 = vmatpush.msra.mxu0 %v6524
    %6678 = vmatpush.msra.mxu0 %v6523
    %6679 = vmatpush.msra.mxu0 %v6522
    %6680 = vmatpush.msra.mxu0 %v6521
    %6681 = vmatpush.msra.mxu0 %v6520
    %6682 = vmatpush.msra.mxu0 %v6519
    %6683 = vmatmul.f32.gmra.mxu0 %v6372
    %v6684 = vpop.f32.mrf.mxu0
    %v6685 = vadd.f32 %v6665, %v6684
    %6686 = vmatmul.f32.gmra.mxu0 %v6373
    %v6687 = vpop.f32.mrf.mxu0
    %v6688 = vadd.f32 %v6665, %v6687
    %6689 = vmatmul.f32.gmra.mxu0 %v6374
    %v6690 = vpop.f32.mrf.mxu0
    %v6691 = vadd.f32 %v6665, %v6690
    %6692 = vmatmul.f32.gmra.mxu0 %v6375
    %v6693 = vpop.f32.mrf.mxu0
    %v6694 = vadd.f32 %v6665, %v6693
    %6695 = vmatmul.f32.gmra.mxu0 %v6376
    %v6696 = vpop.f32.mrf.mxu0
    %v6697 = vadd.f32 %v6665, %v6696
    %6698 = vmatmul.f32.gmra.mxu0 %v6377
    %v6699 = vpop.f32.mrf.mxu0
    %v6700 = vadd.f32 %v6665, %v6699
    %6701 = vmatmul.f32.gmra.mxu0 %v6378
    %v6702 = vpop.f32.mrf.mxu0
    %v6703 = vadd.f32 %v6665, %v6702
    %6704 = vmatmul.f32.gmra.mxu0 %v6379
    %v6705 = vpop.f32.mrf.mxu0
    %v6706 = vadd.f32 %v6665, %v6705
    %6707 = vmatmul.f32.gmra.mxu0 %v6380
    %v6708 = vpop.f32.mrf.mxu0
    %v6709 = vadd.f32 %v6665, %v6708
    %6710 = vmatmul.f32.gmra.mxu0 %v6381
    %v6711 = vpop.f32.mrf.mxu0
    %v6712 = vadd.f32 %v6665, %v6711
    %6713 = vmatmul.f32.gmra.mxu0 %v6382
    %v6714 = vpop.f32.mrf.mxu0
    %v6715 = vadd.f32 %v6665, %v6714
    %6716 = vmatmul.f32.gmra.mxu0 %v6383
    %v6717 = vpop.f32.mrf.mxu0
    %v6718 = vadd.f32 %v6665, %v6717
    %6719 = vmatmul.f32.gmra.mxu0 %v6384
    %v6720 = vpop.f32.mrf.mxu0
    %v6721 = vadd.f32 %v6665, %v6720
    %6722 = vmatmul.f32.gmra.mxu0 %v6385
    %v6723 = vpop.f32.mrf.mxu0
    %v6724 = vadd.f32 %v6665, %v6723
    %6725 = vmatmul.f32.gmra.mxu0 %v6386
    %v6726 = vpop.f32.mrf.mxu0
    %v6727 = vadd.f32 %v6665, %v6726
    %6728 = vmatmul.f32.gmra.mxu0 %v6393
    %v6729 = vpop.f32.mrf.mxu0
    %v6730 = vadd.f32 %v6665, %v6729
    %6731 = vmatmul.f32.gmra.mxu0 %v6394
    %v6732 = vpop.f32.mrf.mxu0
    %v6733 = vadd.f32 %v6665, %v6732
    %6734 = vmatmul.f32.gmra.mxu0 %v6395
    %v6735 = vpop.f32.mrf.mxu0
    %v6736 = vadd.f32 %v6665, %v6735
    %6737 = vmatmul.f32.gmra.mxu0 %v6396
    %v6738 = vpop.f32.mrf.mxu0
    %v6739 = vadd.f32 %v6665, %v6738
    %6740 = vmatmul.f32.gmra.mxu0 %v6397
    %v6741 = vpop.f32.mrf.mxu0
    %v6742 = vadd.f32 %v6665, %v6741
    %6743 = vmatmul.f32.gmra.mxu0 %v6398
    %v6744 = vpop.f32.mrf.mxu0
    %v6745 = vadd.f32 %v6665, %v6744
    %6746 = vmatmul.f32.gmra.mxu0 %v6399
    %v6747 = vpop.f32.mrf.mxu0
    %v6748 = vadd.f32 %v6665, %v6747
    %6749 = vmatmul.f32.gmra.mxu0 %v6400
    %v6750 = vpop.f32.mrf.mxu0
    %v6751 = vadd.f32 %v6665, %v6750
    %6752 = vmatmul.f32.gmra.mxu0 %v6401
    %v6753 = vpop.f32.mrf.mxu0
    %v6754 = vadd.f32 %v6665, %v6753
    %6755 = vmatmul.f32.gmra.mxu0 %v6402
    %v6756 = vpop.f32.mrf.mxu0
    %v6757 = vadd.f32 %v6665, %v6756
    %6758 = vmatmul.f32.gmra.mxu0 %v6403
    %v6759 = vpop.f32.mrf.mxu0
    %v6760 = vadd.f32 %v6665, %v6759
    %6761 = vmatmul.f32.gmra.mxu0 %v6404
    %v6762 = vpop.f32.mrf.mxu0
    %v6763 = vadd.f32 %v6665, %v6762
    %6764 = vmatmul.f32.gmra.mxu0 %v6405
    %v6765 = vpop.f32.mrf.mxu0
    %v6766 = vadd.f32 %v6665, %v6765
    %6767 = vmatmul.f32.gmra.mxu0 %v6406
    %v6768 = vpop.f32.mrf.mxu0
    %v6769 = vadd.f32 %v6665, %v6768
    %6770 = vmatmul.f32.gmra.mxu0 %v6407
    %v6771 = vpop.f32.mrf.mxu0
    %v6772 = vadd.f32 %v6665, %v6771
    %6773 = vmatmul.f32.gmra.mxu0 %v6414
    %v6774 = vpop.f32.mrf.mxu0
    %v6775 = vadd.f32 %v6665, %v6774
    %6776 = vmatmul.f32.gmra.mxu0 %v6415
    %v6777 = vpop.f32.mrf.mxu0
    %v6778 = vadd.f32 %v6665, %v6777
    %6779 = vmatmul.f32.gmra.mxu0 %v6416
    %v6780 = vpop.f32.mrf.mxu0
    %v6781 = vadd.f32 %v6665, %v6780
    %6782 = vmatmul.f32.gmra.mxu0 %v6417
    %v6783 = vpop.f32.mrf.mxu0
    %v6784 = vadd.f32 %v6665, %v6783
    %6785 = vmatmul.f32.gmra.mxu0 %v6418
    %v6786 = vpop.f32.mrf.mxu0
    %v6787 = vadd.f32 %v6665, %v6786
    %6788 = vmatmul.f32.gmra.mxu0 %v6419
    %v6789 = vpop.f32.mrf.mxu0
    %v6790 = vadd.f32 %v6665, %v6789
    %6791 = vmatmul.f32.gmra.mxu0 %v6420
    %v6792 = vpop.f32.mrf.mxu0
    %v6793 = vadd.f32 %v6665, %v6792
    %6794 = vmatmul.f32.gmra.mxu0 %v6421
    %v6795 = vpop.f32.mrf.mxu0
    %v6796 = vadd.f32 %v6665, %v6795
    %6797 = vmatmul.f32.gmra.mxu0 %v6422
    %v6798 = vpop.f32.mrf.mxu0
    %v6799 = vadd.f32 %v6665, %v6798
    %6800 = vmatmul.f32.gmra.mxu0 %v6423
    %v6801 = vpop.f32.mrf.mxu0
    %v6802 = vadd.f32 %v6665, %v6801
    %6803 = vmatmul.f32.gmra.mxu0 %v6424
    %v6804 = vpop.f32.mrf.mxu0
    %v6805 = vadd.f32 %v6665, %v6804
    %6806 = vmatmul.f32.gmra.mxu0 %v6425
    %v6807 = vpop.f32.mrf.mxu0
    %v6808 = vadd.f32 %v6665, %v6807
    %6809 = vmatmul.f32.gmra.mxu0 %v6426
    %v6810 = vpop.f32.mrf.mxu0
    %v6811 = vadd.f32 %v6665, %v6810
    %6812 = vmatmul.f32.gmra.mxu0 %v6427
    %v6813 = vpop.f32.mrf.mxu0
    %v6814 = vadd.f32 %v6665, %v6813
    %6815 = vmatmul.f32.gmra.mxu0 %v6428
    %v6816 = vpop.f32.mrf.mxu0
    %v6817 = vadd.f32 %v6665, %v6816
    %6818 = vmatmul.f32.gmra.mxu0 %v6435
    %v6819 = vpop.f32.mrf.mxu0
    %v6820 = vadd.f32 %v6665, %v6819
    %6821 = vmatmul.f32.gmra.mxu0 %v6436
    %v6822 = vpop.f32.mrf.mxu0
    %v6823 = vadd.f32 %v6665, %v6822
    %6824 = vmatmul.f32.gmra.mxu0 %v6437
    %v6825 = vpop.f32.mrf.mxu0
    %v6826 = vadd.f32 %v6665, %v6825
    %6827 = vmatmul.f32.gmra.mxu0 %v6438
    %v6828 = vpop.f32.mrf.mxu0
    %v6829 = vadd.f32 %v6665, %v6828
    %6830 = vmatmul.f32.gmra.mxu0 %v6439
    %v6831 = vpop.f32.mrf.mxu0
    %v6832 = vadd.f32 %v6665, %v6831
    %6833 = vmatmul.f32.gmra.mxu0 %v6440
    %v6834 = vpop.f32.mrf.mxu0
    %v6835 = vadd.f32 %v6665, %v6834
    %6836 = vmatmul.f32.gmra.mxu0 %v6441
    %v6837 = vpop.f32.mrf.mxu0
    %v6838 = vadd.f32 %v6665, %v6837
    %6839 = vmatmul.f32.gmra.mxu0 %v6442
    %v6840 = vpop.f32.mrf.mxu0
    %v6841 = vadd.f32 %v6665, %v6840
    %6842 = vmatmul.f32.gmra.mxu0 %v6443
    %v6843 = vpop.f32.mrf.mxu0
    %v6844 = vadd.f32 %v6665, %v6843
    %6845 = vmatmul.f32.gmra.mxu0 %v6444
    %v6846 = vpop.f32.mrf.mxu0
    %v6847 = vadd.f32 %v6665, %v6846
    %6848 = vmatmul.f32.gmra.mxu0 %v6445
    %v6849 = vpop.f32.mrf.mxu0
    %v6850 = vadd.f32 %v6665, %v6849
    %6851 = vmatmul.f32.gmra.mxu0 %v6446
    %v6852 = vpop.f32.mrf.mxu0
    %v6853 = vadd.f32 %v6665, %v6852
    %6854 = vmatmul.f32.gmra.mxu0 %v6447
    %v6855 = vpop.f32.mrf.mxu0
    %v6856 = vadd.f32 %v6665, %v6855
    %6857 = vmatmul.f32.gmra.mxu0 %v6448
    %v6858 = vpop.f32.mrf.mxu0
    %v6859 = vadd.f32 %v6665, %v6858
    %6860 = vmatmul.f32.gmra.mxu0 %v6449
    %v6861 = vpop.f32.mrf.mxu0
    %v6862 = vadd.f32 %v6665, %v6861
    %6863 = vmatmul.f32.gmra.mxu0 %v6456
    %v6864 = vpop.f32.mrf.mxu0
    %v6865 = vadd.f32 %v6665, %v6864
    %6866 = vmatmul.f32.gmra.mxu0 %v6457
    %v6867 = vpop.f32.mrf.mxu0
    %v6868 = vadd.f32 %v6665, %v6867
    %6869 = vmatmul.f32.gmra.mxu0 %v6458
    %v6870 = vpop.f32.mrf.mxu0
    %v6871 = vadd.f32 %v6665, %v6870
    %6872 = vmatmul.f32.gmra.mxu0 %v6459
    %v6873 = vpop.f32.mrf.mxu0
    %v6874 = vadd.f32 %v6665, %v6873
    %6875 = vmatmul.f32.gmra.mxu0 %v6460
    %v6876 = vpop.f32.mrf.mxu0
    %v6877 = vadd.f32 %v6665, %v6876
    %6878 = vmatmul.f32.gmra.mxu0 %v6461
    %v6879 = vpop.f32.mrf.mxu0
    %v6880 = vadd.f32 %v6665, %v6879
    %6881 = vmatmul.f32.gmra.mxu0 %v6462
    %v6882 = vpop.f32.mrf.mxu0
    %v6883 = vadd.f32 %v6665, %v6882
    %6884 = vmatmul.f32.gmra.mxu0 %v6463
    %v6885 = vpop.f32.mrf.mxu0
    %v6886 = vadd.f32 %v6665, %v6885
    %6887 = vmatmul.f32.gmra.mxu0 %v6464
    %v6888 = vpop.f32.mrf.mxu0
    %v6889 = vadd.f32 %v6665, %v6888
    %6890 = vmatmul.f32.gmra.mxu0 %v6465
    %v6891 = vpop.f32.mrf.mxu0
    %v6892 = vadd.f32 %v6665, %v6891
    %6893 = vmatmul.f32.gmra.mxu0 %v6466
    %v6894 = vpop.f32.mrf.mxu0
    %v6895 = vadd.f32 %v6665, %v6894
    %6896 = vmatmul.f32.gmra.mxu0 %v6467
    %v6897 = vpop.f32.mrf.mxu0
    %v6898 = vadd.f32 %v6665, %v6897
    %6899 = vmatmul.f32.gmra.mxu0 %v6468
    %v6900 = vpop.f32.mrf.mxu0
    %v6901 = vadd.f32 %v6665, %v6900
    %6902 = vmatmul.f32.gmra.mxu0 %v6469
    %v6903 = vpop.f32.mrf.mxu0
    %v6904 = vadd.f32 %v6665, %v6903
    %6905 = vmatmul.f32.gmra.mxu0 %v6470
    %v6906 = vpop.f32.mrf.mxu0
    %v6907 = vadd.f32 %v6665, %v6906
    %6908 = vdwg.mxu0
    %6909 = vmatpush.msra.mxu0 %v6550
    %6910 = vmatpush.msra.mxu0 %v6549
    %6911 = vmatpush.msra.mxu0 %v6548
    %6912 = vmatpush.msra.mxu0 %v6547
    %6913 = vmatpush.msra.mxu0 %v6546
    %6914 = vmatpush.msra.mxu0 %v6545
    %6915 = vmatpush.msra.mxu0 %v6544
    %6916 = vmatpush.msra.mxu0 %v6543
    %6917 = vmatpush.msra.mxu0 %v6542
    %6918 = vmatpush.msra.mxu0 %v6541
    %6919 = vmatpush.msra.mxu0 %v6540
    %6920 = vmatpush.msra.mxu0 %v6539
    %6921 = vmatpush.msra.mxu0 %v6538
    %6922 = vmatpush.msra.mxu0 %v6537
    %6923 = vmatpush.msra.mxu0 %v6536
    %6924 = vmatpush.msra.mxu0 %v6535
    %6925 = vmatmul.f32.gmra.mxu0 %v6375
    %v6926 = vpop.f32.mrf.mxu0
    %v6927 = vadd.f32 %v6685, %v6926
    %6928 = vmatmul.f32.gmra.mxu0 %v6376
    %v6929 = vpop.f32.mrf.mxu0
    %v6930 = vadd.f32 %v6688, %v6929
    %6931 = vmatmul.f32.gmra.mxu0 %v6377
    %v6932 = vpop.f32.mrf.mxu0
    %v6933 = vadd.f32 %v6691, %v6932
    %6934 = vmatmul.f32.gmra.mxu0 %v6378
    %v6935 = vpop.f32.mrf.mxu0
    %v6936 = vadd.f32 %v6694, %v6935
    %6937 = vmatmul.f32.gmra.mxu0 %v6379
    %v6938 = vpop.f32.mrf.mxu0
    %v6939 = vadd.f32 %v6697, %v6938
    %6940 = vmatmul.f32.gmra.mxu0 %v6380
    %v6941 = vpop.f32.mrf.mxu0
    %v6942 = vadd.f32 %v6700, %v6941
    %6943 = vmatmul.f32.gmra.mxu0 %v6381
    %v6944 = vpop.f32.mrf.mxu0
    %v6945 = vadd.f32 %v6703, %v6944
    %6946 = vmatmul.f32.gmra.mxu0 %v6382
    %v6947 = vpop.f32.mrf.mxu0
    %v6948 = vadd.f32 %v6706, %v6947
    %6949 = vmatmul.f32.gmra.mxu0 %v6383
    %v6950 = vpop.f32.mrf.mxu0
    %v6951 = vadd.f32 %v6709, %v6950
    %6952 = vmatmul.f32.gmra.mxu0 %v6384
    %v6953 = vpop.f32.mrf.mxu0
    %v6954 = vadd.f32 %v6712, %v6953
    %6955 = vmatmul.f32.gmra.mxu0 %v6385
    %v6956 = vpop.f32.mrf.mxu0
    %v6957 = vadd.f32 %v6715, %v6956
    %6958 = vmatmul.f32.gmra.mxu0 %v6386
    %v6959 = vpop.f32.mrf.mxu0
    %v6960 = vadd.f32 %v6718, %v6959
    %6961 = vmatmul.f32.gmra.mxu0 %v6387
    %v6962 = vpop.f32.mrf.mxu0
    %v6963 = vadd.f32 %v6721, %v6962
    %6964 = vmatmul.f32.gmra.mxu0 %v6388
    %v6965 = vpop.f32.mrf.mxu0
    %v6966 = vadd.f32 %v6724, %v6965
    %6967 = vmatmul.f32.gmra.mxu0 %v6389
    %v6968 = vpop.f32.mrf.mxu0
    %v6969 = vadd.f32 %v6727, %v6968
    %6970 = vmatmul.f32.gmra.mxu0 %v6396
    %v6971 = vpop.f32.mrf.mxu0
    %v6972 = vadd.f32 %v6730, %v6971
    %6973 = vmatmul.f32.gmra.mxu0 %v6397
    %v6974 = vpop.f32.mrf.mxu0
    %v6975 = vadd.f32 %v6733, %v6974
    %6976 = vmatmul.f32.gmra.mxu0 %v6398
    %v6977 = vpop.f32.mrf.mxu0
    %v6978 = vadd.f32 %v6736, %v6977
    %6979 = vmatmul.f32.gmra.mxu0 %v6399
    %v6980 = vpop.f32.mrf.mxu0
    %v6981 = vadd.f32 %v6739, %v6980
    %6982 = vmatmul.f32.gmra.mxu0 %v6400
    %v6983 = vpop.f32.mrf.mxu0
    %v6984 = vadd.f32 %v6742, %v6983
    %6985 = vmatmul.f32.gmra.mxu0 %v6401
    %v6986 = vpop.f32.mrf.mxu0
    %v6987 = vadd.f32 %v6745, %v6986
    %6988 = vmatmul.f32.gmra.mxu0 %v6402
    %v6989 = vpop.f32.mrf.mxu0
    %v6990 = vadd.f32 %v6748, %v6989
    %6991 = vmatmul.f32.gmra.mxu0 %v6403
    %v6992 = vpop.f32.mrf.mxu0
    %v6993 = vadd.f32 %v6751, %v6992
    %6994 = vmatmul.f32.gmra.mxu0 %v6404
    %v6995 = vpop.f32.mrf.mxu0
    %v6996 = vadd.f32 %v6754, %v6995
    %6997 = vmatmul.f32.gmra.mxu0 %v6405
    %v6998 = vpop.f32.mrf.mxu0
    %v6999 = vadd.f32 %v6757, %v6998
    %7000 = vmatmul.f32.gmra.mxu0 %v6406
    %v7001 = vpop.f32.mrf.mxu0
    %v7002 = vadd.f32 %v6760, %v7001
    %7003 = vmatmul.f32.gmra.mxu0 %v6407
    %v7004 = vpop.f32.mrf.mxu0
    %v7005 = vadd.f32 %v6763, %v7004
    %7006 = vmatmul.f32.gmra.mxu0 %v6408
    %v7007 = vpop.f32.mrf.mxu0
    %v7008 = vadd.f32 %v6766, %v7007
    %7009 = vmatmul.f32.gmra.mxu0 %v6409
    %v7010 = vpop.f32.mrf.mxu0
    %v7011 = vadd.f32 %v6769, %v7010
    %7012 = vmatmul.f32.gmra.mxu0 %v6410
    %v7013 = vpop.f32.mrf.mxu0
    %v7014 = vadd.f32 %v6772, %v7013
    %7015 = vmatmul.f32.gmra.mxu0 %v6417
    %v7016 = vpop.f32.mrf.mxu0
    %v7017 = vadd.f32 %v6775, %v7016
    %7018 = vmatmul.f32.gmra.mxu0 %v6418
    %v7019 = vpop.f32.mrf.mxu0
    %v7020 = vadd.f32 %v6778, %v7019
    %7021 = vmatmul.f32.gmra.mxu0 %v6419
    %v7022 = vpop.f32.mrf.mxu0
    %v7023 = vadd.f32 %v6781, %v7022
    %7024 = vmatmul.f32.gmra.mxu0 %v6420
    %v7025 = vpop.f32.mrf.mxu0
    %v7026 = vadd.f32 %v6784, %v7025
    %7027 = vmatmul.f32.gmra.mxu0 %v6421
    %v7028 = vpop.f32.mrf.mxu0
    %v7029 = vadd.f32 %v6787, %v7028
    %7030 = vmatmul.f32.gmra.mxu0 %v6422
    %v7031 = vpop.f32.mrf.mxu0
    %v7032 = vadd.f32 %v6790, %v7031
    %7033 = vmatmul.f32.gmra.mxu0 %v6423
    %v7034 = vpop.f32.mrf.mxu0
    %v7035 = vadd.f32 %v6793, %v7034
    %7036 = vmatmul.f32.gmra.mxu0 %v6424
    %v7037 = vpop.f32.mrf.mxu0
    %v7038 = vadd.f32 %v6796, %v7037
    %7039 = vmatmul.f32.gmra.mxu0 %v6425
    %v7040 = vpop.f32.mrf.mxu0
    %v7041 = vadd.f32 %v6799, %v7040
    %7042 = vmatmul.f32.gmra.mxu0 %v6426
    %v7043 = vpop.f32.mrf.mxu0
    %v7044 = vadd.f32 %v6802, %v7043
    %7045 = vmatmul.f32.gmra.mxu0 %v6427
    %v7046 = vpop.f32.mrf.mxu0
    %v7047 = vadd.f32 %v6805, %v7046
    %7048 = vmatmul.f32.gmra.mxu0 %v6428
    %v7049 = vpop.f32.mrf.mxu0
    %v7050 = vadd.f32 %v6808, %v7049
    %7051 = vmatmul.f32.gmra.mxu0 %v6429
    %v7052 = vpop.f32.mrf.mxu0
    %v7053 = vadd.f32 %v6811, %v7052
    %7054 = vmatmul.f32.gmra.mxu0 %v6430
    %v7055 = vpop.f32.mrf.mxu0
    %v7056 = vadd.f32 %v6814, %v7055
    %7057 = vmatmul.f32.gmra.mxu0 %v6431
    %v7058 = vpop.f32.mrf.mxu0
    %v7059 = vadd.f32 %v6817, %v7058
    %7060 = vmatmul.f32.gmra.mxu0 %v6438
    %v7061 = vpop.f32.mrf.mxu0
    %v7062 = vadd.f32 %v6820, %v7061
    %7063 = vmatmul.f32.gmra.mxu0 %v6439
    %v7064 = vpop.f32.mrf.mxu0
    %v7065 = vadd.f32 %v6823, %v7064
    %7066 = vmatmul.f32.gmra.mxu0 %v6440
    %v7067 = vpop.f32.mrf.mxu0
    %v7068 = vadd.f32 %v6826, %v7067
    %7069 = vmatmul.f32.gmra.mxu0 %v6441
    %v7070 = vpop.f32.mrf.mxu0
    %v7071 = vadd.f32 %v6829, %v7070
    %7072 = vmatmul.f32.gmra.mxu0 %v6442
    %v7073 = vpop.f32.mrf.mxu0
    %v7074 = vadd.f32 %v6832, %v7073
    %7075 = vmatmul.f32.gmra.mxu0 %v6443
    %v7076 = vpop.f32.mrf.mxu0
    %v7077 = vadd.f32 %v6835, %v7076
    %7078 = vmatmul.f32.gmra.mxu0 %v6444
    %v7079 = vpop.f32.mrf.mxu0
    %v7080 = vadd.f32 %v6838, %v7079
    %7081 = vmatmul.f32.gmra.mxu0 %v6445
    %v7082 = vpop.f32.mrf.mxu0
    %v7083 = vadd.f32 %v6841, %v7082
    %7084 = vmatmul.f32.gmra.mxu0 %v6446
    %v7085 = vpop.f32.mrf.mxu0
    %v7086 = vadd.f32 %v6844, %v7085
    %7087 = vmatmul.f32.gmra.mxu0 %v6447
    %v7088 = vpop.f32.mrf.mxu0
    %v7089 = vadd.f32 %v6847, %v7088
    %7090 = vmatmul.f32.gmra.mxu0 %v6448
    %v7091 = vpop.f32.mrf.mxu0
    %v7092 = vadd.f32 %v6850, %v7091
    %7093 = vmatmul.f32.gmra.mxu0 %v6449
    %v7094 = vpop.f32.mrf.mxu0
    %v7095 = vadd.f32 %v6853, %v7094
    %7096 = vmatmul.f32.gmra.mxu0 %v6450
    %v7097 = vpop.f32.mrf.mxu0
    %v7098 = vadd.f32 %v6856, %v7097
    %7099 = vmatmul.f32.gmra.mxu0 %v6451
    %v7100 = vpop.f32.mrf.mxu0
    %v7101 = vadd.f32 %v6859, %v7100
    %7102 = vmatmul.f32.gmra.mxu0 %v6452
    %v7103 = vpop.f32.mrf.mxu0
    %v7104 = vadd.f32 %v6862, %v7103
    %7105 = vmatmul.f32.gmra.mxu0 %v6459
    %v7106 = vpop.f32.mrf.mxu0
    %v7107 = vadd.f32 %v6865, %v7106
    %7108 = vmatmul.f32.gmra.mxu0 %v6460
    %v7109 = vpop.f32.mrf.mxu0
    %v7110 = vadd.f32 %v6868, %v7109
    %7111 = vmatmul.f32.gmra.mxu0 %v6461
    %v7112 = vpop.f32.mrf.mxu0
    %v7113 = vadd.f32 %v6871, %v7112
    %7114 = vmatmul.f32.gmra.mxu0 %v6462
    %v7115 = vpop.f32.mrf.mxu0
    %v7116 = vadd.f32 %v6874, %v7115
    %7117 = vmatmul.f32.gmra.mxu0 %v6463
    %v7118 = vpop.f32.mrf.mxu0
    %v7119 = vadd.f32 %v6877, %v7118
    %7120 = vmatmul.f32.gmra.mxu0 %v6464
    %v7121 = vpop.f32.mrf.mxu0
    %v7122 = vadd.f32 %v6880, %v7121
    %7123 = vmatmul.f32.gmra.mxu0 %v6465
    %v7124 = vpop.f32.mrf.mxu0
    %v7125 = vadd.f32 %v6883, %v7124
    %7126 = vmatmul.f32.gmra.mxu0 %v6466
    %v7127 = vpop.f32.mrf.mxu0
    %v7128 = vadd.f32 %v6886, %v7127
    %7129 = vmatmul.f32.gmra.mxu0 %v6467
    %v7130 = vpop.f32.mrf.mxu0
    %v7131 = vadd.f32 %v6889, %v7130
    %7132 = vmatmul.f32.gmra.mxu0 %v6468
    %v7133 = vpop.f32.mrf.mxu0
    %v7134 = vadd.f32 %v6892, %v7133
    %7135 = vmatmul.f32.gmra.mxu0 %v6469
    %v7136 = vpop.f32.mrf.mxu0
    %v7137 = vadd.f32 %v6895, %v7136
    %7138 = vmatmul.f32.gmra.mxu0 %v6470
    %v7139 = vpop.f32.mrf.mxu0
    %v7140 = vadd.f32 %v6898, %v7139
    %7141 = vmatmul.f32.gmra.mxu0 %v6471
    %v7142 = vpop.f32.mrf.mxu0
    %v7143 = vadd.f32 %v6901, %v7142
    %7144 = vmatmul.f32.gmra.mxu0 %v6472
    %v7145 = vpop.f32.mrf.mxu0
    %v7146 = vadd.f32 %v6904, %v7145
    %7147 = vmatmul.f32.gmra.mxu0 %v6473
    %v7148 = vpop.f32.mrf.mxu0
    %v7149 = vadd.f32 %v6907, %v7148
    %7150 = vdwg.mxu0
    %7151 = vmatpush.msra.mxu0 %v6566
    %7152 = vmatpush.msra.mxu0 %v6565
    %7153 = vmatpush.msra.mxu0 %v6564
    %7154 = vmatpush.msra.mxu0 %v6563
    %7155 = vmatpush.msra.mxu0 %v6562
    %7156 = vmatpush.msra.mxu0 %v6561
    %7157 = vmatpush.msra.mxu0 %v6560
    %7158 = vmatpush.msra.mxu0 %v6559
    %7159 = vmatpush.msra.mxu0 %v6558
    %7160 = vmatpush.msra.mxu0 %v6557
    %7161 = vmatpush.msra.mxu0 %v6556
    %7162 = vmatpush.msra.mxu0 %v6555
    %7163 = vmatpush.msra.mxu0 %v6554
    %7164 = vmatpush.msra.mxu0 %v6553
    %7165 = vmatpush.msra.mxu0 %v6552
    %7166 = vmatpush.msra.mxu0 %v6551
    %7167 = vmatmul.f32.gmra.mxu0 %v6378
    %v7168 = vpop.f32.mrf.mxu0
    %v7169 = vadd.f32 %v6927, %v7168
    %7170 = vmatmul.f32.gmra.mxu0 %v6379
    %v7171 = vpop.f32.mrf.mxu0
    %v7172 = vadd.f32 %v6930, %v7171
    %7173 = vmatmul.f32.gmra.mxu0 %v6380
    %v7174 = vpop.f32.mrf.mxu0
    %v7175 = vadd.f32 %v6933, %v7174
    %7176 = vmatmul.f32.gmra.mxu0 %v6381
    %v7177 = vpop.f32.mrf.mxu0
    %v7178 = vadd.f32 %v6936, %v7177
    %7179 = vmatmul.f32.gmra.mxu0 %v6382
    %v7180 = vpop.f32.mrf.mxu0
    %v7181 = vadd.f32 %v6939, %v7180
    %7182 = vmatmul.f32.gmra.mxu0 %v6383
    %v7183 = vpop.f32.mrf.mxu0
    %v7184 = vadd.f32 %v6942, %v7183
    %7185 = vmatmul.f32.gmra.mxu0 %v6384
    %v7186 = vpop.f32.mrf.mxu0
    %v7187 = vadd.f32 %v6945, %v7186
    %7188 = vmatmul.f32.gmra.mxu0 %v6385
    %v7189 = vpop.f32.mrf.mxu0
    %v7190 = vadd.f32 %v6948, %v7189
    %7191 = vmatmul.f32.gmra.mxu0 %v6386
    %v7192 = vpop.f32.mrf.mxu0
    %v7193 = vadd.f32 %v6951, %v7192
    %7194 = vmatmul.f32.gmra.mxu0 %v6387
    %v7195 = vpop.f32.mrf.mxu0
    %v7196 = vadd.f32 %v6954, %v7195
    %7197 = vmatmul.f32.gmra.mxu0 %v6388
    %v7198 = vpop.f32.mrf.mxu0
    %v7199 = vadd.f32 %v6957, %v7198
    %7200 = vmatmul.f32.gmra.mxu0 %v6389
    %v7201 = vpop.f32.mrf.mxu0
    %v7202 = vadd.f32 %v6960, %v7201
    %7203 = vmatmul.f32.gmra.mxu0 %v6390
    %v7204 = vpop.f32.mrf.mxu0
    %v7205 = vadd.f32 %v6963, %v7204
    %7206 = vmatmul.f32.gmra.mxu0 %v6391
    %v7207 = vpop.f32.mrf.mxu0
    %v7208 = vadd.f32 %v6966, %v7207
    %7209 = vmatmul.f32.gmra.mxu0 %v6392
    %v7210 = vpop.f32.mrf.mxu0
    %v7211 = vadd.f32 %v6969, %v7210
    %7212 = vmatmul.f32.gmra.mxu0 %v6399
    %v7213 = vpop.f32.mrf.mxu0
    %v7214 = vadd.f32 %v6972, %v7213
    %7215 = vmatmul.f32.gmra.mxu0 %v6400
    %v7216 = vpop.f32.mrf.mxu0
    %v7217 = vadd.f32 %v6975, %v7216
    %7218 = vmatmul.f32.gmra.mxu0 %v6401
    %v7219 = vpop.f32.mrf.mxu0
    %v7220 = vadd.f32 %v6978, %v7219
    %7221 = vmatmul.f32.gmra.mxu0 %v6402
    %v7222 = vpop.f32.mrf.mxu0
    %v7223 = vadd.f32 %v6981, %v7222
    %7224 = vmatmul.f32.gmra.mxu0 %v6403
    %v7225 = vpop.f32.mrf.mxu0
    %v7226 = vadd.f32 %v6984, %v7225
    %7227 = vmatmul.f32.gmra.mxu0 %v6404
    %v7228 = vpop.f32.mrf.mxu0
    %v7229 = vadd.f32 %v6987, %v7228
    %7230 = vmatmul.f32.gmra.mxu0 %v6405
    %v7231 = vpop.f32.mrf.mxu0
    %v7232 = vadd.f32 %v6990, %v7231
    %7233 = vmatmul.f32.gmra.mxu0 %v6406
    %v7234 = vpop.f32.mrf.mxu0
    %v7235 = vadd.f32 %v6993, %v7234
    %7236 = vmatmul.f32.gmra.mxu0 %v6407
    %v7237 = vpop.f32.mrf.mxu0
    %v7238 = vadd.f32 %v6996, %v7237
    %7239 = vmatmul.f32.gmra.mxu0 %v6408
    %v7240 = vpop.f32.mrf.mxu0
    %v7241 = vadd.f32 %v6999, %v7240
    %7242 = vmatmul.f32.gmra.mxu0 %v6409
    %v7243 = vpop.f32.mrf.mxu0
    %v7244 = vadd.f32 %v7002, %v7243
    %7245 = vmatmul.f32.gmra.mxu0 %v6410
    %v7246 = vpop.f32.mrf.mxu0
    %v7247 = vadd.f32 %v7005, %v7246
    %7248 = vmatmul.f32.gmra.mxu0 %v6411
    %v7249 = vpop.f32.mrf.mxu0
    %v7250 = vadd.f32 %v7008, %v7249
    %7251 = vmatmul.f32.gmra.mxu0 %v6412
    %v7252 = vpop.f32.mrf.mxu0
    %v7253 = vadd.f32 %v7011, %v7252
    %7254 = vmatmul.f32.gmra.mxu0 %v6413
    %v7255 = vpop.f32.mrf.mxu0
    %v7256 = vadd.f32 %v7014, %v7255
    %7257 = vmatmul.f32.gmra.mxu0 %v6420
    %v7258 = vpop.f32.mrf.mxu0
    %v7259 = vadd.f32 %v7017, %v7258
    %7260 = vmatmul.f32.gmra.mxu0 %v6421
    %v7261 = vpop.f32.mrf.mxu0
    %v7262 = vadd.f32 %v7020, %v7261
    %7263 = vmatmul.f32.gmra.mxu0 %v6422
    %v7264 = vpop.f32.mrf.mxu0
    %v7265 = vadd.f32 %v7023, %v7264
    %7266 = vmatmul.f32.gmra.mxu0 %v6423
    %v7267 = vpop.f32.mrf.mxu0
    %v7268 = vadd.f32 %v7026, %v7267
    %7269 = vmatmul.f32.gmra.mxu0 %v6424
    %v7270 = vpop.f32.mrf.mxu0
    %v7271 = vadd.f32 %v7029, %v7270
    %7272 = vmatmul.f32.gmra.mxu0 %v6425
    %v7273 = vpop.f32.mrf.mxu0
    %v7274 = vadd.f32 %v7032, %v7273
    %7275 = vmatmul.f32.gmra.mxu0 %v6426
    %v7276 = vpop.f32.mrf.mxu0
    %v7277 = vadd.f32 %v7035, %v7276
    %7278 = vmatmul.f32.gmra.mxu0 %v6427
    %v7279 = vpop.f32.mrf.mxu0
    %v7280 = vadd.f32 %v7038, %v7279
    %7281 = vmatmul.f32.gmra.mxu0 %v6428
    %v7282 = vpop.f32.mrf.mxu0
    %v7283 = vadd.f32 %v7041, %v7282
    %7284 = vmatmul.f32.gmra.mxu0 %v6429
    %v7285 = vpop.f32.mrf.mxu0
    %v7286 = vadd.f32 %v7044, %v7285
    %7287 = vmatmul.f32.gmra.mxu0 %v6430
    %v7288 = vpop.f32.mrf.mxu0
    %v7289 = vadd.f32 %v7047, %v7288
    %7290 = vmatmul.f32.gmra.mxu0 %v6431
    %v7291 = vpop.f32.mrf.mxu0
    %v7292 = vadd.f32 %v7050, %v7291
    %7293 = vmatmul.f32.gmra.mxu0 %v6432
    %v7294 = vpop.f32.mrf.mxu0
    %v7295 = vadd.f32 %v7053, %v7294
    %7296 = vmatmul.f32.gmra.mxu0 %v6433
    %v7297 = vpop.f32.mrf.mxu0
    %v7298 = vadd.f32 %v7056, %v7297
    %7299 = vmatmul.f32.gmra.mxu0 %v6434
    %v7300 = vpop.f32.mrf.mxu0
    %v7301 = vadd.f32 %v7059, %v7300
    %7302 = vmatmul.f32.gmra.mxu0 %v6441
    %v7303 = vpop.f32.mrf.mxu0
    %v7304 = vadd.f32 %v7062, %v7303
    %7305 = vmatmul.f32.gmra.mxu0 %v6442
    %v7306 = vpop.f32.mrf.mxu0
    %v7307 = vadd.f32 %v7065, %v7306
    %7308 = vmatmul.f32.gmra.mxu0 %v6443
    %v7309 = vpop.f32.mrf.mxu0
    %v7310 = vadd.f32 %v7068, %v7309
    %7311 = vmatmul.f32.gmra.mxu0 %v6444
    %v7312 = vpop.f32.mrf.mxu0
    %v7313 = vadd.f32 %v7071, %v7312
    %7314 = vmatmul.f32.gmra.mxu0 %v6445
    %v7315 = vpop.f32.mrf.mxu0
    %v7316 = vadd.f32 %v7074, %v7315
    %7317 = vmatmul.f32.gmra.mxu0 %v6446
    %v7318 = vpop.f32.mrf.mxu0
    %v7319 = vadd.f32 %v7077, %v7318
    %7320 = vmatmul.f32.gmra.mxu0 %v6447
    %v7321 = vpop.f32.mrf.mxu0
    %v7322 = vadd.f32 %v7080, %v7321
    %7323 = vmatmul.f32.gmra.mxu0 %v6448
    %v7324 = vpop.f32.mrf.mxu0
    %v7325 = vadd.f32 %v7083, %v7324
    %7326 = vmatmul.f32.gmra.mxu0 %v6449
    %v7327 = vpop.f32.mrf.mxu0
    %v7328 = vadd.f32 %v7086, %v7327
    %7329 = vmatmul.f32.gmra.mxu0 %v6450
    %v7330 = vpop.f32.mrf.mxu0
    %v7331 = vadd.f32 %v7089, %v7330
    %7332 = vmatmul.f32.gmra.mxu0 %v6451
    %v7333 = vpop.f32.mrf.mxu0
    %v7334 = vadd.f32 %v7092, %v7333
    %7335 = vmatmul.f32.gmra.mxu0 %v6452
    %v7336 = vpop.f32.mrf.mxu0
    %v7337 = vadd.f32 %v7095, %v7336
    %7338 = vmatmul.f32.gmra.mxu0 %v6453
    %v7339 = vpop.f32.mrf.mxu0
    %v7340 = vadd.f32 %v7098, %v7339
    %7341 = vmatmul.f32.gmra.mxu0 %v6454
    %v7342 = vpop.f32.mrf.mxu0
    %v7343 = vadd.f32 %v7101, %v7342
    %7344 = vmatmul.f32.gmra.mxu0 %v6455
    %v7345 = vpop.f32.mrf.mxu0
    %v7346 = vadd.f32 %v7104, %v7345
    %7347 = vmatmul.f32.gmra.mxu0 %v6462
    %v7348 = vpop.f32.mrf.mxu0
    %v7349 = vadd.f32 %v7107, %v7348
    %7350 = vmatmul.f32.gmra.mxu0 %v6463
    %v7351 = vpop.f32.mrf.mxu0
    %v7352 = vadd.f32 %v7110, %v7351
    %7353 = vmatmul.f32.gmra.mxu0 %v6464
    %v7354 = vpop.f32.mrf.mxu0
    %v7355 = vadd.f32 %v7113, %v7354
    %7356 = vmatmul.f32.gmra.mxu0 %v6465
    %v7357 = vpop.f32.mrf.mxu0
    %v7358 = vadd.f32 %v7116, %v7357
    %7359 = vmatmul.f32.gmra.mxu0 %v6466
    %v7360 = vpop.f32.mrf.mxu0
    %v7361 = vadd.f32 %v7119, %v7360
    %7362 = vmatmul.f32.gmra.mxu0 %v6467
    %v7363 = vpop.f32.mrf.mxu0
    %v7364 = vadd.f32 %v7122, %v7363
    %7365 = vmatmul.f32.gmra.mxu0 %v6468
    %v7366 = vpop.f32.mrf.mxu0
    %v7367 = vadd.f32 %v7125, %v7366
    %7368 = vmatmul.f32.gmra.mxu0 %v6469
    %v7369 = vpop.f32.mrf.mxu0
    %v7370 = vadd.f32 %v7128, %v7369
    %7371 = vmatmul.f32.gmra.mxu0 %v6470
    %v7372 = vpop.f32.mrf.mxu0
    %v7373 = vadd.f32 %v7131, %v7372
    %7374 = vmatmul.f32.gmra.mxu0 %v6471
    %v7375 = vpop.f32.mrf.mxu0
    %v7376 = vadd.f32 %v7134, %v7375
    %7377 = vmatmul.f32.gmra.mxu0 %v6472
    %v7378 = vpop.f32.mrf.mxu0
    %v7379 = vadd.f32 %v7137, %v7378
    %7380 = vmatmul.f32.gmra.mxu0 %v6473
    %v7381 = vpop.f32.mrf.mxu0
    %v7382 = vadd.f32 %v7140, %v7381
    %7383 = vmatmul.f32.gmra.mxu0 %v6474
    %v7384 = vpop.f32.mrf.mxu0
    %v7385 = vadd.f32 %v7143, %v7384
    %7386 = vmatmul.f32.gmra.mxu0 %v6475
    %v7387 = vpop.f32.mrf.mxu0
    %v7388 = vadd.f32 %v7146, %v7387
    %7389 = vmatmul.f32.gmra.mxu0 %v6476
    %v7390 = vpop.f32.mrf.mxu0
    %v7391 = vadd.f32 %v7149, %v7390
    %7392 = vdwg.mxu0
    %7393 = vmatpush.msra.mxu0 %v6582
    %7394 = vmatpush.msra.mxu0 %v6581
    %7395 = vmatpush.msra.mxu0 %v6580
    %7396 = vmatpush.msra.mxu0 %v6579
    %7397 = vmatpush.msra.mxu0 %v6578
    %7398 = vmatpush.msra.mxu0 %v6577
    %7399 = vmatpush.msra.mxu0 %v6576
    %7400 = vmatpush.msra.mxu0 %v6575
    %7401 = vmatpush.msra.mxu0 %v6574
    %7402 = vmatpush.msra.mxu0 %v6573
    %7403 = vmatpush.msra.mxu0 %v6572
    %7404 = vmatpush.msra.mxu0 %v6571
    %7405 = vmatpush.msra.mxu0 %v6570
    %7406 = vmatpush.msra.mxu0 %v6569
    %7407 = vmatpush.msra.mxu0 %v6568
    %7408 = vmatpush.msra.mxu0 %v6567
    %7409 = vmatmul.f32.gmra.mxu0 %v6393
    %v7410 = vpop.f32.mrf.mxu0
    %v7411 = vadd.f32 %v7169, %v7410
    %7412 = vmatmul.f32.gmra.mxu0 %v6394
    %v7413 = vpop.f32.mrf.mxu0
    %v7414 = vadd.f32 %v7172, %v7413
    %7415 = vmatmul.f32.gmra.mxu0 %v6395
    %v7416 = vpop.f32.mrf.mxu0
    %v7417 = vadd.f32 %v7175, %v7416
    %7418 = vmatmul.f32.gmra.mxu0 %v6396
    %v7419 = vpop.f32.mrf.mxu0
    %v7420 = vadd.f32 %v7178, %v7419
    %7421 = vmatmul.f32.gmra.mxu0 %v6397
    %v7422 = vpop.f32.mrf.mxu0
    %v7423 = vadd.f32 %v7181, %v7422
    %7424 = vmatmul.f32.gmra.mxu0 %v6398
    %v7425 = vpop.f32.mrf.mxu0
    %v7426 = vadd.f32 %v7184, %v7425
    %7427 = vmatmul.f32.gmra.mxu0 %v6399
    %v7428 = vpop.f32.mrf.mxu0
    %v7429 = vadd.f32 %v7187, %v7428
    %7430 = vmatmul.f32.gmra.mxu0 %v6400
    %v7431 = vpop.f32.mrf.mxu0
    %v7432 = vadd.f32 %v7190, %v7431
    %7433 = vmatmul.f32.gmra.mxu0 %v6401
    %v7434 = vpop.f32.mrf.mxu0
    %v7435 = vadd.f32 %v7193, %v7434
    %7436 = vmatmul.f32.gmra.mxu0 %v6402
    %v7437 = vpop.f32.mrf.mxu0
    %v7438 = vadd.f32 %v7196, %v7437
    %7439 = vmatmul.f32.gmra.mxu0 %v6403
    %v7440 = vpop.f32.mrf.mxu0
    %v7441 = vadd.f32 %v7199, %v7440
    %7442 = vmatmul.f32.gmra.mxu0 %v6404
    %v7443 = vpop.f32.mrf.mxu0
    %v7444 = vadd.f32 %v7202, %v7443
    %7445 = vmatmul.f32.gmra.mxu0 %v6405
    %v7446 = vpop.f32.mrf.mxu0
    %v7447 = vadd.f32 %v7205, %v7446
    %7448 = vmatmul.f32.gmra.mxu0 %v6406
    %v7449 = vpop.f32.mrf.mxu0
    %v7450 = vadd.f32 %v7208, %v7449
    %7451 = vmatmul.f32.gmra.mxu0 %v6407
    %v7452 = vpop.f32.mrf.mxu0
    %v7453 = vadd.f32 %v7211, %v7452
    %7454 = vmatmul.f32.gmra.mxu0 %v6414
    %v7455 = vpop.f32.mrf.mxu0
    %v7456 = vadd.f32 %v7214, %v7455
    %7457 = vmatmul.f32.gmra.mxu0 %v6415
    %v7458 = vpop.f32.mrf.mxu0
    %v7459 = vadd.f32 %v7217, %v7458
    %7460 = vmatmul.f32.gmra.mxu0 %v6416
    %v7461 = vpop.f32.mrf.mxu0
    %v7462 = vadd.f32 %v7220, %v7461
    %7463 = vmatmul.f32.gmra.mxu0 %v6417
    %v7464 = vpop.f32.mrf.mxu0
    %v7465 = vadd.f32 %v7223, %v7464
    %7466 = vmatmul.f32.gmra.mxu0 %v6418
    %v7467 = vpop.f32.mrf.mxu0
    %v7468 = vadd.f32 %v7226, %v7467
    %7469 = vmatmul.f32.gmra.mxu0 %v6419
    %v7470 = vpop.f32.mrf.mxu0
    %v7471 = vadd.f32 %v7229, %v7470
    %7472 = vmatmul.f32.gmra.mxu0 %v6420
    %v7473 = vpop.f32.mrf.mxu0
    %v7474 = vadd.f32 %v7232, %v7473
    %7475 = vmatmul.f32.gmra.mxu0 %v6421
    %v7476 = vpop.f32.mrf.mxu0
    %v7477 = vadd.f32 %v7235, %v7476
    %7478 = vmatmul.f32.gmra.mxu0 %v6422
    %v7479 = vpop.f32.mrf.mxu0
    %v7480 = vadd.f32 %v7238, %v7479
    %7481 = vmatmul.f32.gmra.mxu0 %v6423
    %v7482 = vpop.f32.mrf.mxu0
    %v7483 = vadd.f32 %v7241, %v7482
    %7484 = vmatmul.f32.gmra.mxu0 %v6424
    %v7485 = vpop.f32.mrf.mxu0
    %v7486 = vadd.f32 %v7244, %v7485
    %7487 = vmatmul.f32.gmra.mxu0 %v6425
    %v7488 = vpop.f32.mrf.mxu0
    %v7489 = vadd.f32 %v7247, %v7488
    %7490 = vmatmul.f32.gmra.mxu0 %v6426
    %v7491 = vpop.f32.mrf.mxu0
    %v7492 = vadd.f32 %v7250, %v7491
    %7493 = vmatmul.f32.gmra.mxu0 %v6427
    %v7494 = vpop.f32.mrf.mxu0
    %v7495 = vadd.f32 %v7253, %v7494
    %7496 = vmatmul.f32.gmra.mxu0 %v6428
    %v7497 = vpop.f32.mrf.mxu0
    %v7498 = vadd.f32 %v7256, %v7497
    %7499 = vmatmul.f32.gmra.mxu0 %v6435
    %v7500 = vpop.f32.mrf.mxu0
    %v7501 = vadd.f32 %v7259, %v7500
    %7502 = vmatmul.f32.gmra.mxu0 %v6436
    %v7503 = vpop.f32.mrf.mxu0
    %v7504 = vadd.f32 %v7262, %v7503
    %7505 = vmatmul.f32.gmra.mxu0 %v6437
    %v7506 = vpop.f32.mrf.mxu0
    %v7507 = vadd.f32 %v7265, %v7506
    %7508 = vmatmul.f32.gmra.mxu0 %v6438
    %v7509 = vpop.f32.mrf.mxu0
    %v7510 = vadd.f32 %v7268, %v7509
    %7511 = vmatmul.f32.gmra.mxu0 %v6439
    %v7512 = vpop.f32.mrf.mxu0
    %v7513 = vadd.f32 %v7271, %v7512
    %7514 = vmatmul.f32.gmra.mxu0 %v6440
    %v7515 = vpop.f32.mrf.mxu0
    %v7516 = vadd.f32 %v7274, %v7515
    %7517 = vmatmul.f32.gmra.mxu0 %v6441
    %v7518 = vpop.f32.mrf.mxu0
    %v7519 = vadd.f32 %v7277, %v7518
    %7520 = vmatmul.f32.gmra.mxu0 %v6442
    %v7521 = vpop.f32.mrf.mxu0
    %v7522 = vadd.f32 %v7280, %v7521
    %7523 = vmatmul.f32.gmra.mxu0 %v6443
    %v7524 = vpop.f32.mrf.mxu0
    %v7525 = vadd.f32 %v7283, %v7524
    %7526 = vmatmul.f32.gmra.mxu0 %v6444
    %v7527 = vpop.f32.mrf.mxu0
    %v7528 = vadd.f32 %v7286, %v7527
    %7529 = vmatmul.f32.gmra.mxu0 %v6445
    %v7530 = vpop.f32.mrf.mxu0
    %v7531 = vadd.f32 %v7289, %v7530
    %7532 = vmatmul.f32.gmra.mxu0 %v6446
    %v7533 = vpop.f32.mrf.mxu0
    %v7534 = vadd.f32 %v7292, %v7533
    %7535 = vmatmul.f32.gmra.mxu0 %v6447
    %v7536 = vpop.f32.mrf.mxu0
    %v7537 = vadd.f32 %v7295, %v7536
    %7538 = vmatmul.f32.gmra.mxu0 %v6448
    %v7539 = vpop.f32.mrf.mxu0
    %v7540 = vadd.f32 %v7298, %v7539
    %7541 = vmatmul.f32.gmra.mxu0 %v6449
    %v7542 = vpop.f32.mrf.mxu0
    %v7543 = vadd.f32 %v7301, %v7542
    %7544 = vmatmul.f32.gmra.mxu0 %v6456
    %v7545 = vpop.f32.mrf.mxu0
    %v7546 = vadd.f32 %v7304, %v7545
    %7547 = vmatmul.f32.gmra.mxu0 %v6457
    %v7548 = vpop.f32.mrf.mxu0
    %v7549 = vadd.f32 %v7307, %v7548
    %7550 = vmatmul.f32.gmra.mxu0 %v6458
    %v7551 = vpop.f32.mrf.mxu0
    %v7552 = vadd.f32 %v7310, %v7551
    %7553 = vmatmul.f32.gmra.mxu0 %v6459
    %v7554 = vpop.f32.mrf.mxu0
    %v7555 = vadd.f32 %v7313, %v7554
    %7556 = vmatmul.f32.gmra.mxu0 %v6460
    %v7557 = vpop.f32.mrf.mxu0
    %v7558 = vadd.f32 %v7316, %v7557
    %7559 = vmatmul.f32.gmra.mxu0 %v6461
    %v7560 = vpop.f32.mrf.mxu0
    %v7561 = vadd.f32 %v7319, %v7560
    %7562 = vmatmul.f32.gmra.mxu0 %v6462
    %v7563 = vpop.f32.mrf.mxu0
    %v7564 = vadd.f32 %v7322, %v7563
    %7565 = vmatmul.f32.gmra.mxu0 %v6463
    %v7566 = vpop.f32.mrf.mxu0
    %v7567 = vadd.f32 %v7325, %v7566
    %7568 = vmatmul.f32.gmra.mxu0 %v6464
    %v7569 = vpop.f32.mrf.mxu0
    %v7570 = vadd.f32 %v7328, %v7569
    %7571 = vmatmul.f32.gmra.mxu0 %v6465
    %v7572 = vpop.f32.mrf.mxu0
    %v7573 = vadd.f32 %v7331, %v7572
    %7574 = vmatmul.f32.gmra.mxu0 %v6466
    %v7575 = vpop.f32.mrf.mxu0
    %v7576 = vadd.f32 %v7334, %v7575
    %7577 = vmatmul.f32.gmra.mxu0 %v6467
    %v7578 = vpop.f32.mrf.mxu0
    %v7579 = vadd.f32 %v7337, %v7578
    %7580 = vmatmul.f32.gmra.mxu0 %v6468
    %v7581 = vpop.f32.mrf.mxu0
    %v7582 = vadd.f32 %v7340, %v7581
    %7583 = vmatmul.f32.gmra.mxu0 %v6469
    %v7584 = vpop.f32.mrf.mxu0
    %v7585 = vadd.f32 %v7343, %v7584
    %7586 = vmatmul.f32.gmra.mxu0 %v6470
    %v7587 = vpop.f32.mrf.mxu0
    %v7588 = vadd.f32 %v7346, %v7587
    %7589 = vmatmul.f32.gmra.mxu0 %v6477
    %v7590 = vpop.f32.mrf.mxu0
    %v7591 = vadd.f32 %v7349, %v7590
    %7592 = vmatmul.f32.gmra.mxu0 %v6478
    %v7593 = vpop.f32.mrf.mxu0
    %v7594 = vadd.f32 %v7352, %v7593
    %7595 = vmatmul.f32.gmra.mxu0 %v6479
    %v7596 = vpop.f32.mrf.mxu0
    %v7597 = vadd.f32 %v7355, %v7596
    %7598 = vmatmul.f32.gmra.mxu0 %v6480
    %v7599 = vpop.f32.mrf.mxu0
    %v7600 = vadd.f32 %v7358, %v7599
    %7601 = vmatmul.f32.gmra.mxu0 %v6481
    %v7602 = vpop.f32.mrf.mxu0
    %v7603 = vadd.f32 %v7361, %v7602
    %7604 = vmatmul.f32.gmra.mxu0 %v6482
    %v7605 = vpop.f32.mrf.mxu0
    %v7606 = vadd.f32 %v7364, %v7605
    %7607 = vmatmul.f32.gmra.mxu0 %v6483
    %v7608 = vpop.f32.mrf.mxu0
    %v7609 = vadd.f32 %v7367, %v7608
    %7610 = vmatmul.f32.gmra.mxu0 %v6484
    %v7611 = vpop.f32.mrf.mxu0
    %v7612 = vadd.f32 %v7370, %v7611
    %7613 = vmatmul.f32.gmra.mxu0 %v6485
    %v7614 = vpop.f32.mrf.mxu0
    %v7615 = vadd.f32 %v7373, %v7614
    %7616 = vmatmul.f32.gmra.mxu0 %v6486
    %v7617 = vpop.f32.mrf.mxu0
    %v7618 = vadd.f32 %v7376, %v7617
    %7619 = vmatmul.f32.gmra.mxu0 %v6487
    %v7620 = vpop.f32.mrf.mxu0
    %v7621 = vadd.f32 %v7379, %v7620
    %7622 = vmatmul.f32.gmra.mxu0 %v6488
    %v7623 = vpop.f32.mrf.mxu0
    %v7624 = vadd.f32 %v7382, %v7623
    %7625 = vmatmul.f32.gmra.mxu0 %v6489
    %v7626 = vpop.f32.mrf.mxu0
    %v7627 = vadd.f32 %v7385, %v7626
    %7628 = vmatmul.f32.gmra.mxu0 %v6490
    %v7629 = vpop.f32.mrf.mxu0
    %v7630 = vadd.f32 %v7388, %v7629
    %7631 = vmatmul.f32.gmra.mxu0 %v6491
    %v7632 = vpop.f32.mrf.mxu0
    %v7633 = vadd.f32 %v7391, %v7632
    %7634 = vdwg.mxu0
    %7635 = vmatpush.msra.mxu0 %v6598
    %7636 = vmatpush.msra.mxu0 %v6597
    %7637 = vmatpush.msra.mxu0 %v6596
    %7638 = vmatpush.msra.mxu0 %v6595
    %7639 = vmatpush.msra.mxu0 %v6594
    %7640 = vmatpush.msra.mxu0 %v6593
    %7641 = vmatpush.msra.mxu0 %v6592
    %7642 = vmatpush.msra.mxu0 %v6591
    %7643 = vmatpush.msra.mxu0 %v6590
    %7644 = vmatpush.msra.mxu0 %v6589
    %7645 = vmatpush.msra.mxu0 %v6588
    %7646 = vmatpush.msra.mxu0 %v6587
    %7647 = vmatpush.msra.mxu0 %v6586
    %7648 = vmatpush.msra.mxu0 %v6585
    %7649 = vmatpush.msra.mxu0 %v6584
    %7650 = vmatpush.msra.mxu0 %v6583
    %7651 = vmatmul.f32.gmra.mxu0 %v6396
    %v7652 = vpop.f32.mrf.mxu0
    %v7653 = vadd.f32 %v7411, %v7652
    %7654 = vmatmul.f32.gmra.mxu0 %v6397
    %v7655 = vpop.f32.mrf.mxu0
    %v7656 = vadd.f32 %v7414, %v7655
    %7657 = vmatmul.f32.gmra.mxu0 %v6398
    %v7658 = vpop.f32.mrf.mxu0
    %v7659 = vadd.f32 %v7417, %v7658
    %7660 = vmatmul.f32.gmra.mxu0 %v6399
    %v7661 = vpop.f32.mrf.mxu0
    %v7662 = vadd.f32 %v7420, %v7661
    %7663 = vmatmul.f32.gmra.mxu0 %v6400
    %v7664 = vpop.f32.mrf.mxu0
    %v7665 = vadd.f32 %v7423, %v7664
    %7666 = vmatmul.f32.gmra.mxu0 %v6401
    %v7667 = vpop.f32.mrf.mxu0
    %v7668 = vadd.f32 %v7426, %v7667
    %7669 = vmatmul.f32.gmra.mxu0 %v6402
    %v7670 = vpop.f32.mrf.mxu0
    %v7671 = vadd.f32 %v7429, %v7670
    %7672 = vmatmul.f32.gmra.mxu0 %v6403
    %v7673 = vpop.f32.mrf.mxu0
    %v7674 = vadd.f32 %v7432, %v7673
    %7675 = vmatmul.f32.gmra.mxu0 %v6404
    %v7676 = vpop.f32.mrf.mxu0
    %v7677 = vadd.f32 %v7435, %v7676
    %7678 = vmatmul.f32.gmra.mxu0 %v6405
    %v7679 = vpop.f32.mrf.mxu0
    %v7680 = vadd.f32 %v7438, %v7679
    %7681 = vmatmul.f32.gmra.mxu0 %v6406
    %v7682 = vpop.f32.mrf.mxu0
    %v7683 = vadd.f32 %v7441, %v7682
    %7684 = vmatmul.f32.gmra.mxu0 %v6407
    %v7685 = vpop.f32.mrf.mxu0
    %v7686 = vadd.f32 %v7444, %v7685
    %7687 = vmatmul.f32.gmra.mxu0 %v6408
    %v7688 = vpop.f32.mrf.mxu0
    %v7689 = vadd.f32 %v7447, %v7688
    %7690 = vmatmul.f32.gmra.mxu0 %v6409
    %v7691 = vpop.f32.mrf.mxu0
    %v7692 = vadd.f32 %v7450, %v7691
    %7693 = vmatmul.f32.gmra.mxu0 %v6410
    %v7694 = vpop.f32.mrf.mxu0
    %v7695 = vadd.f32 %v7453, %v7694
    %7696 = vmatmul.f32.gmra.mxu0 %v6417
    %v7697 = vpop.f32.mrf.mxu0
    %v7698 = vadd.f32 %v7456, %v7697
    %7699 = vmatmul.f32.gmra.mxu0 %v6418
    %v7700 = vpop.f32.mrf.mxu0
    %v7701 = vadd.f32 %v7459, %v7700
    %7702 = vmatmul.f32.gmra.mxu0 %v6419
    %v7703 = vpop.f32.mrf.mxu0
    %v7704 = vadd.f32 %v7462, %v7703
    %7705 = vmatmul.f32.gmra.mxu0 %v6420
    %v7706 = vpop.f32.mrf.mxu0
    %v7707 = vadd.f32 %v7465, %v7706
    %7708 = vmatmul.f32.gmra.mxu0 %v6421
    %v7709 = vpop.f32.mrf.mxu0
    %v7710 = vadd.f32 %v7468, %v7709
    %7711 = vmatmul.f32.gmra.mxu0 %v6422
    %v7712 = vpop.f32.mrf.mxu0
    %v7713 = vadd.f32 %v7471, %v7712
    %7714 = vmatmul.f32.gmra.mxu0 %v6423
    %v7715 = vpop.f32.mrf.mxu0
    %v7716 = vadd.f32 %v7474, %v7715
    %7717 = vmatmul.f32.gmra.mxu0 %v6424
    %v7718 = vpop.f32.mrf.mxu0
    %v7719 = vadd.f32 %v7477, %v7718
    %7720 = vmatmul.f32.gmra.mxu0 %v6425
    %v7721 = vpop.f32.mrf.mxu0
    %v7722 = vadd.f32 %v7480, %v7721
    %7723 = vmatmul.f32.gmra.mxu0 %v6426
    %v7724 = vpop.f32.mrf.mxu0
    %v7725 = vadd.f32 %v7483, %v7724
    %7726 = vmatmul.f32.gmra.mxu0 %v6427
    %v7727 = vpop.f32.mrf.mxu0
    %v7728 = vadd.f32 %v7486, %v7727
    %7729 = vmatmul.f32.gmra.mxu0 %v6428
    %v7730 = vpop.f32.mrf.mxu0
    %v7731 = vadd.f32 %v7489, %v7730
    %7732 = vmatmul.f32.gmra.mxu0 %v6429
    %v7733 = vpop.f32.mrf.mxu0
    %v7734 = vadd.f32 %v7492, %v7733
    %7735 = vmatmul.f32.gmra.mxu0 %v6430
    %v7736 = vpop.f32.mrf.mxu0
    %v7737 = vadd.f32 %v7495, %v7736
    %7738 = vmatmul.f32.gmra.mxu0 %v6431
    %v7739 = vpop.f32.mrf.mxu0
    %v7740 = vadd.f32 %v7498, %v7739
    %7741 = vmatmul.f32.gmra.mxu0 %v6438
    %v7742 = vpop.f32.mrf.mxu0
    %v7743 = vadd.f32 %v7501, %v7742
    %7744 = vmatmul.f32.gmra.mxu0 %v6439
    %v7745 = vpop.f32.mrf.mxu0
    %v7746 = vadd.f32 %v7504, %v7745
    %7747 = vmatmul.f32.gmra.mxu0 %v6440
    %v7748 = vpop.f32.mrf.mxu0
    %v7749 = vadd.f32 %v7507, %v7748
    %7750 = vmatmul.f32.gmra.mxu0 %v6441
    %v7751 = vpop.f32.mrf.mxu0
    %v7752 = vadd.f32 %v7510, %v7751
    %7753 = vmatmul.f32.gmra.mxu0 %v6442
    %v7754 = vpop.f32.mrf.mxu0
    %v7755 = vadd.f32 %v7513, %v7754
    %7756 = vmatmul.f32.gmra.mxu0 %v6443
    %v7757 = vpop.f32.mrf.mxu0
    %v7758 = vadd.f32 %v7516, %v7757
    %7759 = vmatmul.f32.gmra.mxu0 %v6444
    %v7760 = vpop.f32.mrf.mxu0
    %v7761 = vadd.f32 %v7519, %v7760
    %7762 = vmatmul.f32.gmra.mxu0 %v6445
    %v7763 = vpop.f32.mrf.mxu0
    %v7764 = vadd.f32 %v7522, %v7763
    %7765 = vmatmul.f32.gmra.mxu0 %v6446
    %v7766 = vpop.f32.mrf.mxu0
    %v7767 = vadd.f32 %v7525, %v7766
    %7768 = vmatmul.f32.gmra.mxu0 %v6447
    %v7769 = vpop.f32.mrf.mxu0
    %v7770 = vadd.f32 %v7528, %v7769
    %7771 = vmatmul.f32.gmra.mxu0 %v6448
    %v7772 = vpop.f32.mrf.mxu0
    %v7773 = vadd.f32 %v7531, %v7772
    %7774 = vmatmul.f32.gmra.mxu0 %v6449
    %v7775 = vpop.f32.mrf.mxu0
    %v7776 = vadd.f32 %v7534, %v7775
    %7777 = vmatmul.f32.gmra.mxu0 %v6450
    %v7778 = vpop.f32.mrf.mxu0
    %v7779 = vadd.f32 %v7537, %v7778
    %7780 = vmatmul.f32.gmra.mxu0 %v6451
    %v7781 = vpop.f32.mrf.mxu0
    %v7782 = vadd.f32 %v7540, %v7781
    %7783 = vmatmul.f32.gmra.mxu0 %v6452
    %v7784 = vpop.f32.mrf.mxu0
    %v7785 = vadd.f32 %v7543, %v7784
    %7786 = vmatmul.f32.gmra.mxu0 %v6459
    %v7787 = vpop.f32.mrf.mxu0
    %v7788 = vadd.f32 %v7546, %v7787
    %7789 = vmatmul.f32.gmra.mxu0 %v6460
    %v7790 = vpop.f32.mrf.mxu0
    %v7791 = vadd.f32 %v7549, %v7790
    %7792 = vmatmul.f32.gmra.mxu0 %v6461
    %v7793 = vpop.f32.mrf.mxu0
    %v7794 = vadd.f32 %v7552, %v7793
    %7795 = vmatmul.f32.gmra.mxu0 %v6462
    %v7796 = vpop.f32.mrf.mxu0
    %v7797 = vadd.f32 %v7555, %v7796
    %7798 = vmatmul.f32.gmra.mxu0 %v6463
    %v7799 = vpop.f32.mrf.mxu0
    %v7800 = vadd.f32 %v7558, %v7799
    %7801 = vmatmul.f32.gmra.mxu0 %v6464
    %v7802 = vpop.f32.mrf.mxu0
    %v7803 = vadd.f32 %v7561, %v7802
    %7804 = vmatmul.f32.gmra.mxu0 %v6465
    %v7805 = vpop.f32.mrf.mxu0
    %v7806 = vadd.f32 %v7564, %v7805
    %7807 = vmatmul.f32.gmra.mxu0 %v6466
    %v7808 = vpop.f32.mrf.mxu0
    %v7809 = vadd.f32 %v7567, %v7808
    %7810 = vmatmul.f32.gmra.mxu0 %v6467
    %v7811 = vpop.f32.mrf.mxu0
    %v7812 = vadd.f32 %v7570, %v7811
    %7813 = vmatmul.f32.gmra.mxu0 %v6468
    %v7814 = vpop.f32.mrf.mxu0
    %v7815 = vadd.f32 %v7573, %v7814
    %7816 = vmatmul.f32.gmra.mxu0 %v6469
    %v7817 = vpop.f32.mrf.mxu0
    %v7818 = vadd.f32 %v7576, %v7817
    %7819 = vmatmul.f32.gmra.mxu0 %v6470
    %v7820 = vpop.f32.mrf.mxu0
    %v7821 = vadd.f32 %v7579, %v7820
    %7822 = vmatmul.f32.gmra.mxu0 %v6471
    %v7823 = vpop.f32.mrf.mxu0
    %v7824 = vadd.f32 %v7582, %v7823
    %7825 = vmatmul.f32.gmra.mxu0 %v6472
    %v7826 = vpop.f32.mrf.mxu0
    %v7827 = vadd.f32 %v7585, %v7826
    %7828 = vmatmul.f32.gmra.mxu0 %v6473
    %v7829 = vpop.f32.mrf.mxu0
    %v7830 = vadd.f32 %v7588, %v7829
    %7831 = vmatmul.f32.gmra.mxu0 %v6480
    %v7832 = vpop.f32.mrf.mxu0
    %v7833 = vadd.f32 %v7591, %v7832
    %7834 = vmatmul.f32.gmra.mxu0 %v6481
    %v7835 = vpop.f32.mrf.mxu0
    %v7836 = vadd.f32 %v7594, %v7835
    %7837 = vmatmul.f32.gmra.mxu0 %v6482
    %v7838 = vpop.f32.mrf.mxu0
    %v7839 = vadd.f32 %v7597, %v7838
    %7840 = vmatmul.f32.gmra.mxu0 %v6483
    %v7841 = vpop.f32.mrf.mxu0
    %v7842 = vadd.f32 %v7600, %v7841
    %7843 = vmatmul.f32.gmra.mxu0 %v6484
    %v7844 = vpop.f32.mrf.mxu0
    %v7845 = vadd.f32 %v7603, %v7844
    %7846 = vmatmul.f32.gmra.mxu0 %v6485
    %v7847 = vpop.f32.mrf.mxu0
    %v7848 = vadd.f32 %v7606, %v7847
    %7849 = vmatmul.f32.gmra.mxu0 %v6486
    %v7850 = vpop.f32.mrf.mxu0
    %v7851 = vadd.f32 %v7609, %v7850
    %7852 = vmatmul.f32.gmra.mxu0 %v6487
    %v7853 = vpop.f32.mrf.mxu0
    %v7854 = vadd.f32 %v7612, %v7853
    %7855 = vmatmul.f32.gmra.mxu0 %v6488
    %v7856 = vpop.f32.mrf.mxu0
    %v7857 = vadd.f32 %v7615, %v7856
    %7858 = vmatmul.f32.gmra.mxu0 %v6489
    %v7859 = vpop.f32.mrf.mxu0
    %v7860 = vadd.f32 %v7618, %v7859
    %7861 = vmatmul.f32.gmra.mxu0 %v6490
    %v7862 = vpop.f32.mrf.mxu0
    %v7863 = vadd.f32 %v7621, %v7862
    %7864 = vmatmul.f32.gmra.mxu0 %v6491
    %v7865 = vpop.f32.mrf.mxu0
    %v7866 = vadd.f32 %v7624, %v7865
    %7867 = vmatmul.f32.gmra.mxu0 %v6492
    %v7868 = vpop.f32.mrf.mxu0
    %v7869 = vadd.f32 %v7627, %v7868
    %7870 = vmatmul.f32.gmra.mxu0 %v6493
    %v7871 = vpop.f32.mrf.mxu0
    %v7872 = vadd.f32 %v7630, %v7871
    %7873 = vmatmul.f32.gmra.mxu0 %v6494
    %v7874 = vpop.f32.mrf.mxu0
    %v7875 = vadd.f32 %v7633, %v7874
    %7876 = vdwg.mxu0
    %7877 = vmatpush.msra.mxu0 %v6614
    %7878 = vmatpush.msra.mxu0 %v6613
    %7879 = vmatpush.msra.mxu0 %v6612
    %7880 = vmatpush.msra.mxu0 %v6611
    %7881 = vmatpush.msra.mxu0 %v6610
    %7882 = vmatpush.msra.mxu0 %v6609
    %7883 = vmatpush.msra.mxu0 %v6608
    %7884 = vmatpush.msra.mxu0 %v6607
    %7885 = vmatpush.msra.mxu0 %v6606
    %7886 = vmatpush.msra.mxu0 %v6605
    %7887 = vmatpush.msra.mxu0 %v6604
    %7888 = vmatpush.msra.mxu0 %v6603
    %7889 = vmatpush.msra.mxu0 %v6602
    %7890 = vmatpush.msra.mxu0 %v6601
    %7891 = vmatpush.msra.mxu0 %v6600
    %7892 = vmatpush.msra.mxu0 %v6599
    %7893 = vmatmul.f32.gmra.mxu0 %v6399
    %v7894 = vpop.f32.mrf.mxu0
    %v7895 = vadd.f32 %v7653, %v7894
    %7896 = vmatmul.f32.gmra.mxu0 %v6400
    %v7897 = vpop.f32.mrf.mxu0
    %v7898 = vadd.f32 %v7656, %v7897
    %7899 = vmatmul.f32.gmra.mxu0 %v6401
    %v7900 = vpop.f32.mrf.mxu0
    %v7901 = vadd.f32 %v7659, %v7900
    %7902 = vmatmul.f32.gmra.mxu0 %v6402
    %v7903 = vpop.f32.mrf.mxu0
    %v7904 = vadd.f32 %v7662, %v7903
    %7905 = vmatmul.f32.gmra.mxu0 %v6403
    %v7906 = vpop.f32.mrf.mxu0
    %v7907 = vadd.f32 %v7665, %v7906
    %7908 = vmatmul.f32.gmra.mxu0 %v6404
    %v7909 = vpop.f32.mrf.mxu0
    %v7910 = vadd.f32 %v7668, %v7909
    %7911 = vmatmul.f32.gmra.mxu0 %v6405
    %v7912 = vpop.f32.mrf.mxu0
    %v7913 = vadd.f32 %v7671, %v7912
    %7914 = vmatmul.f32.gmra.mxu0 %v6406
    %v7915 = vpop.f32.mrf.mxu0
    %v7916 = vadd.f32 %v7674, %v7915
    %7917 = vmatmul.f32.gmra.mxu0 %v6407
    %v7918 = vpop.f32.mrf.mxu0
    %v7919 = vadd.f32 %v7677, %v7918
    %7920 = vmatmul.f32.gmra.mxu0 %v6408
    %v7921 = vpop.f32.mrf.mxu0
    %v7922 = vadd.f32 %v7680, %v7921
    %7923 = vmatmul.f32.gmra.mxu0 %v6409
    %v7924 = vpop.f32.mrf.mxu0
    %v7925 = vadd.f32 %v7683, %v7924
    %7926 = vmatmul.f32.gmra.mxu0 %v6410
    %v7927 = vpop.f32.mrf.mxu0
    %v7928 = vadd.f32 %v7686, %v7927
    %7929 = vmatmul.f32.gmra.mxu0 %v6411
    %v7930 = vpop.f32.mrf.mxu0
    %v7931 = vadd.f32 %v7689, %v7930
    %7932 = vmatmul.f32.gmra.mxu0 %v6412
    %v7933 = vpop.f32.mrf.mxu0
    %v7934 = vadd.f32 %v7692, %v7933
    %7935 = vmatmul.f32.gmra.mxu0 %v6413
    %v7936 = vpop.f32.mrf.mxu0
    %v7937 = vadd.f32 %v7695, %v7936
    %7938 = vmatmul.f32.gmra.mxu0 %v6420
    %v7939 = vpop.f32.mrf.mxu0
    %v7940 = vadd.f32 %v7698, %v7939
    %7941 = vmatmul.f32.gmra.mxu0 %v6421
    %v7942 = vpop.f32.mrf.mxu0
    %v7943 = vadd.f32 %v7701, %v7942
    %7944 = vmatmul.f32.gmra.mxu0 %v6422
    %v7945 = vpop.f32.mrf.mxu0
    %v7946 = vadd.f32 %v7704, %v7945
    %7947 = vmatmul.f32.gmra.mxu0 %v6423
    %v7948 = vpop.f32.mrf.mxu0
    %v7949 = vadd.f32 %v7707, %v7948
    %7950 = vmatmul.f32.gmra.mxu0 %v6424
    %v7951 = vpop.f32.mrf.mxu0
    %v7952 = vadd.f32 %v7710, %v7951
    %7953 = vmatmul.f32.gmra.mxu0 %v6425
    %v7954 = vpop.f32.mrf.mxu0
    %v7955 = vadd.f32 %v7713, %v7954
    %7956 = vmatmul.f32.gmra.mxu0 %v6426
    %v7957 = vpop.f32.mrf.mxu0
    %v7958 = vadd.f32 %v7716, %v7957
    %7959 = vmatmul.f32.gmra.mxu0 %v6427
    %v7960 = vpop.f32.mrf.mxu0
    %v7961 = vadd.f32 %v7719, %v7960
    %7962 = vmatmul.f32.gmra.mxu0 %v6428
    %v7963 = vpop.f32.mrf.mxu0
    %v7964 = vadd.f32 %v7722, %v7963
    %7965 = vmatmul.f32.gmra.mxu0 %v6429
    %v7966 = vpop.f32.mrf.mxu0
    %v7967 = vadd.f32 %v7725, %v7966
    %7968 = vmatmul.f32.gmra.mxu0 %v6430
    %v7969 = vpop.f32.mrf.mxu0
    %v7970 = vadd.f32 %v7728, %v7969
    %7971 = vmatmul.f32.gmra.mxu0 %v6431
    %v7972 = vpop.f32.mrf.mxu0
    %v7973 = vadd.f32 %v7731, %v7972
    %7974 = vmatmul.f32.gmra.mxu0 %v6432
    %v7975 = vpop.f32.mrf.mxu0
    %v7976 = vadd.f32 %v7734, %v7975
    %7977 = vmatmul.f32.gmra.mxu0 %v6433
    %v7978 = vpop.f32.mrf.mxu0
    %v7979 = vadd.f32 %v7737, %v7978
    %7980 = vmatmul.f32.gmra.mxu0 %v6434
    %v7981 = vpop.f32.mrf.mxu0
    %v7982 = vadd.f32 %v7740, %v7981
    %7983 = vmatmul.f32.gmra.mxu0 %v6441
    %v7984 = vpop.f32.mrf.mxu0
    %v7985 = vadd.f32 %v7743, %v7984
    %7986 = vmatmul.f32.gmra.mxu0 %v6442
    %v7987 = vpop.f32.mrf.mxu0
    %v7988 = vadd.f32 %v7746, %v7987
    %7989 = vmatmul.f32.gmra.mxu0 %v6443
    %v7990 = vpop.f32.mrf.mxu0
    %v7991 = vadd.f32 %v7749, %v7990
    %7992 = vmatmul.f32.gmra.mxu0 %v6444
    %v7993 = vpop.f32.mrf.mxu0
    %v7994 = vadd.f32 %v7752, %v7993
    %7995 = vmatmul.f32.gmra.mxu0 %v6445
    %v7996 = vpop.f32.mrf.mxu0
    %v7997 = vadd.f32 %v7755, %v7996
    %7998 = vmatmul.f32.gmra.mxu0 %v6446
    %v7999 = vpop.f32.mrf.mxu0
    %v8000 = vadd.f32 %v7758, %v7999
    %8001 = vmatmul.f32.gmra.mxu0 %v6447
    %v8002 = vpop.f32.mrf.mxu0
    %v8003 = vadd.f32 %v7761, %v8002
    %8004 = vmatmul.f32.gmra.mxu0 %v6448
    %v8005 = vpop.f32.mrf.mxu0
    %v8006 = vadd.f32 %v7764, %v8005
    %8007 = vmatmul.f32.gmra.mxu0 %v6449
    %v8008 = vpop.f32.mrf.mxu0
    %v8009 = vadd.f32 %v7767, %v8008
    %8010 = vmatmul.f32.gmra.mxu0 %v6450
    %v8011 = vpop.f32.mrf.mxu0
    %v8012 = vadd.f32 %v7770, %v8011
    %8013 = vmatmul.f32.gmra.mxu0 %v6451
    %v8014 = vpop.f32.mrf.mxu0
    %v8015 = vadd.f32 %v7773, %v8014
    %8016 = vmatmul.f32.gmra.mxu0 %v6452
    %v8017 = vpop.f32.mrf.mxu0
    %v8018 = vadd.f32 %v7776, %v8017
    %8019 = vmatmul.f32.gmra.mxu0 %v6453
    %v8020 = vpop.f32.mrf.mxu0
    %v8021 = vadd.f32 %v7779, %v8020
    %8022 = vmatmul.f32.gmra.mxu0 %v6454
    %v8023 = vpop.f32.mrf.mxu0
    %v8024 = vadd.f32 %v7782, %v8023
    %8025 = vmatmul.f32.gmra.mxu0 %v6455
    %v8026 = vpop.f32.mrf.mxu0
    %v8027 = vadd.f32 %v7785, %v8026
    %8028 = vmatmul.f32.gmra.mxu0 %v6462
    %v8029 = vpop.f32.mrf.mxu0
    %v8030 = vadd.f32 %v7788, %v8029
    %8031 = vmatmul.f32.gmra.mxu0 %v6463
    %v8032 = vpop.f32.mrf.mxu0
    %v8033 = vadd.f32 %v7791, %v8032
    %8034 = vmatmul.f32.gmra.mxu0 %v6464
    %v8035 = vpop.f32.mrf.mxu0
    %v8036 = vadd.f32 %v7794, %v8035
    %8037 = vmatmul.f32.gmra.mxu0 %v6465
    %v8038 = vpop.f32.mrf.mxu0
    %v8039 = vadd.f32 %v7797, %v8038
    %8040 = vmatmul.f32.gmra.mxu0 %v6466
    %v8041 = vpop.f32.mrf.mxu0
    %v8042 = vadd.f32 %v7800, %v8041
    %8043 = vmatmul.f32.gmra.mxu0 %v6467
    %v8044 = vpop.f32.mrf.mxu0
    %v8045 = vadd.f32 %v7803, %v8044
    %8046 = vmatmul.f32.gmra.mxu0 %v6468
    %v8047 = vpop.f32.mrf.mxu0
    %v8048 = vadd.f32 %v7806, %v8047
    %8049 = vmatmul.f32.gmra.mxu0 %v6469
    %v8050 = vpop.f32.mrf.mxu0
    %v8051 = vadd.f32 %v7809, %v8050
    %8052 = vmatmul.f32.gmra.mxu0 %v6470
    %v8053 = vpop.f32.mrf.mxu0
    %v8054 = vadd.f32 %v7812, %v8053
    %8055 = vmatmul.f32.gmra.mxu0 %v6471
    %v8056 = vpop.f32.mrf.mxu0
    %v8057 = vadd.f32 %v7815, %v8056
    %8058 = vmatmul.f32.gmra.mxu0 %v6472
    %v8059 = vpop.f32.mrf.mxu0
    %v8060 = vadd.f32 %v7818, %v8059
    %8061 = vmatmul.f32.gmra.mxu0 %v6473
    %v8062 = vpop.f32.mrf.mxu0
    %v8063 = vadd.f32 %v7821, %v8062
    %8064 = vmatmul.f32.gmra.mxu0 %v6474
    %v8065 = vpop.f32.mrf.mxu0
    %v8066 = vadd.f32 %v7824, %v8065
    %8067 = vmatmul.f32.gmra.mxu0 %v6475
    %v8068 = vpop.f32.mrf.mxu0
    %v8069 = vadd.f32 %v7827, %v8068
    %8070 = vmatmul.f32.gmra.mxu0 %v6476
    %v8071 = vpop.f32.mrf.mxu0
    %v8072 = vadd.f32 %v7830, %v8071
    %8073 = vmatmul.f32.gmra.mxu0 %v6483
    %v8074 = vpop.f32.mrf.mxu0
    %v8075 = vadd.f32 %v7833, %v8074
    %8076 = vmatmul.f32.gmra.mxu0 %v6484
    %v8077 = vpop.f32.mrf.mxu0
    %v8078 = vadd.f32 %v7836, %v8077
    %8079 = vmatmul.f32.gmra.mxu0 %v6485
    %v8080 = vpop.f32.mrf.mxu0
    %v8081 = vadd.f32 %v7839, %v8080
    %8082 = vmatmul.f32.gmra.mxu0 %v6486
    %v8083 = vpop.f32.mrf.mxu0
    %v8084 = vadd.f32 %v7842, %v8083
    %8085 = vmatmul.f32.gmra.mxu0 %v6487
    %v8086 = vpop.f32.mrf.mxu0
    %v8087 = vadd.f32 %v7845, %v8086
    %8088 = vmatmul.f32.gmra.mxu0 %v6488
    %v8089 = vpop.f32.mrf.mxu0
    %v8090 = vadd.f32 %v7848, %v8089
    %8091 = vmatmul.f32.gmra.mxu0 %v6489
    %v8092 = vpop.f32.mrf.mxu0
    %v8093 = vadd.f32 %v7851, %v8092
    %8094 = vmatmul.f32.gmra.mxu0 %v6490
    %v8095 = vpop.f32.mrf.mxu0
    %v8096 = vadd.f32 %v7854, %v8095
    %8097 = vmatmul.f32.gmra.mxu0 %v6491
    %v8098 = vpop.f32.mrf.mxu0
    %v8099 = vadd.f32 %v7857, %v8098
    %8100 = vmatmul.f32.gmra.mxu0 %v6492
    %v8101 = vpop.f32.mrf.mxu0
    %v8102 = vadd.f32 %v7860, %v8101
    %8103 = vmatmul.f32.gmra.mxu0 %v6493
    %v8104 = vpop.f32.mrf.mxu0
    %v8105 = vadd.f32 %v7863, %v8104
    %8106 = vmatmul.f32.gmra.mxu0 %v6494
    %v8107 = vpop.f32.mrf.mxu0
    %v8108 = vadd.f32 %v7866, %v8107
    %8109 = vmatmul.f32.gmra.mxu0 %v6495
    %v8110 = vpop.f32.mrf.mxu0
    %v8111 = vadd.f32 %v7869, %v8110
    %8112 = vmatmul.f32.gmra.mxu0 %v6496
    %v8113 = vpop.f32.mrf.mxu0
    %v8114 = vadd.f32 %v7872, %v8113
    %8115 = vmatmul.f32.gmra.mxu0 %v6497
    %v8116 = vpop.f32.mrf.mxu0
    %v8117 = vadd.f32 %v7875, %v8116
    %8118 = vdwg.mxu0
    %8119 = vmatpush.msra.mxu0 %v6630
    %8120 = vmatpush.msra.mxu0 %v6629
    %8121 = vmatpush.msra.mxu0 %v6628
    %8122 = vmatpush.msra.mxu0 %v6627
    %8123 = vmatpush.msra.mxu0 %v6626
    %8124 = vmatpush.msra.mxu0 %v6625
    %8125 = vmatpush.msra.mxu0 %v6624
    %8126 = vmatpush.msra.mxu0 %v6623
    %8127 = vmatpush.msra.mxu0 %v6622
    %8128 = vmatpush.msra.mxu0 %v6621
    %8129 = vmatpush.msra.mxu0 %v6620
    %8130 = vmatpush.msra.mxu0 %v6619
    %8131 = vmatpush.msra.mxu0 %v6618
    %8132 = vmatpush.msra.mxu0 %v6617
    %8133 = vmatpush.msra.mxu0 %v6616
    %8134 = vmatpush.msra.mxu0 %v6615
    %8135 = vmatmul.f32.gmra.mxu0 %v6414
    %v8136 = vpop.f32.mrf.mxu0
    %v8137 = vadd.f32 %v7895, %v8136
    %8138 = vmatmul.f32.gmra.mxu0 %v6415
    %v8139 = vpop.f32.mrf.mxu0
    %v8140 = vadd.f32 %v7898, %v8139
    %8141 = vmatmul.f32.gmra.mxu0 %v6416
    %v8142 = vpop.f32.mrf.mxu0
    %v8143 = vadd.f32 %v7901, %v8142
    %8144 = vmatmul.f32.gmra.mxu0 %v6417
    %v8145 = vpop.f32.mrf.mxu0
    %v8146 = vadd.f32 %v7904, %v8145
    %8147 = vmatmul.f32.gmra.mxu0 %v6418
    %v8148 = vpop.f32.mrf.mxu0
    %v8149 = vadd.f32 %v7907, %v8148
    %8150 = vmatmul.f32.gmra.mxu0 %v6419
    %v8151 = vpop.f32.mrf.mxu0
    %v8152 = vadd.f32 %v7910, %v8151
    %8153 = vmatmul.f32.gmra.mxu0 %v6420
    %v8154 = vpop.f32.mrf.mxu0
    %v8155 = vadd.f32 %v7913, %v8154
    %8156 = vmatmul.f32.gmra.mxu0 %v6421
    %v8157 = vpop.f32.mrf.mxu0
    %v8158 = vadd.f32 %v7916, %v8157
    %8159 = vmatmul.f32.gmra.mxu0 %v6422
    %v8160 = vpop.f32.mrf.mxu0
    %v8161 = vadd.f32 %v7919, %v8160
    %8162 = vmatmul.f32.gmra.mxu0 %v6423
    %v8163 = vpop.f32.mrf.mxu0
    %v8164 = vadd.f32 %v7922, %v8163
    %8165 = vmatmul.f32.gmra.mxu0 %v6424
    %v8166 = vpop.f32.mrf.mxu0
    %v8167 = vadd.f32 %v7925, %v8166
    %8168 = vmatmul.f32.gmra.mxu0 %v6425
    %v8169 = vpop.f32.mrf.mxu0
    %v8170 = vadd.f32 %v7928, %v8169
    %8171 = vmatmul.f32.gmra.mxu0 %v6426
    %v8172 = vpop.f32.mrf.mxu0
    %v8173 = vadd.f32 %v7931, %v8172
    %8174 = vmatmul.f32.gmra.mxu0 %v6427
    %v8175 = vpop.f32.mrf.mxu0
    %v8176 = vadd.f32 %v7934, %v8175
    %8177 = vmatmul.f32.gmra.mxu0 %v6428
    %v8178 = vpop.f32.mrf.mxu0
    %v8179 = vadd.f32 %v7937, %v8178
    %8180 = vmatmul.f32.gmra.mxu0 %v6435
    %v8181 = vpop.f32.mrf.mxu0
    %v8182 = vadd.f32 %v7940, %v8181
    %8183 = vmatmul.f32.gmra.mxu0 %v6436
    %v8184 = vpop.f32.mrf.mxu0
    %v8185 = vadd.f32 %v7943, %v8184
    %8186 = vmatmul.f32.gmra.mxu0 %v6437
    %v8187 = vpop.f32.mrf.mxu0
    %v8188 = vadd.f32 %v7946, %v8187
    %8189 = vmatmul.f32.gmra.mxu0 %v6438
    %v8190 = vpop.f32.mrf.mxu0
    %v8191 = vadd.f32 %v7949, %v8190
    %8192 = vmatmul.f32.gmra.mxu0 %v6439
    %v8193 = vpop.f32.mrf.mxu0
    %v8194 = vadd.f32 %v7952, %v8193
    %8195 = vmatmul.f32.gmra.mxu0 %v6440
    %v8196 = vpop.f32.mrf.mxu0
    %v8197 = vadd.f32 %v7955, %v8196
    %8198 = vmatmul.f32.gmra.mxu0 %v6441
    %v8199 = vpop.f32.mrf.mxu0
    %v8200 = vadd.f32 %v7958, %v8199
    %8201 = vmatmul.f32.gmra.mxu0 %v6442
    %v8202 = vpop.f32.mrf.mxu0
    %v8203 = vadd.f32 %v7961, %v8202
    %8204 = vmatmul.f32.gmra.mxu0 %v6443
    %v8205 = vpop.f32.mrf.mxu0
    %v8206 = vadd.f32 %v7964, %v8205
    %8207 = vmatmul.f32.gmra.mxu0 %v6444
    %v8208 = vpop.f32.mrf.mxu0
    %v8209 = vadd.f32 %v7967, %v8208
    %8210 = vmatmul.f32.gmra.mxu0 %v6445
    %v8211 = vpop.f32.mrf.mxu0
    %v8212 = vadd.f32 %v7970, %v8211
    %8213 = vmatmul.f32.gmra.mxu0 %v6446
    %v8214 = vpop.f32.mrf.mxu0
    %v8215 = vadd.f32 %v7973, %v8214
    %8216 = vmatmul.f32.gmra.mxu0 %v6447
    %v8217 = vpop.f32.mrf.mxu0
    %v8218 = vadd.f32 %v7976, %v8217
    %8219 = vmatmul.f32.gmra.mxu0 %v6448
    %v8220 = vpop.f32.mrf.mxu0
    %v8221 = vadd.f32 %v7979, %v8220
    %8222 = vmatmul.f32.gmra.mxu0 %v6449
    %v8223 = vpop.f32.mrf.mxu0
    %v8224 = vadd.f32 %v7982, %v8223
    %8225 = vmatmul.f32.gmra.mxu0 %v6456
    %v8226 = vpop.f32.mrf.mxu0
    %v8227 = vadd.f32 %v7985, %v8226
    %8228 = vmatmul.f32.gmra.mxu0 %v6457
    %v8229 = vpop.f32.mrf.mxu0
    %v8230 = vadd.f32 %v7988, %v8229
    %8231 = vmatmul.f32.gmra.mxu0 %v6458
    %v8232 = vpop.f32.mrf.mxu0
    %v8233 = vadd.f32 %v7991, %v8232
    %8234 = vmatmul.f32.gmra.mxu0 %v6459
    %v8235 = vpop.f32.mrf.mxu0
    %v8236 = vadd.f32 %v7994, %v8235
    %8237 = vmatmul.f32.gmra.mxu0 %v6460
    %v8238 = vpop.f32.mrf.mxu0
    %v8239 = vadd.f32 %v7997, %v8238
    %8240 = vmatmul.f32.gmra.mxu0 %v6461
    %v8241 = vpop.f32.mrf.mxu0
    %v8242 = vadd.f32 %v8000, %v8241
    %8243 = vmatmul.f32.gmra.mxu0 %v6462
    %v8244 = vpop.f32.mrf.mxu0
    %v8245 = vadd.f32 %v8003, %v8244
    %8246 = vmatmul.f32.gmra.mxu0 %v6463
    %v8247 = vpop.f32.mrf.mxu0
    %v8248 = vadd.f32 %v8006, %v8247
    %8249 = vmatmul.f32.gmra.mxu0 %v6464
    %v8250 = vpop.f32.mrf.mxu0
    %v8251 = vadd.f32 %v8009, %v8250
    %8252 = vmatmul.f32.gmra.mxu0 %v6465
    %v8253 = vpop.f32.mrf.mxu0
    %v8254 = vadd.f32 %v8012, %v8253
    %8255 = vmatmul.f32.gmra.mxu0 %v6466
    %v8256 = vpop.f32.mrf.mxu0
    %v8257 = vadd.f32 %v8015, %v8256
    %8258 = vmatmul.f32.gmra.mxu0 %v6467
    %v8259 = vpop.f32.mrf.mxu0
    %v8260 = vadd.f32 %v8018, %v8259
    %8261 = vmatmul.f32.gmra.mxu0 %v6468
    %v8262 = vpop.f32.mrf.mxu0
    %v8263 = vadd.f32 %v8021, %v8262
    %8264 = vmatmul.f32.gmra.mxu0 %v6469
    %v8265 = vpop.f32.mrf.mxu0
    %v8266 = vadd.f32 %v8024, %v8265
    %8267 = vmatmul.f32.gmra.mxu0 %v6470
    %v8268 = vpop.f32.mrf.mxu0
    %v8269 = vadd.f32 %v8027, %v8268
    %8270 = vmatmul.f32.gmra.mxu0 %v6477
    %v8271 = vpop.f32.mrf.mxu0
    %v8272 = vadd.f32 %v8030, %v8271
    %8273 = vmatmul.f32.gmra.mxu0 %v6478
    %v8274 = vpop.f32.mrf.mxu0
    %v8275 = vadd.f32 %v8033, %v8274
    %8276 = vmatmul.f32.gmra.mxu0 %v6479
    %v8277 = vpop.f32.mrf.mxu0
    %v8278 = vadd.f32 %v8036, %v8277
    %8279 = vmatmul.f32.gmra.mxu0 %v6480
    %v8280 = vpop.f32.mrf.mxu0
    %v8281 = vadd.f32 %v8039, %v8280
    %8282 = vmatmul.f32.gmra.mxu0 %v6481
    %v8283 = vpop.f32.mrf.mxu0
    %v8284 = vadd.f32 %v8042, %v8283
    %8285 = vmatmul.f32.gmra.mxu0 %v6482
    %v8286 = vpop.f32.mrf.mxu0
    %v8287 = vadd.f32 %v8045, %v8286
    %8288 = vmatmul.f32.gmra.mxu0 %v6483
    %v8289 = vpop.f32.mrf.mxu0
    %v8290 = vadd.f32 %v8048, %v8289
    %8291 = vmatmul.f32.gmra.mxu0 %v6484
    %v8292 = vpop.f32.mrf.mxu0
    %v8293 = vadd.f32 %v8051, %v8292
    %8294 = vmatmul.f32.gmra.mxu0 %v6485
    %v8295 = vpop.f32.mrf.mxu0
    %v8296 = vadd.f32 %v8054, %v8295
    %8297 = vmatmul.f32.gmra.mxu0 %v6486
    %v8298 = vpop.f32.mrf.mxu0
    %v8299 = vadd.f32 %v8057, %v8298
    %8300 = vmatmul.f32.gmra.mxu0 %v6487
    %v8301 = vpop.f32.mrf.mxu0
    %v8302 = vadd.f32 %v8060, %v8301
    %8303 = vmatmul.f32.gmra.mxu0 %v6488
    %v8304 = vpop.f32.mrf.mxu0
    %v8305 = vadd.f32 %v8063, %v8304
    %8306 = vmatmul.f32.gmra.mxu0 %v6489
    %v8307 = vpop.f32.mrf.mxu0
    %v8308 = vadd.f32 %v8066, %v8307
    %8309 = vmatmul.f32.gmra.mxu0 %v6490
    %v8310 = vpop.f32.mrf.mxu0
    %v8311 = vadd.f32 %v8069, %v8310
    %8312 = vmatmul.f32.gmra.mxu0 %v6491
    %v8313 = vpop.f32.mrf.mxu0
    %v8314 = vadd.f32 %v8072, %v8313
    %8315 = vmatmul.f32.gmra.mxu0 %v6498
    %v8316 = vpop.f32.mrf.mxu0
    %v8317 = vadd.f32 %v8075, %v8316
    %8318 = vmatmul.f32.gmra.mxu0 %v6499
    %v8319 = vpop.f32.mrf.mxu0
    %v8320 = vadd.f32 %v8078, %v8319
    %8321 = vmatmul.f32.gmra.mxu0 %v6500
    %v8322 = vpop.f32.mrf.mxu0
    %v8323 = vadd.f32 %v8081, %v8322
    %8324 = vmatmul.f32.gmra.mxu0 %v6501
    %v8325 = vpop.f32.mrf.mxu0
    %v8326 = vadd.f32 %v8084, %v8325
    %8327 = vmatmul.f32.gmra.mxu0 %v6502
    %v8328 = vpop.f32.mrf.mxu0
    %v8329 = vadd.f32 %v8087, %v8328
    %8330 = vmatmul.f32.gmra.mxu0 %v6503
    %v8331 = vpop.f32.mrf.mxu0
    %v8332 = vadd.f32 %v8090, %v8331
    %8333 = vmatmul.f32.gmra.mxu0 %v6504
    %v8334 = vpop.f32.mrf.mxu0
    %v8335 = vadd.f32 %v8093, %v8334
    %8336 = vmatmul.f32.gmra.mxu0 %v6505
    %v8337 = vpop.f32.mrf.mxu0
    %v8338 = vadd.f32 %v8096, %v8337
    %8339 = vmatmul.f32.gmra.mxu0 %v6506
    %v8340 = vpop.f32.mrf.mxu0
    %v8341 = vadd.f32 %v8099, %v8340
    %8342 = vmatmul.f32.gmra.mxu0 %v6507
    %v8343 = vpop.f32.mrf.mxu0
    %v8344 = vadd.f32 %v8102, %v8343
    %8345 = vmatmul.f32.gmra.mxu0 %v6508
    %v8346 = vpop.f32.mrf.mxu0
    %v8347 = vadd.f32 %v8105, %v8346
    %8348 = vmatmul.f32.gmra.mxu0 %v6509
    %v8349 = vpop.f32.mrf.mxu0
    %v8350 = vadd.f32 %v8108, %v8349
    %8351 = vmatmul.f32.gmra.mxu0 %v6510
    %v8352 = vpop.f32.mrf.mxu0
    %v8353 = vadd.f32 %v8111, %v8352
    %8354 = vmatmul.f32.gmra.mxu0 %v6511
    %v8355 = vpop.f32.mrf.mxu0
    %v8356 = vadd.f32 %v8114, %v8355
    %8357 = vmatmul.f32.gmra.mxu0 %v6512
    %v8358 = vpop.f32.mrf.mxu0
    %v8359 = vadd.f32 %v8117, %v8358
    %8360 = vdwg.mxu0
    %8361 = vmatpush.msra.mxu0 %v6646
    %8362 = vmatpush.msra.mxu0 %v6645
    %8363 = vmatpush.msra.mxu0 %v6644
    %8364 = vmatpush.msra.mxu0 %v6643
    %8365 = vmatpush.msra.mxu0 %v6642
    %8366 = vmatpush.msra.mxu0 %v6641
    %8367 = vmatpush.msra.mxu0 %v6640
    %8368 = vmatpush.msra.mxu0 %v6639
    %8369 = vmatpush.msra.mxu0 %v6638
    %8370 = vmatpush.msra.mxu0 %v6637
    %8371 = vmatpush.msra.mxu0 %v6636
    %8372 = vmatpush.msra.mxu0 %v6635
    %8373 = vmatpush.msra.mxu0 %v6634
    %8374 = vmatpush.msra.mxu0 %v6633
    %8375 = vmatpush.msra.mxu0 %v6632
    %8376 = vmatpush.msra.mxu0 %v6631
    %8377 = vmatmul.f32.gmra.mxu0 %v6417
    %v8378 = vpop.f32.mrf.mxu0
    %v8379 = vadd.f32 %v8137, %v8378
    %8380 = vmatmul.f32.gmra.mxu0 %v6418
    %v8381 = vpop.f32.mrf.mxu0
    %v8382 = vadd.f32 %v8140, %v8381
    %8383 = vmatmul.f32.gmra.mxu0 %v6419
    %v8384 = vpop.f32.mrf.mxu0
    %v8385 = vadd.f32 %v8143, %v8384
    %8386 = vmatmul.f32.gmra.mxu0 %v6420
    %v8387 = vpop.f32.mrf.mxu0
    %v8388 = vadd.f32 %v8146, %v8387
    %8389 = vmatmul.f32.gmra.mxu0 %v6421
    %v8390 = vpop.f32.mrf.mxu0
    %v8391 = vadd.f32 %v8149, %v8390
    %8392 = vmatmul.f32.gmra.mxu0 %v6422
    %v8393 = vpop.f32.mrf.mxu0
    %v8394 = vadd.f32 %v8152, %v8393
    %8395 = vmatmul.f32.gmra.mxu0 %v6423
    %v8396 = vpop.f32.mrf.mxu0
    %v8397 = vadd.f32 %v8155, %v8396
    %8398 = vmatmul.f32.gmra.mxu0 %v6424
    %v8399 = vpop.f32.mrf.mxu0
    %v8400 = vadd.f32 %v8158, %v8399
    %8401 = vmatmul.f32.gmra.mxu0 %v6425
    %v8402 = vpop.f32.mrf.mxu0
    %v8403 = vadd.f32 %v8161, %v8402
    %8404 = vmatmul.f32.gmra.mxu0 %v6426
    %v8405 = vpop.f32.mrf.mxu0
    %v8406 = vadd.f32 %v8164, %v8405
    %8407 = vmatmul.f32.gmra.mxu0 %v6427
    %v8408 = vpop.f32.mrf.mxu0
    %v8409 = vadd.f32 %v8167, %v8408
    %8410 = vmatmul.f32.gmra.mxu0 %v6428
    %v8411 = vpop.f32.mrf.mxu0
    %v8412 = vadd.f32 %v8170, %v8411
    %8413 = vmatmul.f32.gmra.mxu0 %v6429
    %v8414 = vpop.f32.mrf.mxu0
    %v8415 = vadd.f32 %v8173, %v8414
    %8416 = vmatmul.f32.gmra.mxu0 %v6430
    %v8417 = vpop.f32.mrf.mxu0
    %v8418 = vadd.f32 %v8176, %v8417
    %8419 = vmatmul.f32.gmra.mxu0 %v6431
    %v8420 = vpop.f32.mrf.mxu0
    %v8421 = vadd.f32 %v8179, %v8420
    %8422 = vmatmul.f32.gmra.mxu0 %v6438
    %v8423 = vpop.f32.mrf.mxu0
    %v8424 = vadd.f32 %v8182, %v8423
    %8425 = vmatmul.f32.gmra.mxu0 %v6439
    %v8426 = vpop.f32.mrf.mxu0
    %v8427 = vadd.f32 %v8185, %v8426
    %8428 = vmatmul.f32.gmra.mxu0 %v6440
    %v8429 = vpop.f32.mrf.mxu0
    %v8430 = vadd.f32 %v8188, %v8429
    %8431 = vmatmul.f32.gmra.mxu0 %v6441
    %v8432 = vpop.f32.mrf.mxu0
    %v8433 = vadd.f32 %v8191, %v8432
    %8434 = vmatmul.f32.gmra.mxu0 %v6442
    %v8435 = vpop.f32.mrf.mxu0
    %v8436 = vadd.f32 %v8194, %v8435
    %8437 = vmatmul.f32.gmra.mxu0 %v6443
    %v8438 = vpop.f32.mrf.mxu0
    %v8439 = vadd.f32 %v8197, %v8438
    %8440 = vmatmul.f32.gmra.mxu0 %v6444
    %v8441 = vpop.f32.mrf.mxu0
    %v8442 = vadd.f32 %v8200, %v8441
    %8443 = vmatmul.f32.gmra.mxu0 %v6445
    %v8444 = vpop.f32.mrf.mxu0
    %v8445 = vadd.f32 %v8203, %v8444
    %8446 = vmatmul.f32.gmra.mxu0 %v6446
    %v8447 = vpop.f32.mrf.mxu0
    %v8448 = vadd.f32 %v8206, %v8447
    %8449 = vmatmul.f32.gmra.mxu0 %v6447
    %v8450 = vpop.f32.mrf.mxu0
    %v8451 = vadd.f32 %v8209, %v8450
    %8452 = vmatmul.f32.gmra.mxu0 %v6448
    %v8453 = vpop.f32.mrf.mxu0
    %v8454 = vadd.f32 %v8212, %v8453
    %8455 = vmatmul.f32.gmra.mxu0 %v6449
    %v8456 = vpop.f32.mrf.mxu0
    %v8457 = vadd.f32 %v8215, %v8456
    %8458 = vmatmul.f32.gmra.mxu0 %v6450
    %v8459 = vpop.f32.mrf.mxu0
    %v8460 = vadd.f32 %v8218, %v8459
    %8461 = vmatmul.f32.gmra.mxu0 %v6451
    %v8462 = vpop.f32.mrf.mxu0
    %v8463 = vadd.f32 %v8221, %v8462
    %8464 = vmatmul.f32.gmra.mxu0 %v6452
    %v8465 = vpop.f32.mrf.mxu0
    %v8466 = vadd.f32 %v8224, %v8465
    %8467 = vmatmul.f32.gmra.mxu0 %v6459
    %v8468 = vpop.f32.mrf.mxu0
    %v8469 = vadd.f32 %v8227, %v8468
    %8470 = vmatmul.f32.gmra.mxu0 %v6460
    %v8471 = vpop.f32.mrf.mxu0
    %v8472 = vadd.f32 %v8230, %v8471
    %8473 = vmatmul.f32.gmra.mxu0 %v6461
    %v8474 = vpop.f32.mrf.mxu0
    %v8475 = vadd.f32 %v8233, %v8474
    %8476 = vmatmul.f32.gmra.mxu0 %v6462
    %v8477 = vpop.f32.mrf.mxu0
    %v8478 = vadd.f32 %v8236, %v8477
    %8479 = vmatmul.f32.gmra.mxu0 %v6463
    %v8480 = vpop.f32.mrf.mxu0
    %v8481 = vadd.f32 %v8239, %v8480
    %8482 = vmatmul.f32.gmra.mxu0 %v6464
    %v8483 = vpop.f32.mrf.mxu0
    %v8484 = vadd.f32 %v8242, %v8483
    %8485 = vmatmul.f32.gmra.mxu0 %v6465
    %v8486 = vpop.f32.mrf.mxu0
    %v8487 = vadd.f32 %v8245, %v8486
    %8488 = vmatmul.f32.gmra.mxu0 %v6466
    %v8489 = vpop.f32.mrf.mxu0
    %v8490 = vadd.f32 %v8248, %v8489
    %8491 = vmatmul.f32.gmra.mxu0 %v6467
    %v8492 = vpop.f32.mrf.mxu0
    %v8493 = vadd.f32 %v8251, %v8492
    %8494 = vmatmul.f32.gmra.mxu0 %v6468
    %v8495 = vpop.f32.mrf.mxu0
    %v8496 = vadd.f32 %v8254, %v8495
    %8497 = vmatmul.f32.gmra.mxu0 %v6469
    %v8498 = vpop.f32.mrf.mxu0
    %v8499 = vadd.f32 %v8257, %v8498
    %8500 = vmatmul.f32.gmra.mxu0 %v6470
    %v8501 = vpop.f32.mrf.mxu0
    %v8502 = vadd.f32 %v8260, %v8501
    %8503 = vmatmul.f32.gmra.mxu0 %v6471
    %v8504 = vpop.f32.mrf.mxu0
    %v8505 = vadd.f32 %v8263, %v8504
    %8506 = vmatmul.f32.gmra.mxu0 %v6472
    %v8507 = vpop.f32.mrf.mxu0
    %v8508 = vadd.f32 %v8266, %v8507
    %8509 = vmatmul.f32.gmra.mxu0 %v6473
    %v8510 = vpop.f32.mrf.mxu0
    %v8511 = vadd.f32 %v8269, %v8510
    %8512 = vmatmul.f32.gmra.mxu0 %v6480
    %v8513 = vpop.f32.mrf.mxu0
    %v8514 = vadd.f32 %v8272, %v8513
    %8515 = vmatmul.f32.gmra.mxu0 %v6481
    %v8516 = vpop.f32.mrf.mxu0
    %v8517 = vadd.f32 %v8275, %v8516
    %8518 = vmatmul.f32.gmra.mxu0 %v6482
    %v8519 = vpop.f32.mrf.mxu0
    %v8520 = vadd.f32 %v8278, %v8519
    %8521 = vmatmul.f32.gmra.mxu0 %v6483
    %v8522 = vpop.f32.mrf.mxu0
    %v8523 = vadd.f32 %v8281, %v8522
    %8524 = vmatmul.f32.gmra.mxu0 %v6484
    %v8525 = vpop.f32.mrf.mxu0
    %v8526 = vadd.f32 %v8284, %v8525
    %8527 = vmatmul.f32.gmra.mxu0 %v6485
    %v8528 = vpop.f32.mrf.mxu0
    %v8529 = vadd.f32 %v8287, %v8528
    %8530 = vmatmul.f32.gmra.mxu0 %v6486
    %v8531 = vpop.f32.mrf.mxu0
    %v8532 = vadd.f32 %v8290, %v8531
    %8533 = vmatmul.f32.gmra.mxu0 %v6487
    %v8534 = vpop.f32.mrf.mxu0
    %v8535 = vadd.f32 %v8293, %v8534
    %8536 = vmatmul.f32.gmra.mxu0 %v6488
    %v8537 = vpop.f32.mrf.mxu0
    %v8538 = vadd.f32 %v8296, %v8537
    %8539 = vmatmul.f32.gmra.mxu0 %v6489
    %v8540 = vpop.f32.mrf.mxu0
    %v8541 = vadd.f32 %v8299, %v8540
    %8542 = vmatmul.f32.gmra.mxu0 %v6490
    %v8543 = vpop.f32.mrf.mxu0
    %v8544 = vadd.f32 %v8302, %v8543
    %8545 = vmatmul.f32.gmra.mxu0 %v6491
    %v8546 = vpop.f32.mrf.mxu0
    %v8547 = vadd.f32 %v8305, %v8546
    %8548 = vmatmul.f32.gmra.mxu0 %v6492
    %v8549 = vpop.f32.mrf.mxu0
    %v8550 = vadd.f32 %v8308, %v8549
    %8551 = vmatmul.f32.gmra.mxu0 %v6493
    %v8552 = vpop.f32.mrf.mxu0
    %v8553 = vadd.f32 %v8311, %v8552
    %8554 = vmatmul.f32.gmra.mxu0 %v6494
    %v8555 = vpop.f32.mrf.mxu0
    %v8556 = vadd.f32 %v8314, %v8555
    %8557 = vmatmul.f32.gmra.mxu0 %v6501
    %v8558 = vpop.f32.mrf.mxu0
    %v8559 = vadd.f32 %v8317, %v8558
    %8560 = vmatmul.f32.gmra.mxu0 %v6502
    %v8561 = vpop.f32.mrf.mxu0
    %v8562 = vadd.f32 %v8320, %v8561
    %8563 = vmatmul.f32.gmra.mxu0 %v6503
    %v8564 = vpop.f32.mrf.mxu0
    %v8565 = vadd.f32 %v8323, %v8564
    %8566 = vmatmul.f32.gmra.mxu0 %v6504
    %v8567 = vpop.f32.mrf.mxu0
    %v8568 = vadd.f32 %v8326, %v8567
    %8569 = vmatmul.f32.gmra.mxu0 %v6505
    %v8570 = vpop.f32.mrf.mxu0
    %v8571 = vadd.f32 %v8329, %v8570
    %8572 = vmatmul.f32.gmra.mxu0 %v6506
    %v8573 = vpop.f32.mrf.mxu0
    %v8574 = vadd.f32 %v8332, %v8573
    %8575 = vmatmul.f32.gmra.mxu0 %v6507
    %v8576 = vpop.f32.mrf.mxu0
    %v8577 = vadd.f32 %v8335, %v8576
    %8578 = vmatmul.f32.gmra.mxu0 %v6508
    %v8579 = vpop.f32.mrf.mxu0
    %v8580 = vadd.f32 %v8338, %v8579
    %8581 = vmatmul.f32.gmra.mxu0 %v6509
    %v8582 = vpop.f32.mrf.mxu0
    %v8583 = vadd.f32 %v8341, %v8582
    %8584 = vmatmul.f32.gmra.mxu0 %v6510
    %v8585 = vpop.f32.mrf.mxu0
    %v8586 = vadd.f32 %v8344, %v8585
    %8587 = vmatmul.f32.gmra.mxu0 %v6511
    %v8588 = vpop.f32.mrf.mxu0
    %v8589 = vadd.f32 %v8347, %v8588
    %8590 = vmatmul.f32.gmra.mxu0 %v6512
    %v8591 = vpop.f32.mrf.mxu0
    %v8592 = vadd.f32 %v8350, %v8591
    %8593 = vmatmul.f32.gmra.mxu0 %v6513
    %v8594 = vpop.f32.mrf.mxu0
    %v8595 = vadd.f32 %v8353, %v8594
    %8596 = vmatmul.f32.gmra.mxu0 %v6514
    %v8597 = vpop.f32.mrf.mxu0
    %v8598 = vadd.f32 %v8356, %v8597
    %8599 = vmatmul.f32.gmra.mxu0 %v6515
    %v8600 = vpop.f32.mrf.mxu0
    %v8601 = vadd.f32 %v8359, %v8600
    %8602 = vdwg.mxu0
    %8603 = vmatpush.msra.mxu0 %v6662
    %8604 = vmatpush.msra.mxu0 %v6661
    %8605 = vmatpush.msra.mxu0 %v6660
    %8606 = vmatpush.msra.mxu0 %v6659
    %8607 = vmatpush.msra.mxu0 %v6658
    %8608 = vmatpush.msra.mxu0 %v6657
    %8609 = vmatpush.msra.mxu0 %v6656
    %8610 = vmatpush.msra.mxu0 %v6655
    %8611 = vmatpush.msra.mxu0 %v6654
    %8612 = vmatpush.msra.mxu0 %v6653
    %8613 = vmatpush.msra.mxu0 %v6652
    %8614 = vmatpush.msra.mxu0 %v6651
    %8615 = vmatpush.msra.mxu0 %v6650
    %8616 = vmatpush.msra.mxu0 %v6649
    %8617 = vmatpush.msra.mxu0 %v6648
    %8618 = vmatpush.msra.mxu0 %v6647
    %8619 = vmatmul.f32.gmra.mxu0 %v6420
    %v8620 = vpop.f32.mrf.mxu0
    %v8621 = vadd.f32 %v8379, %v8620
    %8622 = vmatmul.f32.gmra.mxu0 %v6421
    %v8623 = vpop.f32.mrf.mxu0
    %v8624 = vadd.f32 %v8382, %v8623
    %8625 = vmatmul.f32.gmra.mxu0 %v6422
    %v8626 = vpop.f32.mrf.mxu0
    %v8627 = vadd.f32 %v8385, %v8626
    %8628 = vmatmul.f32.gmra.mxu0 %v6423
    %v8629 = vpop.f32.mrf.mxu0
    %v8630 = vadd.f32 %v8388, %v8629
    %8631 = vmatmul.f32.gmra.mxu0 %v6424
    %v8632 = vpop.f32.mrf.mxu0
    %v8633 = vadd.f32 %v8391, %v8632
    %8634 = vmatmul.f32.gmra.mxu0 %v6425
    %v8635 = vpop.f32.mrf.mxu0
    %v8636 = vadd.f32 %v8394, %v8635
    %8637 = vmatmul.f32.gmra.mxu0 %v6426
    %v8638 = vpop.f32.mrf.mxu0
    %v8639 = vadd.f32 %v8397, %v8638
    %8640 = vmatmul.f32.gmra.mxu0 %v6427
    %v8641 = vpop.f32.mrf.mxu0
    %v8642 = vadd.f32 %v8400, %v8641
    %8643 = vmatmul.f32.gmra.mxu0 %v6428
    %v8644 = vpop.f32.mrf.mxu0
    %v8645 = vadd.f32 %v8403, %v8644
    %8646 = vmatmul.f32.gmra.mxu0 %v6429
    %v8647 = vpop.f32.mrf.mxu0
    %v8648 = vadd.f32 %v8406, %v8647
    %8649 = vmatmul.f32.gmra.mxu0 %v6430
    %v8650 = vpop.f32.mrf.mxu0
    %v8651 = vadd.f32 %v8409, %v8650
    %8652 = vmatmul.f32.gmra.mxu0 %v6431
    %v8653 = vpop.f32.mrf.mxu0
    %v8654 = vadd.f32 %v8412, %v8653
    %8655 = vmatmul.f32.gmra.mxu0 %v6432
    %v8656 = vpop.f32.mrf.mxu0
    %v8657 = vadd.f32 %v8415, %v8656
    %8658 = vmatmul.f32.gmra.mxu0 %v6433
    %v8659 = vpop.f32.mrf.mxu0
    %v8660 = vadd.f32 %v8418, %v8659
    %8661 = vmatmul.f32.gmra.mxu0 %v6434
    %v8662 = vpop.f32.mrf.mxu0
    %v8663 = vadd.f32 %v8421, %v8662
    %8664 = vmatmul.f32.gmra.mxu0 %v6441
    %v8665 = vpop.f32.mrf.mxu0
    %v8666 = vadd.f32 %v8424, %v8665
    %8667 = vmatmul.f32.gmra.mxu0 %v6442
    %v8668 = vpop.f32.mrf.mxu0
    %v8669 = vadd.f32 %v8427, %v8668
    %8670 = vmatmul.f32.gmra.mxu0 %v6443
    %v8671 = vpop.f32.mrf.mxu0
    %v8672 = vadd.f32 %v8430, %v8671
    %8673 = vmatmul.f32.gmra.mxu0 %v6444
    %v8674 = vpop.f32.mrf.mxu0
    %v8675 = vadd.f32 %v8433, %v8674
    %8676 = vmatmul.f32.gmra.mxu0 %v6445
    %v8677 = vpop.f32.mrf.mxu0
    %v8678 = vadd.f32 %v8436, %v8677
    %8679 = vmatmul.f32.gmra.mxu0 %v6446
    %v8680 = vpop.f32.mrf.mxu0
    %v8681 = vadd.f32 %v8439, %v8680
    %8682 = vmatmul.f32.gmra.mxu0 %v6447
    %v8683 = vpop.f32.mrf.mxu0
    %v8684 = vadd.f32 %v8442, %v8683
    %8685 = vmatmul.f32.gmra.mxu0 %v6448
    %v8686 = vpop.f32.mrf.mxu0
    %v8687 = vadd.f32 %v8445, %v8686
    %8688 = vmatmul.f32.gmra.mxu0 %v6449
    %v8689 = vpop.f32.mrf.mxu0
    %v8690 = vadd.f32 %v8448, %v8689
    %8691 = vmatmul.f32.gmra.mxu0 %v6450
    %v8692 = vpop.f32.mrf.mxu0
    %v8693 = vadd.f32 %v8451, %v8692
    %8694 = vmatmul.f32.gmra.mxu0 %v6451
    %v8695 = vpop.f32.mrf.mxu0
    %v8696 = vadd.f32 %v8454, %v8695
    %8697 = vmatmul.f32.gmra.mxu0 %v6452
    %v8698 = vpop.f32.mrf.mxu0
    %v8699 = vadd.f32 %v8457, %v8698
    %8700 = vmatmul.f32.gmra.mxu0 %v6453
    %v8701 = vpop.f32.mrf.mxu0
    %v8702 = vadd.f32 %v8460, %v8701
    %8703 = vmatmul.f32.gmra.mxu0 %v6454
    %v8704 = vpop.f32.mrf.mxu0
    %v8705 = vadd.f32 %v8463, %v8704
    %8706 = vmatmul.f32.gmra.mxu0 %v6455
    %v8707 = vpop.f32.mrf.mxu0
    %v8708 = vadd.f32 %v8466, %v8707
    %8709 = vmatmul.f32.gmra.mxu0 %v6462
    %v8710 = vpop.f32.mrf.mxu0
    %v8711 = vadd.f32 %v8469, %v8710
    %8712 = vmatmul.f32.gmra.mxu0 %v6463
    %v8713 = vpop.f32.mrf.mxu0
    %v8714 = vadd.f32 %v8472, %v8713
    %8715 = vmatmul.f32.gmra.mxu0 %v6464
    %v8716 = vpop.f32.mrf.mxu0
    %v8717 = vadd.f32 %v8475, %v8716
    %8718 = vmatmul.f32.gmra.mxu0 %v6465
    %v8719 = vpop.f32.mrf.mxu0
    %v8720 = vadd.f32 %v8478, %v8719
    %8721 = vmatmul.f32.gmra.mxu0 %v6466
    %v8722 = vpop.f32.mrf.mxu0
    %v8723 = vadd.f32 %v8481, %v8722
    %8724 = vmatmul.f32.gmra.mxu0 %v6467
    %v8725 = vpop.f32.mrf.mxu0
    %v8726 = vadd.f32 %v8484, %v8725
    %8727 = vmatmul.f32.gmra.mxu0 %v6468
    %v8728 = vpop.f32.mrf.mxu0
    %v8729 = vadd.f32 %v8487, %v8728
    %8730 = vmatmul.f32.gmra.mxu0 %v6469
    %v8731 = vpop.f32.mrf.mxu0
    %v8732 = vadd.f32 %v8490, %v8731
    %8733 = vmatmul.f32.gmra.mxu0 %v6470
    %v8734 = vpop.f32.mrf.mxu0
    %v8735 = vadd.f32 %v8493, %v8734
    %8736 = vmatmul.f32.gmra.mxu0 %v6471
    %v8737 = vpop.f32.mrf.mxu0
    %v8738 = vadd.f32 %v8496, %v8737
    %8739 = vmatmul.f32.gmra.mxu0 %v6472
    %v8740 = vpop.f32.mrf.mxu0
    %v8741 = vadd.f32 %v8499, %v8740
    %8742 = vmatmul.f32.gmra.mxu0 %v6473
    %v8743 = vpop.f32.mrf.mxu0
    %v8744 = vadd.f32 %v8502, %v8743
    %8745 = vmatmul.f32.gmra.mxu0 %v6474
    %v8746 = vpop.f32.mrf.mxu0
    %v8747 = vadd.f32 %v8505, %v8746
    %8748 = vmatmul.f32.gmra.mxu0 %v6475
    %v8749 = vpop.f32.mrf.mxu0
    %v8750 = vadd.f32 %v8508, %v8749
    %8751 = vmatmul.f32.gmra.mxu0 %v6476
    %v8752 = vpop.f32.mrf.mxu0
    %v8753 = vadd.f32 %v8511, %v8752
    %8754 = vmatmul.f32.gmra.mxu0 %v6483
    %v8755 = vpop.f32.mrf.mxu0
    %v8756 = vadd.f32 %v8514, %v8755
    %8757 = vmatmul.f32.gmra.mxu0 %v6484
    %v8758 = vpop.f32.mrf.mxu0
    %v8759 = vadd.f32 %v8517, %v8758
    %8760 = vmatmul.f32.gmra.mxu0 %v6485
    %v8761 = vpop.f32.mrf.mxu0
    %v8762 = vadd.f32 %v8520, %v8761
    %8763 = vmatmul.f32.gmra.mxu0 %v6486
    %v8764 = vpop.f32.mrf.mxu0
    %v8765 = vadd.f32 %v8523, %v8764
    %8766 = vmatmul.f32.gmra.mxu0 %v6487
    %v8767 = vpop.f32.mrf.mxu0
    %v8768 = vadd.f32 %v8526, %v8767
    %8769 = vmatmul.f32.gmra.mxu0 %v6488
    %v8770 = vpop.f32.mrf.mxu0
    %v8771 = vadd.f32 %v8529, %v8770
    %8772 = vmatmul.f32.gmra.mxu0 %v6489
    %v8773 = vpop.f32.mrf.mxu0
    %v8774 = vadd.f32 %v8532, %v8773
    %8775 = vmatmul.f32.gmra.mxu0 %v6490
    %v8776 = vpop.f32.mrf.mxu0
    %v8777 = vadd.f32 %v8535, %v8776
    %8778 = vmatmul.f32.gmra.mxu0 %v6491
    %v8779 = vpop.f32.mrf.mxu0
    %v8780 = vadd.f32 %v8538, %v8779
    %8781 = vmatmul.f32.gmra.mxu0 %v6492
    %v8782 = vpop.f32.mrf.mxu0
    %v8783 = vadd.f32 %v8541, %v8782
    %8784 = vmatmul.f32.gmra.mxu0 %v6493
    %v8785 = vpop.f32.mrf.mxu0
    %v8786 = vadd.f32 %v8544, %v8785
    %8787 = vmatmul.f32.gmra.mxu0 %v6494
    %v8788 = vpop.f32.mrf.mxu0
    %v8789 = vadd.f32 %v8547, %v8788
    %8790 = vmatmul.f32.gmra.mxu0 %v6495
    %v8791 = vpop.f32.mrf.mxu0
    %v8792 = vadd.f32 %v8550, %v8791
    %8793 = vmatmul.f32.gmra.mxu0 %v6496
    %v8794 = vpop.f32.mrf.mxu0
    %v8795 = vadd.f32 %v8553, %v8794
    %8796 = vmatmul.f32.gmra.mxu0 %v6497
    %v8797 = vpop.f32.mrf.mxu0
    %v8798 = vadd.f32 %v8556, %v8797
    %8799 = vmatmul.f32.gmra.mxu0 %v6504
    %v8800 = vpop.f32.mrf.mxu0
    %v8801 = vadd.f32 %v8559, %v8800
    %8802 = vmatmul.f32.gmra.mxu0 %v6505
    %v8803 = vpop.f32.mrf.mxu0
    %v8804 = vadd.f32 %v8562, %v8803
    %8805 = vmatmul.f32.gmra.mxu0 %v6506
    %v8806 = vpop.f32.mrf.mxu0
    %v8807 = vadd.f32 %v8565, %v8806
    %8808 = vmatmul.f32.gmra.mxu0 %v6507
    %v8809 = vpop.f32.mrf.mxu0
    %v8810 = vadd.f32 %v8568, %v8809
    %8811 = vmatmul.f32.gmra.mxu0 %v6508
    %v8812 = vpop.f32.mrf.mxu0
    %v8813 = vadd.f32 %v8571, %v8812
    %8814 = vmatmul.f32.gmra.mxu0 %v6509
    %v8815 = vpop.f32.mrf.mxu0
    %v8816 = vadd.f32 %v8574, %v8815
    %8817 = vmatmul.f32.gmra.mxu0 %v6510
    %v8818 = vpop.f32.mrf.mxu0
    %v8819 = vadd.f32 %v8577, %v8818
    %8820 = vmatmul.f32.gmra.mxu0 %v6511
    %v8821 = vpop.f32.mrf.mxu0
    %v8822 = vadd.f32 %v8580, %v8821
    %8823 = vmatmul.f32.gmra.mxu0 %v6512
    %v8824 = vpop.f32.mrf.mxu0
    %v8825 = vadd.f32 %v8583, %v8824
    %8826 = vmatmul.f32.gmra.mxu0 %v6513
    %v8827 = vpop.f32.mrf.mxu0
    %v8828 = vadd.f32 %v8586, %v8827
    %8829 = vmatmul.f32.gmra.mxu0 %v6514
    %v8830 = vpop.f32.mrf.mxu0
    %v8831 = vadd.f32 %v8589, %v8830
    %8832 = vmatmul.f32.gmra.mxu0 %v6515
    %v8833 = vpop.f32.mrf.mxu0
    %v8834 = vadd.f32 %v8592, %v8833
    %8835 = vmatmul.f32.gmra.mxu0 %v6516
    %v8836 = vpop.f32.mrf.mxu0
    %v8837 = vadd.f32 %v8595, %v8836
    %8838 = vmatmul.f32.gmra.mxu0 %v6517
    %v8839 = vpop.f32.mrf.mxu0
    %v8840 = vadd.f32 %v8598, %v8839
    %8841 = vmatmul.f32.gmra.mxu0 %v6518
    %v8842 = vpop.f32.mrf.mxu0
    %v8843 = vadd.f32 %v8601, %v8842
    %8844 = vdwg.mxu0
    %v8845 = vmax.f32 %v8621, 0.0
    %v8846 = vmax.f32 %v8624, 0.0
    %v8847 = vmax.f32 %v8627, 0.0
    %v8848 = vmax.f32 %v8630, 0.0
    %v8849 = vmax.f32 %v8633, 0.0
    %v8850 = vmax.f32 %v8636, 0.0
    %v8851 = vmax.f32 %v8639, 0.0
    %v8852 = vmax.f32 %v8642, 0.0
    %v8853 = vmax.f32 %v8645, 0.0
    %v8854 = vmax.f32 %v8648, 0.0
    %v8855 = vmax.f32 %v8651, 0.0
    %v8856 = vmax.f32 %v8654, 0.0
    %v8857 = vmax.f32 %v8657, 0.0
    %v8858 = vmax.f32 %v8660, 0.0
    %v8859 = vmax.f32 %v8663, 0.0
    %v8860 = vmax.f32 %v8666, 0.0
    %v8861 = vmax.f32 %v8669, 0.0
    %v8862 = vmax.f32 %v8672, 0.0
    %v8863 = vmax.f32 %v8675, 0.0
    %v8864 = vmax.f32 %v8678, 0.0
    %v8865 = vmax.f32 %v8681, 0.0
    %v8866 = vmax.f32 %v8684, 0.0
    %v8867 = vmax.f32 %v8687, 0.0
    %v8868 = vmax.f32 %v8690, 0.0
    %v8869 = vmax.f32 %v8693, 0.0
    %v8870 = vmax.f32 %v8696, 0.0
    %v8871 = vmax.f32 %v8699, 0.0
    %v8872 = vmax.f32 %v8702, 0.0
    %v8873 = vmax.f32 %v8705, 0.0
    %v8874 = vmax.f32 %v8708, 0.0
    %v8875 = vmax.f32 %v8711, 0.0
    %v8876 = vmax.f32 %v8714, 0.0
    %v8877 = vmax.f32 %v8717, 0.0
    %v8878 = vmax.f32 %v8720, 0.0
    %v8879 = vmax.f32 %v8723, 0.0
    %v8880 = vmax.f32 %v8726, 0.0
    %v8881 = vmax.f32 %v8729, 0.0
    %v8882 = vmax.f32 %v8732, 0.0
    %v8883 = vmax.f32 %v8735, 0.0
    %v8884 = vmax.f32 %v8738, 0.0
    %v8885 = vmax.f32 %v8741, 0.0
    %v8886 = vmax.f32 %v8744, 0.0
    %v8887 = vmax.f32 %v8747, 0.0
    %v8888 = vmax.f32 %v8750, 0.0
    %v8889 = vmax.f32 %v8753, 0.0
    %v8890 = vmax.f32 %v8756, 0.0
    %v8891 = vmax.f32 %v8759, 0.0
    %v8892 = vmax.f32 %v8762, 0.0
    %v8893 = vmax.f32 %v8765, 0.0
    %v8894 = vmax.f32 %v8768, 0.0
    %v8895 = vmax.f32 %v8771, 0.0
    %v8896 = vmax.f32 %v8774, 0.0
    %v8897 = vmax.f32 %v8777, 0.0
    %v8898 = vmax.f32 %v8780, 0.0
    %v8899 = vmax.f32 %v8783, 0.0
    %v8900 = vmax.f32 %v8786, 0.0
    %v8901 = vmax.f32 %v8789, 0.0
    %v8902 = vmax.f32 %v8792, 0.0
    %v8903 = vmax.f32 %v8795, 0.0
    %v8904 = vmax.f32 %v8798, 0.0
    %v8905 = vmax.f32 %v8801, 0.0
    %v8906 = vmax.f32 %v8804, 0.0
    %v8907 = vmax.f32 %v8807, 0.0
    %v8908 = vmax.f32 %v8810, 0.0
    %v8909 = vmax.f32 %v8813, 0.0
    %v8910 = vmax.f32 %v8816, 0.0
    %v8911 = vmax.f32 %v8819, 0.0
    %v8912 = vmax.f32 %v8822, 0.0
    %v8913 = vmax.f32 %v8825, 0.0
    %v8914 = vmax.f32 %v8828, 0.0
    %v8915 = vmax.f32 %v8831, 0.0
    %v8916 = vmax.f32 %v8834, 0.0
    %v8917 = vmax.f32 %v8837, 0.0
    %v8918 = vmax.f32 %v8840, 0.0
    %v8919 = vmax.f32 %v8843, 0.0
    %v8920 = vld [vmem:[#allocation3] sm:$0xff]
    %v8921 = vld [vmem:[#allocation3 + $0x8] sm:$0xff]
    %v8922 = vld [vmem:[#allocation3 + $0x10] sm:$0xff]
    %v8923 = vld [vmem:[#allocation3 + $0x18] sm:$0xff]
    %v8924 = vld [vmem:[#allocation3 + $0x20] sm:$0xff]
    %v8925 = vld [vmem:[#allocation3 + $0x28] sm:$0xff]
    %v8926 = vld [vmem:[#allocation3 + $0x30] sm:$0xff]
    %v8927 = vld [vmem:[#allocation3 + $0x38] sm:$0xff]
    %v8928 = vld [vmem:[#allocation3 + $0x40] sm:$0xff]
    %v8929 = vld [vmem:[#allocation3 + $0x48] sm:$0xff]
    %v8930 = vld [vmem:[#allocation3 + $0x50] sm:$0xff]
    %v8931 = vld [vmem:[#allocation3 + $0x58] sm:$0xff]
    %v8932 = vld [vmem:[#allocation3 + $0x60] sm:$0xff]
    %v8933 = vld [vmem:[#allocation3 + $0x68] sm:$0xff]
    %v8934 = vld [vmem:[#allocation3 + $0x70] sm:$0xff]
    %v8935 = vld [vmem:[#allocation3 + $0x78] sm:$0xff]
    %v8936 = vld [vmem:[#allocation3 + $0x80] sm:$0xff]
    %v8937 = vld [vmem:[#allocation3 + $0x88] sm:$0xff]
    %v8938 = vld [vmem:[#allocation3 + $0x90] sm:$0xff]
    %v8939 = vld [vmem:[#allocation3 + $0x98] sm:$0xff]
    %v8940 = vld [vmem:[#allocation3 + $0xa0] sm:$0xff]
    %v8941 = vld [vmem:[#allocation3 + $0xa8] sm:$0xff]
    %v8942 = vld [vmem:[#allocation3 + $0xb0] sm:$0xff]
    %v8943 = vld [vmem:[#allocation3 + $0xb8] sm:$0xff]
    %v8944 = vld [vmem:[#allocation3 + $0xc0] sm:$0xff]
    %v8945 = vld [vmem:[#allocation3 + $0xc8] sm:$0xff]
    %v8946 = vld [vmem:[#allocation3 + $0xd0] sm:$0xff]
    %v8947 = vld [vmem:[#allocation3 + $0xd8] sm:$0xff]
    %v8948 = vld [vmem:[#allocation3 + $0xe0] sm:$0xff]
    %v8949 = vld [vmem:[#allocation3 + $0xe8] sm:$0xff]
    %v8950 = vld [vmem:[#allocation3 + $0xf0] sm:$0xff]
    %v8951 = vld [vmem:[#allocation3 + $0xf8] sm:$0xff]
    %v8952 = vld [vmem:[#allocation3 + $0x100] sm:$0xff]
    %v8953 = vld [vmem:[#allocation3 + $0x108] sm:$0xff]
    %v8954 = vld [vmem:[#allocation3 + $0x110] sm:$0xff]
    %v8955 = vld [vmem:[#allocation3 + $0x118] sm:$0xff]
    %v8956 = vld [vmem:[#allocation3 + $0x120] sm:$0xff]
    %v8957 = vld [vmem:[#allocation3 + $0x128] sm:$0xff]
    %v8958 = vld [vmem:[#allocation3 + $0x130] sm:$0xff]
    %v8959 = vld [vmem:[#allocation3 + $0x138] sm:$0xff]
    %v8960 = vld [vmem:[#allocation3 + $0x140] sm:$0xff]
    %v8961 = vld [vmem:[#allocation3 + $0x148] sm:$0xff]
    %v8962 = vld [vmem:[#allocation3 + $0x150] sm:$0xff]
    %v8963 = vld [vmem:[#allocation3 + $0x158] sm:$0xff]
    %v8964 = vld [vmem:[#allocation3 + $0x160] sm:$0xff]
    %v8965 = vld [vmem:[#allocation3 + $0x168] sm:$0xff]
    %v8966 = vld [vmem:[#allocation3 + $0x170] sm:$0xff]
    %v8967 = vld [vmem:[#allocation3 + $0x178] sm:$0xff]
    %v8968 = vld [vmem:[#allocation3 + $0x180] sm:$0xff]
    %v8969 = vld [vmem:[#allocation3 + $0x188] sm:$0xff]
    %v8970 = vld [vmem:[#allocation3 + $0x190] sm:$0xff]
    %v8971 = vld [vmem:[#allocation3 + $0x198] sm:$0xff]
    %v8972 = vld [vmem:[#allocation3 + $0x1a0] sm:$0xff]
    %v8973 = vld [vmem:[#allocation3 + $0x1a8] sm:$0xff]
    %v8974 = vld [vmem:[#allocation3 + $0x1b0] sm:$0xff]
    %v8975 = vld [vmem:[#allocation3 + $0x1b8] sm:$0xff]
    %v8976 = vld [vmem:[#allocation3 + $0x1c0] sm:$0xff]
    %v8977 = vld [vmem:[#allocation3 + $0x1c8] sm:$0xff]
    %v8978 = vld [vmem:[#allocation3 + $0x1d0] sm:$0xff]
    %v8979 = vld [vmem:[#allocation3 + $0x1d8] sm:$0xff]
    %v8980 = vld [vmem:[#allocation3 + $0x1e0] sm:$0xff]
    %v8981 = vld [vmem:[#allocation3 + $0x1e8] sm:$0xff]
    %v8982 = vld [vmem:[#allocation3 + $0x1f0] sm:$0xff]
    %v8983 = vld [vmem:[#allocation3 + $0x1f8] sm:$0xff]
    %v8984 = vld [vmem:[#allocation3 + $0x200] sm:$0xff]
    %v8985 = vld [vmem:[#allocation3 + $0x208] sm:$0xff]
    %v8986 = vld [vmem:[#allocation3 + $0x210] sm:$0xff]
    %v8987 = vld [vmem:[#allocation3 + $0x218] sm:$0xff]
    %v8988 = vld [vmem:[#allocation3 + $0x220] sm:$0xff]
    %v8989 = vld [vmem:[#allocation3 + $0x228] sm:$0xff]
    %v8990 = vld [vmem:[#allocation3 + $0x230] sm:$0xff]
    %v8991 = vld [vmem:[#allocation3 + $0x238] sm:$0xff]
    %v8992 = vld [vmem:[#allocation3 + $0x240] sm:$0xff]
    %v8993 = vld [vmem:[#allocation3 + $0x248] sm:$0xff]
    %v8994 = vld [vmem:[#allocation3 + $0x250] sm:$0xff]
    %v8995 = vld [vmem:[#allocation3 + $0x258] sm:$0xff]
    %v8996 = vld [vmem:[#allocation3 + $0x260] sm:$0xff]
    %v8997 = vld [vmem:[#allocation3 + $0x268] sm:$0xff]
    %v8998 = vld [vmem:[#allocation3 + $0x270] sm:$0xff]
    %v8999 = vld [vmem:[#allocation3 + $0x278] sm:$0xff]
    %v9000 = vld [vmem:[#allocation3 + $0x280] sm:$0xff]
    %v9001 = vld [vmem:[#allocation3 + $0x288] sm:$0xff]
    %v9002 = vld [vmem:[#allocation3 + $0x290] sm:$0xff]
    %v9003 = vld [vmem:[#allocation3 + $0x298] sm:$0xff]
    %v9004 = vld [vmem:[#allocation3 + $0x2a0] sm:$0xff]
    %v9005 = vld [vmem:[#allocation3 + $0x2a8] sm:$0xff]
    %v9006 = vld [vmem:[#allocation3 + $0x2b0] sm:$0xff]
    %v9007 = vld [vmem:[#allocation3 + $0x2b8] sm:$0xff]
    %v9008 = vld [vmem:[#allocation3 + $0x2c0] sm:$0xff]
    %v9009 = vld [vmem:[#allocation3 + $0x2c8] sm:$0xff]
    %v9010 = vld [vmem:[#allocation3 + $0x2d0] sm:$0xff]
    %v9011 = vld [vmem:[#allocation3 + $0x2d8] sm:$0xff]
    %v9012 = vld [vmem:[#allocation3 + $0x2e0] sm:$0xff]
    %v9013 = vld [vmem:[#allocation3 + $0x2e8] sm:$0xff]
    %v9014 = vld [vmem:[#allocation3 + $0x2f0] sm:$0xff]
    %v9015 = vld [vmem:[#allocation3 + $0x2f8] sm:$0xff]
    %v9016 = vld [vmem:[#allocation3 + $0x300] sm:$0xff]
    %v9017 = vld [vmem:[#allocation3 + $0x308] sm:$0xff]
    %v9018 = vld [vmem:[#allocation3 + $0x310] sm:$0xff]
    %v9019 = vld [vmem:[#allocation3 + $0x318] sm:$0xff]
    %v9020 = vld [vmem:[#allocation3 + $0x320] sm:$0xff]
    %v9021 = vld [vmem:[#allocation3 + $0x328] sm:$0xff]
    %v9022 = vld [vmem:[#allocation3 + $0x330] sm:$0xff]
    %v9023 = vld [vmem:[#allocation3 + $0x338] sm:$0xff]
    %v9024 = vld [vmem:[#allocation3 + $0x340] sm:$0xff]
    %v9025 = vld [vmem:[#allocation3 + $0x348] sm:$0xff]
    %v9026 = vld [vmem:[#allocation3 + $0x350] sm:$0xff]
    %v9027 = vld [vmem:[#allocation3 + $0x358] sm:$0xff]
    %v9028 = vld [vmem:[#allocation3 + $0x360] sm:$0xff]
    %v9029 = vld [vmem:[#allocation3 + $0x368] sm:$0xff]
    %v9030 = vld [vmem:[#allocation3 + $0x370] sm:$0xff]
    %v9031 = vld [vmem:[#allocation3 + $0x378] sm:$0xff]
    %v9032 = vld [vmem:[#allocation3 + $0x380] sm:$0xff]
    %v9033 = vld [vmem:[#allocation3 + $0x388] sm:$0xff]
    %v9034 = vld [vmem:[#allocation3 + $0x390] sm:$0xff]
    %v9035 = vld [vmem:[#allocation3 + $0x398] sm:$0xff]
    %v9036 = vld [vmem:[#allocation3 + $0x3a0] sm:$0xff]
    %v9037 = vld [vmem:[#allocation3 + $0x3a8] sm:$0xff]
    %v9038 = vld [vmem:[#allocation3 + $0x3b0] sm:$0xff]
    %v9039 = vld [vmem:[#allocation3 + $0x3b8] sm:$0xff]
    %v9040 = vld [vmem:[#allocation3 + $0x3c0] sm:$0xff]
    %v9041 = vld [vmem:[#allocation3 + $0x3c8] sm:$0xff]
    %v9042 = vld [vmem:[#allocation3 + $0x3d0] sm:$0xff]
    %v9043 = vld [vmem:[#allocation3 + $0x3d8] sm:$0xff]
    %v9044 = vld [vmem:[#allocation3 + $0x3e0] sm:$0xff]
    %v9045 = vld [vmem:[#allocation3 + $0x3e8] sm:$0xff]
    %v9046 = vld [vmem:[#allocation3 + $0x3f0] sm:$0xff]
    %v9047 = vld [vmem:[#allocation3 + $0x3f8] sm:$0xff]
    %v9048 = vld [vmem:[#allocation3 + $0x400] sm:$0xff]
    %v9049 = vld [vmem:[#allocation3 + $0x408] sm:$0xff]
    %v9050 = vld [vmem:[#allocation3 + $0x410] sm:$0xff]
    %v9051 = vld [vmem:[#allocation3 + $0x418] sm:$0xff]
    %v9052 = vld [vmem:[#allocation3 + $0x420] sm:$0xff]
    %v9053 = vld [vmem:[#allocation3 + $0x428] sm:$0xff]
    %v9054 = vld [vmem:[#allocation3 + $0x430] sm:$0xff]
    %v9055 = vld [vmem:[#allocation3 + $0x438] sm:$0xff]
    %v9056 = vld [vmem:[#allocation3 + $0x440] sm:$0xff]
    %v9057 = vld [vmem:[#allocation3 + $0x448] sm:$0xff]
    %v9058 = vld [vmem:[#allocation3 + $0x450] sm:$0xff]
    %v9059 = vld [vmem:[#allocation3 + $0x458] sm:$0xff]
    %v9060 = vld [vmem:[#allocation3 + $0x460] sm:$0xff]
    %v9061 = vld [vmem:[#allocation3 + $0x468] sm:$0xff]
    %v9062 = vld [vmem:[#allocation3 + $0x470] sm:$0xff]
    %v9063 = vld [vmem:[#allocation3 + $0x478] sm:$0xff]
    %v9064 = vld [vmem:[%s8] sm:$0x1]
    %v9066 = vperm.slane %v9064, 0
    %9068 = vmatpush.msra.mxu0 %v8935
    %9069 = vmatpush.msra.mxu0 %v8934
    %9070 = vmatpush.msra.mxu0 %v8933
    %9071 = vmatpush.msra.mxu0 %v8932
    %9072 = vmatpush.msra.mxu0 %v8931
    %9073 = vmatpush.msra.mxu0 %v8930
    %9074 = vmatpush.msra.mxu0 %v8929
    %9075 = vmatpush.msra.mxu0 %v8928
    %9076 = vmatpush.msra.mxu0 %v8927
    %9077 = vmatpush.msra.mxu0 %v8926
    %9078 = vmatpush.msra.mxu0 %v8925
    %9079 = vmatpush.msra.mxu0 %v8924
    %9080 = vmatpush.msra.mxu0 %v8923
    %9081 = vmatpush.msra.mxu0 %v8922
    %9082 = vmatpush.msra.mxu0 %v8921
    %9083 = vmatpush.msra.mxu0 %v8920
    %9084 = vmatmul.f32.gmra.mxu0 %v8845
    %v9085 = vpop.f32.mrf.mxu0
    %v9086 = vadd.f32 %v9066, %v9085
    %9087 = vmatmul.f32.gmra.mxu0 %v8846
    %v9088 = vpop.f32.mrf.mxu0
    %v9089 = vadd.f32 %v9066, %v9088
    %9090 = vmatmul.f32.gmra.mxu0 %v8847
    %v9091 = vpop.f32.mrf.mxu0
    %v9092 = vadd.f32 %v9066, %v9091
    %9093 = vmatmul.f32.gmra.mxu0 %v8848
    %v9094 = vpop.f32.mrf.mxu0
    %v9095 = vadd.f32 %v9066, %v9094
    %9096 = vmatmul.f32.gmra.mxu0 %v8849
    %v9097 = vpop.f32.mrf.mxu0
    %v9098 = vadd.f32 %v9066, %v9097
    %9099 = vmatmul.f32.gmra.mxu0 %v8850
    %v9100 = vpop.f32.mrf.mxu0
    %v9101 = vadd.f32 %v9066, %v9100
    %9102 = vmatmul.f32.gmra.mxu0 %v8851
    %v9103 = vpop.f32.mrf.mxu0
    %v9104 = vadd.f32 %v9066, %v9103
    %9105 = vmatmul.f32.gmra.mxu0 %v8852
    %v9106 = vpop.f32.mrf.mxu0
    %v9107 = vadd.f32 %v9066, %v9106
    %9108 = vmatmul.f32.gmra.mxu0 %v8853
    %v9109 = vpop.f32.mrf.mxu0
    %v9110 = vadd.f32 %v9066, %v9109
    %9111 = vmatmul.f32.gmra.mxu0 %v8860
    %v9112 = vpop.f32.mrf.mxu0
    %v9113 = vadd.f32 %v9066, %v9112
    %9114 = vmatmul.f32.gmra.mxu0 %v8861
    %v9115 = vpop.f32.mrf.mxu0
    %v9116 = vadd.f32 %v9066, %v9115
    %9117 = vmatmul.f32.gmra.mxu0 %v8862
    %v9118 = vpop.f32.mrf.mxu0
    %v9119 = vadd.f32 %v9066, %v9118
    %9120 = vmatmul.f32.gmra.mxu0 %v8863
    %v9121 = vpop.f32.mrf.mxu0
    %v9122 = vadd.f32 %v9066, %v9121
    %9123 = vmatmul.f32.gmra.mxu0 %v8864
    %v9124 = vpop.f32.mrf.mxu0
    %v9125 = vadd.f32 %v9066, %v9124
    %9126 = vmatmul.f32.gmra.mxu0 %v8865
    %v9127 = vpop.f32.mrf.mxu0
    %v9128 = vadd.f32 %v9066, %v9127
    %9129 = vmatmul.f32.gmra.mxu0 %v8866
    %v9130 = vpop.f32.mrf.mxu0
    %v9131 = vadd.f32 %v9066, %v9130
    %9132 = vmatmul.f32.gmra.mxu0 %v8867
    %v9133 = vpop.f32.mrf.mxu0
    %v9134 = vadd.f32 %v9066, %v9133
    %9135 = vmatmul.f32.gmra.mxu0 %v8868
    %v9136 = vpop.f32.mrf.mxu0
    %v9137 = vadd.f32 %v9066, %v9136
    %9138 = vmatmul.f32.gmra.mxu0 %v8875
    %v9139 = vpop.f32.mrf.mxu0
    %v9140 = vadd.f32 %v9066, %v9139
    %9141 = vmatmul.f32.gmra.mxu0 %v8876
    %v9142 = vpop.f32.mrf.mxu0
    %v9143 = vadd.f32 %v9066, %v9142
    %9144 = vmatmul.f32.gmra.mxu0 %v8877
    %v9145 = vpop.f32.mrf.mxu0
    %v9146 = vadd.f32 %v9066, %v9145
    %9147 = vmatmul.f32.gmra.mxu0 %v8878
    %v9148 = vpop.f32.mrf.mxu0
    %v9149 = vadd.f32 %v9066, %v9148
    %9150 = vmatmul.f32.gmra.mxu0 %v8879
    %v9151 = vpop.f32.mrf.mxu0
    %v9152 = vadd.f32 %v9066, %v9151
    %9153 = vmatmul.f32.gmra.mxu0 %v8880
    %v9154 = vpop.f32.mrf.mxu0
    %v9155 = vadd.f32 %v9066, %v9154
    %9156 = vmatmul.f32.gmra.mxu0 %v8881
    %v9157 = vpop.f32.mrf.mxu0
    %v9158 = vadd.f32 %v9066, %v9157
    %9159 = vmatmul.f32.gmra.mxu0 %v8882
    %v9160 = vpop.f32.mrf.mxu0
    %v9161 = vadd.f32 %v9066, %v9160
    %9162 = vmatmul.f32.gmra.mxu0 %v8883
    %v9163 = vpop.f32.mrf.mxu0
    %v9164 = vadd.f32 %v9066, %v9163
    %9165 = vdwg.mxu0
    %9166 = vmatpush.msra.mxu0 %v8951
    %9167 = vmatpush.msra.mxu0 %v8950
    %9168 = vmatpush.msra.mxu0 %v8949
    %9169 = vmatpush.msra.mxu0 %v8948
    %9170 = vmatpush.msra.mxu0 %v8947
    %9171 = vmatpush.msra.mxu0 %v8946
    %9172 = vmatpush.msra.mxu0 %v8945
    %9173 = vmatpush.msra.mxu0 %v8944
    %9174 = vmatpush.msra.mxu0 %v8943
    %9175 = vmatpush.msra.mxu0 %v8942
    %9176 = vmatpush.msra.mxu0 %v8941
    %9177 = vmatpush.msra.mxu0 %v8940
    %9178 = vmatpush.msra.mxu0 %v8939
    %9179 = vmatpush.msra.mxu0 %v8938
    %9180 = vmatpush.msra.mxu0 %v8937
    %9181 = vmatpush.msra.mxu0 %v8936
    %9182 = vmatmul.f32.gmra.mxu0 %v8848
    %v9183 = vpop.f32.mrf.mxu0
    %v9184 = vadd.f32 %v9086, %v9183
    %9185 = vmatmul.f32.gmra.mxu0 %v8849
    %v9186 = vpop.f32.mrf.mxu0
    %v9187 = vadd.f32 %v9089, %v9186
    %9188 = vmatmul.f32.gmra.mxu0 %v8850
    %v9189 = vpop.f32.mrf.mxu0
    %v9190 = vadd.f32 %v9092, %v9189
    %9191 = vmatmul.f32.gmra.mxu0 %v8851
    %v9192 = vpop.f32.mrf.mxu0
    %v9193 = vadd.f32 %v9095, %v9192
    %9194 = vmatmul.f32.gmra.mxu0 %v8852
    %v9195 = vpop.f32.mrf.mxu0
    %v9196 = vadd.f32 %v9098, %v9195
    %9197 = vmatmul.f32.gmra.mxu0 %v8853
    %v9198 = vpop.f32.mrf.mxu0
    %v9199 = vadd.f32 %v9101, %v9198
    %9200 = vmatmul.f32.gmra.mxu0 %v8854
    %v9201 = vpop.f32.mrf.mxu0
    %v9202 = vadd.f32 %v9104, %v9201
    %9203 = vmatmul.f32.gmra.mxu0 %v8855
    %v9204 = vpop.f32.mrf.mxu0
    %v9205 = vadd.f32 %v9107, %v9204
    %9206 = vmatmul.f32.gmra.mxu0 %v8856
    %v9207 = vpop.f32.mrf.mxu0
    %v9208 = vadd.f32 %v9110, %v9207
    %9209 = vmatmul.f32.gmra.mxu0 %v8863
    %v9210 = vpop.f32.mrf.mxu0
    %v9211 = vadd.f32 %v9113, %v9210
    %9212 = vmatmul.f32.gmra.mxu0 %v8864
    %v9213 = vpop.f32.mrf.mxu0
    %v9214 = vadd.f32 %v9116, %v9213
    %9215 = vmatmul.f32.gmra.mxu0 %v8865
    %v9216 = vpop.f32.mrf.mxu0
    %v9217 = vadd.f32 %v9119, %v9216
    %9218 = vmatmul.f32.gmra.mxu0 %v8866
    %v9219 = vpop.f32.mrf.mxu0
    %v9220 = vadd.f32 %v9122, %v9219
    %9221 = vmatmul.f32.gmra.mxu0 %v8867
    %v9222 = vpop.f32.mrf.mxu0
    %v9223 = vadd.f32 %v9125, %v9222
    %9224 = vmatmul.f32.gmra.mxu0 %v8868
    %v9225 = vpop.f32.mrf.mxu0
    %v9226 = vadd.f32 %v9128, %v9225
    %9227 = vmatmul.f32.gmra.mxu0 %v8869
    %v9228 = vpop.f32.mrf.mxu0
    %v9229 = vadd.f32 %v9131, %v9228
    %9230 = vmatmul.f32.gmra.mxu0 %v8870
    %v9231 = vpop.f32.mrf.mxu0
    %v9232 = vadd.f32 %v9134, %v9231
    %9233 = vmatmul.f32.gmra.mxu0 %v8871
    %v9234 = vpop.f32.mrf.mxu0
    %v9235 = vadd.f32 %v9137, %v9234
    %9236 = vmatmul.f32.gmra.mxu0 %v8878
    %v9237 = vpop.f32.mrf.mxu0
    %v9238 = vadd.f32 %v9140, %v9237
    %9239 = vmatmul.f32.gmra.mxu0 %v8879
    %v9240 = vpop.f32.mrf.mxu0
    %v9241 = vadd.f32 %v9143, %v9240
    %9242 = vmatmul.f32.gmra.mxu0 %v8880
    %v9243 = vpop.f32.mrf.mxu0
    %v9244 = vadd.f32 %v9146, %v9243
    %9245 = vmatmul.f32.gmra.mxu0 %v8881
    %v9246 = vpop.f32.mrf.mxu0
    %v9247 = vadd.f32 %v9149, %v9246
    %9248 = vmatmul.f32.gmra.mxu0 %v8882
    %v9249 = vpop.f32.mrf.mxu0
    %v9250 = vadd.f32 %v9152, %v9249
    %9251 = vmatmul.f32.gmra.mxu0 %v8883
    %v9252 = vpop.f32.mrf.mxu0
    %v9253 = vadd.f32 %v9155, %v9252
    %9254 = vmatmul.f32.gmra.mxu0 %v8884
    %v9255 = vpop.f32.mrf.mxu0
    %v9256 = vadd.f32 %v9158, %v9255
    %9257 = vmatmul.f32.gmra.mxu0 %v8885
    %v9258 = vpop.f32.mrf.mxu0
    %v9259 = vadd.f32 %v9161, %v9258
    %9260 = vmatmul.f32.gmra.mxu0 %v8886
    %v9261 = vpop.f32.mrf.mxu0
    %v9262 = vadd.f32 %v9164, %v9261
    %9263 = vdwg.mxu0
    %9264 = vmatpush.msra.mxu0 %v8967
    %9265 = vmatpush.msra.mxu0 %v8966
    %9266 = vmatpush.msra.mxu0 %v8965
    %9267 = vmatpush.msra.mxu0 %v8964
    %9268 = vmatpush.msra.mxu0 %v8963
    %9269 = vmatpush.msra.mxu0 %v8962
    %9270 = vmatpush.msra.mxu0 %v8961
    %9271 = vmatpush.msra.mxu0 %v8960
    %9272 = vmatpush.msra.mxu0 %v8959
    %9273 = vmatpush.msra.mxu0 %v8958
    %9274 = vmatpush.msra.mxu0 %v8957
    %9275 = vmatpush.msra.mxu0 %v8956
    %9276 = vmatpush.msra.mxu0 %v8955
    %9277 = vmatpush.msra.mxu0 %v8954
    %9278 = vmatpush.msra.mxu0 %v8953
    %9279 = vmatpush.msra.mxu0 %v8952
    %9280 = vmatmul.f32.gmra.mxu0 %v8851
    %v9281 = vpop.f32.mrf.mxu0
    %v9282 = vadd.f32 %v9184, %v9281
    %9283 = vmatmul.f32.gmra.mxu0 %v8852
    %v9284 = vpop.f32.mrf.mxu0
    %v9285 = vadd.f32 %v9187, %v9284
    %9286 = vmatmul.f32.gmra.mxu0 %v8853
    %v9287 = vpop.f32.mrf.mxu0
    %v9288 = vadd.f32 %v9190, %v9287
    %9289 = vmatmul.f32.gmra.mxu0 %v8854
    %v9290 = vpop.f32.mrf.mxu0
    %v9291 = vadd.f32 %v9193, %v9290
    %9292 = vmatmul.f32.gmra.mxu0 %v8855
    %v9293 = vpop.f32.mrf.mxu0
    %v9294 = vadd.f32 %v9196, %v9293
    %9295 = vmatmul.f32.gmra.mxu0 %v8856
    %v9296 = vpop.f32.mrf.mxu0
    %v9297 = vadd.f32 %v9199, %v9296
    %9298 = vmatmul.f32.gmra.mxu0 %v8857
    %v9299 = vpop.f32.mrf.mxu0
    %v9300 = vadd.f32 %v9202, %v9299
    %9301 = vmatmul.f32.gmra.mxu0 %v8858
    %v9302 = vpop.f32.mrf.mxu0
    %v9303 = vadd.f32 %v9205, %v9302
    %9304 = vmatmul.f32.gmra.mxu0 %v8859
    %v9305 = vpop.f32.mrf.mxu0
    %v9306 = vadd.f32 %v9208, %v9305
    %9307 = vmatmul.f32.gmra.mxu0 %v8866
    %v9308 = vpop.f32.mrf.mxu0
    %v9309 = vadd.f32 %v9211, %v9308
    %9310 = vmatmul.f32.gmra.mxu0 %v8867
    %v9311 = vpop.f32.mrf.mxu0
    %v9312 = vadd.f32 %v9214, %v9311
    %9313 = vmatmul.f32.gmra.mxu0 %v8868
    %v9314 = vpop.f32.mrf.mxu0
    %v9315 = vadd.f32 %v9217, %v9314
    %9316 = vmatmul.f32.gmra.mxu0 %v8869
    %v9317 = vpop.f32.mrf.mxu0
    %v9318 = vadd.f32 %v9220, %v9317
    %9319 = vmatmul.f32.gmra.mxu0 %v8870
    %v9320 = vpop.f32.mrf.mxu0
    %v9321 = vadd.f32 %v9223, %v9320
    %9322 = vmatmul.f32.gmra.mxu0 %v8871
    %v9323 = vpop.f32.mrf.mxu0
    %v9324 = vadd.f32 %v9226, %v9323
    %9325 = vmatmul.f32.gmra.mxu0 %v8872
    %v9326 = vpop.f32.mrf.mxu0
    %v9327 = vadd.f32 %v9229, %v9326
    %9328 = vmatmul.f32.gmra.mxu0 %v8873
    %v9329 = vpop.f32.mrf.mxu0
    %v9330 = vadd.f32 %v9232, %v9329
    %9331 = vmatmul.f32.gmra.mxu0 %v8874
    %v9332 = vpop.f32.mrf.mxu0
    %v9333 = vadd.f32 %v9235, %v9332
    %9334 = vmatmul.f32.gmra.mxu0 %v8881
    %v9335 = vpop.f32.mrf.mxu0
    %v9336 = vadd.f32 %v9238, %v9335
    %9337 = vmatmul.f32.gmra.mxu0 %v8882
    %v9338 = vpop.f32.mrf.mxu0
    %v9339 = vadd.f32 %v9241, %v9338
    %9340 = vmatmul.f32.gmra.mxu0 %v8883
    %v9341 = vpop.f32.mrf.mxu0
    %v9342 = vadd.f32 %v9244, %v9341
    %9343 = vmatmul.f32.gmra.mxu0 %v8884
    %v9344 = vpop.f32.mrf.mxu0
    %v9345 = vadd.f32 %v9247, %v9344
    %9346 = vmatmul.f32.gmra.mxu0 %v8885
    %v9347 = vpop.f32.mrf.mxu0
    %v9348 = vadd.f32 %v9250, %v9347
    %9349 = vmatmul.f32.gmra.mxu0 %v8886
    %v9350 = vpop.f32.mrf.mxu0
    %v9351 = vadd.f32 %v9253, %v9350
    %9352 = vmatmul.f32.gmra.mxu0 %v8887
    %v9353 = vpop.f32.mrf.mxu0
    %v9354 = vadd.f32 %v9256, %v9353
    %9355 = vmatmul.f32.gmra.mxu0 %v8888
    %v9356 = vpop.f32.mrf.mxu0
    %v9357 = vadd.f32 %v9259, %v9356
    %9358 = vmatmul.f32.gmra.mxu0 %v8889
    %v9359 = vpop.f32.mrf.mxu0
    %v9360 = vadd.f32 %v9262, %v9359
    %9361 = vdwg.mxu0
    %9362 = vmatpush.msra.mxu0 %v8983
    %9363 = vmatpush.msra.mxu0 %v8982
    %9364 = vmatpush.msra.mxu0 %v8981
    %9365 = vmatpush.msra.mxu0 %v8980
    %9366 = vmatpush.msra.mxu0 %v8979
    %9367 = vmatpush.msra.mxu0 %v8978
    %9368 = vmatpush.msra.mxu0 %v8977
    %9369 = vmatpush.msra.mxu0 %v8976
    %9370 = vmatpush.msra.mxu0 %v8975
    %9371 = vmatpush.msra.mxu0 %v8974
    %9372 = vmatpush.msra.mxu0 %v8973
    %9373 = vmatpush.msra.mxu0 %v8972
    %9374 = vmatpush.msra.mxu0 %v8971
    %9375 = vmatpush.msra.mxu0 %v8970
    %9376 = vmatpush.msra.mxu0 %v8969
    %9377 = vmatpush.msra.mxu0 %v8968
    %9378 = vmatmul.f32.gmra.mxu0 %v8860
    %v9379 = vpop.f32.mrf.mxu0
    %v9380 = vadd.f32 %v9282, %v9379
    %9381 = vmatmul.f32.gmra.mxu0 %v8861
    %v9382 = vpop.f32.mrf.mxu0
    %v9383 = vadd.f32 %v9285, %v9382
    %9384 = vmatmul.f32.gmra.mxu0 %v8862
    %v9385 = vpop.f32.mrf.mxu0
    %v9386 = vadd.f32 %v9288, %v9385
    %9387 = vmatmul.f32.gmra.mxu0 %v8863
    %v9388 = vpop.f32.mrf.mxu0
    %v9389 = vadd.f32 %v9291, %v9388
    %9390 = vmatmul.f32.gmra.mxu0 %v8864
    %v9391 = vpop.f32.mrf.mxu0
    %v9392 = vadd.f32 %v9294, %v9391
    %9393 = vmatmul.f32.gmra.mxu0 %v8865
    %v9394 = vpop.f32.mrf.mxu0
    %v9395 = vadd.f32 %v9297, %v9394
    %9396 = vmatmul.f32.gmra.mxu0 %v8866
    %v9397 = vpop.f32.mrf.mxu0
    %v9398 = vadd.f32 %v9300, %v9397
    %9399 = vmatmul.f32.gmra.mxu0 %v8867
    %v9400 = vpop.f32.mrf.mxu0
    %v9401 = vadd.f32 %v9303, %v9400
    %9402 = vmatmul.f32.gmra.mxu0 %v8868
    %v9403 = vpop.f32.mrf.mxu0
    %v9404 = vadd.f32 %v9306, %v9403
    %9405 = vmatmul.f32.gmra.mxu0 %v8875
    %v9406 = vpop.f32.mrf.mxu0
    %v9407 = vadd.f32 %v9309, %v9406
    %9408 = vmatmul.f32.gmra.mxu0 %v8876
    %v9409 = vpop.f32.mrf.mxu0
    %v9410 = vadd.f32 %v9312, %v9409
    %9411 = vmatmul.f32.gmra.mxu0 %v8877
    %v9412 = vpop.f32.mrf.mxu0
    %v9413 = vadd.f32 %v9315, %v9412
    %9414 = vmatmul.f32.gmra.mxu0 %v8878
    %v9415 = vpop.f32.mrf.mxu0
    %v9416 = vadd.f32 %v9318, %v9415
    %9417 = vmatmul.f32.gmra.mxu0 %v8879
    %v9418 = vpop.f32.mrf.mxu0
    %v9419 = vadd.f32 %v9321, %v9418
    %9420 = vmatmul.f32.gmra.mxu0 %v8880
    %v9421 = vpop.f32.mrf.mxu0
    %v9422 = vadd.f32 %v9324, %v9421
    %9423 = vmatmul.f32.gmra.mxu0 %v8881
    %v9424 = vpop.f32.mrf.mxu0
    %v9425 = vadd.f32 %v9327, %v9424
    %9426 = vmatmul.f32.gmra.mxu0 %v8882
    %v9427 = vpop.f32.mrf.mxu0
    %v9428 = vadd.f32 %v9330, %v9427
    %9429 = vmatmul.f32.gmra.mxu0 %v8883
    %v9430 = vpop.f32.mrf.mxu0
    %v9431 = vadd.f32 %v9333, %v9430
    %9432 = vmatmul.f32.gmra.mxu0 %v8890
    %v9433 = vpop.f32.mrf.mxu0
    %v9434 = vadd.f32 %v9336, %v9433
    %9435 = vmatmul.f32.gmra.mxu0 %v8891
    %v9436 = vpop.f32.mrf.mxu0
    %v9437 = vadd.f32 %v9339, %v9436
    %9438 = vmatmul.f32.gmra.mxu0 %v8892
    %v9439 = vpop.f32.mrf.mxu0
    %v9440 = vadd.f32 %v9342, %v9439
    %9441 = vmatmul.f32.gmra.mxu0 %v8893
    %v9442 = vpop.f32.mrf.mxu0
    %v9443 = vadd.f32 %v9345, %v9442
    %9444 = vmatmul.f32.gmra.mxu0 %v8894
    %v9445 = vpop.f32.mrf.mxu0
    %v9446 = vadd.f32 %v9348, %v9445
    %9447 = vmatmul.f32.gmra.mxu0 %v8895
    %v9448 = vpop.f32.mrf.mxu0
    %v9449 = vadd.f32 %v9351, %v9448
    %9450 = vmatmul.f32.gmra.mxu0 %v8896
    %v9451 = vpop.f32.mrf.mxu0
    %v9452 = vadd.f32 %v9354, %v9451
    %9453 = vmatmul.f32.gmra.mxu0 %v8897
    %v9454 = vpop.f32.mrf.mxu0
    %v9455 = vadd.f32 %v9357, %v9454
    %9456 = vmatmul.f32.gmra.mxu0 %v8898
    %v9457 = vpop.f32.mrf.mxu0
    %v9458 = vadd.f32 %v9360, %v9457
    %9459 = vdwg.mxu0
    %9460 = vmatpush.msra.mxu0 %v8999
    %9461 = vmatpush.msra.mxu0 %v8998
    %9462 = vmatpush.msra.mxu0 %v8997
    %9463 = vmatpush.msra.mxu0 %v8996
    %9464 = vmatpush.msra.mxu0 %v8995
    %9465 = vmatpush.msra.mxu0 %v8994
    %9466 = vmatpush.msra.mxu0 %v8993
    %9467 = vmatpush.msra.mxu0 %v8992
    %9468 = vmatpush.msra.mxu0 %v8991
    %9469 = vmatpush.msra.mxu0 %v8990
    %9470 = vmatpush.msra.mxu0 %v8989
    %9471 = vmatpush.msra.mxu0 %v8988
    %9472 = vmatpush.msra.mxu0 %v8987
    %9473 = vmatpush.msra.mxu0 %v8986
    %9474 = vmatpush.msra.mxu0 %v8985
    %9475 = vmatpush.msra.mxu0 %v8984
    %9476 = vmatmul.f32.gmra.mxu0 %v8863
    %v9477 = vpop.f32.mrf.mxu0
    %v9478 = vadd.f32 %v9380, %v9477
    %9479 = vmatmul.f32.gmra.mxu0 %v8864
    %v9480 = vpop.f32.mrf.mxu0
    %v9481 = vadd.f32 %v9383, %v9480
    %9482 = vmatmul.f32.gmra.mxu0 %v8865
    %v9483 = vpop.f32.mrf.mxu0
    %v9484 = vadd.f32 %v9386, %v9483
    %9485 = vmatmul.f32.gmra.mxu0 %v8866
    %v9486 = vpop.f32.mrf.mxu0
    %v9487 = vadd.f32 %v9389, %v9486
    %9488 = vmatmul.f32.gmra.mxu0 %v8867
    %v9489 = vpop.f32.mrf.mxu0
    %v9490 = vadd.f32 %v9392, %v9489
    %9491 = vmatmul.f32.gmra.mxu0 %v8868
    %v9492 = vpop.f32.mrf.mxu0
    %v9493 = vadd.f32 %v9395, %v9492
    %9494 = vmatmul.f32.gmra.mxu0 %v8869
    %v9495 = vpop.f32.mrf.mxu0
    %v9496 = vadd.f32 %v9398, %v9495
    %9497 = vmatmul.f32.gmra.mxu0 %v8870
    %v9498 = vpop.f32.mrf.mxu0
    %v9499 = vadd.f32 %v9401, %v9498
    %9500 = vmatmul.f32.gmra.mxu0 %v8871
    %v9501 = vpop.f32.mrf.mxu0
    %v9502 = vadd.f32 %v9404, %v9501
    %9503 = vmatmul.f32.gmra.mxu0 %v8878
    %v9504 = vpop.f32.mrf.mxu0
    %v9505 = vadd.f32 %v9407, %v9504
    %9506 = vmatmul.f32.gmra.mxu0 %v8879
    %v9507 = vpop.f32.mrf.mxu0
    %v9508 = vadd.f32 %v9410, %v9507
    %9509 = vmatmul.f32.gmra.mxu0 %v8880
    %v9510 = vpop.f32.mrf.mxu0
    %v9511 = vadd.f32 %v9413, %v9510
    %9512 = vmatmul.f32.gmra.mxu0 %v8881
    %v9513 = vpop.f32.mrf.mxu0
    %v9514 = vadd.f32 %v9416, %v9513
    %9515 = vmatmul.f32.gmra.mxu0 %v8882
    %v9516 = vpop.f32.mrf.mxu0
    %v9517 = vadd.f32 %v9419, %v9516
    %9518 = vmatmul.f32.gmra.mxu0 %v8883
    %v9519 = vpop.f32.mrf.mxu0
    %v9520 = vadd.f32 %v9422, %v9519
    %9521 = vmatmul.f32.gmra.mxu0 %v8884
    %v9522 = vpop.f32.mrf.mxu0
    %v9523 = vadd.f32 %v9425, %v9522
    %9524 = vmatmul.f32.gmra.mxu0 %v8885
    %v9525 = vpop.f32.mrf.mxu0
    %v9526 = vadd.f32 %v9428, %v9525
    %9527 = vmatmul.f32.gmra.mxu0 %v8886
    %v9528 = vpop.f32.mrf.mxu0
    %v9529 = vadd.f32 %v9431, %v9528
    %9530 = vmatmul.f32.gmra.mxu0 %v8893
    %v9531 = vpop.f32.mrf.mxu0
    %v9532 = vadd.f32 %v9434, %v9531
    %9533 = vmatmul.f32.gmra.mxu0 %v8894
    %v9534 = vpop.f32.mrf.mxu0
    %v9535 = vadd.f32 %v9437, %v9534
    %9536 = vmatmul.f32.gmra.mxu0 %v8895
    %v9537 = vpop.f32.mrf.mxu0
    %v9538 = vadd.f32 %v9440, %v9537
    %9539 = vmatmul.f32.gmra.mxu0 %v8896
    %v9540 = vpop.f32.mrf.mxu0
    %v9541 = vadd.f32 %v9443, %v9540
    %9542 = vmatmul.f32.gmra.mxu0 %v8897
    %v9543 = vpop.f32.mrf.mxu0
    %v9544 = vadd.f32 %v9446, %v9543
    %9545 = vmatmul.f32.gmra.mxu0 %v8898
    %v9546 = vpop.f32.mrf.mxu0
    %v9547 = vadd.f32 %v9449, %v9546
    %9548 = vmatmul.f32.gmra.mxu0 %v8899
    %v9549 = vpop.f32.mrf.mxu0
    %v9550 = vadd.f32 %v9452, %v9549
    %9551 = vmatmul.f32.gmra.mxu0 %v8900
    %v9552 = vpop.f32.mrf.mxu0
    %v9553 = vadd.f32 %v9455, %v9552
    %9554 = vmatmul.f32.gmra.mxu0 %v8901
    %v9555 = vpop.f32.mrf.mxu0
    %v9556 = vadd.f32 %v9458, %v9555
    %9557 = vdwg.mxu0
    %9558 = vmatpush.msra.mxu0 %v9015
    %9559 = vmatpush.msra.mxu0 %v9014
    %9560 = vmatpush.msra.mxu0 %v9013
    %9561 = vmatpush.msra.mxu0 %v9012
    %9562 = vmatpush.msra.mxu0 %v9011
    %9563 = vmatpush.msra.mxu0 %v9010
    %9564 = vmatpush.msra.mxu0 %v9009
    %9565 = vmatpush.msra.mxu0 %v9008
    %9566 = vmatpush.msra.mxu0 %v9007
    %9567 = vmatpush.msra.mxu0 %v9006
    %9568 = vmatpush.msra.mxu0 %v9005
    %9569 = vmatpush.msra.mxu0 %v9004
    %9570 = vmatpush.msra.mxu0 %v9003
    %9571 = vmatpush.msra.mxu0 %v9002
    %9572 = vmatpush.msra.mxu0 %v9001
    %9573 = vmatpush.msra.mxu0 %v9000
    %9574 = vmatmul.f32.gmra.mxu0 %v8866
    %v9575 = vpop.f32.mrf.mxu0
    %v9576 = vadd.f32 %v9478, %v9575
    %9577 = vmatmul.f32.gmra.mxu0 %v8867
    %v9578 = vpop.f32.mrf.mxu0
    %v9579 = vadd.f32 %v9481, %v9578
    %9580 = vmatmul.f32.gmra.mxu0 %v8868
    %v9581 = vpop.f32.mrf.mxu0
    %v9582 = vadd.f32 %v9484, %v9581
    %9583 = vmatmul.f32.gmra.mxu0 %v8869
    %v9584 = vpop.f32.mrf.mxu0
    %v9585 = vadd.f32 %v9487, %v9584
    %9586 = vmatmul.f32.gmra.mxu0 %v8870
    %v9587 = vpop.f32.mrf.mxu0
    %v9588 = vadd.f32 %v9490, %v9587
    %9589 = vmatmul.f32.gmra.mxu0 %v8871
    %v9590 = vpop.f32.mrf.mxu0
    %v9591 = vadd.f32 %v9493, %v9590
    %9592 = vmatmul.f32.gmra.mxu0 %v8872
    %v9593 = vpop.f32.mrf.mxu0
    %v9594 = vadd.f32 %v9496, %v9593
    %9595 = vmatmul.f32.gmra.mxu0 %v8873
    %v9596 = vpop.f32.mrf.mxu0
    %v9597 = vadd.f32 %v9499, %v9596
    %9598 = vmatmul.f32.gmra.mxu0 %v8874
    %v9599 = vpop.f32.mrf.mxu0
    %v9600 = vadd.f32 %v9502, %v9599
    %9601 = vmatmul.f32.gmra.mxu0 %v8881
    %v9602 = vpop.f32.mrf.mxu0
    %v9603 = vadd.f32 %v9505, %v9602
    %9604 = vmatmul.f32.gmra.mxu0 %v8882
    %v9605 = vpop.f32.mrf.mxu0
    %v9606 = vadd.f32 %v9508, %v9605
    %9607 = vmatmul.f32.gmra.mxu0 %v8883
    %v9608 = vpop.f32.mrf.mxu0
    %v9609 = vadd.f32 %v9511, %v9608
    %9610 = vmatmul.f32.gmra.mxu0 %v8884
    %v9611 = vpop.f32.mrf.mxu0
    %v9612 = vadd.f32 %v9514, %v9611
    %9613 = vmatmul.f32.gmra.mxu0 %v8885
    %v9614 = vpop.f32.mrf.mxu0
    %v9615 = vadd.f32 %v9517, %v9614
    %9616 = vmatmul.f32.gmra.mxu0 %v8886
    %v9617 = vpop.f32.mrf.mxu0
    %v9618 = vadd.f32 %v9520, %v9617
    %9619 = vmatmul.f32.gmra.mxu0 %v8887
    %v9620 = vpop.f32.mrf.mxu0
    %v9621 = vadd.f32 %v9523, %v9620
    %9622 = vmatmul.f32.gmra.mxu0 %v8888
    %v9623 = vpop.f32.mrf.mxu0
    %v9624 = vadd.f32 %v9526, %v9623
    %9625 = vmatmul.f32.gmra.mxu0 %v8889
    %v9626 = vpop.f32.mrf.mxu0
    %v9627 = vadd.f32 %v9529, %v9626
    %9628 = vmatmul.f32.gmra.mxu0 %v8896
    %v9629 = vpop.f32.mrf.mxu0
    %v9630 = vadd.f32 %v9532, %v9629
    %9631 = vmatmul.f32.gmra.mxu0 %v8897
    %v9632 = vpop.f32.mrf.mxu0
    %v9633 = vadd.f32 %v9535, %v9632
    %9634 = vmatmul.f32.gmra.mxu0 %v8898
    %v9635 = vpop.f32.mrf.mxu0
    %v9636 = vadd.f32 %v9538, %v9635
    %9637 = vmatmul.f32.gmra.mxu0 %v8899
    %v9638 = vpop.f32.mrf.mxu0
    %v9639 = vadd.f32 %v9541, %v9638
    %9640 = vmatmul.f32.gmra.mxu0 %v8900
    %v9641 = vpop.f32.mrf.mxu0
    %v9642 = vadd.f32 %v9544, %v9641
    %9643 = vmatmul.f32.gmra.mxu0 %v8901
    %v9644 = vpop.f32.mrf.mxu0
    %v9645 = vadd.f32 %v9547, %v9644
    %9646 = vmatmul.f32.gmra.mxu0 %v8902
    %v9647 = vpop.f32.mrf.mxu0
    %v9648 = vadd.f32 %v9550, %v9647
    %9649 = vmatmul.f32.gmra.mxu0 %v8903
    %v9650 = vpop.f32.mrf.mxu0
    %v9651 = vadd.f32 %v9553, %v9650
    %9652 = vmatmul.f32.gmra.mxu0 %v8904
    %v9653 = vpop.f32.mrf.mxu0
    %v9654 = vadd.f32 %v9556, %v9653
    %9655 = vdwg.mxu0
    %9656 = vmatpush.msra.mxu0 %v9031
    %9657 = vmatpush.msra.mxu0 %v9030
    %9658 = vmatpush.msra.mxu0 %v9029
    %9659 = vmatpush.msra.mxu0 %v9028
    %9660 = vmatpush.msra.mxu0 %v9027
    %9661 = vmatpush.msra.mxu0 %v9026
    %9662 = vmatpush.msra.mxu0 %v9025
    %9663 = vmatpush.msra.mxu0 %v9024
    %9664 = vmatpush.msra.mxu0 %v9023
    %9665 = vmatpush.msra.mxu0 %v9022
    %9666 = vmatpush.msra.mxu0 %v9021
    %9667 = vmatpush.msra.mxu0 %v9020
    %9668 = vmatpush.msra.mxu0 %v9019
    %9669 = vmatpush.msra.mxu0 %v9018
    %9670 = vmatpush.msra.mxu0 %v9017
    %9671 = vmatpush.msra.mxu0 %v9016
    %9672 = vmatmul.f32.gmra.mxu0 %v8875
    %v9673 = vpop.f32.mrf.mxu0
    %v9674 = vadd.f32 %v9576, %v9673
    %9675 = vmatmul.f32.gmra.mxu0 %v8876
    %v9676 = vpop.f32.mrf.mxu0
    %v9677 = vadd.f32 %v9579, %v9676
    %9678 = vmatmul.f32.gmra.mxu0 %v8877
    %v9679 = vpop.f32.mrf.mxu0
    %v9680 = vadd.f32 %v9582, %v9679
    %9681 = vmatmul.f32.gmra.mxu0 %v8878
    %v9682 = vpop.f32.mrf.mxu0
    %v9683 = vadd.f32 %v9585, %v9682
    %9684 = vmatmul.f32.gmra.mxu0 %v8879
    %v9685 = vpop.f32.mrf.mxu0
    %v9686 = vadd.f32 %v9588, %v9685
    %9687 = vmatmul.f32.gmra.mxu0 %v8880
    %v9688 = vpop.f32.mrf.mxu0
    %v9689 = vadd.f32 %v9591, %v9688
    %9690 = vmatmul.f32.gmra.mxu0 %v8881
    %v9691 = vpop.f32.mrf.mxu0
    %v9692 = vadd.f32 %v9594, %v9691
    %9693 = vmatmul.f32.gmra.mxu0 %v8882
    %v9694 = vpop.f32.mrf.mxu0
    %v9695 = vadd.f32 %v9597, %v9694
    %9696 = vmatmul.f32.gmra.mxu0 %v8883
    %v9697 = vpop.f32.mrf.mxu0
    %v9698 = vadd.f32 %v9600, %v9697
    %9699 = vmatmul.f32.gmra.mxu0 %v8890
    %v9700 = vpop.f32.mrf.mxu0
    %v9701 = vadd.f32 %v9603, %v9700
    %9702 = vmatmul.f32.gmra.mxu0 %v8891
    %v9703 = vpop.f32.mrf.mxu0
    %v9704 = vadd.f32 %v9606, %v9703
    %9705 = vmatmul.f32.gmra.mxu0 %v8892
    %v9706 = vpop.f32.mrf.mxu0
    %v9707 = vadd.f32 %v9609, %v9706
    %9708 = vmatmul.f32.gmra.mxu0 %v8893
    %v9709 = vpop.f32.mrf.mxu0
    %v9710 = vadd.f32 %v9612, %v9709
    %9711 = vmatmul.f32.gmra.mxu0 %v8894
    %v9712 = vpop.f32.mrf.mxu0
    %v9713 = vadd.f32 %v9615, %v9712
    %9714 = vmatmul.f32.gmra.mxu0 %v8895
    %v9715 = vpop.f32.mrf.mxu0
    %v9716 = vadd.f32 %v9618, %v9715
    %9717 = vmatmul.f32.gmra.mxu0 %v8896
    %v9718 = vpop.f32.mrf.mxu0
    %v9719 = vadd.f32 %v9621, %v9718
    %9720 = vmatmul.f32.gmra.mxu0 %v8897
    %v9721 = vpop.f32.mrf.mxu0
    %v9722 = vadd.f32 %v9624, %v9721
    %9723 = vmatmul.f32.gmra.mxu0 %v8898
    %v9724 = vpop.f32.mrf.mxu0
    %v9725 = vadd.f32 %v9627, %v9724
    %9726 = vmatmul.f32.gmra.mxu0 %v8905
    %v9727 = vpop.f32.mrf.mxu0
    %v9728 = vadd.f32 %v9630, %v9727
    %9729 = vmatmul.f32.gmra.mxu0 %v8906
    %v9730 = vpop.f32.mrf.mxu0
    %v9731 = vadd.f32 %v9633, %v9730
    %9732 = vmatmul.f32.gmra.mxu0 %v8907
    %v9733 = vpop.f32.mrf.mxu0
    %v9734 = vadd.f32 %v9636, %v9733
    %9735 = vmatmul.f32.gmra.mxu0 %v8908
    %v9736 = vpop.f32.mrf.mxu0
    %v9737 = vadd.f32 %v9639, %v9736
    %9738 = vmatmul.f32.gmra.mxu0 %v8909
    %v9739 = vpop.f32.mrf.mxu0
    %v9740 = vadd.f32 %v9642, %v9739
    %9741 = vmatmul.f32.gmra.mxu0 %v8910
    %v9742 = vpop.f32.mrf.mxu0
    %v9743 = vadd.f32 %v9645, %v9742
    %9744 = vmatmul.f32.gmra.mxu0 %v8911
    %v9745 = vpop.f32.mrf.mxu0
    %v9746 = vadd.f32 %v9648, %v9745
    %9747 = vmatmul.f32.gmra.mxu0 %v8912
    %v9748 = vpop.f32.mrf.mxu0
    %v9749 = vadd.f32 %v9651, %v9748
    %9750 = vmatmul.f32.gmra.mxu0 %v8913
    %v9751 = vpop.f32.mrf.mxu0
    %v9752 = vadd.f32 %v9654, %v9751
    %9753 = vdwg.mxu0
    %9754 = vmatpush.msra.mxu0 %v9047
    %9755 = vmatpush.msra.mxu0 %v9046
    %9756 = vmatpush.msra.mxu0 %v9045
    %9757 = vmatpush.msra.mxu0 %v9044
    %9758 = vmatpush.msra.mxu0 %v9043
    %9759 = vmatpush.msra.mxu0 %v9042
    %9760 = vmatpush.msra.mxu0 %v9041
    %9761 = vmatpush.msra.mxu0 %v9040
    %9762 = vmatpush.msra.mxu0 %v9039
    %9763 = vmatpush.msra.mxu0 %v9038
    %9764 = vmatpush.msra.mxu0 %v9037
    %9765 = vmatpush.msra.mxu0 %v9036
    %9766 = vmatpush.msra.mxu0 %v9035
    %9767 = vmatpush.msra.mxu0 %v9034
    %9768 = vmatpush.msra.mxu0 %v9033
    %9769 = vmatpush.msra.mxu0 %v9032
    %9770 = vmatmul.f32.gmra.mxu0 %v8878
    %v9771 = vpop.f32.mrf.mxu0
    %v9772 = vadd.f32 %v9674, %v9771
    %9773 = vmatmul.f32.gmra.mxu0 %v8879
    %v9774 = vpop.f32.mrf.mxu0
    %v9775 = vadd.f32 %v9677, %v9774
    %9776 = vmatmul.f32.gmra.mxu0 %v8880
    %v9777 = vpop.f32.mrf.mxu0
    %v9778 = vadd.f32 %v9680, %v9777
    %9779 = vmatmul.f32.gmra.mxu0 %v8881
    %v9780 = vpop.f32.mrf.mxu0
    %v9781 = vadd.f32 %v9683, %v9780
    %9782 = vmatmul.f32.gmra.mxu0 %v8882
    %v9783 = vpop.f32.mrf.mxu0
    %v9784 = vadd.f32 %v9686, %v9783
    %9785 = vmatmul.f32.gmra.mxu0 %v8883
    %v9786 = vpop.f32.mrf.mxu0
    %v9787 = vadd.f32 %v9689, %v9786
    %9788 = vmatmul.f32.gmra.mxu0 %v8884
    %v9789 = vpop.f32.mrf.mxu0
    %v9790 = vadd.f32 %v9692, %v9789
    %9791 = vmatmul.f32.gmra.mxu0 %v8885
    %v9792 = vpop.f32.mrf.mxu0
    %v9793 = vadd.f32 %v9695, %v9792
    %9794 = vmatmul.f32.gmra.mxu0 %v8886
    %v9795 = vpop.f32.mrf.mxu0
    %v9796 = vadd.f32 %v9698, %v9795
    %9797 = vmatmul.f32.gmra.mxu0 %v8893
    %v9798 = vpop.f32.mrf.mxu0
    %v9799 = vadd.f32 %v9701, %v9798
    %9800 = vmatmul.f32.gmra.mxu0 %v8894
    %v9801 = vpop.f32.mrf.mxu0
    %v9802 = vadd.f32 %v9704, %v9801
    %9803 = vmatmul.f32.gmra.mxu0 %v8895
    %v9804 = vpop.f32.mrf.mxu0
    %v9805 = vadd.f32 %v9707, %v9804
    %9806 = vmatmul.f32.gmra.mxu0 %v8896
    %v9807 = vpop.f32.mrf.mxu0
    %v9808 = vadd.f32 %v9710, %v9807
    %9809 = vmatmul.f32.gmra.mxu0 %v8897
    %v9810 = vpop.f32.mrf.mxu0
    %v9811 = vadd.f32 %v9713, %v9810
    %9812 = vmatmul.f32.gmra.mxu0 %v8898
    %v9813 = vpop.f32.mrf.mxu0
    %v9814 = vadd.f32 %v9716, %v9813
    %9815 = vmatmul.f32.gmra.mxu0 %v8899
    %v9816 = vpop.f32.mrf.mxu0
    %v9817 = vadd.f32 %v9719, %v9816
    %9818 = vmatmul.f32.gmra.mxu0 %v8900
    %v9819 = vpop.f32.mrf.mxu0
    %v9820 = vadd.f32 %v9722, %v9819
    %9821 = vmatmul.f32.gmra.mxu0 %v8901
    %v9822 = vpop.f32.mrf.mxu0
    %v9823 = vadd.f32 %v9725, %v9822
    %9824 = vmatmul.f32.gmra.mxu0 %v8908
    %v9825 = vpop.f32.mrf.mxu0
    %v9826 = vadd.f32 %v9728, %v9825
    %9827 = vmatmul.f32.gmra.mxu0 %v8909
    %v9828 = vpop.f32.mrf.mxu0
    %v9829 = vadd.f32 %v9731, %v9828
    %9830 = vmatmul.f32.gmra.mxu0 %v8910
    %v9831 = vpop.f32.mrf.mxu0
    %v9832 = vadd.f32 %v9734, %v9831
    %9833 = vmatmul.f32.gmra.mxu0 %v8911
    %v9834 = vpop.f32.mrf.mxu0
    %v9835 = vadd.f32 %v9737, %v9834
    %9836 = vmatmul.f32.gmra.mxu0 %v8912
    %v9837 = vpop.f32.mrf.mxu0
    %v9838 = vadd.f32 %v9740, %v9837
    %9839 = vmatmul.f32.gmra.mxu0 %v8913
    %v9840 = vpop.f32.mrf.mxu0
    %v9841 = vadd.f32 %v9743, %v9840
    %9842 = vmatmul.f32.gmra.mxu0 %v8914
    %v9843 = vpop.f32.mrf.mxu0
    %v9844 = vadd.f32 %v9746, %v9843
    %9845 = vmatmul.f32.gmra.mxu0 %v8915
    %v9846 = vpop.f32.mrf.mxu0
    %v9847 = vadd.f32 %v9749, %v9846
    %9848 = vmatmul.f32.gmra.mxu0 %v8916
    %v9849 = vpop.f32.mrf.mxu0
    %v9850 = vadd.f32 %v9752, %v9849
    %9851 = vdwg.mxu0
    %9852 = vmatpush.msra.mxu0 %v9063
    %9853 = vmatpush.msra.mxu0 %v9062
    %9854 = vmatpush.msra.mxu0 %v9061
    %9855 = vmatpush.msra.mxu0 %v9060
    %9856 = vmatpush.msra.mxu0 %v9059
    %9857 = vmatpush.msra.mxu0 %v9058
    %9858 = vmatpush.msra.mxu0 %v9057
    %9859 = vmatpush.msra.mxu0 %v9056
    %9860 = vmatpush.msra.mxu0 %v9055
    %9861 = vmatpush.msra.mxu0 %v9054
    %9862 = vmatpush.msra.mxu0 %v9053
    %9863 = vmatpush.msra.mxu0 %v9052
    %9864 = vmatpush.msra.mxu0 %v9051
    %9865 = vmatpush.msra.mxu0 %v9050
    %9866 = vmatpush.msra.mxu0 %v9049
    %9867 = vmatpush.msra.mxu0 %v9048
    %9868 = vmatmul.f32.gmra.mxu0 %v8881
    %v9869 = vpop.f32.mrf.mxu0
    %v9870 = vadd.f32 %v9772, %v9869
    %9871 = vmatmul.f32.gmra.mxu0 %v8882
    %v9872 = vpop.f32.mrf.mxu0
    %v9873 = vadd.f32 %v9775, %v9872
    %9874 = vmatmul.f32.gmra.mxu0 %v8883
    %v9875 = vpop.f32.mrf.mxu0
    %v9876 = vadd.f32 %v9778, %v9875
    %9877 = vmatmul.f32.gmra.mxu0 %v8884
    %v9878 = vpop.f32.mrf.mxu0
    %v9879 = vadd.f32 %v9781, %v9878
    %9880 = vmatmul.f32.gmra.mxu0 %v8885
    %v9881 = vpop.f32.mrf.mxu0
    %v9882 = vadd.f32 %v9784, %v9881
    %9883 = vmatmul.f32.gmra.mxu0 %v8886
    %v9884 = vpop.f32.mrf.mxu0
    %v9885 = vadd.f32 %v9787, %v9884
    %9886 = vmatmul.f32.gmra.mxu0 %v8887
    %v9887 = vpop.f32.mrf.mxu0
    %v9888 = vadd.f32 %v9790, %v9887
    %9889 = vmatmul.f32.gmra.mxu0 %v8888
    %v9890 = vpop.f32.mrf.mxu0
    %v9891 = vadd.f32 %v9793, %v9890
    %9892 = vmatmul.f32.gmra.mxu0 %v8889
    %v9893 = vpop.f32.mrf.mxu0
    %v9894 = vadd.f32 %v9796, %v9893
    %9895 = vmatmul.f32.gmra.mxu0 %v8896
    %v9896 = vpop.f32.mrf.mxu0
    %v9897 = vadd.f32 %v9799, %v9896
    %9898 = vmatmul.f32.gmra.mxu0 %v8897
    %v9899 = vpop.f32.mrf.mxu0
    %v9900 = vadd.f32 %v9802, %v9899
    %9901 = vmatmul.f32.gmra.mxu0 %v8898
    %v9902 = vpop.f32.mrf.mxu0
    %v9903 = vadd.f32 %v9805, %v9902
    %9904 = vmatmul.f32.gmra.mxu0 %v8899
    %v9905 = vpop.f32.mrf.mxu0
    %v9906 = vadd.f32 %v9808, %v9905
    %9907 = vmatmul.f32.gmra.mxu0 %v8900
    %v9908 = vpop.f32.mrf.mxu0
    %v9909 = vadd.f32 %v9811, %v9908
    %9910 = vmatmul.f32.gmra.mxu0 %v8901
    %v9911 = vpop.f32.mrf.mxu0
    %v9912 = vadd.f32 %v9814, %v9911
    %9913 = vmatmul.f32.gmra.mxu0 %v8902
    %v9914 = vpop.f32.mrf.mxu0
    %v9915 = vadd.f32 %v9817, %v9914
    %9916 = vmatmul.f32.gmra.mxu0 %v8903
    %v9917 = vpop.f32.mrf.mxu0
    %v9918 = vadd.f32 %v9820, %v9917
    %9919 = vmatmul.f32.gmra.mxu0 %v8904
    %v9920 = vpop.f32.mrf.mxu0
    %v9921 = vadd.f32 %v9823, %v9920
    %9922 = vmatmul.f32.gmra.mxu0 %v8911
    %v9923 = vpop.f32.mrf.mxu0
    %v9924 = vadd.f32 %v9826, %v9923
    %9925 = vmatmul.f32.gmra.mxu0 %v8912
    %v9926 = vpop.f32.mrf.mxu0
    %v9927 = vadd.f32 %v9829, %v9926
    %9928 = vmatmul.f32.gmra.mxu0 %v8913
    %v9929 = vpop.f32.mrf.mxu0
    %v9930 = vadd.f32 %v9832, %v9929
    %9931 = vmatmul.f32.gmra.mxu0 %v8914
    %v9932 = vpop.f32.mrf.mxu0
    %v9933 = vadd.f32 %v9835, %v9932
    %9934 = vmatmul.f32.gmra.mxu0 %v8915
    %v9935 = vpop.f32.mrf.mxu0
    %v9936 = vadd.f32 %v9838, %v9935
    %9937 = vmatmul.f32.gmra.mxu0 %v8916
    %v9938 = vpop.f32.mrf.mxu0
    %v9939 = vadd.f32 %v9841, %v9938
    %9940 = vmatmul.f32.gmra.mxu0 %v8917
    %v9941 = vpop.f32.mrf.mxu0
    %v9942 = vadd.f32 %v9844, %v9941
    %9943 = vmatmul.f32.gmra.mxu0 %v8918
    %v9944 = vpop.f32.mrf.mxu0
    %v9945 = vadd.f32 %v9847, %v9944
    %9946 = vmatmul.f32.gmra.mxu0 %v8919
    %v9947 = vpop.f32.mrf.mxu0
    %v9948 = vadd.f32 %v9850, %v9947
    %9949 = vdwg.mxu0
    %v9950 = vmax.f32 %v9870, 0.0
    %v9951 = vmax.f32 %v9873, 0.0
    %v9952 = vmax.f32 %v9876, 0.0
    %v9953 = vmax.f32 %v9879, 0.0
    %v9954 = vmax.f32 %v9882, 0.0
    %v9955 = vmax.f32 %v9885, 0.0
    %v9956 = vmax.f32 %v9888, 0.0
    %v9957 = vmax.f32 %v9891, 0.0
    %v9958 = vmax.f32 %v9894, 0.0
    %v9959 = vmax.f32 %v9897, 0.0
    %v9960 = vmax.f32 %v9900, 0.0
    %v9961 = vmax.f32 %v9903, 0.0
    %v9962 = vmax.f32 %v9906, 0.0
    %v9963 = vmax.f32 %v9909, 0.0
    %v9964 = vmax.f32 %v9912, 0.0
    %v9965 = vmax.f32 %v9915, 0.0
    %v9966 = vmax.f32 %v9918, 0.0
    %v9967 = vmax.f32 %v9921, 0.0
    %v9968 = vmax.f32 %v9924, 0.0
    %v9969 = vmax.f32 %v9927, 0.0
    %v9970 = vmax.f32 %v9930, 0.0
    %v9971 = vmax.f32 %v9933, 0.0
    %v9972 = vmax.f32 %v9936, 0.0
    %v9973 = vmax.f32 %v9939, 0.0
    %v9974 = vmax.f32 %v9942, 0.0
    %v9975 = vmax.f32 %v9945, 0.0
    %v9976 = vmax.f32 %v9948, 0.0
    %v9977 = vld [vmem:[#allocation5] sm:$0xff]
    %v9978 = vld [vmem:[#allocation5 + $0x8] sm:$0xff]
    %v9979 = vld [vmem:[#allocation5 + $0x10] sm:$0xff]
    %v9980 = vld [vmem:[#allocation5 + $0x18] sm:$0xff]
    %v9981 = vld [vmem:[#allocation5 + $0x20] sm:$0xff]
    %v9982 = vld [vmem:[#allocation5 + $0x28] sm:$0xff]
    %v9983 = vld [vmem:[#allocation5 + $0x30] sm:$0xff]
    %v9984 = vld [vmem:[#allocation5 + $0x38] sm:$0xff]
    %v9985 = vld [vmem:[#allocation5 + $0x40] sm:$0xff]
    %v9986 = vld [vmem:[#allocation5 + $0x48] sm:$0xff]
    %v9987 = vld [vmem:[#allocation5 + $0x50] sm:$0xff]
    %v9988 = vld [vmem:[#allocation5 + $0x58] sm:$0xff]
    %v9989 = vld [vmem:[#allocation5 + $0x60] sm:$0xff]
    %v9990 = vld [vmem:[#allocation5 + $0x68] sm:$0xff]
    %v9991 = vld [vmem:[#allocation5 + $0x70] sm:$0xff]
    %v9992 = vld [vmem:[#allocation5 + $0x78] sm:$0xff]
    %v9993 = vld [vmem:[#allocation5 + $0x80] sm:$0xff]
    %v9994 = vld [vmem:[#allocation5 + $0x88] sm:$0xff]
    %v9995 = vld [vmem:[#allocation5 + $0x90] sm:$0xff]
    %v9996 = vld [vmem:[#allocation5 + $0x98] sm:$0xff]
    %v9997 = vld [vmem:[#allocation5 + $0xa0] sm:$0xff]
    %v9998 = vld [vmem:[#allocation5 + $0xa8] sm:$0xff]
    %v9999 = vld [vmem:[#allocation5 + $0xb0] sm:$0xff]
    %v10000 = vld [vmem:[#allocation5 + $0xb8] sm:$0xff]
    %v10001 = vld [vmem:[#allocation5 + $0xc0] sm:$0xff]
    %v10002 = vld [vmem:[#allocation5 + $0xc8] sm:$0xff]
    %v10003 = vld [vmem:[#allocation5 + $0xd0] sm:$0xff]
    %v10004 = vld [vmem:[#allocation5 + $0xd8] sm:$0xff]
    %v10005 = vld [vmem:[#allocation5 + $0xe0] sm:$0xff]
    %v10006 = vld [vmem:[#allocation5 + $0xe8] sm:$0xff]
    %v10007 = vld [vmem:[#allocation5 + $0xf0] sm:$0xff]
    %v10008 = vld [vmem:[#allocation5 + $0xf8] sm:$0xff]
    %v10009 = vld [vmem:[#allocation5 + $0x100] sm:$0xff]
    %v10010 = vld [vmem:[#allocation5 + $0x108] sm:$0xff]
    %v10011 = vld [vmem:[#allocation5 + $0x110] sm:$0xff]
    %v10012 = vld [vmem:[#allocation5 + $0x118] sm:$0xff]
    %v10013 = vld [vmem:[#allocation5 + $0x120] sm:$0xff]
    %v10014 = vld [vmem:[#allocation5 + $0x128] sm:$0xff]
    %v10015 = vld [vmem:[#allocation5 + $0x130] sm:$0xff]
    %v10016 = vld [vmem:[#allocation5 + $0x138] sm:$0xff]
    %v10017 = vld [vmem:[#allocation5 + $0x140] sm:$0xff]
    %v10018 = vld [vmem:[#allocation5 + $0x148] sm:$0xff]
    %v10019 = vld [vmem:[#allocation5 + $0x150] sm:$0xff]
    %v10020 = vld [vmem:[#allocation5 + $0x158] sm:$0xff]
    %v10021 = vld [vmem:[#allocation5 + $0x160] sm:$0xff]
    %v10022 = vld [vmem:[#allocation5 + $0x168] sm:$0xff]
    %v10023 = vld [vmem:[#allocation5 + $0x170] sm:$0xff]
    %v10024 = vld [vmem:[#allocation5 + $0x178] sm:$0xff]
    %v10025 = vld [vmem:[#allocation5 + $0x180] sm:$0xff]
    %v10026 = vld [vmem:[#allocation5 + $0x188] sm:$0xff]
    %v10027 = vld [vmem:[#allocation5 + $0x190] sm:$0xff]
    %v10028 = vld [vmem:[#allocation5 + $0x198] sm:$0xff]
    %v10029 = vld [vmem:[#allocation5 + $0x1a0] sm:$0xff]
    %v10030 = vld [vmem:[#allocation5 + $0x1a8] sm:$0xff]
    %v10031 = vld [vmem:[#allocation5 + $0x1b0] sm:$0xff]
    %v10032 = vld [vmem:[#allocation5 + $0x1b8] sm:$0xff]
    %v10033 = vld [vmem:[#allocation5 + $0x1c0] sm:$0xff]
    %v10034 = vld [vmem:[#allocation5 + $0x1c8] sm:$0xff]
    %v10035 = vld [vmem:[#allocation5 + $0x1d0] sm:$0xff]
    %v10036 = vld [vmem:[#allocation5 + $0x1d8] sm:$0xff]
    %v10037 = vld [vmem:[#allocation5 + $0x1e0] sm:$0xff]
    %v10038 = vld [vmem:[#allocation5 + $0x1e8] sm:$0xff]
    %v10039 = vld [vmem:[#allocation5 + $0x1f0] sm:$0xff]
    %v10040 = vld [vmem:[#allocation5 + $0x1f8] sm:$0xff]
    %v10041 = vld [vmem:[#allocation5 + $0x200] sm:$0xff]
    %v10042 = vld [vmem:[#allocation5 + $0x208] sm:$0xff]
    %v10043 = vld [vmem:[#allocation5 + $0x210] sm:$0xff]
    %v10044 = vld [vmem:[#allocation5 + $0x218] sm:$0xff]
    %v10045 = vld [vmem:[#allocation5 + $0x220] sm:$0xff]
    %v10046 = vld [vmem:[#allocation5 + $0x228] sm:$0xff]
    %v10047 = vld [vmem:[#allocation5 + $0x230] sm:$0xff]
    %v10048 = vld [vmem:[#allocation5 + $0x238] sm:$0xff]
    %v10049 = vld [vmem:[#allocation5 + $0x240] sm:$0xff]
    %v10050 = vld [vmem:[#allocation5 + $0x248] sm:$0xff]
    %v10051 = vld [vmem:[#allocation5 + $0x250] sm:$0xff]
    %v10052 = vld [vmem:[#allocation5 + $0x258] sm:$0xff]
    %v10053 = vld [vmem:[#allocation5 + $0x260] sm:$0xff]
    %v10054 = vld [vmem:[#allocation5 + $0x268] sm:$0xff]
    %v10055 = vld [vmem:[#allocation5 + $0x270] sm:$0xff]
    %v10056 = vld [vmem:[#allocation5 + $0x278] sm:$0xff]
    %v10057 = vld [vmem:[#allocation5 + $0x280] sm:$0xff]
    %v10058 = vld [vmem:[#allocation5 + $0x288] sm:$0xff]
    %v10059 = vld [vmem:[#allocation5 + $0x290] sm:$0xff]
    %v10060 = vld [vmem:[#allocation5 + $0x298] sm:$0xff]
    %v10061 = vld [vmem:[#allocation5 + $0x2a0] sm:$0xff]
    %v10062 = vld [vmem:[#allocation5 + $0x2a8] sm:$0xff]
    %v10063 = vld [vmem:[#allocation5 + $0x2b0] sm:$0xff]
    %v10064 = vld [vmem:[#allocation5 + $0x2b8] sm:$0xff]
    %v10065 = vld [vmem:[#allocation5 + $0x2c0] sm:$0xff]
    %v10066 = vld [vmem:[#allocation5 + $0x2c8] sm:$0xff]
    %v10067 = vld [vmem:[#allocation5 + $0x2d0] sm:$0xff]
    %v10068 = vld [vmem:[#allocation5 + $0x2d8] sm:$0xff]
    %v10069 = vld [vmem:[#allocation5 + $0x2e0] sm:$0xff]
    %v10070 = vld [vmem:[#allocation5 + $0x2e8] sm:$0xff]
    %v10071 = vld [vmem:[#allocation5 + $0x2f0] sm:$0xff]
    %v10072 = vld [vmem:[#allocation5 + $0x2f8] sm:$0xff]
    %v10073 = vld [vmem:[#allocation5 + $0x300] sm:$0xff]
    %v10074 = vld [vmem:[#allocation5 + $0x308] sm:$0xff]
    %v10075 = vld [vmem:[#allocation5 + $0x310] sm:$0xff]
    %v10076 = vld [vmem:[#allocation5 + $0x318] sm:$0xff]
    %v10077 = vld [vmem:[#allocation5 + $0x320] sm:$0xff]
    %v10078 = vld [vmem:[#allocation5 + $0x328] sm:$0xff]
    %v10079 = vld [vmem:[#allocation5 + $0x330] sm:$0xff]
    %v10080 = vld [vmem:[#allocation5 + $0x338] sm:$0xff]
    %v10081 = vld [vmem:[#allocation5 + $0x340] sm:$0xff]
    %v10082 = vld [vmem:[#allocation5 + $0x348] sm:$0xff]
    %v10083 = vld [vmem:[#allocation5 + $0x350] sm:$0xff]
    %v10084 = vld [vmem:[#allocation5 + $0x358] sm:$0xff]
    %v10085 = vld [vmem:[#allocation5 + $0x360] sm:$0xff]
    %v10086 = vld [vmem:[#allocation5 + $0x368] sm:$0xff]
    %v10087 = vld [vmem:[#allocation5 + $0x370] sm:$0xff]
    %v10088 = vld [vmem:[#allocation5 + $0x378] sm:$0xff]
    %v10089 = vld [vmem:[#allocation5 + $0x380] sm:$0xff]
    %v10090 = vld [vmem:[#allocation5 + $0x388] sm:$0xff]
    %v10091 = vld [vmem:[#allocation5 + $0x390] sm:$0xff]
    %v10092 = vld [vmem:[#allocation5 + $0x398] sm:$0xff]
    %v10093 = vld [vmem:[#allocation5 + $0x3a0] sm:$0xff]
    %v10094 = vld [vmem:[#allocation5 + $0x3a8] sm:$0xff]
    %v10095 = vld [vmem:[#allocation5 + $0x3b0] sm:$0xff]
    %v10096 = vld [vmem:[#allocation5 + $0x3b8] sm:$0xff]
    %v10097 = vld [vmem:[#allocation5 + $0x3c0] sm:$0xff]
    %v10098 = vld [vmem:[#allocation5 + $0x3c8] sm:$0xff]
    %v10099 = vld [vmem:[#allocation5 + $0x3d0] sm:$0xff]
    %v10100 = vld [vmem:[#allocation5 + $0x3d8] sm:$0xff]
    %v10101 = vld [vmem:[#allocation5 + $0x3e0] sm:$0xff]
    %v10102 = vld [vmem:[#allocation5 + $0x3e8] sm:$0xff]
    %v10103 = vld [vmem:[#allocation5 + $0x3f0] sm:$0xff]
    %v10104 = vld [vmem:[#allocation5 + $0x3f8] sm:$0xff]
    %v10105 = vld [vmem:[#allocation5 + $0x400] sm:$0xff]
    %v10106 = vld [vmem:[#allocation5 + $0x408] sm:$0xff]
    %v10107 = vld [vmem:[#allocation5 + $0x410] sm:$0xff]
    %v10108 = vld [vmem:[#allocation5 + $0x418] sm:$0xff]
    %v10109 = vld [vmem:[#allocation5 + $0x420] sm:$0xff]
    %v10110 = vld [vmem:[#allocation5 + $0x428] sm:$0xff]
    %v10111 = vld [vmem:[#allocation5 + $0x430] sm:$0xff]
    %v10112 = vld [vmem:[#allocation5 + $0x438] sm:$0xff]
    %v10113 = vld [vmem:[#allocation5 + $0x440] sm:$0xff]
    %v10114 = vld [vmem:[#allocation5 + $0x448] sm:$0xff]
    %v10115 = vld [vmem:[#allocation5 + $0x450] sm:$0xff]
    %v10116 = vld [vmem:[#allocation5 + $0x458] sm:$0xff]
    %v10117 = vld [vmem:[#allocation5 + $0x460] sm:$0xff]
    %v10118 = vld [vmem:[#allocation5 + $0x468] sm:$0xff]
    %v10119 = vld [vmem:[#allocation5 + $0x470] sm:$0xff]
    %v10120 = vld [vmem:[#allocation5 + $0x478] sm:$0xff]
    %v10121 = vld [vmem:[%s10] sm:$0x1]
    %v10123 = vperm.slane %v10121, 0
    %10125 = vmatpush.msra.mxu0 %v9992
    %10126 = vmatpush.msra.mxu0 %v9991
    %10127 = vmatpush.msra.mxu0 %v9990
    %10128 = vmatpush.msra.mxu0 %v9989
    %10129 = vmatpush.msra.mxu0 %v9988
    %10130 = vmatpush.msra.mxu0 %v9987
    %10131 = vmatpush.msra.mxu0 %v9986
    %10132 = vmatpush.msra.mxu0 %v9985
    %10133 = vmatpush.msra.mxu0 %v9984
    %10134 = vmatpush.msra.mxu0 %v9983
    %10135 = vmatpush.msra.mxu0 %v9982
    %10136 = vmatpush.msra.mxu0 %v9981
    %10137 = vmatpush.msra.mxu0 %v9980
    %10138 = vmatpush.msra.mxu0 %v9979
    %10139 = vmatpush.msra.mxu0 %v9978
    %10140 = vmatpush.msra.mxu0 %v9977
    %10141 = vmatmul.f32.gmra.mxu0 %v9950
    %v10142 = vpop.f32.mrf.mxu0
    %v10143 = vadd.f32 %v10123, %v10142
    %10144 = vmatmul.f32.gmra.mxu0 %v9951
    %v10145 = vpop.f32.mrf.mxu0
    %v10146 = vadd.f32 %v10123, %v10145
    %10147 = vmatmul.f32.gmra.mxu0 %v9952
    %v10148 = vpop.f32.mrf.mxu0
    %v10149 = vadd.f32 %v10123, %v10148
    %10150 = vdwg.mxu0
    %10151 = vmatpush.msra.mxu0 %v10008
    %10152 = vmatpush.msra.mxu0 %v10007
    %10153 = vmatpush.msra.mxu0 %v10006
    %10154 = vmatpush.msra.mxu0 %v10005
    %10155 = vmatpush.msra.mxu0 %v10004
    %10156 = vmatpush.msra.mxu0 %v10003
    %10157 = vmatpush.msra.mxu0 %v10002
    %10158 = vmatpush.msra.mxu0 %v10001
    %10159 = vmatpush.msra.mxu0 %v10000
    %10160 = vmatpush.msra.mxu0 %v9999
    %10161 = vmatpush.msra.mxu0 %v9998
    %10162 = vmatpush.msra.mxu0 %v9997
    %10163 = vmatpush.msra.mxu0 %v9996
    %10164 = vmatpush.msra.mxu0 %v9995
    %10165 = vmatpush.msra.mxu0 %v9994
    %10166 = vmatpush.msra.mxu0 %v9993
    %10167 = vmatmul.f32.gmra.mxu0 %v9953
    %v10168 = vpop.f32.mrf.mxu0
    %v10169 = vadd.f32 %v10143, %v10168
    %10170 = vmatmul.f32.gmra.mxu0 %v9954
    %v10171 = vpop.f32.mrf.mxu0
    %v10172 = vadd.f32 %v10146, %v10171
    %10173 = vmatmul.f32.gmra.mxu0 %v9955
    %v10174 = vpop.f32.mrf.mxu0
    %v10175 = vadd.f32 %v10149, %v10174
    %10176 = vdwg.mxu0
    %10177 = vmatpush.msra.mxu0 %v10024
    %10178 = vmatpush.msra.mxu0 %v10023
    %10179 = vmatpush.msra.mxu0 %v10022
    %10180 = vmatpush.msra.mxu0 %v10021
    %10181 = vmatpush.msra.mxu0 %v10020
    %10182 = vmatpush.msra.mxu0 %v10019
    %10183 = vmatpush.msra.mxu0 %v10018
    %10184 = vmatpush.msra.mxu0 %v10017
    %10185 = vmatpush.msra.mxu0 %v10016
    %10186 = vmatpush.msra.mxu0 %v10015
    %10187 = vmatpush.msra.mxu0 %v10014
    %10188 = vmatpush.msra.mxu0 %v10013
    %10189 = vmatpush.msra.mxu0 %v10012
    %10190 = vmatpush.msra.mxu0 %v10011
    %10191 = vmatpush.msra.mxu0 %v10010
    %10192 = vmatpush.msra.mxu0 %v10009
    %10193 = vmatmul.f32.gmra.mxu0 %v9956
    %v10194 = vpop.f32.mrf.mxu0
    %v10195 = vadd.f32 %v10169, %v10194
    %10196 = vmatmul.f32.gmra.mxu0 %v9957
    %v10197 = vpop.f32.mrf.mxu0
    %v10198 = vadd.f32 %v10172, %v10197
    %10199 = vmatmul.f32.gmra.mxu0 %v9958
    %v10200 = vpop.f32.mrf.mxu0
    %v10201 = vadd.f32 %v10175, %v10200
    %10202 = vdwg.mxu0
    %10203 = vmatpush.msra.mxu0 %v10040
    %10204 = vmatpush.msra.mxu0 %v10039
    %10205 = vmatpush.msra.mxu0 %v10038
    %10206 = vmatpush.msra.mxu0 %v10037
    %10207 = vmatpush.msra.mxu0 %v10036
    %10208 = vmatpush.msra.mxu0 %v10035
    %10209 = vmatpush.msra.mxu0 %v10034
    %10210 = vmatpush.msra.mxu0 %v10033
    %10211 = vmatpush.msra.mxu0 %v10032
    %10212 = vmatpush.msra.mxu0 %v10031
    %10213 = vmatpush.msra.mxu0 %v10030
    %10214 = vmatpush.msra.mxu0 %v10029
    %10215 = vmatpush.msra.mxu0 %v10028
    %10216 = vmatpush.msra.mxu0 %v10027
    %10217 = vmatpush.msra.mxu0 %v10026
    %10218 = vmatpush.msra.mxu0 %v10025
    %10219 = vmatmul.f32.gmra.mxu0 %v9959
    %v10220 = vpop.f32.mrf.mxu0
    %v10221 = vadd.f32 %v10195, %v10220
    %10222 = vmatmul.f32.gmra.mxu0 %v9960
    %v10223 = vpop.f32.mrf.mxu0
    %v10224 = vadd.f32 %v10198, %v10223
    %10225 = vmatmul.f32.gmra.mxu0 %v9961
    %v10226 = vpop.f32.mrf.mxu0
    %v10227 = vadd.f32 %v10201, %v10226
    %10228 = vdwg.mxu0
    %10229 = vmatpush.msra.mxu0 %v10056
    %10230 = vmatpush.msra.mxu0 %v10055
    %10231 = vmatpush.msra.mxu0 %v10054
    %10232 = vmatpush.msra.mxu0 %v10053
    %10233 = vmatpush.msra.mxu0 %v10052
    %10234 = vmatpush.msra.mxu0 %v10051
    %10235 = vmatpush.msra.mxu0 %v10050
    %10236 = vmatpush.msra.mxu0 %v10049
    %10237 = vmatpush.msra.mxu0 %v10048
    %10238 = vmatpush.msra.mxu0 %v10047
    %10239 = vmatpush.msra.mxu0 %v10046
    %10240 = vmatpush.msra.mxu0 %v10045
    %10241 = vmatpush.msra.mxu0 %v10044
    %10242 = vmatpush.msra.mxu0 %v10043
    %10243 = vmatpush.msra.mxu0 %v10042
    %10244 = vmatpush.msra.mxu0 %v10041
    %10245 = vmatmul.f32.gmra.mxu0 %v9962
    %v10246 = vpop.f32.mrf.mxu0
    %v10247 = vadd.f32 %v10221, %v10246
    %10248 = vmatmul.f32.gmra.mxu0 %v9963
    %v10249 = vpop.f32.mrf.mxu0
    %v10250 = vadd.f32 %v10224, %v10249
    %10251 = vmatmul.f32.gmra.mxu0 %v9964
    %v10252 = vpop.f32.mrf.mxu0
    %v10253 = vadd.f32 %v10227, %v10252
    %10254 = vdwg.mxu0
    %10255 = vmatpush.msra.mxu0 %v10072
    %10256 = vmatpush.msra.mxu0 %v10071
    %10257 = vmatpush.msra.mxu0 %v10070
    %10258 = vmatpush.msra.mxu0 %v10069
    %10259 = vmatpush.msra.mxu0 %v10068
    %10260 = vmatpush.msra.mxu0 %v10067
    %10261 = vmatpush.msra.mxu0 %v10066
    %10262 = vmatpush.msra.mxu0 %v10065
    %10263 = vmatpush.msra.mxu0 %v10064
    %10264 = vmatpush.msra.mxu0 %v10063
    %10265 = vmatpush.msra.mxu0 %v10062
    %10266 = vmatpush.msra.mxu0 %v10061
    %10267 = vmatpush.msra.mxu0 %v10060
    %10268 = vmatpush.msra.mxu0 %v10059
    %10269 = vmatpush.msra.mxu0 %v10058
    %10270 = vmatpush.msra.mxu0 %v10057
    %10271 = vmatmul.f32.gmra.mxu0 %v9965
    %v10272 = vpop.f32.mrf.mxu0
    %v10273 = vadd.f32 %v10247, %v10272
    %10274 = vmatmul.f32.gmra.mxu0 %v9966
    %v10275 = vpop.f32.mrf.mxu0
    %v10276 = vadd.f32 %v10250, %v10275
    %10277 = vmatmul.f32.gmra.mxu0 %v9967
    %v10278 = vpop.f32.mrf.mxu0
    %v10279 = vadd.f32 %v10253, %v10278
    %10280 = vdwg.mxu0
    %10281 = vmatpush.msra.mxu0 %v10088
    %10282 = vmatpush.msra.mxu0 %v10087
    %10283 = vmatpush.msra.mxu0 %v10086
    %10284 = vmatpush.msra.mxu0 %v10085
    %10285 = vmatpush.msra.mxu0 %v10084
    %10286 = vmatpush.msra.mxu0 %v10083
    %10287 = vmatpush.msra.mxu0 %v10082
    %10288 = vmatpush.msra.mxu0 %v10081
    %10289 = vmatpush.msra.mxu0 %v10080
    %10290 = vmatpush.msra.mxu0 %v10079
    %10291 = vmatpush.msra.mxu0 %v10078
    %10292 = vmatpush.msra.mxu0 %v10077
    %10293 = vmatpush.msra.mxu0 %v10076
    %10294 = vmatpush.msra.mxu0 %v10075
    %10295 = vmatpush.msra.mxu0 %v10074
    %10296 = vmatpush.msra.mxu0 %v10073
    %10297 = vmatmul.f32.gmra.mxu0 %v9968
    %v10298 = vpop.f32.mrf.mxu0
    %v10299 = vadd.f32 %v10273, %v10298
    %10300 = vmatmul.f32.gmra.mxu0 %v9969
    %v10301 = vpop.f32.mrf.mxu0
    %v10302 = vadd.f32 %v10276, %v10301
    %10303 = vmatmul.f32.gmra.mxu0 %v9970
    %v10304 = vpop.f32.mrf.mxu0
    %v10305 = vadd.f32 %v10279, %v10304
    %10306 = vdwg.mxu0
    %10307 = vmatpush.msra.mxu0 %v10104
    %10308 = vmatpush.msra.mxu0 %v10103
    %10309 = vmatpush.msra.mxu0 %v10102
    %10310 = vmatpush.msra.mxu0 %v10101
    %10311 = vmatpush.msra.mxu0 %v10100
    %10312 = vmatpush.msra.mxu0 %v10099
    %10313 = vmatpush.msra.mxu0 %v10098
    %10314 = vmatpush.msra.mxu0 %v10097
    %10315 = vmatpush.msra.mxu0 %v10096
    %10316 = vmatpush.msra.mxu0 %v10095
    %10317 = vmatpush.msra.mxu0 %v10094
    %10318 = vmatpush.msra.mxu0 %v10093
    %10319 = vmatpush.msra.mxu0 %v10092
    %10320 = vmatpush.msra.mxu0 %v10091
    %10321 = vmatpush.msra.mxu0 %v10090
    %10322 = vmatpush.msra.mxu0 %v10089
    %10323 = vmatmul.f32.gmra.mxu0 %v9971
    %v10324 = vpop.f32.mrf.mxu0
    %v10325 = vadd.f32 %v10299, %v10324
    %10326 = vmatmul.f32.gmra.mxu0 %v9972
    %v10327 = vpop.f32.mrf.mxu0
    %v10328 = vadd.f32 %v10302, %v10327
    %10329 = vmatmul.f32.gmra.mxu0 %v9973
    %v10330 = vpop.f32.mrf.mxu0
    %v10331 = vadd.f32 %v10305, %v10330
    %10332 = vdwg.mxu0
    %10333 = vmatpush.msra.mxu0 %v10120
    %10334 = vmatpush.msra.mxu0 %v10119
    %10335 = vmatpush.msra.mxu0 %v10118
    %10336 = vmatpush.msra.mxu0 %v10117
    %10337 = vmatpush.msra.mxu0 %v10116
    %10338 = vmatpush.msra.mxu0 %v10115
    %10339 = vmatpush.msra.mxu0 %v10114
    %10340 = vmatpush.msra.mxu0 %v10113
    %10341 = vmatpush.msra.mxu0 %v10112
    %10342 = vmatpush.msra.mxu0 %v10111
    %10343 = vmatpush.msra.mxu0 %v10110
    %10344 = vmatpush.msra.mxu0 %v10109
    %10345 = vmatpush.msra.mxu0 %v10108
    %10346 = vmatpush.msra.mxu0 %v10107
    %10347 = vmatpush.msra.mxu0 %v10106
    %10348 = vmatpush.msra.mxu0 %v10105
    %10349 = vmatmul.f32.gmra.mxu0 %v9974
    %v10350 = vpop.f32.mrf.mxu0
    %v10351 = vadd.f32 %v10325, %v10350
    %10352 = vmatmul.f32.gmra.mxu0 %v9975
    %v10353 = vpop.f32.mrf.mxu0
    %v10354 = vadd.f32 %v10328, %v10353
    %10355 = vmatmul.f32.gmra.mxu0 %v9976
    %v10356 = vpop.f32.mrf.mxu0
    %v10357 = vadd.f32 %v10331, %v10356
    %10358 = vdwg.mxu0
    %v10359 = vmax.f32 %v10351, 0.0
    %v10360 = vmax.f32 %v10354, 0.0
    %v10361 = vmax.f32 %v10357, 0.0
    %v10362 = vld [vmem:[%s11] sm:$0xff]
    %v10363 = vld [vmem:[%s11 + $0x8] sm:$0xff]
    %v10364 = vld [vmem:[%s11 + $0x10] sm:$0xff]
    %v10365 = vld [vmem:[%s11 + $0x18] sm:$0xff]
    %v10366 = vld [vmem:[%s11 + $0x20] sm:$0xff]
    %v10367 = vld [vmem:[%s11 + $0x28] sm:$0xff]
    %v10368 = vld [vmem:[%s11 + $0x30] sm:$0xff]
    %v10369 = vld [vmem:[%s11 + $0x38] sm:$0xff]
    %v10370 = vld [vmem:[%s11 + $0x40] sm:$0xff]
    %v10371 = vld [vmem:[%s11 + $0x48] sm:$0xff]
    %v10372 = vld [vmem:[%s11 + $0x50] sm:$0xff]
    %v10373 = vld [vmem:[%s11 + $0x58] sm:$0xff]
    %v10374 = vld [vmem:[%s11 + $0x60] sm:$0xff]
    %v10375 = vld [vmem:[%s11 + $0x68] sm:$0xff]
    %v10376 = vld [vmem:[%s11 + $0x70] sm:$0xff]
    %v10377 = vld [vmem:[%s11 + $0x78] sm:$0xff]
    %v10378 = vld [vmem:[%s11 + $0x80] sm:$0xff]
    %v10379 = vld [vmem:[%s11 + $0x88] sm:$0xff]
    %v10380 = vld [vmem:[%s11 + $0x90] sm:$0xff]
    %v10381 = vld [vmem:[%s11 + $0x98] sm:$0xff]
    %v10382 = vld [vmem:[%s11 + $0xa0] sm:$0xff]
    %v10383 = vld [vmem:[%s11 + $0xa8] sm:$0xff]
    %v10384 = vld [vmem:[%s11 + $0xb0] sm:$0xff]
    %v10385 = vld [vmem:[%s11 + $0xb8] sm:$0xff]
    %v10386 = vld [vmem:[%s11 + $0xc0] sm:$0xff]
    %v10387 = vld [vmem:[%s11 + $0xc8] sm:$0xff]
    %v10388 = vld [vmem:[%s11 + $0xd0] sm:$0xff]
    %v10389 = vld [vmem:[%s11 + $0xd8] sm:$0xff]
    %v10390 = vld [vmem:[%s11 + $0xe0] sm:$0xff]
    %v10391 = vld [vmem:[%s11 + $0xe8] sm:$0xff]
    %v10392 = vld [vmem:[%s11 + $0xf0] sm:$0xff]
    %v10393 = vld [vmem:[%s11 + $0xf8] sm:$0xff]
    %v10394 = vld [vmem:[%s11 + $0x100] sm:$0xff]
    %v10395 = vld [vmem:[%s11 + $0x108] sm:$0xff]
    %v10396 = vld [vmem:[%s11 + $0x110] sm:$0xff]
    %v10397 = vld [vmem:[%s11 + $0x118] sm:$0xff]
    %v10398 = vld [vmem:[%s11 + $0x120] sm:$0xff]
    %v10399 = vld [vmem:[%s11 + $0x128] sm:$0xff]
    %v10400 = vld [vmem:[%s11 + $0x130] sm:$0xff]
    %v10401 = vld [vmem:[%s11 + $0x138] sm:$0xff]
    %v10402 = vld [vmem:[%s11 + $0x140] sm:$0xff]
    %v10403 = vld [vmem:[%s11 + $0x148] sm:$0xff]
    %v10404 = vld [vmem:[%s11 + $0x150] sm:$0xff]
    %v10405 = vld [vmem:[%s11 + $0x158] sm:$0xff]
    %v10406 = vld [vmem:[%s11 + $0x160] sm:$0xff]
    %v10407 = vld [vmem:[%s11 + $0x168] sm:$0xff]
    %v10408 = vld [vmem:[%s11 + $0x170] sm:$0xff]
    %v10409 = vld [vmem:[%s11 + $0x178] sm:$0xff]
    %10410 = vmatpush.msra.mxu0 %v10407
    %10411 = vmatpush.msra.mxu0 %v10404
    %10412 = vmatpush.msra.mxu0 %v10401
    %10413 = vmatpush.msra.mxu0 %v10398
    %10414 = vmatpush.msra.mxu0 %v10395
    %10415 = vmatpush.msra.mxu0 %v10392
    %10416 = vmatpush.msra.mxu0 %v10389
    %10417 = vmatpush.msra.mxu0 %v10386
    %10418 = vmatpush.msra.mxu0 %v10383
    %10419 = vmatpush.msra.mxu0 %v10380
    %10420 = vmatpush.msra.mxu0 %v10377
    %10421 = vmatpush.msra.mxu0 %v10374
    %10422 = vmatpush.msra.mxu0 %v10371
    %10423 = vmatpush.msra.mxu0 %v10368
    %10424 = vmatpush.msra.mxu0 %v10365
    %10425 = vmatpush.msra.mxu0 %v10362
    %10426 = vmatmul.f32.gmra.mxu0 %v10359
    %v10427 = vpop.f32.mrf.mxu0
    %v10428 = vadd.f32 0.0, %v10427
    %10429 = vdwg.mxu0
    %10430 = vmatpush.msra.mxu0 %v10408
    %10431 = vmatpush.msra.mxu0 %v10405
    %10432 = vmatpush.msra.mxu0 %v10402
    %10433 = vmatpush.msra.mxu0 %v10399
    %10434 = vmatpush.msra.mxu0 %v10396
    %10435 = vmatpush.msra.mxu0 %v10393
    %10436 = vmatpush.msra.mxu0 %v10390
    %10437 = vmatpush.msra.mxu0 %v10387
    %10438 = vmatpush.msra.mxu0 %v10384
    %10439 = vmatpush.msra.mxu0 %v10381
    %10440 = vmatpush.msra.mxu0 %v10378
    %10441 = vmatpush.msra.mxu0 %v10375
    %10442 = vmatpush.msra.mxu0 %v10372
    %10443 = vmatpush.msra.mxu0 %v10369
    %10444 = vmatpush.msra.mxu0 %v10366
    %10445 = vmatpush.msra.mxu0 %v10363
    %10446 = vmatmul.f32.gmra.mxu0 %v10359
    %v10447 = vpop.f32.mrf.mxu0
    %v10448 = vadd.f32 0.0, %v10447
    %10449 = vdwg.mxu0
    %10450 = vmatpush.msra.mxu0 %v10409
    %10451 = vmatpush.msra.mxu0 %v10406
    %10452 = vmatpush.msra.mxu0 %v10403
    %10453 = vmatpush.msra.mxu0 %v10400
    %10454 = vmatpush.msra.mxu0 %v10397
    %10455 = vmatpush.msra.mxu0 %v10394
    %10456 = vmatpush.msra.mxu0 %v10391
    %10457 = vmatpush.msra.mxu0 %v10388
    %10458 = vmatpush.msra.mxu0 %v10385
    %10459 = vmatpush.msra.mxu0 %v10382
    %10460 = vmatpush.msra.mxu0 %v10379
    %10461 = vmatpush.msra.mxu0 %v10376
    %10462 = vmatpush.msra.mxu0 %v10373
    %10463 = vmatpush.msra.mxu0 %v10370
    %10464 = vmatpush.msra.mxu0 %v10367
    %10465 = vmatpush.msra.mxu0 %v10364
    %10466 = vmatmul.f32.gmra.mxu0 %v10359
    %v10467 = vpop.f32.mrf.mxu0
    %v10468 = vadd.f32 0.0, %v10467
    %10469 = vdwg.mxu0
    %v10470 = vld [vmem:[%s12] sm:$0xff]
    %v10471 = vld [vmem:[%s12 + $0x8] sm:$0xff]
    %v10472 = vld [vmem:[%s12 + $0x10] sm:$0xff]
    %v10473 = vld [vmem:[%s12 + $0x18] sm:$0xff]
    %v10474 = vld [vmem:[%s12 + $0x20] sm:$0xff]
    %v10475 = vld [vmem:[%s12 + $0x28] sm:$0xff]
    %v10476 = vld [vmem:[%s12 + $0x30] sm:$0xff]
    %v10477 = vld [vmem:[%s12 + $0x38] sm:$0xff]
    %v10478 = vld [vmem:[%s12 + $0x40] sm:$0xff]
    %v10479 = vld [vmem:[%s12 + $0x48] sm:$0xff]
    %v10480 = vld [vmem:[%s12 + $0x50] sm:$0xff]
    %v10481 = vld [vmem:[%s12 + $0x58] sm:$0xff]
    %v10482 = vld [vmem:[%s12 + $0x60] sm:$0xff]
    %v10483 = vld [vmem:[%s12 + $0x68] sm:$0xff]
    %v10484 = vld [vmem:[%s12 + $0x70] sm:$0xff]
    %v10485 = vld [vmem:[%s12 + $0x78] sm:$0xff]
    %v10486 = vld [vmem:[%s12 + $0x80] sm:$0xff]
    %v10487 = vld [vmem:[%s12 + $0x88] sm:$0xff]
    %v10488 = vld [vmem:[%s12 + $0x90] sm:$0xff]
    %v10489 = vld [vmem:[%s12 + $0x98] sm:$0xff]
    %v10490 = vld [vmem:[%s12 + $0xa0] sm:$0xff]
    %v10491 = vld [vmem:[%s12 + $0xa8] sm:$0xff]
    %v10492 = vld [vmem:[%s12 + $0xb0] sm:$0xff]
    %v10493 = vld [vmem:[%s12 + $0xb8] sm:$0xff]
    %v10494 = vld [vmem:[%s12 + $0xc0] sm:$0xff]
    %v10495 = vld [vmem:[%s12 + $0xc8] sm:$0xff]
    %v10496 = vld [vmem:[%s12 + $0xd0] sm:$0xff]
    %v10497 = vld [vmem:[%s12 + $0xd8] sm:$0xff]
    %v10498 = vld [vmem:[%s12 + $0xe0] sm:$0xff]
    %v10499 = vld [vmem:[%s12 + $0xe8] sm:$0xff]
    %v10500 = vld [vmem:[%s12 + $0xf0] sm:$0xff]
    %v10501 = vld [vmem:[%s12 + $0xf8] sm:$0xff]
    %v10502 = vld [vmem:[%s12 + $0x100] sm:$0xff]
    %v10503 = vld [vmem:[%s12 + $0x108] sm:$0xff]
    %v10504 = vld [vmem:[%s12 + $0x110] sm:$0xff]
    %v10505 = vld [vmem:[%s12 + $0x118] sm:$0xff]
    %v10506 = vld [vmem:[%s12 + $0x120] sm:$0xff]
    %v10507 = vld [vmem:[%s12 + $0x128] sm:$0xff]
    %v10508 = vld [vmem:[%s12 + $0x130] sm:$0xff]
    %v10509 = vld [vmem:[%s12 + $0x138] sm:$0xff]
    %v10510 = vld [vmem:[%s12 + $0x140] sm:$0xff]
    %v10511 = vld [vmem:[%s12 + $0x148] sm:$0xff]
    %v10512 = vld [vmem:[%s12 + $0x150] sm:$0xff]
    %v10513 = vld [vmem:[%s12 + $0x158] sm:$0xff]
    %v10514 = vld [vmem:[%s12 + $0x160] sm:$0xff]
    %v10515 = vld [vmem:[%s12 + $0x168] sm:$0xff]
    %v10516 = vld [vmem:[%s12 + $0x170] sm:$0xff]
    %v10517 = vld [vmem:[%s12 + $0x178] sm:$0xff]
    %10518 = vmatpush.msra.mxu0 %v10515
    %10519 = vmatpush.msra.mxu0 %v10512
    %10520 = vmatpush.msra.mxu0 %v10509
    %10521 = vmatpush.msra.mxu0 %v10506
    %10522 = vmatpush.msra.mxu0 %v10503
    %10523 = vmatpush.msra.mxu0 %v10500
    %10524 = vmatpush.msra.mxu0 %v10497
    %10525 = vmatpush.msra.mxu0 %v10494
    %10526 = vmatpush.msra.mxu0 %v10491
    %10527 = vmatpush.msra.mxu0 %v10488
    %10528 = vmatpush.msra.mxu0 %v10485
    %10529 = vmatpush.msra.mxu0 %v10482
    %10530 = vmatpush.msra.mxu0 %v10479
    %10531 = vmatpush.msra.mxu0 %v10476
    %10532 = vmatpush.msra.mxu0 %v10473
    %10533 = vmatpush.msra.mxu0 %v10470
    %10534 = vmatmul.f32.gmra.mxu0 %v10360
    %v10535 = vpop.f32.mrf.mxu0
    %v10536 = vadd.f32 %v10428, %v10535
    %10537 = vmatmul.f32.gmra.mxu0 %v10361
    %v10538 = vpop.f32.mrf.mxu0
    %v10539 = vadd.f32 %v10428, %v10538
    %10540 = vdwg.mxu0
    %10541 = vmatpush.msra.mxu0 %v10516
    %10542 = vmatpush.msra.mxu0 %v10513
    %10543 = vmatpush.msra.mxu0 %v10510
    %10544 = vmatpush.msra.mxu0 %v10507
    %10545 = vmatpush.msra.mxu0 %v10504
    %10546 = vmatpush.msra.mxu0 %v10501
    %10547 = vmatpush.msra.mxu0 %v10498
    %10548 = vmatpush.msra.mxu0 %v10495
    %10549 = vmatpush.msra.mxu0 %v10492
    %10550 = vmatpush.msra.mxu0 %v10489
    %10551 = vmatpush.msra.mxu0 %v10486
    %10552 = vmatpush.msra.mxu0 %v10483
    %10553 = vmatpush.msra.mxu0 %v10480
    %10554 = vmatpush.msra.mxu0 %v10477
    %10555 = vmatpush.msra.mxu0 %v10474
    %10556 = vmatpush.msra.mxu0 %v10471
    %10557 = vmatmul.f32.gmra.mxu0 %v10360
    %v10558 = vpop.f32.mrf.mxu0
    %v10559 = vadd.f32 %v10448, %v10558
    %10560 = vmatmul.f32.gmra.mxu0 %v10361
    %v10561 = vpop.f32.mrf.mxu0
    %v10562 = vadd.f32 %v10448, %v10561
    %10563 = vdwg.mxu0
    %10564 = vmatpush.msra.mxu0 %v10517
    %10565 = vmatpush.msra.mxu0 %v10514
    %10566 = vmatpush.msra.mxu0 %v10511
    %10567 = vmatpush.msra.mxu0 %v10508
    %10568 = vmatpush.msra.mxu0 %v10505
    %10569 = vmatpush.msra.mxu0 %v10502
    %10570 = vmatpush.msra.mxu0 %v10499
    %10571 = vmatpush.msra.mxu0 %v10496
    %10572 = vmatpush.msra.mxu0 %v10493
    %10573 = vmatpush.msra.mxu0 %v10490
    %10574 = vmatpush.msra.mxu0 %v10487
    %10575 = vmatpush.msra.mxu0 %v10484
    %10576 = vmatpush.msra.mxu0 %v10481
    %10577 = vmatpush.msra.mxu0 %v10478
    %10578 = vmatpush.msra.mxu0 %v10475
    %10579 = vmatpush.msra.mxu0 %v10472
    %10580 = vmatmul.f32.gmra.mxu0 %v10360
    %v10581 = vpop.f32.mrf.mxu0
    %v10582 = vadd.f32 %v10468, %v10581
    %10583 = vmatmul.f32.gmra.mxu0 %v10361
    %v10584 = vpop.f32.mrf.mxu0
    %v10585 = vadd.f32 %v10468, %v10584
    %10586 = vdwg.mxu0
    %v10587 = vld [vmem:[%s13] sm:$0x7]
    %v10589 = vperm.slane %v10587, 0
    %v10590 = vperm.slane %v10587, 1
    %v10591 = vperm.slane %v10587, 2
    %v10595 = vadd.f32 %v10536, %v10589
    %v10596 = vadd.f32 %v10559, %v10590
    %v10597 = vadd.f32 %v10582, %v10591
    %v10598 = vadd.f32 %v10539, %v10589
    %v10599 = vadd.f32 %v10562, %v10590
    %v10600 = vadd.f32 %v10585, %v10591
    %v10601 = vmax.f32 %v10595, 0.0
    %v10602 = vmax.f32 %v10596, 0.0
    %v10603 = vmax.f32 %v10597, 0.0
    %v10604 = vmax.f32 %v10598, 0.0
    %v10605 = vmax.f32 %v10599, 0.0
    %v10606 = vmax.f32 %v10600, 0.0
    %v10607 = vld [vmem:[#allocation7] sm:$0xff]
    %v10608 = vld [vmem:[#allocation7 + $0x8] sm:$0xff]
    %v10609 = vld [vmem:[#allocation7 + $0x10] sm:$0xff]
    %v10610 = vld [vmem:[#allocation7 + $0x18] sm:$0xff]
    %v10611 = vld [vmem:[#allocation7 + $0x20] sm:$0xff]
    %v10612 = vld [vmem:[#allocation7 + $0x28] sm:$0xff]
    %v10613 = vld [vmem:[#allocation7 + $0x30] sm:$0xff]
    %v10614 = vld [vmem:[#allocation7 + $0x38] sm:$0xff]
    %v10615 = vld [vmem:[#allocation7 + $0x40] sm:$0xff]
    %v10616 = vld [vmem:[#allocation7 + $0x48] sm:$0xff]
    %v10617 = vld [vmem:[#allocation7 + $0x50] sm:$0xff]
    %v10618 = vld [vmem:[#allocation7 + $0x58] sm:$0xff]
    %v10619 = vld [vmem:[#allocation7 + $0x60] sm:$0xff]
    %v10620 = vld [vmem:[#allocation7 + $0x68] sm:$0xff]
    %v10621 = vld [vmem:[#allocation7 + $0x70] sm:$0xff]
    %v10622 = vld [vmem:[#allocation7 + $0x78] sm:$0xff]
    %v10623 = vld [vmem:[#allocation7 + $0x80] sm:$0xff]
    %v10624 = vld [vmem:[#allocation7 + $0x88] sm:$0xff]
    %v10625 = vld [vmem:[#allocation7 + $0x90] sm:$0xff]
    %v10626 = vld [vmem:[#allocation7 + $0x98] sm:$0xff]
    %v10627 = vld [vmem:[#allocation7 + $0xa0] sm:$0xff]
    %v10628 = vld [vmem:[#allocation7 + $0xa8] sm:$0xff]
    %v10629 = vld [vmem:[#allocation7 + $0xb0] sm:$0xff]
    %v10630 = vld [vmem:[#allocation7 + $0xb8] sm:$0xff]
    %v10631 = vld [vmem:[#allocation7 + $0xc0] sm:$0xff]
    %v10632 = vld [vmem:[#allocation7 + $0xc8] sm:$0xff]
    %v10633 = vld [vmem:[#allocation7 + $0xd0] sm:$0xff]
    %v10634 = vld [vmem:[#allocation7 + $0xd8] sm:$0xff]
    %v10635 = vld [vmem:[#allocation7 + $0xe0] sm:$0xff]
    %v10636 = vld [vmem:[#allocation7 + $0xe8] sm:$0xff]
    %v10637 = vld [vmem:[#allocation7 + $0xf0] sm:$0xff]
    %v10638 = vld [vmem:[#allocation7 + $0xf8] sm:$0xff]
    %v10639 = vld [vmem:[#allocation7 + $0x100] sm:$0xff]
    %v10640 = vld [vmem:[#allocation7 + $0x108] sm:$0xff]
    %v10641 = vld [vmem:[#allocation7 + $0x110] sm:$0xff]
    %v10642 = vld [vmem:[#allocation7 + $0x118] sm:$0xff]
    %v10643 = vld [vmem:[#allocation7 + $0x120] sm:$0xff]
    %v10644 = vld [vmem:[#allocation7 + $0x128] sm:$0xff]
    %v10645 = vld [vmem:[#allocation7 + $0x130] sm:$0xff]
    %v10646 = vld [vmem:[#allocation7 + $0x138] sm:$0xff]
    %v10647 = vld [vmem:[#allocation7 + $0x140] sm:$0xff]
    %v10648 = vld [vmem:[#allocation7 + $0x148] sm:$0xff]
    %v10649 = vld [vmem:[#allocation7 + $0x150] sm:$0xff]
    %v10650 = vld [vmem:[#allocation7 + $0x158] sm:$0xff]
    %v10651 = vld [vmem:[#allocation7 + $0x160] sm:$0xff]
    %v10652 = vld [vmem:[#allocation7 + $0x168] sm:$0xff]
    %v10653 = vld [vmem:[#allocation7 + $0x170] sm:$0xff]
    %v10654 = vld [vmem:[#allocation7 + $0x178] sm:$0xff]
    %v10655 = vld [vmem:[#allocation7 + $0x180] sm:$0xff]
    %v10656 = vld [vmem:[#allocation7 + $0x188] sm:$0xff]
    %v10657 = vld [vmem:[#allocation7 + $0x190] sm:$0xff]
    %v10658 = vld [vmem:[#allocation7 + $0x198] sm:$0xff]
    %v10659 = vld [vmem:[#allocation7 + $0x1a0] sm:$0xff]
    %v10660 = vld [vmem:[#allocation7 + $0x1a8] sm:$0xff]
    %v10661 = vld [vmem:[#allocation7 + $0x1b0] sm:$0xff]
    %v10662 = vld [vmem:[#allocation7 + $0x1b8] sm:$0xff]
    %v10663 = vld [vmem:[#allocation7 + $0x1c0] sm:$0xff]
    %v10664 = vld [vmem:[#allocation7 + $0x1c8] sm:$0xff]
    %v10665 = vld [vmem:[#allocation7 + $0x1d0] sm:$0xff]
    %v10666 = vld [vmem:[#allocation7 + $0x1d8] sm:$0xff]
    %v10667 = vld [vmem:[#allocation7 + $0x1e0] sm:$0xff]
    %v10668 = vld [vmem:[#allocation7 + $0x1e8] sm:$0xff]
    %v10669 = vld [vmem:[#allocation7 + $0x1f0] sm:$0xff]
    %v10670 = vld [vmem:[#allocation7 + $0x1f8] sm:$0xff]
    %v10671 = vld [vmem:[#allocation7 + $0x200] sm:$0xff]
    %v10672 = vld [vmem:[#allocation7 + $0x208] sm:$0xff]
    %v10673 = vld [vmem:[#allocation7 + $0x210] sm:$0xff]
    %v10674 = vld [vmem:[#allocation7 + $0x218] sm:$0xff]
    %v10675 = vld [vmem:[#allocation7 + $0x220] sm:$0xff]
    %v10676 = vld [vmem:[#allocation7 + $0x228] sm:$0xff]
    %v10677 = vld [vmem:[#allocation7 + $0x230] sm:$0xff]
    %v10678 = vld [vmem:[#allocation7 + $0x238] sm:$0xff]
    %v10679 = vld [vmem:[#allocation7 + $0x240] sm:$0xff]
    %v10680 = vld [vmem:[#allocation7 + $0x248] sm:$0xff]
    %v10681 = vld [vmem:[#allocation7 + $0x250] sm:$0xff]
    %v10682 = vld [vmem:[#allocation7 + $0x258] sm:$0xff]
    %v10683 = vld [vmem:[#allocation7 + $0x260] sm:$0xff]
    %v10684 = vld [vmem:[#allocation7 + $0x268] sm:$0xff]
    %v10685 = vld [vmem:[#allocation7 + $0x270] sm:$0xff]
    %v10686 = vld [vmem:[#allocation7 + $0x278] sm:$0xff]
    %v10687 = vld [vmem:[#allocation7 + $0x280] sm:$0xff]
    %v10688 = vld [vmem:[#allocation7 + $0x288] sm:$0xff]
    %v10689 = vld [vmem:[#allocation7 + $0x290] sm:$0xff]
    %v10690 = vld [vmem:[#allocation7 + $0x298] sm:$0xff]
    %v10691 = vld [vmem:[#allocation7 + $0x2a0] sm:$0xff]
    %v10692 = vld [vmem:[#allocation7 + $0x2a8] sm:$0xff]
    %v10693 = vld [vmem:[#allocation7 + $0x2b0] sm:$0xff]
    %v10694 = vld [vmem:[#allocation7 + $0x2b8] sm:$0xff]
    %v10695 = vld [vmem:[#allocation7 + $0x2c0] sm:$0xff]
    %v10696 = vld [vmem:[#allocation7 + $0x2c8] sm:$0xff]
    %v10697 = vld [vmem:[#allocation7 + $0x2d0] sm:$0xff]
    %v10698 = vld [vmem:[#allocation7 + $0x2d8] sm:$0xff]
    %v10699 = vld [vmem:[#allocation7 + $0x2e0] sm:$0xff]
    %v10700 = vld [vmem:[#allocation7 + $0x2e8] sm:$0xff]
    %v10701 = vld [vmem:[#allocation7 + $0x2f0] sm:$0xff]
    %v10702 = vld [vmem:[#allocation7 + $0x2f8] sm:$0xff]
    %v10703 = vld [vmem:[#allocation7 + $0x300] sm:$0xff]
    %v10704 = vld [vmem:[#allocation7 + $0x308] sm:$0xff]
    %v10705 = vld [vmem:[#allocation7 + $0x310] sm:$0xff]
    %v10706 = vld [vmem:[#allocation7 + $0x318] sm:$0xff]
    %v10707 = vld [vmem:[#allocation7 + $0x320] sm:$0xff]
    %v10708 = vld [vmem:[#allocation7 + $0x328] sm:$0xff]
    %v10709 = vld [vmem:[#allocation7 + $0x330] sm:$0xff]
    %v10710 = vld [vmem:[#allocation7 + $0x338] sm:$0xff]
    %v10711 = vld [vmem:[#allocation7 + $0x340] sm:$0xff]
    %v10712 = vld [vmem:[#allocation7 + $0x348] sm:$0xff]
    %v10713 = vld [vmem:[#allocation7 + $0x350] sm:$0xff]
    %v10714 = vld [vmem:[#allocation7 + $0x358] sm:$0xff]
    %v10715 = vld [vmem:[#allocation7 + $0x360] sm:$0xff]
    %v10716 = vld [vmem:[#allocation7 + $0x368] sm:$0xff]
    %v10717 = vld [vmem:[#allocation7 + $0x370] sm:$0xff]
    %v10718 = vld [vmem:[#allocation7 + $0x378] sm:$0xff]
    %v10719 = vld [vmem:[#allocation7 + $0x380] sm:$0xff]
    %v10720 = vld [vmem:[#allocation7 + $0x388] sm:$0xff]
    %v10721 = vld [vmem:[#allocation7 + $0x390] sm:$0xff]
    %v10722 = vld [vmem:[#allocation7 + $0x398] sm:$0xff]
    %v10723 = vld [vmem:[#allocation7 + $0x3a0] sm:$0xff]
    %v10724 = vld [vmem:[#allocation7 + $0x3a8] sm:$0xff]
    %v10725 = vld [vmem:[#allocation7 + $0x3b0] sm:$0xff]
    %v10726 = vld [vmem:[#allocation7 + $0x3b8] sm:$0xff]
    %v10727 = vld [vmem:[#allocation7 + $0x3c0] sm:$0xff]
    %v10728 = vld [vmem:[#allocation7 + $0x3c8] sm:$0xff]
    %v10729 = vld [vmem:[#allocation7 + $0x3d0] sm:$0xff]
    %v10730 = vld [vmem:[#allocation7 + $0x3d8] sm:$0xff]
    %v10731 = vld [vmem:[#allocation7 + $0x3e0] sm:$0xff]
    %v10732 = vld [vmem:[#allocation7 + $0x3e8] sm:$0xff]
    %v10733 = vld [vmem:[#allocation7 + $0x3f0] sm:$0xff]
    %v10734 = vld [vmem:[#allocation7 + $0x3f8] sm:$0xff]
    %v10735 = vld [vmem:[#allocation7 + $0x400] sm:$0xff]
    %v10736 = vld [vmem:[#allocation7 + $0x408] sm:$0xff]
    %v10737 = vld [vmem:[#allocation7 + $0x410] sm:$0xff]
    %v10738 = vld [vmem:[#allocation7 + $0x418] sm:$0xff]
    %v10739 = vld [vmem:[#allocation7 + $0x420] sm:$0xff]
    %v10740 = vld [vmem:[#allocation7 + $0x428] sm:$0xff]
    %v10741 = vld [vmem:[#allocation7 + $0x430] sm:$0xff]
    %v10742 = vld [vmem:[#allocation7 + $0x438] sm:$0xff]
    %v10743 = vld [vmem:[#allocation7 + $0x440] sm:$0xff]
    %v10744 = vld [vmem:[#allocation7 + $0x448] sm:$0xff]
    %v10745 = vld [vmem:[#allocation7 + $0x450] sm:$0xff]
    %v10746 = vld [vmem:[#allocation7 + $0x458] sm:$0xff]
    %v10747 = vld [vmem:[#allocation7 + $0x460] sm:$0xff]
    %v10748 = vld [vmem:[#allocation7 + $0x468] sm:$0xff]
    %v10749 = vld [vmem:[#allocation7 + $0x470] sm:$0xff]
    %v10750 = vld [vmem:[#allocation7 + $0x478] sm:$0xff]
    %v10751 = vld [vmem:[%s15] sm:$0x7]
    %v10753 = vperm.slane %v10751, 0
    %v10754 = vperm.slane %v10751, 1
    %v10755 = vperm.slane %v10751, 2
    %10759 = vmatpush.msra.mxu0 %v10652
    %10760 = vmatpush.msra.mxu0 %v10649
    %10761 = vmatpush.msra.mxu0 %v10646
    %10762 = vmatpush.msra.mxu0 %v10643
    %10763 = vmatpush.msra.mxu0 %v10640
    %10764 = vmatpush.msra.mxu0 %v10637
    %10765 = vmatpush.msra.mxu0 %v10634
    %10766 = vmatpush.msra.mxu0 %v10631
    %10767 = vmatpush.msra.mxu0 %v10628
    %10768 = vmatpush.msra.mxu0 %v10625
    %10769 = vmatpush.msra.mxu0 %v10622
    %10770 = vmatpush.msra.mxu0 %v10619
    %10771 = vmatpush.msra.mxu0 %v10616
    %10772 = vmatpush.msra.mxu0 %v10613
    %10773 = vmatpush.msra.mxu0 %v10610
    %10774 = vmatpush.msra.mxu0 %v10607
    %10775 = vmatmul.f32.gmra.mxu0 %v10601
    %v10776 = vpop.f32.mrf.mxu0
    %v10777 = vadd.f32 %v10753, %v10776
    %10778 = vmatmul.f32.gmra.mxu0 %v10604
    %v10779 = vpop.f32.mrf.mxu0
    %v10780 = vadd.f32 %v10753, %v10779
    %10781 = vdwg.mxu0
    %10782 = vmatpush.msra.mxu0 %v10700
    %10783 = vmatpush.msra.mxu0 %v10697
    %10784 = vmatpush.msra.mxu0 %v10694
    %10785 = vmatpush.msra.mxu0 %v10691
    %10786 = vmatpush.msra.mxu0 %v10688
    %10787 = vmatpush.msra.mxu0 %v10685
    %10788 = vmatpush.msra.mxu0 %v10682
    %10789 = vmatpush.msra.mxu0 %v10679
    %10790 = vmatpush.msra.mxu0 %v10676
    %10791 = vmatpush.msra.mxu0 %v10673
    %10792 = vmatpush.msra.mxu0 %v10670
    %10793 = vmatpush.msra.mxu0 %v10667
    %10794 = vmatpush.msra.mxu0 %v10664
    %10795 = vmatpush.msra.mxu0 %v10661
    %10796 = vmatpush.msra.mxu0 %v10658
    %10797 = vmatpush.msra.mxu0 %v10655
    %10798 = vmatmul.f32.gmra.mxu0 %v10602
    %v10799 = vpop.f32.mrf.mxu0
    %v10800 = vadd.f32 %v10777, %v10799
    %10801 = vmatmul.f32.gmra.mxu0 %v10605
    %v10802 = vpop.f32.mrf.mxu0
    %v10803 = vadd.f32 %v10780, %v10802
    %10804 = vdwg.mxu0
    %10805 = vmatpush.msra.mxu0 %v10748
    %10806 = vmatpush.msra.mxu0 %v10745
    %10807 = vmatpush.msra.mxu0 %v10742
    %10808 = vmatpush.msra.mxu0 %v10739
    %10809 = vmatpush.msra.mxu0 %v10736
    %10810 = vmatpush.msra.mxu0 %v10733
    %10811 = vmatpush.msra.mxu0 %v10730
    %10812 = vmatpush.msra.mxu0 %v10727
    %10813 = vmatpush.msra.mxu0 %v10724
    %10814 = vmatpush.msra.mxu0 %v10721
    %10815 = vmatpush.msra.mxu0 %v10718
    %10816 = vmatpush.msra.mxu0 %v10715
    %10817 = vmatpush.msra.mxu0 %v10712
    %10818 = vmatpush.msra.mxu0 %v10709
    %10819 = vmatpush.msra.mxu0 %v10706
    %10820 = vmatpush.msra.mxu0 %v10703
    %10821 = vmatmul.f32.gmra.mxu0 %v10603
    %v10822 = vpop.f32.mrf.mxu0
    %v10823 = vadd.f32 %v10800, %v10822
    %10824 = vmatmul.f32.gmra.mxu0 %v10606
    %v10825 = vpop.f32.mrf.mxu0
    %v10826 = vadd.f32 %v10803, %v10825
    %10827 = vdwg.mxu0
    %10828 = vmatpush.msra.mxu0 %v10653
    %10829 = vmatpush.msra.mxu0 %v10650
    %10830 = vmatpush.msra.mxu0 %v10647
    %10831 = vmatpush.msra.mxu0 %v10644
    %10832 = vmatpush.msra.mxu0 %v10641
    %10833 = vmatpush.msra.mxu0 %v10638
    %10834 = vmatpush.msra.mxu0 %v10635
    %10835 = vmatpush.msra.mxu0 %v10632
    %10836 = vmatpush.msra.mxu0 %v10629
    %10837 = vmatpush.msra.mxu0 %v10626
    %10838 = vmatpush.msra.mxu0 %v10623
    %10839 = vmatpush.msra.mxu0 %v10620
    %10840 = vmatpush.msra.mxu0 %v10617
    %10841 = vmatpush.msra.mxu0 %v10614
    %10842 = vmatpush.msra.mxu0 %v10611
    %10843 = vmatpush.msra.mxu0 %v10608
    %10844 = vmatmul.f32.gmra.mxu0 %v10601
    %v10845 = vpop.f32.mrf.mxu0
    %v10846 = vadd.f32 %v10754, %v10845
    %10847 = vmatmul.f32.gmra.mxu0 %v10604
    %v10848 = vpop.f32.mrf.mxu0
    %v10849 = vadd.f32 %v10754, %v10848
    %10850 = vdwg.mxu0
    %10851 = vmatpush.msra.mxu0 %v10701
    %10852 = vmatpush.msra.mxu0 %v10698
    %10853 = vmatpush.msra.mxu0 %v10695
    %10854 = vmatpush.msra.mxu0 %v10692
    %10855 = vmatpush.msra.mxu0 %v10689
    %10856 = vmatpush.msra.mxu0 %v10686
    %10857 = vmatpush.msra.mxu0 %v10683
    %10858 = vmatpush.msra.mxu0 %v10680
    %10859 = vmatpush.msra.mxu0 %v10677
    %10860 = vmatpush.msra.mxu0 %v10674
    %10861 = vmatpush.msra.mxu0 %v10671
    %10862 = vmatpush.msra.mxu0 %v10668
    %10863 = vmatpush.msra.mxu0 %v10665
    %10864 = vmatpush.msra.mxu0 %v10662
    %10865 = vmatpush.msra.mxu0 %v10659
    %10866 = vmatpush.msra.mxu0 %v10656
    %10867 = vmatmul.f32.gmra.mxu0 %v10602
    %v10868 = vpop.f32.mrf.mxu0
    %v10869 = vadd.f32 %v10846, %v10868
    %10870 = vmatmul.f32.gmra.mxu0 %v10605
    %v10871 = vpop.f32.mrf.mxu0
    %v10872 = vadd.f32 %v10849, %v10871
    %10873 = vdwg.mxu0
    %10874 = vmatpush.msra.mxu0 %v10749
    %10875 = vmatpush.msra.mxu0 %v10746
    %10876 = vmatpush.msra.mxu0 %v10743
    %10877 = vmatpush.msra.mxu0 %v10740
    %10878 = vmatpush.msra.mxu0 %v10737
    %10879 = vmatpush.msra.mxu0 %v10734
    %10880 = vmatpush.msra.mxu0 %v10731
    %10881 = vmatpush.msra.mxu0 %v10728
    %10882 = vmatpush.msra.mxu0 %v10725
    %10883 = vmatpush.msra.mxu0 %v10722
    %10884 = vmatpush.msra.mxu0 %v10719
    %10885 = vmatpush.msra.mxu0 %v10716
    %10886 = vmatpush.msra.mxu0 %v10713
    %10887 = vmatpush.msra.mxu0 %v10710
    %10888 = vmatpush.msra.mxu0 %v10707
    %10889 = vmatpush.msra.mxu0 %v10704
    %10890 = vmatmul.f32.gmra.mxu0 %v10603
    %v10891 = vpop.f32.mrf.mxu0
    %v10892 = vadd.f32 %v10869, %v10891
    %10893 = vmatmul.f32.gmra.mxu0 %v10606
    %v10894 = vpop.f32.mrf.mxu0
    %v10895 = vadd.f32 %v10872, %v10894
    %10896 = vdwg.mxu0
    %10897 = vmatpush.msra.mxu0 %v10654
    %10898 = vmatpush.msra.mxu0 %v10651
    %10899 = vmatpush.msra.mxu0 %v10648
    %10900 = vmatpush.msra.mxu0 %v10645
    %10901 = vmatpush.msra.mxu0 %v10642
    %10902 = vmatpush.msra.mxu0 %v10639
    %10903 = vmatpush.msra.mxu0 %v10636
    %10904 = vmatpush.msra.mxu0 %v10633
    %10905 = vmatpush.msra.mxu0 %v10630
    %10906 = vmatpush.msra.mxu0 %v10627
    %10907 = vmatpush.msra.mxu0 %v10624
    %10908 = vmatpush.msra.mxu0 %v10621
    %10909 = vmatpush.msra.mxu0 %v10618
    %10910 = vmatpush.msra.mxu0 %v10615
    %10911 = vmatpush.msra.mxu0 %v10612
    %10912 = vmatpush.msra.mxu0 %v10609
    %10913 = vmatmul.f32.gmra.mxu0 %v10601
    %v10914 = vpop.f32.mrf.mxu0
    %v10915 = vadd.f32 %v10755, %v10914
    %10916 = vmatmul.f32.gmra.mxu0 %v10604
    %v10917 = vpop.f32.mrf.mxu0
    %v10918 = vadd.f32 %v10755, %v10917
    %10919 = vdwg.mxu0
    %10920 = vmatpush.msra.mxu0 %v10702
    %10921 = vmatpush.msra.mxu0 %v10699
    %10922 = vmatpush.msra.mxu0 %v10696
    %10923 = vmatpush.msra.mxu0 %v10693
    %10924 = vmatpush.msra.mxu0 %v10690
    %10925 = vmatpush.msra.mxu0 %v10687
    %10926 = vmatpush.msra.mxu0 %v10684
    %10927 = vmatpush.msra.mxu0 %v10681
    %10928 = vmatpush.msra.mxu0 %v10678
    %10929 = vmatpush.msra.mxu0 %v10675
    %10930 = vmatpush.msra.mxu0 %v10672
    %10931 = vmatpush.msra.mxu0 %v10669
    %10932 = vmatpush.msra.mxu0 %v10666
    %10933 = vmatpush.msra.mxu0 %v10663
    %10934 = vmatpush.msra.mxu0 %v10660
    %10935 = vmatpush.msra.mxu0 %v10657
    %10936 = vmatmul.f32.gmra.mxu0 %v10602
    %v10937 = vpop.f32.mrf.mxu0
    %v10938 = vadd.f32 %v10915, %v10937
    %10939 = vmatmul.f32.gmra.mxu0 %v10605
    %v10940 = vpop.f32.mrf.mxu0
    %v10941 = vadd.f32 %v10918, %v10940
    %10942 = vdwg.mxu0
    %10943 = vmatpush.msra.mxu0 %v10750
    %10944 = vmatpush.msra.mxu0 %v10747
    %10945 = vmatpush.msra.mxu0 %v10744
    %10946 = vmatpush.msra.mxu0 %v10741
    %10947 = vmatpush.msra.mxu0 %v10738
    %10948 = vmatpush.msra.mxu0 %v10735
    %10949 = vmatpush.msra.mxu0 %v10732
    %10950 = vmatpush.msra.mxu0 %v10729
    %10951 = vmatpush.msra.mxu0 %v10726
    %10952 = vmatpush.msra.mxu0 %v10723
    %10953 = vmatpush.msra.mxu0 %v10720
    %10954 = vmatpush.msra.mxu0 %v10717
    %10955 = vmatpush.msra.mxu0 %v10714
    %10956 = vmatpush.msra.mxu0 %v10711
    %10957 = vmatpush.msra.mxu0 %v10708
    %10958 = vmatpush.msra.mxu0 %v10705
    %10959 = vmatmul.f32.gmra.mxu0 %v10603
    %v10960 = vpop.f32.mrf.mxu0
    %v10961 = vadd.f32 %v10938, %v10960
    %10962 = vmatmul.f32.gmra.mxu0 %v10606
    %v10963 = vpop.f32.mrf.mxu0
    %v10964 = vadd.f32 %v10941, %v10963
    %10965 = vdwg.mxu0
    %v10966 = vmax.f32 %v10823, 0.0
    %v10967 = vmax.f32 %v10892, 0.0
    %v10968 = vmax.f32 %v10961, 0.0
    %v10969 = vmax.f32 %v10826, 0.0
    %v10970 = vmax.f32 %v10895, 0.0
    %v10971 = vmax.f32 %v10964, 0.0
    %v10972 = vld [vmem:[#allocation8] sm:$0xff]
    %v10973 = vld [vmem:[#allocation8 + $0x8] sm:$0xff]
    %v10974 = vld [vmem:[#allocation8 + $0x10] sm:$0xff]
    %v10975 = vld [vmem:[#allocation8 + $0x18] sm:$0xff]
    %v10976 = vld [vmem:[#allocation8 + $0x20] sm:$0xff]
    %v10977 = vld [vmem:[#allocation8 + $0x28] sm:$0xff]
    %v10978 = vld [vmem:[#allocation8 + $0x30] sm:$0xff]
    %v10979 = vld [vmem:[#allocation8 + $0x38] sm:$0xff]
    %v10980 = vld [vmem:[#allocation8 + $0x40] sm:$0xff]
    %v10981 = vld [vmem:[#allocation8 + $0x48] sm:$0xff]
    %v10982 = vld [vmem:[#allocation8 + $0x50] sm:$0xff]
    %v10983 = vld [vmem:[#allocation8 + $0x58] sm:$0xff]
    %v10984 = vld [vmem:[#allocation8 + $0x60] sm:$0xff]
    %v10985 = vld [vmem:[#allocation8 + $0x68] sm:$0xff]
    %v10986 = vld [vmem:[#allocation8 + $0x70] sm:$0xff]
    %v10987 = vld [vmem:[#allocation8 + $0x78] sm:$0xff]
    %v10988 = vld [vmem:[#allocation8 + $0x80] sm:$0xff]
    %v10989 = vld [vmem:[#allocation8 + $0x88] sm:$0xff]
    %v10990 = vld [vmem:[#allocation8 + $0x90] sm:$0xff]
    %v10991 = vld [vmem:[#allocation8 + $0x98] sm:$0xff]
    %v10992 = vld [vmem:[#allocation8 + $0xa0] sm:$0xff]
    %v10993 = vld [vmem:[#allocation8 + $0xa8] sm:$0xff]
    %v10994 = vld [vmem:[#allocation8 + $0xb0] sm:$0xff]
    %v10995 = vld [vmem:[#allocation8 + $0xb8] sm:$0xff]
    %v10996 = vld [vmem:[#allocation8 + $0xc0] sm:$0xff]
    %v10997 = vld [vmem:[#allocation8 + $0xc8] sm:$0xff]
    %v10998 = vld [vmem:[#allocation8 + $0xd0] sm:$0xff]
    %v10999 = vld [vmem:[#allocation8 + $0xd8] sm:$0xff]
    %v11000 = vld [vmem:[#allocation8 + $0xe0] sm:$0xff]
    %v11001 = vld [vmem:[#allocation8 + $0xe8] sm:$0xff]
    %v11002 = vld [vmem:[#allocation8 + $0xf0] sm:$0xff]
    %v11003 = vld [vmem:[#allocation8 + $0xf8] sm:$0xff]
    %v11004 = vld [vmem:[#allocation8 + $0x100] sm:$0xff]
    %v11005 = vld [vmem:[#allocation8 + $0x108] sm:$0xff]
    %v11006 = vld [vmem:[#allocation8 + $0x110] sm:$0xff]
    %v11007 = vld [vmem:[#allocation8 + $0x118] sm:$0xff]
    %v11008 = vld [vmem:[#allocation8 + $0x120] sm:$0xff]
    %v11009 = vld [vmem:[#allocation8 + $0x128] sm:$0xff]
    %v11010 = vld [vmem:[#allocation8 + $0x130] sm:$0xff]
    %v11011 = vld [vmem:[#allocation8 + $0x138] sm:$0xff]
    %v11012 = vld [vmem:[#allocation8 + $0x140] sm:$0xff]
    %v11013 = vld [vmem:[#allocation8 + $0x148] sm:$0xff]
    %v11014 = vld [vmem:[#allocation8 + $0x150] sm:$0xff]
    %v11015 = vld [vmem:[#allocation8 + $0x158] sm:$0xff]
    %v11016 = vld [vmem:[#allocation8 + $0x160] sm:$0xff]
    %v11017 = vld [vmem:[#allocation8 + $0x168] sm:$0xff]
    %v11018 = vld [vmem:[#allocation8 + $0x170] sm:$0xff]
    %v11019 = vld [vmem:[#allocation8 + $0x178] sm:$0xff]
    %v11020 = vld [vmem:[#allocation8 + $0x180] sm:$0xff]
    %v11021 = vld [vmem:[#allocation8 + $0x188] sm:$0xff]
    %v11022 = vld [vmem:[#allocation8 + $0x190] sm:$0xff]
    %v11023 = vld [vmem:[#allocation8 + $0x198] sm:$0xff]
    %v11024 = vld [vmem:[#allocation8 + $0x1a0] sm:$0xff]
    %v11025 = vld [vmem:[#allocation8 + $0x1a8] sm:$0xff]
    %v11026 = vld [vmem:[#allocation8 + $0x1b0] sm:$0xff]
    %v11027 = vld [vmem:[#allocation8 + $0x1b8] sm:$0xff]
    %v11028 = vld [vmem:[#allocation8 + $0x1c0] sm:$0xff]
    %v11029 = vld [vmem:[#allocation8 + $0x1c8] sm:$0xff]
    %v11030 = vld [vmem:[#allocation8 + $0x1d0] sm:$0xff]
    %v11031 = vld [vmem:[#allocation8 + $0x1d8] sm:$0xff]
    %v11032 = vld [vmem:[#allocation8 + $0x1e0] sm:$0xff]
    %v11033 = vld [vmem:[#allocation8 + $0x1e8] sm:$0xff]
    %v11034 = vld [vmem:[#allocation8 + $0x1f0] sm:$0xff]
    %v11035 = vld [vmem:[#allocation8 + $0x1f8] sm:$0xff]
    %v11036 = vld [vmem:[#allocation8 + $0x200] sm:$0xff]
    %v11037 = vld [vmem:[#allocation8 + $0x208] sm:$0xff]
    %v11038 = vld [vmem:[#allocation8 + $0x210] sm:$0xff]
    %v11039 = vld [vmem:[#allocation8 + $0x218] sm:$0xff]
    %v11040 = vld [vmem:[#allocation8 + $0x220] sm:$0xff]
    %v11041 = vld [vmem:[#allocation8 + $0x228] sm:$0xff]
    %v11042 = vld [vmem:[#allocation8 + $0x230] sm:$0xff]
    %v11043 = vld [vmem:[#allocation8 + $0x238] sm:$0xff]
    %v11044 = vld [vmem:[#allocation8 + $0x240] sm:$0xff]
    %v11045 = vld [vmem:[#allocation8 + $0x248] sm:$0xff]
    %v11046 = vld [vmem:[#allocation8 + $0x250] sm:$0xff]
    %v11047 = vld [vmem:[#allocation8 + $0x258] sm:$0xff]
    %v11048 = vld [vmem:[#allocation8 + $0x260] sm:$0xff]
    %v11049 = vld [vmem:[#allocation8 + $0x268] sm:$0xff]
    %v11050 = vld [vmem:[#allocation8 + $0x270] sm:$0xff]
    %v11051 = vld [vmem:[#allocation8 + $0x278] sm:$0xff]
    %v11052 = vld [vmem:[#allocation8 + $0x280] sm:$0xff]
    %v11053 = vld [vmem:[#allocation8 + $0x288] sm:$0xff]
    %v11054 = vld [vmem:[#allocation8 + $0x290] sm:$0xff]
    %v11055 = vld [vmem:[#allocation8 + $0x298] sm:$0xff]
    %v11056 = vld [vmem:[#allocation8 + $0x2a0] sm:$0xff]
    %v11057 = vld [vmem:[#allocation8 + $0x2a8] sm:$0xff]
    %v11058 = vld [vmem:[#allocation8 + $0x2b0] sm:$0xff]
    %v11059 = vld [vmem:[#allocation8 + $0x2b8] sm:$0xff]
    %v11060 = vld [vmem:[#allocation8 + $0x2c0] sm:$0xff]
    %v11061 = vld [vmem:[#allocation8 + $0x2c8] sm:$0xff]
    %v11062 = vld [vmem:[#allocation8 + $0x2d0] sm:$0xff]
    %v11063 = vld [vmem:[#allocation8 + $0x2d8] sm:$0xff]
    %v11064 = vld [vmem:[#allocation8 + $0x2e0] sm:$0xff]
    %v11065 = vld [vmem:[#allocation8 + $0x2e8] sm:$0xff]
    %v11066 = vld [vmem:[#allocation8 + $0x2f0] sm:$0xff]
    %v11067 = vld [vmem:[#allocation8 + $0x2f8] sm:$0xff]
    %v11068 = vld [vmem:[#allocation8 + $0x300] sm:$0xff]
    %v11069 = vld [vmem:[#allocation8 + $0x308] sm:$0xff]
    %v11070 = vld [vmem:[#allocation8 + $0x310] sm:$0xff]
    %v11071 = vld [vmem:[#allocation8 + $0x318] sm:$0xff]
    %v11072 = vld [vmem:[#allocation8 + $0x320] sm:$0xff]
    %v11073 = vld [vmem:[#allocation8 + $0x328] sm:$0xff]
    %v11074 = vld [vmem:[#allocation8 + $0x330] sm:$0xff]
    %v11075 = vld [vmem:[#allocation8 + $0x338] sm:$0xff]
    %v11076 = vld [vmem:[#allocation8 + $0x340] sm:$0xff]
    %v11077 = vld [vmem:[#allocation8 + $0x348] sm:$0xff]
    %v11078 = vld [vmem:[#allocation8 + $0x350] sm:$0xff]
    %v11079 = vld [vmem:[#allocation8 + $0x358] sm:$0xff]
    %v11080 = vld [vmem:[#allocation8 + $0x360] sm:$0xff]
    %v11081 = vld [vmem:[#allocation8 + $0x368] sm:$0xff]
    %v11082 = vld [vmem:[#allocation8 + $0x370] sm:$0xff]
    %v11083 = vld [vmem:[#allocation8 + $0x378] sm:$0xff]
    %v11084 = vld [vmem:[#allocation8 + $0x380] sm:$0xff]
    %v11085 = vld [vmem:[#allocation8 + $0x388] sm:$0xff]
    %v11086 = vld [vmem:[#allocation8 + $0x390] sm:$0xff]
    %v11087 = vld [vmem:[#allocation8 + $0x398] sm:$0xff]
    %v11088 = vld [vmem:[#allocation8 + $0x3a0] sm:$0xff]
    %v11089 = vld [vmem:[#allocation8 + $0x3a8] sm:$0xff]
    %v11090 = vld [vmem:[#allocation8 + $0x3b0] sm:$0xff]
    %v11091 = vld [vmem:[#allocation8 + $0x3b8] sm:$0xff]
    %v11092 = vld [vmem:[#allocation8 + $0x3c0] sm:$0xff]
    %v11093 = vld [vmem:[#allocation8 + $0x3c8] sm:$0xff]
    %v11094 = vld [vmem:[#allocation8 + $0x3d0] sm:$0xff]
    %v11095 = vld [vmem:[#allocation8 + $0x3d8] sm:$0xff]
    %v11096 = vld [vmem:[#allocation8 + $0x3e0] sm:$0xff]
    %v11097 = vld [vmem:[#allocation8 + $0x3e8] sm:$0xff]
    %v11098 = vld [vmem:[#allocation8 + $0x3f0] sm:$0xff]
    %v11099 = vld [vmem:[#allocation8 + $0x3f8] sm:$0xff]
    %v11100 = vld [vmem:[#allocation8 + $0x400] sm:$0xff]
    %v11101 = vld [vmem:[#allocation8 + $0x408] sm:$0xff]
    %v11102 = vld [vmem:[#allocation8 + $0x410] sm:$0xff]
    %v11103 = vld [vmem:[#allocation8 + $0x418] sm:$0xff]
    %v11104 = vld [vmem:[#allocation8 + $0x420] sm:$0xff]
    %v11105 = vld [vmem:[#allocation8 + $0x428] sm:$0xff]
    %v11106 = vld [vmem:[#allocation8 + $0x430] sm:$0xff]
    %v11107 = vld [vmem:[#allocation8 + $0x438] sm:$0xff]
    %v11108 = vld [vmem:[#allocation8 + $0x440] sm:$0xff]
    %v11109 = vld [vmem:[#allocation8 + $0x448] sm:$0xff]
    %v11110 = vld [vmem:[#allocation8 + $0x450] sm:$0xff]
    %v11111 = vld [vmem:[#allocation8 + $0x458] sm:$0xff]
    %v11112 = vld [vmem:[#allocation8 + $0x460] sm:$0xff]
    %v11113 = vld [vmem:[#allocation8 + $0x468] sm:$0xff]
    %v11114 = vld [vmem:[#allocation8 + $0x470] sm:$0xff]
    %v11115 = vld [vmem:[#allocation8 + $0x478] sm:$0xff]
    %v11116 = vld [vmem:[%s17] sm:$0x7]
    %v11118 = vperm.slane %v11116, 0
    %v11119 = vperm.slane %v11116, 1
    %v11120 = vperm.slane %v11116, 2
    %11124 = vmatpush.msra.mxu0 %v11017
    %11125 = vmatpush.msra.mxu0 %v11014
    %11126 = vmatpush.msra.mxu0 %v11011
    %11127 = vmatpush.msra.mxu0 %v11008
    %11128 = vmatpush.msra.mxu0 %v11005
    %11129 = vmatpush.msra.mxu0 %v11002
    %11130 = vmatpush.msra.mxu0 %v10999
    %11131 = vmatpush.msra.mxu0 %v10996
    %11132 = vmatpush.msra.mxu0 %v10993
    %11133 = vmatpush.msra.mxu0 %v10990
    %11134 = vmatpush.msra.mxu0 %v10987
    %11135 = vmatpush.msra.mxu0 %v10984
    %11136 = vmatpush.msra.mxu0 %v10981
    %11137 = vmatpush.msra.mxu0 %v10978
    %11138 = vmatpush.msra.mxu0 %v10975
    %11139 = vmatpush.msra.mxu0 %v10972
    %11140 = vmatmul.f32.gmra.mxu0 %v10966
    %v11141 = vpop.f32.mrf.mxu0
    %v11142 = vadd.f32 %v11118, %v11141
    %11143 = vmatmul.f32.gmra.mxu0 %v10969
    %v11144 = vpop.f32.mrf.mxu0
    %v11145 = vadd.f32 %v11118, %v11144
    %11146 = vdwg.mxu0
    %11147 = vmatpush.msra.mxu0 %v11065
    %11148 = vmatpush.msra.mxu0 %v11062
    %11149 = vmatpush.msra.mxu0 %v11059
    %11150 = vmatpush.msra.mxu0 %v11056
    %11151 = vmatpush.msra.mxu0 %v11053
    %11152 = vmatpush.msra.mxu0 %v11050
    %11153 = vmatpush.msra.mxu0 %v11047
    %11154 = vmatpush.msra.mxu0 %v11044
    %11155 = vmatpush.msra.mxu0 %v11041
    %11156 = vmatpush.msra.mxu0 %v11038
    %11157 = vmatpush.msra.mxu0 %v11035
    %11158 = vmatpush.msra.mxu0 %v11032
    %11159 = vmatpush.msra.mxu0 %v11029
    %11160 = vmatpush.msra.mxu0 %v11026
    %11161 = vmatpush.msra.mxu0 %v11023
    %11162 = vmatpush.msra.mxu0 %v11020
    %11163 = vmatmul.f32.gmra.mxu0 %v10967
    %v11164 = vpop.f32.mrf.mxu0
    %v11165 = vadd.f32 %v11142, %v11164
    %11166 = vmatmul.f32.gmra.mxu0 %v10970
    %v11167 = vpop.f32.mrf.mxu0
    %v11168 = vadd.f32 %v11145, %v11167
    %11169 = vdwg.mxu0
    %11170 = vmatpush.msra.mxu0 %v11113
    %11171 = vmatpush.msra.mxu0 %v11110
    %11172 = vmatpush.msra.mxu0 %v11107
    %11173 = vmatpush.msra.mxu0 %v11104
    %11174 = vmatpush.msra.mxu0 %v11101
    %11175 = vmatpush.msra.mxu0 %v11098
    %11176 = vmatpush.msra.mxu0 %v11095
    %11177 = vmatpush.msra.mxu0 %v11092
    %11178 = vmatpush.msra.mxu0 %v11089
    %11179 = vmatpush.msra.mxu0 %v11086
    %11180 = vmatpush.msra.mxu0 %v11083
    %11181 = vmatpush.msra.mxu0 %v11080
    %11182 = vmatpush.msra.mxu0 %v11077
    %11183 = vmatpush.msra.mxu0 %v11074
    %11184 = vmatpush.msra.mxu0 %v11071
    %11185 = vmatpush.msra.mxu0 %v11068
    %11186 = vmatmul.f32.gmra.mxu0 %v10968
    %v11187 = vpop.f32.mrf.mxu0
    %v11188 = vadd.f32 %v11165, %v11187
    %11189 = vmatmul.f32.gmra.mxu0 %v10971
    %v11190 = vpop.f32.mrf.mxu0
    %v11191 = vadd.f32 %v11168, %v11190
    %11192 = vdwg.mxu0
    %11193 = vmatpush.msra.mxu0 %v11018
    %11194 = vmatpush.msra.mxu0 %v11015
    %11195 = vmatpush.msra.mxu0 %v11012
    %11196 = vmatpush.msra.mxu0 %v11009
    %11197 = vmatpush.msra.mxu0 %v11006
    %11198 = vmatpush.msra.mxu0 %v11003
    %11199 = vmatpush.msra.mxu0 %v11000
    %11200 = vmatpush.msra.mxu0 %v10997
    %11201 = vmatpush.msra.mxu0 %v10994
    %11202 = vmatpush.msra.mxu0 %v10991
    %11203 = vmatpush.msra.mxu0 %v10988
    %11204 = vmatpush.msra.mxu0 %v10985
    %11205 = vmatpush.msra.mxu0 %v10982
    %11206 = vmatpush.msra.mxu0 %v10979
    %11207 = vmatpush.msra.mxu0 %v10976
    %11208 = vmatpush.msra.mxu0 %v10973
    %11209 = vmatmul.f32.gmra.mxu0 %v10966
    %v11210 = vpop.f32.mrf.mxu0
    %v11211 = vadd.f32 %v11119, %v11210
    %11212 = vmatmul.f32.gmra.mxu0 %v10969
    %v11213 = vpop.f32.mrf.mxu0
    %v11214 = vadd.f32 %v11119, %v11213
    %11215 = vdwg.mxu0
    %11216 = vmatpush.msra.mxu0 %v11066
    %11217 = vmatpush.msra.mxu0 %v11063
    %11218 = vmatpush.msra.mxu0 %v11060
    %11219 = vmatpush.msra.mxu0 %v11057
    %11220 = vmatpush.msra.mxu0 %v11054
    %11221 = vmatpush.msra.mxu0 %v11051
    %11222 = vmatpush.msra.mxu0 %v11048
    %11223 = vmatpush.msra.mxu0 %v11045
    %11224 = vmatpush.msra.mxu0 %v11042
    %11225 = vmatpush.msra.mxu0 %v11039
    %11226 = vmatpush.msra.mxu0 %v11036
    %11227 = vmatpush.msra.mxu0 %v11033
    %11228 = vmatpush.msra.mxu0 %v11030
    %11229 = vmatpush.msra.mxu0 %v11027
    %11230 = vmatpush.msra.mxu0 %v11024
    %11231 = vmatpush.msra.mxu0 %v11021
    %11232 = vmatmul.f32.gmra.mxu0 %v10967
    %v11233 = vpop.f32.mrf.mxu0
    %v11234 = vadd.f32 %v11211, %v11233
    %11235 = vmatmul.f32.gmra.mxu0 %v10970
    %v11236 = vpop.f32.mrf.mxu0
    %v11237 = vadd.f32 %v11214, %v11236
    %11238 = vdwg.mxu0
    %11239 = vmatpush.msra.mxu0 %v11114
    %11240 = vmatpush.msra.mxu0 %v11111
    %11241 = vmatpush.msra.mxu0 %v11108
    %11242 = vmatpush.msra.mxu0 %v11105
    %11243 = vmatpush.msra.mxu0 %v11102
    %11244 = vmatpush.msra.mxu0 %v11099
    %11245 = vmatpush.msra.mxu0 %v11096
    %11246 = vmatpush.msra.mxu0 %v11093
    %11247 = vmatpush.msra.mxu0 %v11090
    %11248 = vmatpush.msra.mxu0 %v11087
    %11249 = vmatpush.msra.mxu0 %v11084
    %11250 = vmatpush.msra.mxu0 %v11081
    %11251 = vmatpush.msra.mxu0 %v11078
    %11252 = vmatpush.msra.mxu0 %v11075
    %11253 = vmatpush.msra.mxu0 %v11072
    %11254 = vmatpush.msra.mxu0 %v11069
    %11255 = vmatmul.f32.gmra.mxu0 %v10968
    %v11256 = vpop.f32.mrf.mxu0
    %v11257 = vadd.f32 %v11234, %v11256
    %11258 = vmatmul.f32.gmra.mxu0 %v10971
    %v11259 = vpop.f32.mrf.mxu0
    %v11260 = vadd.f32 %v11237, %v11259
    %11261 = vdwg.mxu0
    %11262 = vmatpush.msra.mxu0 %v11019
    %11263 = vmatpush.msra.mxu0 %v11016
    %11264 = vmatpush.msra.mxu0 %v11013
    %11265 = vmatpush.msra.mxu0 %v11010
    %11266 = vmatpush.msra.mxu0 %v11007
    %11267 = vmatpush.msra.mxu0 %v11004
    %11268 = vmatpush.msra.mxu0 %v11001
    %11269 = vmatpush.msra.mxu0 %v10998
    %11270 = vmatpush.msra.mxu0 %v10995
    %11271 = vmatpush.msra.mxu0 %v10992
    %11272 = vmatpush.msra.mxu0 %v10989
    %11273 = vmatpush.msra.mxu0 %v10986
    %11274 = vmatpush.msra.mxu0 %v10983
    %11275 = vmatpush.msra.mxu0 %v10980
    %11276 = vmatpush.msra.mxu0 %v10977
    %11277 = vmatpush.msra.mxu0 %v10974
    %11278 = vmatmul.f32.gmra.mxu0 %v10966
    %v11279 = vpop.f32.mrf.mxu0
    %v11280 = vadd.f32 %v11120, %v11279
    %11281 = vmatmul.f32.gmra.mxu0 %v10969
    %v11282 = vpop.f32.mrf.mxu0
    %v11283 = vadd.f32 %v11120, %v11282
    %11284 = vdwg.mxu0
    %11285 = vmatpush.msra.mxu0 %v11067
    %11286 = vmatpush.msra.mxu0 %v11064
    %11287 = vmatpush.msra.mxu0 %v11061
    %11288 = vmatpush.msra.mxu0 %v11058
    %11289 = vmatpush.msra.mxu0 %v11055
    %11290 = vmatpush.msra.mxu0 %v11052
    %11291 = vmatpush.msra.mxu0 %v11049
    %11292 = vmatpush.msra.mxu0 %v11046
    %11293 = vmatpush.msra.mxu0 %v11043
    %11294 = vmatpush.msra.mxu0 %v11040
    %11295 = vmatpush.msra.mxu0 %v11037
    %11296 = vmatpush.msra.mxu0 %v11034
    %11297 = vmatpush.msra.mxu0 %v11031
    %11298 = vmatpush.msra.mxu0 %v11028
    %11299 = vmatpush.msra.mxu0 %v11025
    %11300 = vmatpush.msra.mxu0 %v11022
    %11301 = vmatmul.f32.gmra.mxu0 %v10967
    %v11302 = vpop.f32.mrf.mxu0
    %v11303 = vadd.f32 %v11280, %v11302
    %11304 = vmatmul.f32.gmra.mxu0 %v10970
    %v11305 = vpop.f32.mrf.mxu0
    %v11306 = vadd.f32 %v11283, %v11305
    %11307 = vdwg.mxu0
    %11308 = vmatpush.msra.mxu0 %v11115
    %11309 = vmatpush.msra.mxu0 %v11112
    %11310 = vmatpush.msra.mxu0 %v11109
    %11311 = vmatpush.msra.mxu0 %v11106
    %11312 = vmatpush.msra.mxu0 %v11103
    %11313 = vmatpush.msra.mxu0 %v11100
    %11314 = vmatpush.msra.mxu0 %v11097
    %11315 = vmatpush.msra.mxu0 %v11094
    %11316 = vmatpush.msra.mxu0 %v11091
    %11317 = vmatpush.msra.mxu0 %v11088
    %11318 = vmatpush.msra.mxu0 %v11085
    %11319 = vmatpush.msra.mxu0 %v11082
    %11320 = vmatpush.msra.mxu0 %v11079
    %11321 = vmatpush.msra.mxu0 %v11076
    %11322 = vmatpush.msra.mxu0 %v11073
    %11323 = vmatpush.msra.mxu0 %v11070
    %11324 = vmatmul.f32.gmra.mxu0 %v10968
    %v11325 = vpop.f32.mrf.mxu0
    %v11326 = vadd.f32 %v11303, %v11325
    %11327 = vmatmul.f32.gmra.mxu0 %v10971
    %v11328 = vpop.f32.mrf.mxu0
    %v11329 = vadd.f32 %v11306, %v11328
    %11330 = vdwg.mxu0
    %v11331 = vmax.f32 %v11188, 0.0
    %v11332 = vmax.f32 %v11257, 0.0
    %v11333 = vmax.f32 %v11326, 0.0
    %v11334 = vmax.f32 %v11191, 0.0
    %v11335 = vmax.f32 %v11260, 0.0
    %v11336 = vmax.f32 %v11329, 0.0
    %v11337 = vld [vmem:[%s18] sm:$0x7]
    %v11339 = vperm.slane %v11337, 0
    %v11340 = vperm.slane %v11337, 1
    %v11341 = vperm.slane %v11337, 2
    %v11345 = vmul.f32 %v11331, %v11339
    %v11346 = vmul.f32 %v11332, %v11340
    %v11347 = vmul.f32 %v11333, %v11341
    %v11348 = vmul.f32 %v11334, %v11339
    %v11349 = vmul.f32 %v11335, %v11340
    %v11350 = vmul.f32 %v11336, %v11341
    %v11351 = vadd.f32 %v11345, %v11346
    %v11352 = vadd.f32 %v11351, %v11347
    %11353 = vadd.xlane.f32.xlu0 %v11352
    %v11354 = vpop.xlane.xlu0 %11353
    %v11355 = vadd.f32 %v11348, %v11349
    %v11356 = vadd.f32 %v11355, %v11350
    %11357 = vadd.xlane.f32.xlu0 %v11356
    %v11358 = vpop.xlane.xlu0 %11357
    %v11359 = vld [vmem:[#allocation2] sm:$0x1]
    %v11361 = vperm.slane %v11359, 0
    %v11363 = vadd.f32 %v11354, %v11361
    %v11364 = vadd.f32 %v11358, %v11361
    %v11365 = vmul.f32 %v11363, 0.5
    %v11366 = vmul.f32 %v11364, 0.5
    %v11367 = vtanh.pop %v11365
    %v11368 = vtanh.pop %v11366
    %v11369 = vadd.f32 %v11367, 1.0
    %v11370 = vadd.f32 %v11368, 1.0
    %v11371 = vmul.f32 %v11369, 0.5
    %v11372 = vmul.f32 %v11370, 0.5
    %vm11373 = vcmask 7168
    %11374 = vst.msk [vmem:[%s20] sm:$0xff] %vm11373, %v11371
    %11375 = vst.msk [vmem:[%s20 + $0x8] sm:$0xff] %vm11373, %v11372
    // Predicated region
    $region98: #{tpu_custom_call.1} parent=1 // pred_check
      _
    $region99: #{tpu_custom_call.1} parent=1 // pred_check_branch
      %11377 = sbr.rel (0) target = $region101
    $region100: #{tpu_custom_call.1} parent=1 // pred_region
      _
    $region101: #{tpu_custom_call.1} parent=1 // pred_fallthru
      _
    // Predicated region
    $region102: #{tpu_custom_call.1} parent=1 // pred_check
      _
    $region103: #{tpu_custom_call.1} parent=1 // pred_check_branch
      %11379 = sbr.rel (0) target = $region105
    $region104: #{tpu_custom_call.1} parent=1 // pred_region
      _
    $region105: #{tpu_custom_call.1} parent=1 // pred_fallthru
      _
    %11380 = vsyncpa [#allocation4], 1
    %11381 = vsyncpa [#allocation6], 1
    %11382 = vsyncpa [#allocation9], 1

</llo_original>
